<compile_context>
chip_gen: v5e
topology: v5e:2x2
jax: 0.10.0
libtpu: 0.0.40
codegen_flags: <defaults>
</compile_context>

<pallas_src>
import functools

import jax
import jax.numpy as jnp
from jax import lax
from jax.experimental import pallas as pl
from jax.experimental.pallas import tpu as pltpu

_LN_EPS = 1e-5


def _gelu(v):
    # exact GELU (erf form) -- matches PyTorch nn.GELU default.
    return 0.5 * v * (1.0 + lax.erf(v * 0.7071067811865476))


# ---------------------------------------------------------------------------
# LORS_Block = Conv_1D (conv1d + channel LayerNorm) + GELU + Layer_SE
#              + F.layer_norm over the length axis (no affine)
# ---------------------------------------------------------------------------
def _lors_block(x, pad_ref, K, cw, cb, g, be, sdw, sdb, suw, sub):
    """x: (B, L, Cin) value; pad_ref: VMEM scratch (B, L+K-1, Cin);
    cw: (K*Cin, Cout) im2col-flattened conv weight."""
    B, L, Cin = x.shape
    Cout = cw.shape[1]
    pad = K // 2

    # Zero-padded input lives in VMEM scratch (no host jnp.pad, no HBM trip).
    pad_ref[...] = jnp.zeros((B, L + K - 1, Cin), jnp.float32)
    pad_ref[:, pad:pad + L, :] = x
    xpad = pad_ref[...]

    # im2col: ONE (B*L, K*Cin) @ (K*Cin, Cout) matmul instead of K tiny dots.
    xcol = jnp.concatenate([xpad[:, t:t + L, :] for t in range(K)], axis=-1)
    acc = jnp.dot(xcol.reshape(B * L, K * Cin), cw,
                  preferred_element_type=jnp.float32) + cb        # (B*L, Cout)

    # LayerNorm over channels (affine).
    mu = jnp.mean(acc, axis=-1, keepdims=True)
    var = jnp.mean((acc - mu) ** 2, axis=-1, keepdims=True)
    h = (acc - mu) * lax.rsqrt(var + _LN_EPS) * g + be

    h = _gelu(h)

    # Layer_SE: global average pool over length, down/up linear, sigmoid gate.
    h3 = h.reshape(B, L, Cout)
    pooled = jnp.mean(h3, axis=1)                                  # (B, Cout)
    z = _gelu(jnp.dot(pooled, sdw, preferred_element_type=jnp.float32) + sdb)
    gate = jax.nn.sigmoid(
        jnp.dot(z, suw, preferred_element_type=jnp.float32) + sub)
    h3 = h3 * gate[:, None, :]

    # F.layer_norm(x, [x.shape[-1]]) with x in NCL normalizes the *length*
    # axis -> axis 1 in channel-last layout, no affine params.
    mu2 = jnp.mean(h3, axis=1, keepdims=True)
    var2 = jnp.mean((h3 - mu2) ** 2, axis=1, keepdims=True)
    return (h3 - mu2) * lax.rsqrt(var2 + _LN_EPS)


# ---------------------------------------------------------------------------
# Gated_Atten: full pair slab, two batched matmuls, single full-tensor blends.
# ---------------------------------------------------------------------------
def _gated_atten(x, y, wd, bd, wp, bp, wdn, bdn, wup, bup, alpha):
    B, Ld, C = x.shape
    Lp = y.shape[1]

    da = (jnp.dot(x.reshape(B * Ld, C), wd,
                  preferred_element_type=jnp.float32) + bd).reshape(B, Ld, C)
    pa = (jnp.dot(y.reshape(B * Lp, C), wp,
                  preferred_element_type=jnp.float32) + bp).reshape(B, Lp, C)

    # relu(drug_att[b,i] + prot_att[b,j]) for all (i, j), then ONE down-proj
    # and ONE up-proj matmul on the flattened (B*Ld*Lp, C) rows.
    t = jnp.maximum(da[:, :, None, :] + pa[:, None, :, :], 0.0)   # (B,Ld,Lp,C)
    t2 = t.reshape(B * Ld * Lp, C)
    hdn = jnp.maximum(
        jnp.dot(t2, wdn, preferred_element_type=jnp.float32) + bdn, 0.0)
    am = jnp.dot(hdn, wup, preferred_element_type=jnp.float32) + bup  # (B*Ld*Lp, C)

    # Compound attention: mean over protein positions (sublane reduce).
    comp = jnp.mean(am.reshape(B * Ld, Lp, C), axis=1).reshape(B, Ld, C)

    # Protein attention: mean over drug positions. Done as a short unrolled
    # register-add over Ld slabs (cheap VPU adds, no awkward relayouts).
    am3 = am.reshape(B, Ld * Lp, C)
    prot = am3[:, 0:Lp, :]
    for i in range(1, Ld):
        prot = prot + am3[:, i * Lp:(i + 1) * Lp, :]
    prot = prot * (1.0 / Ld)                                        # (B, Lp, C)

    gd = jax.nn.sigmoid(comp) * jnp.tanh(comp)
    gp = jax.nn.sigmoid(prot) * jnp.tanh(prot)
    # Single full-tensor blends (no per-position masked stores).
    return x * alpha + x * gd, y * alpha + y * gp


# ---------------------------------------------------------------------------
# Fully fused forward kernel
# ---------------------------------------------------------------------------
def _fused_kernel(*refs, n_drug, n_prot, drug_ks, prot_ks, alpha):
    nb = n_drug + n_prot
    it = iter(refs)
    d_ref = next(it)
    p_ref = next(it)
    block_refs = [[next(it) for _ in range(8)] for _ in range(nb)]
    wd, bd, wp, bp, wdn, bdn, wup, bup = (next(it) for _ in range(8))
    b1, b2, b3, wo, bo = (next(it) for _ in range(5))
    w1_hbm, w2_hbm, w3_hbm = (next(it) for _ in range(3))
    o_ref = next(it)
    pad_refs = [next(it) for _ in range(nb)]
    w1_buf, w2_buf, w3_buf, dma_sem = (next(it) for _ in range(4))

    # Kick off the bf16 head-weight HBM->VMEM DMAs first so the ~1.3 MB
    # transfer hides under the LORS / gated-attention compute.
    copies = [pltpu.make_async_copy(w1_hbm, w1_buf, dma_sem.at[0]),
              pltpu.make_async_copy(w2_hbm, w2_buf, dma_sem.at[1]),
              pltpu.make_async_copy(w3_hbm, w3_buf, dma_sem.at[2])]
    for cp in copies:
        cp.start()

    # Drug / protein LORS towers (all activations stay in VMEM / vregs).
    x = d_ref[...]
    for i in range(n_drug):
        x = _lors_block(x, pad_refs[i], drug_ks[i],
                        *[r[...] for r in block_refs[i]])
    y = p_ref[...]
    for i in range(n_prot):
        y = _lors_block(y, pad_refs[n_drug + i], prot_ks[i],
                        *[r[...] for r in block_refs[n_drug + i]])

    xo, yo = _gated_atten(x, y, wd[...], bd[...], wp[...], bp[...],
                          wdn[...], bdn[...], wup[...], bup[...], alpha)

    # Head: global max pool over length, concat, 4-layer MLP -> scalar.
    # TODO(synk): dropout1/2/3 (p=0.2) are identity at inference and omitted.
    dmax = jnp.max(xo, axis=1)                    # MaxPool1d(Ld)
    pmax = jnp.max(yo, axis=1)                    # MaxPool1d(Lp)
    pair = jnp.concatenate([dmax, pmax], axis=-1)

    for cp in copies:                             # head weights must be in VMEM
        cp.wait()

    h = _gelu(jnp.dot(pair.astype(jnp.bfloat16), w1_buf[...],
                      preferred_element_type=jnp.float32) + b1[...])
    h = _gelu(jnp.dot(h.astype(jnp.bfloat16), w2_buf[...],
                      preferred_element_type=jnp.float32) + b2[...])
    h = _gelu(jnp.dot(h.astype(jnp.bfloat16), w3_buf[...],
                      preferred_element_type=jnp.float32) + b3[...])
    o_ref[...] = jnp.dot(h, wo[...],
                         preferred_element_type=jnp.float32) + bo[...]


def _fused_forward(d_emb, p_emb, params, drug_ks, prot_ks, alpha):
    B, Ld, _ = d_emb.shape
    Lp = p_emb.shape[1]
    drug_blocks = params["drug_blocks"]
    prot_blocks = params["prot_blocks"]
    g = params["gated"]
    hd = params["head"]

    block_args, pad_scratch = [], []

    def pack_blocks(blocks, ks, L):
        for blk, k in zip(blocks, ks):
            cw = blk["conv_w"]                         # (K, Cin, Cout)
            _, cin, cout = cw.shape
            block_args.extend([cw.reshape(k * cin, cout), blk["conv_b"],
                               blk["ln_g"], blk["ln_b"],
                               blk["se_dw"], blk["se_db"],
                               blk["se_uw"], blk["se_ub"]])
            pad_scratch.append(pltpu.VMEM((B, L + k - 1, cin), jnp.float32))

    pack_blocks(drug_blocks, drug_ks, Ld)
    pack_blocks(prot_blocks, prot_ks, Lp)

    gated_args = [g["wd"], g["bd"], g["wp"], g["bp"],
                  g["wdn"], g["bdn"], g["wup"], g["bup"]]
    head_small = [hd["b1"], hd["b2"], hd["b3"], hd["wo"], hd["bo"]]
    head_big = [hd["w1"], hd["w2"], hd["w3"]]          # bf16, prefetched by DMA

    n_vmem_in = 2 + len(block_args) + len(gated_args) + len(head_small)
    in_specs = ([pl.BlockSpec(memory_space=pltpu.MemorySpace.VMEM)] * n_vmem_in
                + [pl.BlockSpec(memory_space=pl.ANY)] * len(head_big))

    scratch_shapes = pad_scratch + [
        pltpu.VMEM(hd["w1"].shape, hd["w1"].dtype),
        pltpu.VMEM(hd["w2"].shape, hd["w2"].dtype),
        pltpu.VMEM(hd["w3"].shape, hd["w3"].dtype),
        pltpu.SemaphoreType.DMA((3,)),
    ]

    kern = functools.partial(
        _fused_kernel,
        n_drug=len(drug_blocks), n_prot=len(prot_blocks),
        drug_ks=drug_ks, prot_ks=prot_ks, alpha=alpha)

    out = pl.pallas_call(
        kern,
        out_shape=jax.ShapeDtypeStruct((B, 1), jnp.float32),
        in_specs=in_specs,
        out_specs=pl.BlockSpec(memory_space=pltpu.MemorySpace.VMEM),
        scratch_shapes=scratch_shapes,
        compiler_params=pltpu.CompilerParams(
            vmem_limit_bytes=32 * 1024 * 1024),
    )(d_emb, p_emb, *block_args, *gated_args, *head_small, *head_big)
    return out[:, 0]                                   # .squeeze(1)


def build_forward(params, alpha=0.5):
    # Kernel sizes are compile-time constants -> capture them statically.
    drug_ks = tuple(int(b["k"]) for b in params["drug_blocks"])
    prot_ks = tuple(int(b["k"]) for b in params["prot_blocks"])

    @jax.jit
    def forward(drug_tokens, prot_tokens, params):
        # Embedding gathers are glue in plain JAX (data-dependent gather).
        d = params["drug_emb"][drug_tokens]            # (B, Ld, E) channel-last
        p = params["prot_emb"][prot_tokens]            # (B, Lp, E)
        return _fused_forward(d, p, params, drug_ks, prot_ks, alpha)

    return forward


# ---------------------------------------------------------------------------
# Parameter init (deterministic, synthetic)
# ---------------------------------------------------------------------------
def _linear_init(key, fan_in, fan_out, dtype=jnp.float32):
    kw, kb = jax.random.split(key)
    w = (jax.random.normal(kw, (fan_in, fan_out), jnp.float32)
         / jnp.sqrt(float(fan_in))).astype(dtype)
    b = jax.random.normal(kb, (1, fan_out), jnp.float32) * 0.01
    return w, b


def init_params(key, *, drug_channels, prot_channels, drug_kernels, prot_kernels):
    kit = iter(jax.random.split(key, 64))
    params = {}

    demb = jax.random.normal(next(kit), (65, drug_channels[0]), jnp.float32) * 0.1
    params["drug_emb"] = demb.at[0].set(0.0)           # padding_idx=0
    pemb = jax.random.normal(next(kit), (26, prot_channels[0]), jnp.float32) * 0.1
    params["prot_emb"] = pemb.at[0].set(0.0)           # padding_idx=0

    def lors_params(cin, cout, k):
        p = {"k": k}
        p["conv_w"] = jax.random.normal(
            next(kit), (k, cin, cout), jnp.float32) / jnp.sqrt(float(cin * k))
        p["conv_b"] = jax.random.normal(next(kit), (1, cout), jnp.float32) * 0.01
        p["ln_g"] = jnp.ones((1, cout), jnp.float32)
        p["ln_b"] = jnp.zeros((1, cout), jnp.float32)
        p["se_dw"], p["se_db"] = _linear_init(next(kit), cout, cout // 2)
        p["se_uw"], p["se_ub"] = _linear_init(next(kit), cout // 2, cout)
        return p

    params["drug_blocks"] = [
        lors_params(drug_channels[i], drug_channels[i + 1], drug_kernels[i])
        for i in range(len(drug_channels) - 1)]
    params["prot_blocks"] = [
        lors_params(prot_channels[i], prot_channels[i + 1], prot_kernels[i])
        for i in range(len(prot_channels) - 1)]

    C = drug_channels[-1]
    g = {}
    g["wd"], g["bd"] = _linear_init(next(kit), C, C)          # drug_attention_layer
    g["wp"], g["bp"] = _linear_init(next(kit), C, C)          # protein_attention_layer
    g["wdn"], g["bdn"] = _linear_init(next(kit), C, C // 2)   # attention_layer_down
    g["wup"], g["bup"] = _linear_init(next(kit), C // 2, C)   # attention_layer_up
    params["gated"] = g

    h = {}
    # Large head weights stored in bf16 (DMA-bound kernel stage); biases f32.
    h["w1"], h["b1"] = _linear_init(next(kit),
                                    drug_channels[-1] + prot_channels[-1], 1024,
                                    dtype=jnp.bfloat16)
    h["w2"], h["b2"] = _linear_init(next(kit), 1024, 512, dtype=jnp.bfloat16)
    h["w3"], h["b3"] = _linear_init(next(kit), 512, 256, dtype=jnp.bfloat16)
    h["wo"], h["bo"] = _linear_init(next(kit), 256, 1)
    params["head"] = h
    return params


if __name__ == "__main__":
    B, Ld, Lp = 2, 16, 24
    drug_channels = [8, 16]
    prot_channels = [8, 16]
    drug_kernels = [3]
    prot_kernels = [5]

    key = jax.random.PRNGKey(0)
    kparam, kdrug, kprot = jax.random.split(key, 3)
    params = init_params(kparam,
                         drug_channels=drug_channels, prot_channels=prot_channels,
                         drug_kernels=drug_kernels, prot_kernels=prot_kernels)

    drug_tokens = jax.random.randint(kdrug, (B, Ld), 0, 65, dtype=jnp.int32)
    prot_tokens = jax.random.randint(kprot, (B, Lp), 0, 26, dtype=jnp.int32)

    forward = build_forward(params, alpha=0.5)
    out = forward(drug_tokens, prot_tokens, params)
    out = jax.block_until_ready(out)
    assert out.shape == (B,) and out.dtype == jnp.float32
    print("KERNEL_OK")
</pallas_src>

<mosaic_0001>
module attributes {stable_mosaic.version = 11 : i64} {
  func.func @_fused_kernel(%arg0: memref<2x16x8xf32, #tpu.memory_space<vmem>>, %arg1: memref<2x24x8xf32, #tpu.memory_space<vmem>>, %arg2: memref<24x16xf32, #tpu.memory_space<vmem>>, %arg3: memref<1x16xf32, #tpu.memory_space<vmem>>, %arg4: memref<1x16xf32, #tpu.memory_space<vmem>>, %arg5: memref<1x16xf32, #tpu.memory_space<vmem>>, %arg6: memref<16x8xf32, #tpu.memory_space<vmem>>, %arg7: memref<1x8xf32, #tpu.memory_space<vmem>>, %arg8: memref<8x16xf32, #tpu.memory_space<vmem>>, %arg9: memref<1x16xf32, #tpu.memory_space<vmem>>, %arg10: memref<40x16xf32, #tpu.memory_space<vmem>>, %arg11: memref<1x16xf32, #tpu.memory_space<vmem>>, %arg12: memref<1x16xf32, #tpu.memory_space<vmem>>, %arg13: memref<1x16xf32, #tpu.memory_space<vmem>>, %arg14: memref<16x8xf32, #tpu.memory_space<vmem>>, %arg15: memref<1x8xf32, #tpu.memory_space<vmem>>, %arg16: memref<8x16xf32, #tpu.memory_space<vmem>>, %arg17: memref<1x16xf32, #tpu.memory_space<vmem>>, %arg18: memref<16x16xf32, #tpu.memory_space<vmem>>, %arg19: memref<1x16xf32, #tpu.memory_space<vmem>>, %arg20: memref<16x16xf32, #tpu.memory_space<vmem>>, %arg21: memref<1x16xf32, #tpu.memory_space<vmem>>, %arg22: memref<16x8xf32, #tpu.memory_space<vmem>>, %arg23: memref<1x8xf32, #tpu.memory_space<vmem>>, %arg24: memref<8x16xf32, #tpu.memory_space<vmem>>, %arg25: memref<1x16xf32, #tpu.memory_space<vmem>>, %arg26: memref<1x1024xf32, #tpu.memory_space<vmem>>, %arg27: memref<1x512xf32, #tpu.memory_space<vmem>>, %arg28: memref<1x256xf32, #tpu.memory_space<vmem>>, %arg29: memref<256x1xf32, #tpu.memory_space<vmem>>, %arg30: memref<1x1xf32, #tpu.memory_space<vmem>>, %arg31: memref<32x1024xbf16, #tpu.memory_space<any>>, %arg32: memref<1024x512xbf16, #tpu.memory_space<any>>, %arg33: memref<512x256xbf16, #tpu.memory_space<any>>, %arg34: memref<2x1xf32, #tpu.memory_space<vmem>>, %arg35: memref<2x18x8xf32, #tpu.memory_space<vmem>>, %arg36: memref<2x28x8xf32, #tpu.memory_space<vmem>>, %arg37: memref<32x1024xbf16, #tpu.memory_space<vmem>>, %arg38: memref<1024x512xbf16, #tpu.memory_space<vmem>>, %arg39: memref<512x256xbf16, #tpu.memory_space<vmem>>, %arg40: memref<3x!tpu.dma_semaphore, #tpu.memory_space<semaphore_mem>>) attributes {dimension_semantics = [], scalar_prefetch = 0 : i64, scratch_operands = 6 : i64, tpu.core_type = #tpu.core_type<tc>} {
    %c0_i32 = arith.constant 0 : i32
    %0 = tpu.memref_slice %arg40[%c0_i32] : memref<3x!tpu.dma_semaphore, #tpu.memory_space<semaphore_mem>> -> memref<1x!tpu.dma_semaphore, #tpu.memory_space<semaphore_mem>>
    %1 = tpu.memref_squeeze %0 : memref<1x!tpu.dma_semaphore, #tpu.memory_space<semaphore_mem>> -> memref<!tpu.dma_semaphore, #tpu.memory_space<semaphore_mem>>
    tpu.enqueue_dma source(%arg31 : memref<32x1024xbf16, #tpu.memory_space<any>>) target(%arg37 : memref<32x1024xbf16, #tpu.memory_space<vmem>>) target_semaphore(%1 : memref<!tpu.dma_semaphore, #tpu.memory_space<semaphore_mem>>)
    %c1_i32 = arith.constant 1 : i32
    %2 = tpu.memref_slice %arg40[%c1_i32] : memref<3x!tpu.dma_semaphore, #tpu.memory_space<semaphore_mem>> -> memref<1x!tpu.dma_semaphore, #tpu.memory_space<semaphore_mem>>
    %3 = tpu.memref_squeeze %2 : memref<1x!tpu.dma_semaphore, #tpu.memory_space<semaphore_mem>> -> memref<!tpu.dma_semaphore, #tpu.memory_space<semaphore_mem>>
    tpu.enqueue_dma source(%arg32 : memref<1024x512xbf16, #tpu.memory_space<any>>) target(%arg38 : memref<1024x512xbf16, #tpu.memory_space<vmem>>) target_semaphore(%3 : memref<!tpu.dma_semaphore, #tpu.memory_space<semaphore_mem>>)
    %c2_i32 = arith.constant 2 : i32
    %4 = tpu.memref_slice %arg40[%c2_i32] : memref<3x!tpu.dma_semaphore, #tpu.memory_space<semaphore_mem>> -> memref<1x!tpu.dma_semaphore, #tpu.memory_space<semaphore_mem>>
    %5 = tpu.memref_squeeze %4 : memref<1x!tpu.dma_semaphore, #tpu.memory_space<semaphore_mem>> -> memref<!tpu.dma_semaphore, #tpu.memory_space<semaphore_mem>>
    tpu.enqueue_dma source(%arg33 : memref<512x256xbf16, #tpu.memory_space<any>>) target(%arg39 : memref<512x256xbf16, #tpu.memory_space<vmem>>) target_semaphore(%5 : memref<!tpu.dma_semaphore, #tpu.memory_space<semaphore_mem>>)
    %c0 = arith.constant 0 : index
    %c0_0 = arith.constant 0 : index
    %c0_1 = arith.constant 0 : index
    %6 = vector.load %arg0[%c0, %c0_0, %c0_1] : memref<2x16x8xf32, #tpu.memory_space<vmem>>, vector<2x16x8xf32>
    %c0_2 = arith.constant 0 : index
    %c0_3 = arith.constant 0 : index
    %7 = vector.load %arg2[%c0_2, %c0_3] : memref<24x16xf32, #tpu.memory_space<vmem>>, vector<24x16xf32>
    %c0_4 = arith.constant 0 : index
    %c0_5 = arith.constant 0 : index
    %8 = vector.load %arg3[%c0_4, %c0_5] : memref<1x16xf32, #tpu.memory_space<vmem>>, vector<1x16xf32>
    %c0_6 = arith.constant 0 : index
    %c0_7 = arith.constant 0 : index
    %9 = vector.load %arg4[%c0_6, %c0_7] : memref<1x16xf32, #tpu.memory_space<vmem>>, vector<1x16xf32>
    %c0_8 = arith.constant 0 : index
    %c0_9 = arith.constant 0 : index
    %10 = vector.load %arg5[%c0_8, %c0_9] : memref<1x16xf32, #tpu.memory_space<vmem>>, vector<1x16xf32>
    %c0_10 = arith.constant 0 : index
    %c0_11 = arith.constant 0 : index
    %11 = vector.load %arg6[%c0_10, %c0_11] : memref<16x8xf32, #tpu.memory_space<vmem>>, vector<16x8xf32>
    %c0_12 = arith.constant 0 : index
    %c0_13 = arith.constant 0 : index
    %12 = vector.load %arg7[%c0_12, %c0_13] : memref<1x8xf32, #tpu.memory_space<vmem>>, vector<1x8xf32>
    %c0_14 = arith.constant 0 : index
    %c0_15 = arith.constant 0 : index
    %13 = vector.load %arg8[%c0_14, %c0_15] : memref<8x16xf32, #tpu.memory_space<vmem>>, vector<8x16xf32>
    %c0_16 = arith.constant 0 : index
    %c0_17 = arith.constant 0 : index
    %14 = vector.load %arg9[%c0_16, %c0_17] : memref<1x16xf32, #tpu.memory_space<vmem>>, vector<1x16xf32>
    %cst = arith.constant 0.000000e+00 : f32
    %15 = vector.broadcast %cst : f32 to vector<2x18x8xf32>
    %c0_18 = arith.constant 0 : index
    %c0_19 = arith.constant 0 : index
    %c0_20 = arith.constant 0 : index
    %16 = vector.load %arg35[%c0_18, %c0_19, %c0_20] : memref<2x18x8xf32, #tpu.memory_space<vmem>>, vector<2x18x8xf32>
    tpu.vector_store %arg35[%c0_18, %c0_19, %c0_20], %15 {strides = array<i32>} : memref<2x18x8xf32, #tpu.memory_space<vmem>>, vector<2x18x8xf32>,
    %c0_21 = arith.constant 0 : index
    %c1 = arith.constant 1 : index
    %c0_22 = arith.constant 0 : index
    %17 = vector.load %arg35[%c0_21, %c1, %c0_22] : memref<2x18x8xf32, #tpu.memory_space<vmem>>, vector<2x16x8xf32>
    tpu.vector_store %arg35[%c0_21, %c1, %c0_22], %6 {strides = array<i32>} : memref<2x18x8xf32, #tpu.memory_space<vmem>>, vector<2x16x8xf32>,
    %c0_23 = arith.constant 0 : index
    %c0_24 = arith.constant 0 : index
    %c0_25 = arith.constant 0 : index
    %18 = vector.load %arg35[%c0_23, %c0_24, %c0_25] : memref<2x18x8xf32, #tpu.memory_space<vmem>>, vector<2x18x8xf32>
    %19 = vector.extract_strided_slice %18 {offsets = [0, 0, 0], sizes = [2, 16, 8], strides = [1, 1, 1]} : vector<2x18x8xf32> to vector<2x16x8xf32>
    %20 = vector.extract_strided_slice %18 {offsets = [0, 1, 0], sizes = [2, 16, 8], strides = [1, 1, 1]} : vector<2x18x8xf32> to vector<2x16x8xf32>
    %21 = vector.extract_strided_slice %18 {offsets = [0, 2, 0], sizes = [2, 16, 8], strides = [1, 1, 1]} : vector<2x18x8xf32> to vector<2x16x8xf32>
    %22 = tpu.concatenate %19, %20, %21 in 2 : vector<2x16x8xf32>, vector<2x16x8xf32>, vector<2x16x8xf32> -> vector<2x16x24xf32>
    %23 = vector.shape_cast %22 : vector<2x16x24xf32> to vector<32x24xf32>
    %cst_26 = arith.constant dense<0.000000e+00> : vector<32x16xf32>
    %24 = tpu.matmul %23, %7, %cst_26 {dimension_numbers = #tpu.dot_dimension_numbers<[1], [0], [0], [1], [0, 0, 1, 1], [], []>} : vector<32x24xf32>, vector<24x16xf32>, vector<32x16xf32> -> vector<32x16xf32>
    %25 = vector.broadcast %8 : vector<1x16xf32> to vector<32x16xf32>
    %26 = arith.addf %24, %25 : vector<32x16xf32>
    %cst_27 = arith.constant dense<0.000000e+00> : vector<32xf32>
    %27 = vector.multi_reduction <add>, %26, %cst_27 [1] : vector<32x16xf32> to vector<32xf32>
    %28 = vector.shape_cast %27 : vector<32xf32> to vector<32x1xf32>
    %cst_28 = arith.constant 1.600000e+01 : f32
    %29 = vector.broadcast %cst_28 : f32 to vector<32x1xf32>
    %30 = arith.divf %28, %29 : vector<32x1xf32>
    %31 = vector.broadcast %30 : vector<32x1xf32> to vector<32x16xf32>
    %32 = arith.subf %26, %31 : vector<32x16xf32>
    %33 = arith.mulf %32, %32 : vector<32x16xf32>
    %cst_29 = arith.constant dense<0.000000e+00> : vector<32xf32>
    %34 = vector.multi_reduction <add>, %33, %cst_29 [1] : vector<32x16xf32> to vector<32xf32>
    %35 = vector.shape_cast %34 : vector<32xf32> to vector<32x1xf32>
    %cst_30 = arith.constant 1.600000e+01 : f32
    %36 = vector.broadcast %cst_30 : f32 to vector<32x1xf32>
    %37 = arith.divf %35, %36 : vector<32x1xf32>
    %38 = vector.broadcast %30 : vector<32x1xf32> to vector<32x16xf32>
    %39 = arith.subf %26, %38 : vector<32x16xf32>
    %cst_31 = arith.constant 9.99999974E-6 : f32
    %40 = vector.broadcast %cst_31 : f32 to vector<32x1xf32>
    %41 = arith.addf %37, %40 : vector<32x1xf32>
    %42 = math.rsqrt %41 : vector<32x1xf32>
    %43 = vector.broadcast %42 : vector<32x1xf32> to vector<32x16xf32>
    %44 = arith.mulf %39, %43 : vector<32x16xf32>
    %45 = vector.broadcast %9 : vector<1x16xf32> to vector<32x16xf32>
    %46 = arith.mulf %44, %45 : vector<32x16xf32>
    %47 = vector.broadcast %10 : vector<1x16xf32> to vector<32x16xf32>
    %48 = arith.addf %46, %47 : vector<32x16xf32>
    %cst_32 = arith.constant 5.000000e-01 : f32
    %49 = vector.broadcast %cst_32 : f32 to vector<32x16xf32>
    %50 = arith.mulf %49, %48 : vector<32x16xf32>
    %cst_33 = arith.constant 0.707106769 : f32
    %51 = vector.broadcast %cst_33 : f32 to vector<32x16xf32>
    %52 = arith.mulf %48, %51 : vector<32x16xf32>
    %53 = math.erf %52 : vector<32x16xf32>
    %cst_34 = arith.constant 1.000000e+00 : f32
    %54 = vector.broadcast %cst_34 : f32 to vector<32x16xf32>
    %55 = arith.addf %54, %53 : vector<32x16xf32>
    %56 = arith.mulf %50, %55 : vector<32x16xf32>
    %57 = vector.shape_cast %56 : vector<32x16xf32> to vector<2x16x16xf32>
    %cst_35 = arith.constant dense<0.000000e+00> : vector<2x16xf32>
    %58 = vector.multi_reduction <add>, %57, %cst_35 [1] : vector<2x16x16xf32> to vector<2x16xf32>
    %cst_36 = arith.constant 1.600000e+01 : f32
    %59 = vector.broadcast %cst_36 : f32 to vector<2x16xf32>
    %60 = arith.divf %58, %59 : vector<2x16xf32>
    %cst_37 = arith.constant dense<0.000000e+00> : vector<2x8xf32>
    %61 = tpu.matmul %60, %11, %cst_37 {dimension_numbers = #tpu.dot_dimension_numbers<[1], [0], [0], [1], [0, 0, 1, 1], [], []>} : vector<2x16xf32>, vector<16x8xf32>, vector<2x8xf32> -> vector<2x8xf32>
    %62 = vector.broadcast %12 : vector<1x8xf32> to vector<2x8xf32>
    %63 = arith.addf %61, %62 : vector<2x8xf32>
    %cst_38 = arith.constant 5.000000e-01 : f32
    %64 = vector.broadcast %cst_38 : f32 to vector<2x8xf32>
    %65 = arith.mulf %64, %63 : vector<2x8xf32>
    %cst_39 = arith.constant 0.707106769 : f32
    %66 = vector.broadcast %cst_39 : f32 to vector<2x8xf32>
    %67 = arith.mulf %63, %66 : vector<2x8xf32>
    %68 = math.erf %67 : vector<2x8xf32>
    %cst_40 = arith.constant 1.000000e+00 : f32
    %69 = vector.broadcast %cst_40 : f32 to vector<2x8xf32>
    %70 = arith.addf %69, %68 : vector<2x8xf32>
    %71 = arith.mulf %65, %70 : vector<2x8xf32>
    %cst_41 = arith.constant dense<0.000000e+00> : vector<2x16xf32>
    %72 = tpu.matmul %71, %13, %cst_41 {dimension_numbers = #tpu.dot_dimension_numbers<[1], [0], [0], [1], [0, 0, 1, 1], [], []>} : vector<2x8xf32>, vector<8x16xf32>, vector<2x16xf32> -> vector<2x16xf32>
    %73 = vector.broadcast %14 : vector<1x16xf32> to vector<2x16xf32>
    %74 = arith.addf %72, %73 : vector<2x16xf32>
    %75 = arith.negf %74 : vector<2x16xf32>
    %76 = math.exp %75 : vector<2x16xf32>
    %cst_42 = arith.constant 1.000000e+00 : f32
    %77 = vector.broadcast %cst_42 : f32 to vector<2x16xf32>
    %78 = arith.addf %77, %76 : vector<2x16xf32>
    %79 = arith.divf %77, %78 : vector<2x16xf32>
    %80 = vector.shape_cast %79 : vector<2x16xf32> to vector<2x1x16xf32>
    %81 = vector.broadcast %80 : vector<2x1x16xf32> to vector<2x16x16xf32>
    %82 = arith.mulf %57, %81 : vector<2x16x16xf32>
    %cst_43 = arith.constant dense<0.000000e+00> : vector<2x16xf32>
    %83 = vector.multi_reduction <add>, %82, %cst_43 [1] : vector<2x16x16xf32> to vector<2x16xf32>
    %84 = vector.shape_cast %83 : vector<2x16xf32> to vector<2x1x16xf32>
    %cst_44 = arith.constant 1.600000e+01 : f32
    %85 = vector.broadcast %cst_44 : f32 to vector<2x1x16xf32>
    %86 = arith.divf %84, %85 : vector<2x1x16xf32>
    %87 = vector.broadcast %86 : vector<2x1x16xf32> to vector<2x16x16xf32>
    %88 = arith.subf %82, %87 : vector<2x16x16xf32>
    %89 = arith.mulf %88, %88 : vector<2x16x16xf32>
    %cst_45 = arith.constant dense<0.000000e+00> : vector<2x16xf32>
    %90 = vector.multi_reduction <add>, %89, %cst_45 [1] : vector<2x16x16xf32> to vector<2x16xf32>
    %91 = vector.shape_cast %90 : vector<2x16xf32> to vector<2x1x16xf32>
    %cst_46 = arith.constant 1.600000e+01 : f32
    %92 = vector.broadcast %cst_46 : f32 to vector<2x1x16xf32>
    %93 = arith.divf %91, %92 : vector<2x1x16xf32>
    %94 = vector.broadcast %86 : vector<2x1x16xf32> to vector<2x16x16xf32>
    %95 = arith.subf %82, %94 : vector<2x16x16xf32>
    %cst_47 = arith.constant 9.99999974E-6 : f32
    %96 = vector.broadcast %cst_47 : f32 to vector<2x1x16xf32>
    %97 = arith.addf %93, %96 : vector<2x1x16xf32>
    %98 = math.rsqrt %97 : vector<2x1x16xf32>
    %99 = vector.broadcast %98 : vector<2x1x16xf32> to vector<2x16x16xf32>
    %100 = arith.mulf %95, %99 : vector<2x16x16xf32>
    %c0_48 = arith.constant 0 : index
    %c0_49 = arith.constant 0 : index
    %c0_50 = arith.constant 0 : index
    %101 = vector.load %arg1[%c0_48, %c0_49, %c0_50] : memref<2x24x8xf32, #tpu.memory_space<vmem>>, vector<2x24x8xf32>
    %c0_51 = arith.constant 0 : index
    %c0_52 = arith.constant 0 : index
    %102 = vector.load %arg10[%c0_51, %c0_52] : memref<40x16xf32, #tpu.memory_space<vmem>>, vector<40x16xf32>
    %c0_53 = arith.constant 0 : index
    %c0_54 = arith.constant 0 : index
    %103 = vector.load %arg11[%c0_53, %c0_54] : memref<1x16xf32, #tpu.memory_space<vmem>>, vector<1x16xf32>
    %c0_55 = arith.constant 0 : index
    %c0_56 = arith.constant 0 : index
    %104 = vector.load %arg12[%c0_55, %c0_56] : memref<1x16xf32, #tpu.memory_space<vmem>>, vector<1x16xf32>
    %c0_57 = arith.constant 0 : index
    %c0_58 = arith.constant 0 : index
    %105 = vector.load %arg13[%c0_57, %c0_58] : memref<1x16xf32, #tpu.memory_space<vmem>>, vector<1x16xf32>
    %c0_59 = arith.constant 0 : index
    %c0_60 = arith.constant 0 : index
    %106 = vector.load %arg14[%c0_59, %c0_60] : memref<16x8xf32, #tpu.memory_space<vmem>>, vector<16x8xf32>
    %c0_61 = arith.constant 0 : index
    %c0_62 = arith.constant 0 : index
    %107 = vector.load %arg15[%c0_61, %c0_62] : memref<1x8xf32, #tpu.memory_space<vmem>>, vector<1x8xf32>
    %c0_63 = arith.constant 0 : index
    %c0_64 = arith.constant 0 : index
    %108 = vector.load %arg16[%c0_63, %c0_64] : memref<8x16xf32, #tpu.memory_space<vmem>>, vector<8x16xf32>
    %c0_65 = arith.constant 0 : index
    %c0_66 = arith.constant 0 : index
    %109 = vector.load %arg17[%c0_65, %c0_66] : memref<1x16xf32, #tpu.memory_space<vmem>>, vector<1x16xf32>
    %cst_67 = arith.constant 0.000000e+00 : f32
    %110 = vector.broadcast %cst_67 : f32 to vector<2x28x8xf32>
    %c0_68 = arith.constant 0 : index
    %c0_69 = arith.constant 0 : index
    %c0_70 = arith.constant 0 : index
    %111 = vector.load %arg36[%c0_68, %c0_69, %c0_70] : memref<2x28x8xf32, #tpu.memory_space<vmem>>, vector<2x28x8xf32>
    tpu.vector_store %arg36[%c0_68, %c0_69, %c0_70], %110 {strides = array<i32>} : memref<2x28x8xf32, #tpu.memory_space<vmem>>, vector<2x28x8xf32>,
    %c0_71 = arith.constant 0 : index
    %c2 = arith.constant 2 : index
    %c0_72 = arith.constant 0 : index
    %112 = vector.load %arg36[%c0_71, %c2, %c0_72] : memref<2x28x8xf32, #tpu.memory_space<vmem>>, vector<2x24x8xf32>
    tpu.vector_store %arg36[%c0_71, %c2, %c0_72], %101 {strides = array<i32>} : memref<2x28x8xf32, #tpu.memory_space<vmem>>, vector<2x24x8xf32>,
    %c0_73 = arith.constant 0 : index
    %c0_74 = arith.constant 0 : index
    %c0_75 = arith.constant 0 : index
    %113 = vector.load %arg36[%c0_73, %c0_74, %c0_75] : memref<2x28x8xf32, #tpu.memory_space<vmem>>, vector<2x28x8xf32>
    %114 = vector.extract_strided_slice %113 {offsets = [0, 0, 0], sizes = [2, 24, 8], strides = [1, 1, 1]} : vector<2x28x8xf32> to vector<2x24x8xf32>
    %115 = vector.extract_strided_slice %113 {offsets = [0, 1, 0], sizes = [2, 24, 8], strides = [1, 1, 1]} : vector<2x28x8xf32> to vector<2x24x8xf32>
    %116 = vector.extract_strided_slice %113 {offsets = [0, 2, 0], sizes = [2, 24, 8], strides = [1, 1, 1]} : vector<2x28x8xf32> to vector<2x24x8xf32>
    %117 = vector.extract_strided_slice %113 {offsets = [0, 3, 0], sizes = [2, 24, 8], strides = [1, 1, 1]} : vector<2x28x8xf32> to vector<2x24x8xf32>
    %118 = vector.extract_strided_slice %113 {offsets = [0, 4, 0], sizes = [2, 24, 8], strides = [1, 1, 1]} : vector<2x28x8xf32> to vector<2x24x8xf32>
    %119 = tpu.concatenate %114, %115, %116, %117, %118 in 2 : vector<2x24x8xf32>, vector<2x24x8xf32>, vector<2x24x8xf32>, vector<2x24x8xf32>, vector<2x24x8xf32> -> vector<2x24x40xf32>
    %120 = vector.shape_cast %119 : vector<2x24x40xf32> to vector<48x40xf32>
    %cst_76 = arith.constant dense<0.000000e+00> : vector<48x16xf32>
    %121 = tpu.matmul %120, %102, %cst_76 {dimension_numbers = #tpu.dot_dimension_numbers<[1], [0], [0], [1], [0, 0, 1, 1], [], []>} : vector<48x40xf32>, vector<40x16xf32>, vector<48x16xf32> -> vector<48x16xf32>
    %122 = vector.broadcast %103 : vector<1x16xf32> to vector<48x16xf32>
    %123 = arith.addf %121, %122 : vector<48x16xf32>
    %cst_77 = arith.constant dense<0.000000e+00> : vector<48xf32>
    %124 = vector.multi_reduction <add>, %123, %cst_77 [1] : vector<48x16xf32> to vector<48xf32>
    %125 = vector.shape_cast %124 : vector<48xf32> to vector<48x1xf32>
    %cst_78 = arith.constant 1.600000e+01 : f32
    %126 = vector.broadcast %cst_78 : f32 to vector<48x1xf32>
    %127 = arith.divf %125, %126 : vector<48x1xf32>
    %128 = vector.broadcast %127 : vector<48x1xf32> to vector<48x16xf32>
    %129 = arith.subf %123, %128 : vector<48x16xf32>
    %130 = arith.mulf %129, %129 : vector<48x16xf32>
    %cst_79 = arith.constant dense<0.000000e+00> : vector<48xf32>
    %131 = vector.multi_reduction <add>, %130, %cst_79 [1] : vector<48x16xf32> to vector<48xf32>
    %132 = vector.shape_cast %131 : vector<48xf32> to vector<48x1xf32>
    %cst_80 = arith.constant 1.600000e+01 : f32
    %133 = vector.broadcast %cst_80 : f32 to vector<48x1xf32>
    %134 = arith.divf %132, %133 : vector<48x1xf32>
    %135 = vector.broadcast %127 : vector<48x1xf32> to vector<48x16xf32>
    %136 = arith.subf %123, %135 : vector<48x16xf32>
    %cst_81 = arith.constant 9.99999974E-6 : f32
    %137 = vector.broadcast %cst_81 : f32 to vector<48x1xf32>
    %138 = arith.addf %134, %137 : vector<48x1xf32>
    %139 = math.rsqrt %138 : vector<48x1xf32>
    %140 = vector.broadcast %139 : vector<48x1xf32> to vector<48x16xf32>
    %141 = arith.mulf %136, %140 : vector<48x16xf32>
    %142 = vector.broadcast %104 : vector<1x16xf32> to vector<48x16xf32>
    %143 = arith.mulf %141, %142 : vector<48x16xf32>
    %144 = vector.broadcast %105 : vector<1x16xf32> to vector<48x16xf32>
    %145 = arith.addf %143, %144 : vector<48x16xf32>
    %cst_82 = arith.constant 5.000000e-01 : f32
    %146 = vector.broadcast %cst_82 : f32 to vector<48x16xf32>
    %147 = arith.mulf %146, %145 : vector<48x16xf32>
    %cst_83 = arith.constant 0.707106769 : f32
    %148 = vector.broadcast %cst_83 : f32 to vector<48x16xf32>
    %149 = arith.mulf %145, %148 : vector<48x16xf32>
    %150 = math.erf %149 : vector<48x16xf32>
    %cst_84 = arith.constant 1.000000e+00 : f32
    %151 = vector.broadcast %cst_84 : f32 to vector<48x16xf32>
    %152 = arith.addf %151, %150 : vector<48x16xf32>
    %153 = arith.mulf %147, %152 : vector<48x16xf32>
    %154 = vector.shape_cast %153 : vector<48x16xf32> to vector<2x24x16xf32>
    %cst_85 = arith.constant dense<0.000000e+00> : vector<2x16xf32>
    %155 = vector.multi_reduction <add>, %154, %cst_85 [1] : vector<2x24x16xf32> to vector<2x16xf32>
    %cst_86 = arith.constant 2.400000e+01 : f32
    %156 = vector.broadcast %cst_86 : f32 to vector<2x16xf32>
    %157 = arith.divf %155, %156 : vector<2x16xf32>
    %cst_87 = arith.constant dense<0.000000e+00> : vector<2x8xf32>
    %158 = tpu.matmul %157, %106, %cst_87 {dimension_numbers = #tpu.dot_dimension_numbers<[1], [0], [0], [1], [0, 0, 1, 1], [], []>} : vector<2x16xf32>, vector<16x8xf32>, vector<2x8xf32> -> vector<2x8xf32>
    %159 = vector.broadcast %107 : vector<1x8xf32> to vector<2x8xf32>
    %160 = arith.addf %158, %159 : vector<2x8xf32>
    %cst_88 = arith.constant 5.000000e-01 : f32
    %161 = vector.broadcast %cst_88 : f32 to vector<2x8xf32>
    %162 = arith.mulf %161, %160 : vector<2x8xf32>
    %cst_89 = arith.constant 0.707106769 : f32
    %163 = vector.broadcast %cst_89 : f32 to vector<2x8xf32>
    %164 = arith.mulf %160, %163 : vector<2x8xf32>
    %165 = math.erf %164 : vector<2x8xf32>
    %cst_90 = arith.constant 1.000000e+00 : f32
    %166 = vector.broadcast %cst_90 : f32 to vector<2x8xf32>
    %167 = arith.addf %166, %165 : vector<2x8xf32>
    %168 = arith.mulf %162, %167 : vector<2x8xf32>
    %cst_91 = arith.constant dense<0.000000e+00> : vector<2x16xf32>
    %169 = tpu.matmul %168, %108, %cst_91 {dimension_numbers = #tpu.dot_dimension_numbers<[1], [0], [0], [1], [0, 0, 1, 1], [], []>} : vector<2x8xf32>, vector<8x16xf32>, vector<2x16xf32> -> vector<2x16xf32>
    %170 = vector.broadcast %109 : vector<1x16xf32> to vector<2x16xf32>
    %171 = arith.addf %169, %170 : vector<2x16xf32>
    %172 = arith.negf %171 : vector<2x16xf32>
    %173 = math.exp %172 : vector<2x16xf32>
    %cst_92 = arith.constant 1.000000e+00 : f32
    %174 = vector.broadcast %cst_92 : f32 to vector<2x16xf32>
    %175 = arith.addf %174, %173 : vector<2x16xf32>
    %176 = arith.divf %174, %175 : vector<2x16xf32>
    %177 = vector.shape_cast %176 : vector<2x16xf32> to vector<2x1x16xf32>
    %178 = vector.broadcast %177 : vector<2x1x16xf32> to vector<2x24x16xf32>
    %179 = arith.mulf %154, %178 : vector<2x24x16xf32>
    %cst_93 = arith.constant dense<0.000000e+00> : vector<2x16xf32>
    %180 = vector.multi_reduction <add>, %179, %cst_93 [1] : vector<2x24x16xf32> to vector<2x16xf32>
    %181 = vector.shape_cast %180 : vector<2x16xf32> to vector<2x1x16xf32>
    %cst_94 = arith.constant 2.400000e+01 : f32
    %182 = vector.broadcast %cst_94 : f32 to vector<2x1x16xf32>
    %183 = arith.divf %181, %182 : vector<2x1x16xf32>
    %184 = vector.broadcast %183 : vector<2x1x16xf32> to vector<2x24x16xf32>
    %185 = arith.subf %179, %184 : vector<2x24x16xf32>
    %186 = arith.mulf %185, %185 : vector<2x24x16xf32>
    %cst_95 = arith.constant dense<0.000000e+00> : vector<2x16xf32>
    %187 = vector.multi_reduction <add>, %186, %cst_95 [1] : vector<2x24x16xf32> to vector<2x16xf32>
    %188 = vector.shape_cast %187 : vector<2x16xf32> to vector<2x1x16xf32>
    %cst_96 = arith.constant 2.400000e+01 : f32
    %189 = vector.broadcast %cst_96 : f32 to vector<2x1x16xf32>
    %190 = arith.divf %188, %189 : vector<2x1x16xf32>
    %191 = vector.broadcast %183 : vector<2x1x16xf32> to vector<2x24x16xf32>
    %192 = arith.subf %179, %191 : vector<2x24x16xf32>
    %cst_97 = arith.constant 9.99999974E-6 : f32
    %193 = vector.broadcast %cst_97 : f32 to vector<2x1x16xf32>
    %194 = arith.addf %190, %193 : vector<2x1x16xf32>
    %195 = math.rsqrt %194 : vector<2x1x16xf32>
    %196 = vector.broadcast %195 : vector<2x1x16xf32> to vector<2x24x16xf32>
    %197 = arith.mulf %192, %196 : vector<2x24x16xf32>
    %c0_98 = arith.constant 0 : index
    %c0_99 = arith.constant 0 : index
    %198 = vector.load %arg18[%c0_98, %c0_99] : memref<16x16xf32, #tpu.memory_space<vmem>>, vector<16x16xf32>
    %c0_100 = arith.constant 0 : index
    %c0_101 = arith.constant 0 : index
    %199 = vector.load %arg19[%c0_100, %c0_101] : memref<1x16xf32, #tpu.memory_space<vmem>>, vector<1x16xf32>
    %c0_102 = arith.constant 0 : index
    %c0_103 = arith.constant 0 : index
    %200 = vector.load %arg20[%c0_102, %c0_103] : memref<16x16xf32, #tpu.memory_space<vmem>>, vector<16x16xf32>
    %c0_104 = arith.constant 0 : index
    %c0_105 = arith.constant 0 : index
    %201 = vector.load %arg21[%c0_104, %c0_105] : memref<1x16xf32, #tpu.memory_space<vmem>>, vector<1x16xf32>
    %c0_106 = arith.constant 0 : index
    %c0_107 = arith.constant 0 : index
    %202 = vector.load %arg22[%c0_106, %c0_107] : memref<16x8xf32, #tpu.memory_space<vmem>>, vector<16x8xf32>
    %c0_108 = arith.constant 0 : index
    %c0_109 = arith.constant 0 : index
    %203 = vector.load %arg23[%c0_108, %c0_109] : memref<1x8xf32, #tpu.memory_space<vmem>>, vector<1x8xf32>
    %c0_110 = arith.constant 0 : index
    %c0_111 = arith.constant 0 : index
    %204 = vector.load %arg24[%c0_110, %c0_111] : memref<8x16xf32, #tpu.memory_space<vmem>>, vector<8x16xf32>
    %c0_112 = arith.constant 0 : index
    %c0_113 = arith.constant 0 : index
    %205 = vector.load %arg25[%c0_112, %c0_113] : memref<1x16xf32, #tpu.memory_space<vmem>>, vector<1x16xf32>
    %206 = vector.shape_cast %100 : vector<2x16x16xf32> to vector<32x16xf32>
    %cst_114 = arith.constant dense<0.000000e+00> : vector<32x16xf32>
    %207 = tpu.matmul %206, %198, %cst_114 {dimension_numbers = #tpu.dot_dimension_numbers<[1], [0], [0], [1], [0, 0, 1, 1], [], []>} : vector<32x16xf32>, vector<16x16xf32>, vector<32x16xf32> -> vector<32x16xf32>
    %208 = vector.broadcast %199 : vector<1x16xf32> to vector<32x16xf32>
    %209 = arith.addf %207, %208 : vector<32x16xf32>
    %210 = vector.shape_cast %209 : vector<32x16xf32> to vector<2x16x16xf32>
    %211 = vector.shape_cast %197 : vector<2x24x16xf32> to vector<48x16xf32>
    %cst_115 = arith.constant dense<0.000000e+00> : vector<48x16xf32>
    %212 = tpu.matmul %211, %200, %cst_115 {dimension_numbers = #tpu.dot_dimension_numbers<[1], [0], [0], [1], [0, 0, 1, 1], [], []>} : vector<48x16xf32>, vector<16x16xf32>, vector<48x16xf32> -> vector<48x16xf32>
    %213 = vector.broadcast %201 : vector<1x16xf32> to vector<48x16xf32>
    %214 = arith.addf %212, %213 : vector<48x16xf32>
    %215 = vector.shape_cast %214 : vector<48x16xf32> to vector<2x24x16xf32>
    %216 = vector.shape_cast %210 : vector<2x16x16xf32> to vector<2x16x1x16xf32>
    %217 = vector.shape_cast %215 : vector<2x24x16xf32> to vector<2x1x24x16xf32>
    %218 = vector.broadcast %216 : vector<2x16x1x16xf32> to vector<2x16x24x16xf32>
    %219 = vector.broadcast %217 : vector<2x1x24x16xf32> to vector<2x16x24x16xf32>
    %220 = arith.addf %218, %219 : vector<2x16x24x16xf32>
    %cst_116 = arith.constant 0.000000e+00 : f32
    %221 = vector.broadcast %cst_116 : f32 to vector<2x16x24x16xf32>
    %222 = arith.maximumf %220, %221 : vector<2x16x24x16xf32>
    %223 = vector.shape_cast %222 : vector<2x16x24x16xf32> to vector<768x16xf32>
    %cst_117 = arith.constant dense<0.000000e+00> : vector<768x8xf32>
    %224 = tpu.matmul %223, %202, %cst_117 {dimension_numbers = #tpu.dot_dimension_numbers<[1], [0], [0], [1], [0, 0, 1, 1], [], []>} : vector<768x16xf32>, vector<16x8xf32>, vector<768x8xf32> -> vector<768x8xf32>
    %225 = vector.broadcast %203 : vector<1x8xf32> to vector<768x8xf32>
    %226 = arith.addf %224, %225 : vector<768x8xf32>
    %cst_118 = arith.constant 0.000000e+00 : f32
    %227 = vector.broadcast %cst_118 : f32 to vector<768x8xf32>
    %228 = arith.maximumf %226, %227 : vector<768x8xf32>
    %cst_119 = arith.constant dense<0.000000e+00> : vector<768x16xf32>
    %229 = tpu.matmul %228, %204, %cst_119 {dimension_numbers = #tpu.dot_dimension_numbers<[1], [0], [0], [1], [0, 0, 1, 1], [], []>} : vector<768x8xf32>, vector<8x16xf32>, vector<768x16xf32> -> vector<768x16xf32>
    %230 = vector.broadcast %205 : vector<1x16xf32> to vector<768x16xf32>
    %231 = arith.addf %229, %230 : vector<768x16xf32>
    %232 = vector.shape_cast %231 : vector<768x16xf32> to vector<32x24x16xf32>
    %cst_120 = arith.constant dense<0.000000e+00> : vector<32x16xf32>
    %233 = vector.multi_reduction <add>, %232, %cst_120 [1] : vector<32x24x16xf32> to vector<32x16xf32>
    %cst_121 = arith.constant 2.400000e+01 : f32
    %234 = vector.broadcast %cst_121 : f32 to vector<32x16xf32>
    %235 = arith.divf %233, %234 : vector<32x16xf32>
    %236 = vector.shape_cast %235 : vector<32x16xf32> to vector<2x16x16xf32>
    %237 = vector.shape_cast %231 : vector<768x16xf32> to vector<2x384x16xf32>
    %238 = vector.extract_strided_slice %237 {offsets = [0, 0, 0], sizes = [2, 24, 16], strides = [1, 1, 1]} : vector<2x384x16xf32> to vector<2x24x16xf32>
    %239 = vector.extract_strided_slice %237 {offsets = [0, 24, 0], sizes = [2, 24, 16], strides = [1, 1, 1]} : vector<2x384x16xf32> to vector<2x24x16xf32>
    %240 = arith.addf %238, %239 : vector<2x24x16xf32>
    %241 = vector.extract_strided_slice %237 {offsets = [0, 48, 0], sizes = [2, 24, 16], strides = [1, 1, 1]} : vector<2x384x16xf32> to vector<2x24x16xf32>
    %242 = arith.addf %240, %241 : vector<2x24x16xf32>
    %243 = vector.extract_strided_slice %237 {offsets = [0, 72, 0], sizes = [2, 24, 16], strides = [1, 1, 1]} : vector<2x384x16xf32> to vector<2x24x16xf32>
    %244 = arith.addf %242, %243 : vector<2x24x16xf32>
    %245 = vector.extract_strided_slice %237 {offsets = [0, 96, 0], sizes = [2, 24, 16], strides = [1, 1, 1]} : vector<2x384x16xf32> to vector<2x24x16xf32>
    %246 = arith.addf %244, %245 : vector<2x24x16xf32>
    %247 = vector.extract_strided_slice %237 {offsets = [0, 120, 0], sizes = [2, 24, 16], strides = [1, 1, 1]} : vector<2x384x16xf32> to vector<2x24x16xf32>
    %248 = arith.addf %246, %247 : vector<2x24x16xf32>
    %249 = vector.extract_strided_slice %237 {offsets = [0, 144, 0], sizes = [2, 24, 16], strides = [1, 1, 1]} : vector<2x384x16xf32> to vector<2x24x16xf32>
    %250 = arith.addf %248, %249 : vector<2x24x16xf32>
    %251 = vector.extract_strided_slice %237 {offsets = [0, 168, 0], sizes = [2, 24, 16], strides = [1, 1, 1]} : vector<2x384x16xf32> to vector<2x24x16xf32>
    %252 = arith.addf %250, %251 : vector<2x24x16xf32>
    %253 = vector.extract_strided_slice %237 {offsets = [0, 192, 0], sizes = [2, 24, 16], strides = [1, 1, 1]} : vector<2x384x16xf32> to vector<2x24x16xf32>
    %254 = arith.addf %252, %253 : vector<2x24x16xf32>
    %255 = vector.extract_strided_slice %237 {offsets = [0, 216, 0], sizes = [2, 24, 16], strides = [1, 1, 1]} : vector<2x384x16xf32> to vector<2x24x16xf32>
    %256 = arith.addf %254, %255 : vector<2x24x16xf32>
    %257 = vector.extract_strided_slice %237 {offsets = [0, 240, 0], sizes = [2, 24, 16], strides = [1, 1, 1]} : vector<2x384x16xf32> to vector<2x24x16xf32>
    %258 = arith.addf %256, %257 : vector<2x24x16xf32>
    %259 = vector.extract_strided_slice %237 {offsets = [0, 264, 0], sizes = [2, 24, 16], strides = [1, 1, 1]} : vector<2x384x16xf32> to vector<2x24x16xf32>
    %260 = arith.addf %258, %259 : vector<2x24x16xf32>
    %261 = vector.extract_strided_slice %237 {offsets = [0, 288, 0], sizes = [2, 24, 16], strides = [1, 1, 1]} : vector<2x384x16xf32> to vector<2x24x16xf32>
    %262 = arith.addf %260, %261 : vector<2x24x16xf32>
    %263 = vector.extract_strided_slice %237 {offsets = [0, 312, 0], sizes = [2, 24, 16], strides = [1, 1, 1]} : vector<2x384x16xf32> to vector<2x24x16xf32>
    %264 = arith.addf %262, %263 : vector<2x24x16xf32>
    %265 = vector.extract_strided_slice %237 {offsets = [0, 336, 0], sizes = [2, 24, 16], strides = [1, 1, 1]} : vector<2x384x16xf32> to vector<2x24x16xf32>
    %266 = arith.addf %264, %265 : vector<2x24x16xf32>
    %267 = vector.extract_strided_slice %237 {offsets = [0, 360, 0], sizes = [2, 24, 16], strides = [1, 1, 1]} : vector<2x384x16xf32> to vector<2x24x16xf32>
    %268 = arith.addf %266, %267 : vector<2x24x16xf32>
    %cst_122 = arith.constant 6.250000e-02 : f32
    %269 = vector.broadcast %cst_122 : f32 to vector<2x24x16xf32>
    %270 = arith.mulf %268, %269 : vector<2x24x16xf32>
    %271 = arith.negf %236 : vector<2x16x16xf32>
    %272 = math.exp %271 : vector<2x16x16xf32>
    %cst_123 = arith.constant 1.000000e+00 : f32
    %273 = vector.broadcast %cst_123 : f32 to vector<2x16x16xf32>
    %274 = arith.addf %273, %272 : vector<2x16x16xf32>
    %275 = arith.divf %273, %274 : vector<2x16x16xf32>
    %276 = math.tanh %236 : vector<2x16x16xf32>
    %277 = arith.mulf %275, %276 : vector<2x16x16xf32>
    %278 = arith.negf %270 : vector<2x24x16xf32>
    %279 = math.exp %278 : vector<2x24x16xf32>
    %cst_124 = arith.constant 1.000000e+00 : f32
    %280 = vector.broadcast %cst_124 : f32 to vector<2x24x16xf32>
    %281 = arith.addf %280, %279 : vector<2x24x16xf32>
    %282 = arith.divf %280, %281 : vector<2x24x16xf32>
    %283 = math.tanh %270 : vector<2x24x16xf32>
    %284 = arith.mulf %282, %283 : vector<2x24x16xf32>
    %cst_125 = arith.constant 5.000000e-01 : f32
    %285 = vector.broadcast %cst_125 : f32 to vector<2x16x16xf32>
    %286 = arith.mulf %100, %285 : vector<2x16x16xf32>
    %287 = arith.mulf %100, %277 : vector<2x16x16xf32>
    %288 = arith.addf %286, %287 : vector<2x16x16xf32>
    %cst_126 = arith.constant 5.000000e-01 : f32
    %289 = vector.broadcast %cst_126 : f32 to vector<2x24x16xf32>
    %290 = arith.mulf %197, %289 : vector<2x24x16xf32>
    %291 = arith.mulf %197, %284 : vector<2x24x16xf32>
    %292 = arith.addf %290, %291 : vector<2x24x16xf32>
    %cst_127 = arith.constant dense<0xFF800000> : vector<2x16xf32>
    %293 = vector.multi_reduction <maximumf>, %288, %cst_127 [1] : vector<2x16x16xf32> to vector<2x16xf32>
    %cst_128 = arith.constant dense<0xFF800000> : vector<2x16xf32>
    %294 = vector.multi_reduction <maximumf>, %292, %cst_128 [1] : vector<2x24x16xf32> to vector<2x16xf32>
    %295 = tpu.concatenate %293, %294 in 1 : vector<2x16xf32>, vector<2x16xf32> -> vector<2x32xf32>
    %c0_i32_129 = arith.constant 0 : i32
    %296 = tpu.memref_slice %arg40[%c0_i32_129] : memref<3x!tpu.dma_semaphore, #tpu.memory_space<semaphore_mem>> -> memref<1x!tpu.dma_semaphore, #tpu.memory_space<semaphore_mem>>
    %297 = tpu.memref_squeeze %296 : memref<1x!tpu.dma_semaphore, #tpu.memory_space<semaphore_mem>> -> memref<!tpu.dma_semaphore, #tpu.memory_space<semaphore_mem>>
    tpu.wait_dma2 semaphore(%297 : memref<!tpu.dma_semaphore, #tpu.memory_space<semaphore_mem>>) src(%arg31 : memref<32x1024xbf16, #tpu.memory_space<any>>) dst(%arg37 : memref<32x1024xbf16, #tpu.memory_space<vmem>>)
    %c1_i32_130 = arith.constant 1 : i32
    %298 = tpu.memref_slice %arg40[%c1_i32_130] : memref<3x!tpu.dma_semaphore, #tpu.memory_space<semaphore_mem>> -> memref<1x!tpu.dma_semaphore, #tpu.memory_space<semaphore_mem>>
    %299 = tpu.memref_squeeze %298 : memref<1x!tpu.dma_semaphore, #tpu.memory_space<semaphore_mem>> -> memref<!tpu.dma_semaphore, #tpu.memory_space<semaphore_mem>>
    tpu.wait_dma2 semaphore(%299 : memref<!tpu.dma_semaphore, #tpu.memory_space<semaphore_mem>>) src(%arg32 : memref<1024x512xbf16, #tpu.memory_space<any>>) dst(%arg38 : memref<1024x512xbf16, #tpu.memory_space<vmem>>)
    %c2_i32_131 = arith.constant 2 : i32
    %300 = tpu.memref_slice %arg40[%c2_i32_131] : memref<3x!tpu.dma_semaphore, #tpu.memory_space<semaphore_mem>> -> memref<1x!tpu.dma_semaphore, #tpu.memory_space<semaphore_mem>>
    %301 = tpu.memref_squeeze %300 : memref<1x!tpu.dma_semaphore, #tpu.memory_space<semaphore_mem>> -> memref<!tpu.dma_semaphore, #tpu.memory_space<semaphore_mem>>
    tpu.wait_dma2 semaphore(%301 : memref<!tpu.dma_semaphore, #tpu.memory_space<semaphore_mem>>) src(%arg33 : memref<512x256xbf16, #tpu.memory_space<any>>) dst(%arg39 : memref<512x256xbf16, #tpu.memory_space<vmem>>)
    %302 = arith.truncf %295 : vector<2x32xf32> to vector<2x32xbf16>
    %c0_132 = arith.constant 0 : index
    %c0_133 = arith.constant 0 : index
    %303 = vector.load %arg37[%c0_132, %c0_133] : memref<32x1024xbf16, #tpu.memory_space<vmem>>, vector<32x1024xbf16>
    %cst_134 = arith.constant dense<0.000000e+00> : vector<2x1024xf32>
    %304 = tpu.matmul %302, %303, %cst_134 {dimension_numbers = #tpu.dot_dimension_numbers<[1], [0], [0], [1], [0, 0, 1, 1], [], []>} : vector<2x32xbf16>, vector<32x1024xbf16>, vector<2x1024xf32> -> vector<2x1024xf32>
    %c0_135 = arith.constant 0 : index
    %c0_136 = arith.constant 0 : index
    %305 = vector.load %arg26[%c0_135, %c0_136] : memref<1x1024xf32, #tpu.memory_space<vmem>>, vector<1x1024xf32>
    %306 = vector.broadcast %305 : vector<1x1024xf32> to vector<2x1024xf32>
    %307 = arith.addf %304, %306 : vector<2x1024xf32>
    %cst_137 = arith.constant 5.000000e-01 : f32
    %308 = vector.broadcast %cst_137 : f32 to vector<2x1024xf32>
    %309 = arith.mulf %308, %307 : vector<2x1024xf32>
    %cst_138 = arith.constant 0.707106769 : f32
    %310 = vector.broadcast %cst_138 : f32 to vector<2x1024xf32>
    %311 = arith.mulf %307, %310 : vector<2x1024xf32>
    %312 = math.erf %311 : vector<2x1024xf32>
    %cst_139 = arith.constant 1.000000e+00 : f32
    %313 = vector.broadcast %cst_139 : f32 to vector<2x1024xf32>
    %314 = arith.addf %313, %312 : vector<2x1024xf32>
    %315 = arith.mulf %309, %314 : vector<2x1024xf32>
    %316 = arith.truncf %315 : vector<2x1024xf32> to vector<2x1024xbf16>
    %c0_140 = arith.constant 0 : index
    %c0_141 = arith.constant 0 : index
    %317 = vector.load %arg38[%c0_140, %c0_141] : memref<1024x512xbf16, #tpu.memory_space<vmem>>, vector<1024x512xbf16>
    %cst_142 = arith.constant dense<0.000000e+00> : vector<2x512xf32>
    %318 = tpu.matmul %316, %317, %cst_142 {dimension_numbers = #tpu.dot_dimension_numbers<[1], [0], [0], [1], [0, 0, 1, 1], [], []>} : vector<2x1024xbf16>, vector<1024x512xbf16>, vector<2x512xf32> -> vector<2x512xf32>
    %c0_143 = arith.constant 0 : index
    %c0_144 = arith.constant 0 : index
    %319 = vector.load %arg27[%c0_143, %c0_144] : memref<1x512xf32, #tpu.memory_space<vmem>>, vector<1x512xf32>
    %320 = vector.broadcast %319 : vector<1x512xf32> to vector<2x512xf32>
    %321 = arith.addf %318, %320 : vector<2x512xf32>
    %cst_145 = arith.constant 5.000000e-01 : f32
    %322 = vector.broadcast %cst_145 : f32 to vector<2x512xf32>
    %323 = arith.mulf %322, %321 : vector<2x512xf32>
    %cst_146 = arith.constant 0.707106769 : f32
    %324 = vector.broadcast %cst_146 : f32 to vector<2x512xf32>
    %325 = arith.mulf %321, %324 : vector<2x512xf32>
    %326 = math.erf %325 : vector<2x512xf32>
    %cst_147 = arith.constant 1.000000e+00 : f32
    %327 = vector.broadcast %cst_147 : f32 to vector<2x512xf32>
    %328 = arith.addf %327, %326 : vector<2x512xf32>
    %329 = arith.mulf %323, %328 : vector<2x512xf32>
    %330 = arith.truncf %329 : vector<2x512xf32> to vector<2x512xbf16>
    %c0_148 = arith.constant 0 : index
    %c0_149 = arith.constant 0 : index
    %331 = vector.load %arg39[%c0_148, %c0_149] : memref<512x256xbf16, #tpu.memory_space<vmem>>, vector<512x256xbf16>
    %cst_150 = arith.constant dense<0.000000e+00> : vector<2x256xf32>
    %332 = tpu.matmul %330, %331, %cst_150 {dimension_numbers = #tpu.dot_dimension_numbers<[1], [0], [0], [1], [0, 0, 1, 1], [], []>} : vector<2x512xbf16>, vector<512x256xbf16>, vector<2x256xf32> -> vector<2x256xf32>
    %c0_151 = arith.constant 0 : index
    %c0_152 = arith.constant 0 : index
    %333 = vector.load %arg28[%c0_151, %c0_152] : memref<1x256xf32, #tpu.memory_space<vmem>>, vector<1x256xf32>
    %334 = vector.broadcast %333 : vector<1x256xf32> to vector<2x256xf32>
    %335 = arith.addf %332, %334 : vector<2x256xf32>
    %cst_153 = arith.constant 5.000000e-01 : f32
    %336 = vector.broadcast %cst_153 : f32 to vector<2x256xf32>
    %337 = arith.mulf %336, %335 : vector<2x256xf32>
    %cst_154 = arith.constant 0.707106769 : f32
    %338 = vector.broadcast %cst_154 : f32 to vector<2x256xf32>
    %339 = arith.mulf %335, %338 : vector<2x256xf32>
    %340 = math.erf %339 : vector<2x256xf32>
    %cst_155 = arith.constant 1.000000e+00 : f32
    %341 = vector.broadcast %cst_155 : f32 to vector<2x256xf32>
    %342 = arith.addf %341, %340 : vector<2x256xf32>
    %343 = arith.mulf %337, %342 : vector<2x256xf32>
    %c0_156 = arith.constant 0 : index
    %c0_157 = arith.constant 0 : index
    %344 = vector.load %arg29[%c0_156, %c0_157] : memref<256x1xf32, #tpu.memory_space<vmem>>, vector<256x1xf32>
    %cst_158 = arith.constant dense<0.000000e+00> : vector<2x1xf32>
    %345 = tpu.matmul %343, %344, %cst_158 {dimension_numbers = #tpu.dot_dimension_numbers<[1], [0], [0], [1], [0, 0, 1, 1], [], []>} : vector<2x256xf32>, vector<256x1xf32>, vector<2x1xf32> -> vector<2x1xf32>
    %c0_159 = arith.constant 0 : index
    %c0_160 = arith.constant 0 : index
    %346 = vector.load %arg30[%c0_159, %c0_160] : memref<1x1xf32, #tpu.memory_space<vmem>>, vector<1x1xf32>
    %347 = vector.broadcast %346 : vector<1x1xf32> to vector<2x1xf32>
    %348 = arith.addf %345, %347 : vector<2x1xf32>
    %c0_161 = arith.constant 0 : index
    %c0_162 = arith.constant 0 : index
    %349 = vector.load %arg34[%c0_161, %c0_162] : memref<2x1xf32, #tpu.memory_space<vmem>>, vector<2x1xf32>
    tpu.vector_store %arg34[%c0_161, %c0_162], %348 {strides = array<i32>} : memref<2x1xf32, #tpu.memory_space<vmem>>, vector<2x1xf32>,
    return
  }
}

</mosaic_0001>

<llo_original>
// kernel: forward.1
$region0: #{forward.1}
  #allocation0 [shape = 'u32[]', space=smem, size = 0x4, offset = 0x4, fixed_abs, tag = 'smem constant byte address 0x4 - core index']
  #allocation1 [shape = 'u32[72,128]{1,0:T(1,128)}', space=vmem, size = 0x9000, scoped, tag = 'internal scratch']
  #allocation2 [shape = 'f32[2,18,8]{2,1,0:T(8,128)}', space=vmem, size = 0x6000, scoped, tag = 'scratch operand']
  #allocation3 [shape = 'f32[2,28,8]{2,1,0:T(8,128)}', space=vmem, size = 0x8000, scoped, tag = 'scratch operand']
  #allocation4 [shape = 'bf16[32,1024]{1,0:T(8,128)(2,1)}', space=vmem, size = 0x10000, scoped, tag = 'scratch operand']
  #allocation5 [shape = 'bf16[1024,512]{1,0:T(8,128)(2,1)}', space=vmem, size = 0x100000, scoped, tag = 'scratch operand']
  #allocation6 [shape = 'bf16[512,256]{1,0:T(8,128)(2,1)}', space=vmem, size = 0x40000, scoped, tag = 'scratch operand']
  #allocation7 [shape = 's32[3]{0}', space=sflag, size = 0xc, scoped, tag = 'scratch operand']
  #allocation8 [shape = 'f32[1,1]{1,0:T(1,128)S(1)}', space=vmem, size = 0x200, scoped, tag = 'scoped memory for forward.1']
  #allocation9 [shape = 's32[]', space=sflag, size = 0x4, offset = 0, fixed_abs, tag = 'sflag constant byte address 0x0 - dummy sync flag']
  #allocation10 [shape = 's32[]', space=sflag, size = 0x4, offset = 0, fixed_abs, tag = 'sflag constant byte address 0x0 - dummy sync flag']
  #allocation11 [shape = 's32[]', space=sflag, size = 0x4, offset = 0, fixed_abs, tag = 'sflag constant byte address 0x0 - dummy sync flag']
  #allocation12 [shape = 'u32[]', space=smem, size = 0x4, offset = 0x44, fixed_abs, tag = 'smem constant byte address 0x44 - assertion arg 0']
  #allocation13 [shape = 'u32[]', space=smem, size = 0x4, offset = 0x48, fixed_abs, tag = 'smem constant byte address 0x48 - assertion arg 1']
  #allocation14 [shape = 's32[]', space=sflag, size = 0x4, offset = 0, fixed_abs, tag = 'sflag constant byte address 0x0 - dummy sync flag']
  %s0 = inlined_call_operand.smem [shape: u32[35], index: -1, kind: input, shape index: {}]
  %s1 = sld [smem:[%s0]]
  %s2 = scalar_lea.smem %s0, 1
  %s3 = sld [smem:[%s2]]
  %s4 = scalar_lea.smem %s0, 2
  %s5 = sld [smem:[%s4]]
  %s6 = scalar_lea.smem %s0, 3
  %s7 = sld [smem:[%s6]]
  %s8 = scalar_lea.smem %s0, 4
  %s9 = sld [smem:[%s8]]
  %s10 = scalar_lea.smem %s0, 5
  %s11 = sld [smem:[%s10]]
  %s12 = scalar_lea.smem %s0, 6
  %s13 = sld [smem:[%s12]]
  %s14 = scalar_lea.smem %s0, 7
  %s15 = sld [smem:[%s14]]
  %s16 = scalar_lea.smem %s0, 8
  %s17 = sld [smem:[%s16]]
  %s18 = scalar_lea.smem %s0, 9
  %s19 = sld [smem:[%s18]]
  %s20 = scalar_lea.smem %s0, 10
  %s21 = sld [smem:[%s20]]
  %s22 = scalar_lea.smem %s0, 11
  %s23 = sld [smem:[%s22]]
  %s24 = scalar_lea.smem %s0, 12
  %s25 = sld [smem:[%s24]]
  %s26 = scalar_lea.smem %s0, 13
  %s27 = sld [smem:[%s26]]
  %s28 = scalar_lea.smem %s0, 14
  %s29 = sld [smem:[%s28]]
  %s30 = scalar_lea.smem %s0, 15
  %s31 = sld [smem:[%s30]]
  %s32 = scalar_lea.smem %s0, 16
  %s33 = sld [smem:[%s32]]
  %s34 = scalar_lea.smem %s0, 17
  %s35 = sld [smem:[%s34]]
  %s36 = scalar_lea.smem %s0, 18
  %s37 = sld [smem:[%s36]]
  %s38 = scalar_lea.smem %s0, 19
  %s39 = sld [smem:[%s38]]
  %s40 = scalar_lea.smem %s0, 20
  %s41 = sld [smem:[%s40]]
  %s42 = scalar_lea.smem %s0, 21
  %s43 = sld [smem:[%s42]]
  %s44 = scalar_lea.smem %s0, 22
  %s45 = sld [smem:[%s44]]
  %s46 = scalar_lea.smem %s0, 23
  %s47 = sld [smem:[%s46]]
  %s48 = scalar_lea.smem %s0, 24
  %s49 = sld [smem:[%s48]]
  %s50 = scalar_lea.smem %s0, 25
  %s51 = sld [smem:[%s50]]
  %s52 = scalar_lea.smem %s0, 26
  %s53 = sld [smem:[%s52]]
  %s54 = scalar_lea.smem %s0, 27
  %s55 = sld [smem:[%s54]]
  %s56 = scalar_lea.smem %s0, 28
  %s57 = sld [smem:[%s56]]
  %s58 = scalar_lea.smem %s0, 29
  %s59 = sld [smem:[%s58]]
  %s60 = scalar_lea.smem %s0, 30
  %s61 = sld [smem:[%s60]]
  %s62 = scalar_lea.smem %s0, 31
  %s63 = sld [smem:[%s62]]
  %s64 = scalar_lea.smem %s0, 32
  %s65 = sld [smem:[%s64]]
  %s66 = scalar_lea.smem %s0, 33
  %s67 = sld [smem:[%s66]]
  %s68 = scalar_lea.smem %s0, 34
  %s69 = sld [smem:[%s68]]
  %s70 = sld [smem:[#allocation0]]
  $region176: #{forward.1} parent=0
    _
  %s72 = ssub.s32 1, %s70
  %s73 = scalar_select 0, %s72, %s70
  %v74 = vstv %s61
  %75 = vst [vmem:[#allocation8] sm:$0x1] %v74
  // Predicated region
  $region2: #{forward.1} parent=0 // pred_check
    _
  $region3: #{forward.1} parent=0 // pred_check_branch
    %77 = sbr.rel (0) target = $region5
  $region4: #{forward.1} parent=0 // pred_region
    _
  $region5: #{forward.1} parent=0 // pred_fallthru
    _
  // Predicated region
  $region6: #{forward.1} parent=0 // pred_check
    _
  $region7: #{forward.1} parent=0 // pred_check_branch
    %79 = sbr.rel (0) target = $region9
  $region8: #{forward.1} parent=0 // pred_region
    _
  $region9: #{forward.1} parent=0 // pred_fallthru
    _
  // Predicated region
  $region10: #{forward.1} parent=0 // pred_check
    _
  $region11: #{forward.1} parent=0 // pred_check_branch
    %81 = sbr.rel (0) target = $region13
  $region12: #{forward.1} parent=0 // pred_region
    _
  $region13: #{forward.1} parent=0 // pred_fallthru
    _
  // Predicated region
  $region14: #{forward.1} parent=0 // pred_check
    _
  $region15: #{forward.1} parent=0 // pred_check_branch
    %83 = sbr.rel (0) target = $region17
  $region16: #{forward.1} parent=0 // pred_region
    _
  $region17: #{forward.1} parent=0 // pred_fallthru
    _
  // Predicated region
  $region18: #{forward.1} parent=0 // pred_check
    _
  $region19: #{forward.1} parent=0 // pred_check_branch
    %85 = sbr.rel (0) target = $region21
  $region20: #{forward.1} parent=0 // pred_region
    _
  $region21: #{forward.1} parent=0 // pred_fallthru
    _
  // Predicated region
  $region22: #{forward.1} parent=0 // pred_check
    _
  $region23: #{forward.1} parent=0 // pred_check_branch
    %87 = sbr.rel (0) target = $region25
  $region24: #{forward.1} parent=0 // pred_region
    _
  $region25: #{forward.1} parent=0 // pred_fallthru
    _
  // Predicated region
  $region26: #{forward.1} parent=0 // pred_check
    _
  $region27: #{forward.1} parent=0 // pred_check_branch
    %89 = sbr.rel (0) target = $region29
  $region28: #{forward.1} parent=0 // pred_region
    _
  $region29: #{forward.1} parent=0 // pred_fallthru
    _
  // Predicated region
  $region30: #{forward.1} parent=0 // pred_check
    _
  $region31: #{forward.1} parent=0 // pred_check_branch
    %91 = sbr.rel (0) target = $region33
  $region32: #{forward.1} parent=0 // pred_region
    _
  $region33: #{forward.1} parent=0 // pred_fallthru
    _
  // Predicated region
  $region34: #{forward.1} parent=0 // pred_check
    _
  $region35: #{forward.1} parent=0 // pred_check_branch
    %93 = sbr.rel (0) target = $region37
  $region36: #{forward.1} parent=0 // pred_region
    _
  $region37: #{forward.1} parent=0 // pred_fallthru
    _
  // Predicated region
  $region38: #{forward.1} parent=0 // pred_check
    _
  $region39: #{forward.1} parent=0 // pred_check_branch
    %95 = sbr.rel (0) target = $region41
  $region40: #{forward.1} parent=0 // pred_region
    _
  $region41: #{forward.1} parent=0 // pred_fallthru
    _
  // Predicated region
  $region42: #{forward.1} parent=0 // pred_check
    _
  $region43: #{forward.1} parent=0 // pred_check_branch
    %97 = sbr.rel (0) target = $region45
  $region44: #{forward.1} parent=0 // pred_region
    _
  $region45: #{forward.1} parent=0 // pred_fallthru
    _
  // Predicated region
  $region46: #{forward.1} parent=0 // pred_check
    _
  $region47: #{forward.1} parent=0 // pred_check_branch
    %99 = sbr.rel (0) target = $region49
  $region48: #{forward.1} parent=0 // pred_region
    _
  $region49: #{forward.1} parent=0 // pred_fallthru
    _
  // Predicated region
  $region50: #{forward.1} parent=0 // pred_check
    _
  $region51: #{forward.1} parent=0 // pred_check_branch
    %101 = sbr.rel (0) target = $region53
  $region52: #{forward.1} parent=0 // pred_region
    _
  $region53: #{forward.1} parent=0 // pred_fallthru
    _
  // Predicated region
  $region54: #{forward.1} parent=0 // pred_check
    _
  $region55: #{forward.1} parent=0 // pred_check_branch
    %103 = sbr.rel (0) target = $region57
  $region56: #{forward.1} parent=0 // pred_region
    _
  $region57: #{forward.1} parent=0 // pred_fallthru
    _
  // Predicated region
  $region58: #{forward.1} parent=0 // pred_check
    _
  $region59: #{forward.1} parent=0 // pred_check_branch
    %105 = sbr.rel (0) target = $region61
  $region60: #{forward.1} parent=0 // pred_region
    _
  $region61: #{forward.1} parent=0 // pred_fallthru
    _
  // Predicated region
  $region62: #{forward.1} parent=0 // pred_check
    _
  $region63: #{forward.1} parent=0 // pred_check_branch
    %107 = sbr.rel (0) target = $region65
  $region64: #{forward.1} parent=0 // pred_region
    _
  $region65: #{forward.1} parent=0 // pred_fallthru
    _
  // Predicated region
  $region66: #{forward.1} parent=0 // pred_check
    _
  $region67: #{forward.1} parent=0 // pred_check_branch
    %109 = sbr.rel (0) target = $region69
  $region68: #{forward.1} parent=0 // pred_region
    _
  $region69: #{forward.1} parent=0 // pred_fallthru
    _
  // Predicated region
  $region70: #{forward.1} parent=0 // pred_check
    _
  $region71: #{forward.1} parent=0 // pred_check_branch
    %111 = sbr.rel (0) target = $region73
  $region72: #{forward.1} parent=0 // pred_region
    _
  $region73: #{forward.1} parent=0 // pred_fallthru
    _
  // Predicated region
  $region74: #{forward.1} parent=0 // pred_check
    _
  $region75: #{forward.1} parent=0 // pred_check_branch
    %113 = sbr.rel (0) target = $region77
  $region76: #{forward.1} parent=0 // pred_region
    _
  $region77: #{forward.1} parent=0 // pred_fallthru
    _
  // Predicated region
  $region78: #{forward.1} parent=0 // pred_check
    _
  $region79: #{forward.1} parent=0 // pred_check_branch
    %115 = sbr.rel (0) target = $region81
  $region80: #{forward.1} parent=0 // pred_region
    _
  $region81: #{forward.1} parent=0 // pred_fallthru
    _
  // Predicated region
  $region82: #{forward.1} parent=0 // pred_check
    _
  $region83: #{forward.1} parent=0 // pred_check_branch
    %117 = sbr.rel (0) target = $region85
  $region84: #{forward.1} parent=0 // pred_region
    _
  $region85: #{forward.1} parent=0 // pred_fallthru
    _
  // Predicated region
  $region86: #{forward.1} parent=0 // pred_check
    _
  $region87: #{forward.1} parent=0 // pred_check_branch
    %119 = sbr.rel (0) target = $region89
  $region88: #{forward.1} parent=0 // pred_region
    _
  $region89: #{forward.1} parent=0 // pred_fallthru
    _
  // Predicated region
  $region90: #{forward.1} parent=0 // pred_check
    _
  $region91: #{forward.1} parent=0 // pred_check_branch
    %121 = sbr.rel (0) target = $region93
  $region92: #{forward.1} parent=0 // pred_region
    _
  $region93: #{forward.1} parent=0 // pred_fallthru
    _
  // Predicated region
  $region94: #{forward.1} parent=0 // pred_check
    _
  $region95: #{forward.1} parent=0 // pred_check_branch
    %123 = sbr.rel (0) target = $region97
  $region96: #{forward.1} parent=0 // pred_region
    _
  $region97: #{forward.1} parent=0 // pred_fallthru
    _
  // Predicated region
  $region98: #{forward.1} parent=0 // pred_check
    _
  $region99: #{forward.1} parent=0 // pred_check_branch
    %125 = sbr.rel (0) target = $region101
  $region100: #{forward.1} parent=0 // pred_region
    _
  $region101: #{forward.1} parent=0 // pred_fallthru
    _
  // Predicated region
  $region102: #{forward.1} parent=0 // pred_check
    _
  $region103: #{forward.1} parent=0 // pred_check_branch
    %127 = sbr.rel (0) target = $region105
  $region104: #{forward.1} parent=0 // pred_region
    _
  $region105: #{forward.1} parent=0 // pred_fallthru
    _
  // Predicated region
  $region106: #{forward.1} parent=0 // pred_check
    _
  $region107: #{forward.1} parent=0 // pred_check_branch
    %129 = sbr.rel (0) target = $region109
  $region108: #{forward.1} parent=0 // pred_region
    _
  $region109: #{forward.1} parent=0 // pred_fallthru
    _
  // Predicated region
  $region110: #{forward.1} parent=0 // pred_check
    _
  $region111: #{forward.1} parent=0 // pred_check_branch
    %131 = sbr.rel (0) target = $region113
  $region112: #{forward.1} parent=0 // pred_region
    _
  $region113: #{forward.1} parent=0 // pred_fallthru
    _
  // Predicated region
  $region114: #{forward.1} parent=0 // pred_check
    _
  $region115: #{forward.1} parent=0 // pred_check_branch
    %133 = sbr.rel (0) target = $region117
  $region116: #{forward.1} parent=0 // pred_region
    _
  $region117: #{forward.1} parent=0 // pred_fallthru
    _
  // Predicated region
  $region118: #{forward.1} parent=0 // pred_check
    _
  $region119: #{forward.1} parent=0 // pred_check_branch
    %135 = sbr.rel (0) target = $region121
  $region120: #{forward.1} parent=0 // pred_region
    _
  $region121: #{forward.1} parent=0 // pred_fallthru
    _
  // Predicated region
  $region122: #{forward.1} parent=0 // pred_check
    _
  $region123: #{forward.1} parent=0 // pred_check_branch
    %137 = sbr.rel (0) target = $region125
  $region124: #{forward.1} parent=0 // pred_region
    _
  $region125: #{forward.1} parent=0 // pred_fallthru
    _
  // Predicated region
  $region126: #{forward.1} parent=0 // pred_check
    _
  $region127: #{forward.1} parent=0 // pred_check_branch
    %140 = sbr.rel (0) target = $region129
  $region128: #{forward.1} parent=0 // pred_region
    loop: start=0, step=1, limit=1
    $region130: #{forward.1} parent=128 // loop_pre_header
      _
    $region131: #{forward.1} parent=128 // loop_header
      %s142 = sphi 0, %s146
      %p143 = scmp.ge.s32.totalorder %s142, 1
      %s147 = sphi %s63, %s63
      %s148 = sphi [#allocation4], [#allocation4]
    $region132: #{forward.1} parent=128 // loop_header_branch
      %145 = sbr.rel (%p143) target = $region136
    $region133: #{forward.1} parent=128 // loop_body
      %v149 = vld [vmem:[%s147] sm:$0xff]
      %150 = vst [vmem:[%s148] sm:$0xff] %v149
      %v151 = vld [vmem:[%s147 + $0x8] sm:$0xff]
      %152 = vst [vmem:[%s148 + $0x8] sm:$0xff] %v151
      %v153 = vld [vmem:[%s147 + $0x10] sm:$0xff]
      %154 = vst [vmem:[%s148 + $0x10] sm:$0xff] %v153
      %v155 = vld [vmem:[%s147 + $0x18] sm:$0xff]
      %156 = vst [vmem:[%s148 + $0x18] sm:$0xff] %v155
      %v157 = vld [vmem:[%s147 + $0x20] sm:$0xff]
      %158 = vst [vmem:[%s148 + $0x20] sm:$0xff] %v157
      %v159 = vld [vmem:[%s147 + $0x28] sm:$0xff]
      %160 = vst [vmem:[%s148 + $0x28] sm:$0xff] %v159
      %v161 = vld [vmem:[%s147 + $0x30] sm:$0xff]
      %162 = vst [vmem:[%s148 + $0x30] sm:$0xff] %v161
      %v163 = vld [vmem:[%s147 + $0x38] sm:$0xff]
      %164 = vst [vmem:[%s148 + $0x38] sm:$0xff] %v163
      %v165 = vld [vmem:[%s147 + $0x40] sm:$0xff]
      %166 = vst [vmem:[%s148 + $0x40] sm:$0xff] %v165
      %v167 = vld [vmem:[%s147 + $0x48] sm:$0xff]
      %168 = vst [vmem:[%s148 + $0x48] sm:$0xff] %v167
      %v169 = vld [vmem:[%s147 + $0x50] sm:$0xff]
      %170 = vst [vmem:[%s148 + $0x50] sm:$0xff] %v169
      %v171 = vld [vmem:[%s147 + $0x58] sm:$0xff]
      %172 = vst [vmem:[%s148 + $0x58] sm:$0xff] %v171
      %v173 = vld [vmem:[%s147 + $0x60] sm:$0xff]
      %174 = vst [vmem:[%s148 + $0x60] sm:$0xff] %v173
      %v175 = vld [vmem:[%s147 + $0x68] sm:$0xff]
      %176 = vst [vmem:[%s148 + $0x68] sm:$0xff] %v175
      %v177 = vld [vmem:[%s147 + $0x70] sm:$0xff]
      %178 = vst [vmem:[%s148 + $0x70] sm:$0xff] %v177
      %v179 = vld [vmem:[%s147 + $0x78] sm:$0xff]
      %180 = vst [vmem:[%s148 + $0x78] sm:$0xff] %v179
    $region134: #{forward.1} parent=128 // loop_footer
      %s146 = sadd.s32 1, %s142
    $region135: #{forward.1} parent=128 // loop_footer_branch
      %141 = sbr.rel target = $region131
    $region136: #{forward.1} parent=128 // loop_exit
      _
  $region129: #{forward.1} parent=0 // pred_fallthru
    _
  // Predicated region
  $region137: #{forward.1} parent=0 // pred_check
    _
  $region138: #{forward.1} parent=0 // pred_check_branch
    %182 = sbr.rel target = $region140
  $region139: #{forward.1} parent=0 // pred_region
    _
  $region140: #{forward.1} parent=0 // pred_fallthru
    _
  // Predicated region
  $region141: #{forward.1} parent=0 // pred_check
    _
  $region142: #{forward.1} parent=0 // pred_check_branch
    %185 = sbr.rel (0) target = $region144
  $region143: #{forward.1} parent=0 // pred_region
    %186 = vsyncadd [#allocation7], 2048
  $region144: #{forward.1} parent=0 // pred_fallthru
    _
  %s187 = scalar_lea.sflag [#allocation7], 1
  // Predicated region
  $region145: #{forward.1} parent=0 // pred_check
    _
  $region146: #{forward.1} parent=0 // pred_check_branch
    %189 = sbr.rel target = $region148
  $region147: #{forward.1} parent=0 // pred_region
    %190 = sst [smem:[#allocation12]] [#allocation11]
    %191 = sst [smem:[#allocation13]] [#allocation10]
  $region148: #{forward.1} parent=0 // pred_fallthru
    _
  %193 = shalt.err (0)
  %s195 = sshll.u32 %s65, 4
  %s196 = int_to_ptr.hbm [resolvable:$true] %s195
  %s197 = sshll.u32 [#allocation5], 4
  %s198 = int_to_ptr.vmem [resolvable:$true] %s197
  %200 = dma.hbm_to_vmem [thread:$0]  %s196, 32768, %s198, %s187
  %s201 = scalar_lea.sflag [#allocation7], 2
  // Predicated region
  $region149: #{forward.1} parent=0 // pred_check
    _
  $region150: #{forward.1} parent=0 // pred_check_branch
    %203 = sbr.rel (0) target = $region152
  $region151: #{forward.1} parent=0 // pred_region
    loop: start=0, step=1, limit=1
    $region153: #{forward.1} parent=151 // loop_pre_header
      _
    $region154: #{forward.1} parent=151 // loop_header
      %s205 = sphi 0, %s209
      %p206 = scmp.ge.s32.totalorder %s205, 1
      %s210 = sphi %s67, %s67
      %s211 = sphi [#allocation6], [#allocation6]
    $region155: #{forward.1} parent=151 // loop_header_branch
      %208 = sbr.rel (%p206) target = $region159
    $region156: #{forward.1} parent=151 // loop_body
      %v212 = vld [vmem:[%s210] sm:$0xff]
      %213 = vst [vmem:[%s211] sm:$0xff] %v212
      %v214 = vld [vmem:[%s210 + $0x8] sm:$0xff]
      %215 = vst [vmem:[%s211 + $0x8] sm:$0xff] %v214
      %v216 = vld [vmem:[%s210 + $0x10] sm:$0xff]
      %217 = vst [vmem:[%s211 + $0x10] sm:$0xff] %v216
      %v218 = vld [vmem:[%s210 + $0x18] sm:$0xff]
      %219 = vst [vmem:[%s211 + $0x18] sm:$0xff] %v218
      %v220 = vld [vmem:[%s210 + $0x20] sm:$0xff]
      %221 = vst [vmem:[%s211 + $0x20] sm:$0xff] %v220
      %v222 = vld [vmem:[%s210 + $0x28] sm:$0xff]
      %223 = vst [vmem:[%s211 + $0x28] sm:$0xff] %v222
      %v224 = vld [vmem:[%s210 + $0x30] sm:$0xff]
      %225 = vst [vmem:[%s211 + $0x30] sm:$0xff] %v224
      %v226 = vld [vmem:[%s210 + $0x38] sm:$0xff]
      %227 = vst [vmem:[%s211 + $0x38] sm:$0xff] %v226
      %v228 = vld [vmem:[%s210 + $0x40] sm:$0xff]
      %229 = vst [vmem:[%s211 + $0x40] sm:$0xff] %v228
      %v230 = vld [vmem:[%s210 + $0x48] sm:$0xff]
      %231 = vst [vmem:[%s211 + $0x48] sm:$0xff] %v230
      %v232 = vld [vmem:[%s210 + $0x50] sm:$0xff]
      %233 = vst [vmem:[%s211 + $0x50] sm:$0xff] %v232
      %v234 = vld [vmem:[%s210 + $0x58] sm:$0xff]
      %235 = vst [vmem:[%s211 + $0x58] sm:$0xff] %v234
      %v236 = vld [vmem:[%s210 + $0x60] sm:$0xff]
      %237 = vst [vmem:[%s211 + $0x60] sm:$0xff] %v236
      %v238 = vld [vmem:[%s210 + $0x68] sm:$0xff]
      %239 = vst [vmem:[%s211 + $0x68] sm:$0xff] %v238
      %v240 = vld [vmem:[%s210 + $0x70] sm:$0xff]
      %241 = vst [vmem:[%s211 + $0x70] sm:$0xff] %v240
      %v242 = vld [vmem:[%s210 + $0x78] sm:$0xff]
      %243 = vst [vmem:[%s211 + $0x78] sm:$0xff] %v242
      %v244 = vld [vmem:[%s210 + $0x80] sm:$0xff]
      %245 = vst [vmem:[%s211 + $0x80] sm:$0xff] %v244
      %v246 = vld [vmem:[%s210 + $0x88] sm:$0xff]
      %247 = vst [vmem:[%s211 + $0x88] sm:$0xff] %v246
      %v248 = vld [vmem:[%s210 + $0x90] sm:$0xff]
      %249 = vst [vmem:[%s211 + $0x90] sm:$0xff] %v248
      %v250 = vld [vmem:[%s210 + $0x98] sm:$0xff]
      %251 = vst [vmem:[%s211 + $0x98] sm:$0xff] %v250
      %v252 = vld [vmem:[%s210 + $0xa0] sm:$0xff]
      %253 = vst [vmem:[%s211 + $0xa0] sm:$0xff] %v252
      %v254 = vld [vmem:[%s210 + $0xa8] sm:$0xff]
      %255 = vst [vmem:[%s211 + $0xa8] sm:$0xff] %v254
      %v256 = vld [vmem:[%s210 + $0xb0] sm:$0xff]
      %257 = vst [vmem:[%s211 + $0xb0] sm:$0xff] %v256
      %v258 = vld [vmem:[%s210 + $0xb8] sm:$0xff]
      %259 = vst [vmem:[%s211 + $0xb8] sm:$0xff] %v258
      %v260 = vld [vmem:[%s210 + $0xc0] sm:$0xff]
      %261 = vst [vmem:[%s211 + $0xc0] sm:$0xff] %v260
      %v262 = vld [vmem:[%s210 + $0xc8] sm:$0xff]
      %263 = vst [vmem:[%s211 + $0xc8] sm:$0xff] %v262
      %v264 = vld [vmem:[%s210 + $0xd0] sm:$0xff]
      %265 = vst [vmem:[%s211 + $0xd0] sm:$0xff] %v264
      %v266 = vld [vmem:[%s210 + $0xd8] sm:$0xff]
      %267 = vst [vmem:[%s211 + $0xd8] sm:$0xff] %v266
      %v268 = vld [vmem:[%s210 + $0xe0] sm:$0xff]
      %269 = vst [vmem:[%s211 + $0xe0] sm:$0xff] %v268
      %v270 = vld [vmem:[%s210 + $0xe8] sm:$0xff]
      %271 = vst [vmem:[%s211 + $0xe8] sm:$0xff] %v270
      %v272 = vld [vmem:[%s210 + $0xf0] sm:$0xff]
      %273 = vst [vmem:[%s211 + $0xf0] sm:$0xff] %v272
      %v274 = vld [vmem:[%s210 + $0xf8] sm:$0xff]
      %275 = vst [vmem:[%s211 + $0xf8] sm:$0xff] %v274
      %v276 = vld [vmem:[%s210 + $0x100] sm:$0xff]
      %277 = vst [vmem:[%s211 + $0x100] sm:$0xff] %v276
      %v278 = vld [vmem:[%s210 + $0x108] sm:$0xff]
      %279 = vst [vmem:[%s211 + $0x108] sm:$0xff] %v278
      %v280 = vld [vmem:[%s210 + $0x110] sm:$0xff]
      %281 = vst [vmem:[%s211 + $0x110] sm:$0xff] %v280
      %v282 = vld [vmem:[%s210 + $0x118] sm:$0xff]
      %283 = vst [vmem:[%s211 + $0x118] sm:$0xff] %v282
      %v284 = vld [vmem:[%s210 + $0x120] sm:$0xff]
      %285 = vst [vmem:[%s211 + $0x120] sm:$0xff] %v284
      %v286 = vld [vmem:[%s210 + $0x128] sm:$0xff]
      %287 = vst [vmem:[%s211 + $0x128] sm:$0xff] %v286
      %v288 = vld [vmem:[%s210 + $0x130] sm:$0xff]
      %289 = vst [vmem:[%s211 + $0x130] sm:$0xff] %v288
      %v290 = vld [vmem:[%s210 + $0x138] sm:$0xff]
      %291 = vst [vmem:[%s211 + $0x138] sm:$0xff] %v290
      %v292 = vld [vmem:[%s210 + $0x140] sm:$0xff]
      %293 = vst [vmem:[%s211 + $0x140] sm:$0xff] %v292
      %v294 = vld [vmem:[%s210 + $0x148] sm:$0xff]
      %295 = vst [vmem:[%s211 + $0x148] sm:$0xff] %v294
      %v296 = vld [vmem:[%s210 + $0x150] sm:$0xff]
      %297 = vst [vmem:[%s211 + $0x150] sm:$0xff] %v296
      %v298 = vld [vmem:[%s210 + $0x158] sm:$0xff]
      %299 = vst [vmem:[%s211 + $0x158] sm:$0xff] %v298
      %v300 = vld [vmem:[%s210 + $0x160] sm:$0xff]
      %301 = vst [vmem:[%s211 + $0x160] sm:$0xff] %v300
      %v302 = vld [vmem:[%s210 + $0x168] sm:$0xff]
      %303 = vst [vmem:[%s211 + $0x168] sm:$0xff] %v302
      %v304 = vld [vmem:[%s210 + $0x170] sm:$0xff]
      %305 = vst [vmem:[%s211 + $0x170] sm:$0xff] %v304
      %v306 = vld [vmem:[%s210 + $0x178] sm:$0xff]
      %307 = vst [vmem:[%s211 + $0x178] sm:$0xff] %v306
      %v308 = vld [vmem:[%s210 + $0x180] sm:$0xff]
      %309 = vst [vmem:[%s211 + $0x180] sm:$0xff] %v308
      %v310 = vld [vmem:[%s210 + $0x188] sm:$0xff]
      %311 = vst [vmem:[%s211 + $0x188] sm:$0xff] %v310
      %v312 = vld [vmem:[%s210 + $0x190] sm:$0xff]
      %313 = vst [vmem:[%s211 + $0x190] sm:$0xff] %v312
      %v314 = vld [vmem:[%s210 + $0x198] sm:$0xff]
      %315 = vst [vmem:[%s211 + $0x198] sm:$0xff] %v314
      %v316 = vld [vmem:[%s210 + $0x1a0] sm:$0xff]
      %317 = vst [vmem:[%s211 + $0x1a0] sm:$0xff] %v316
      %v318 = vld [vmem:[%s210 + $0x1a8] sm:$0xff]
      %319 = vst [vmem:[%s211 + $0x1a8] sm:$0xff] %v318
      %v320 = vld [vmem:[%s210 + $0x1b0] sm:$0xff]
      %321 = vst [vmem:[%s211 + $0x1b0] sm:$0xff] %v320
      %v322 = vld [vmem:[%s210 + $0x1b8] sm:$0xff]
      %323 = vst [vmem:[%s211 + $0x1b8] sm:$0xff] %v322
      %v324 = vld [vmem:[%s210 + $0x1c0] sm:$0xff]
      %325 = vst [vmem:[%s211 + $0x1c0] sm:$0xff] %v324
      %v326 = vld [vmem:[%s210 + $0x1c8] sm:$0xff]
      %327 = vst [vmem:[%s211 + $0x1c8] sm:$0xff] %v326
      %v328 = vld [vmem:[%s210 + $0x1d0] sm:$0xff]
      %329 = vst [vmem:[%s211 + $0x1d0] sm:$0xff] %v328
      %v330 = vld [vmem:[%s210 + $0x1d8] sm:$0xff]
      %331 = vst [vmem:[%s211 + $0x1d8] sm:$0xff] %v330
      %v332 = vld [vmem:[%s210 + $0x1e0] sm:$0xff]
      %333 = vst [vmem:[%s211 + $0x1e0] sm:$0xff] %v332
      %v334 = vld [vmem:[%s210 + $0x1e8] sm:$0xff]
      %335 = vst [vmem:[%s211 + $0x1e8] sm:$0xff] %v334
      %v336 = vld [vmem:[%s210 + $0x1f0] sm:$0xff]
      %337 = vst [vmem:[%s211 + $0x1f0] sm:$0xff] %v336
      %v338 = vld [vmem:[%s210 + $0x1f8] sm:$0xff]
      %339 = vst [vmem:[%s211 + $0x1f8] sm:$0xff] %v338
    $region157: #{forward.1} parent=151 // loop_footer
      %s209 = sadd.s32 1, %s205
    $region158: #{forward.1} parent=151 // loop_footer_branch
      %204 = sbr.rel target = $region154
    $region159: #{forward.1} parent=151 // loop_exit
      _
  $region152: #{forward.1} parent=0 // pred_fallthru
    _
  // Predicated region
  $region160: #{forward.1} parent=0 // pred_check
    _
  $region161: #{forward.1} parent=0 // pred_check_branch
    %341 = sbr.rel target = $region163
  $region162: #{forward.1} parent=0 // pred_region
    _
  $region163: #{forward.1} parent=0 // pred_fallthru
    _
  // Predicated region
  $region164: #{forward.1} parent=0 // pred_check
    _
  $region165: #{forward.1} parent=0 // pred_check_branch
    %344 = sbr.rel (0) target = $region167
  $region166: #{forward.1} parent=0 // pred_region
    %345 = vsyncadd %s201, 8192
  $region167: #{forward.1} parent=0 // pred_fallthru
    _
  %v346 = vld [vmem:[%s1] sm:$0xff]
  %v347 = vld [vmem:[%s1 + $0x8] sm:$0xff]
  %v348 = vld [vmem:[%s1 + $0x10] sm:$0xff]
  %v349 = vld [vmem:[%s1 + $0x18] sm:$0xff]
  %v350 = vld [vmem:[%s5] sm:$0xff]
  %v351 = vld [vmem:[%s5 + $0x8] sm:$0xff]
  %v352 = vld [vmem:[%s5 + $0x10] sm:$0xff]
  %v353 = vld [vmem:[%s7] sm:$0x1]
  %v354 = vld [vmem:[%s9] sm:$0x1]
  %v355 = vld [vmem:[%s11] sm:$0x1]
  %v356 = vld [vmem:[%s13] sm:$0xff]
  %v357 = vld [vmem:[%s13 + $0x8] sm:$0xff]
  %v358 = vld [vmem:[%s15] sm:$0x1]
  %v359 = vld [vmem:[%s17] sm:$0xff]
  %v360 = vld [vmem:[%s19] sm:$0x1]
  %vm361 = vcmask 64512
  %362 = vst.msk [vmem:[#allocation2] sm:$0xff] %vm361, 0.0
  %363 = vst.msk [vmem:[#allocation2 + $0x8] sm:$0xff] %vm361, 0.0
  %vm364 = vcmask 58368
  %365 = vst.msk [vmem:[#allocation2 + $0x10] sm:$0x3] %vm364, 0.0
  %366 = vst.msk [vmem:[#allocation2 + $0x18] sm:$0xff] %vm361, 0.0
  %367 = vst.msk [vmem:[#allocation2 + $0x20] sm:$0xff] %vm361, 0.0
  %368 = vst.msk [vmem:[#allocation2 + $0x28] sm:$0x3] %vm364, 0.0
  %369 = vst.msk [vmem:[#allocation2 + $0x1] sm:$0xff] %vm361, %v346
  %370 = vst.msk [vmem:[#allocation2 + $0x9] sm:$0xff] %vm361, %v347
  %371 = vst.msk [vmem:[#allocation2 + $0x19] sm:$0xff] %vm361, %v348
  %372 = vst.msk [vmem:[#allocation2 + $0x21] sm:$0xff] %vm361, %v349
  %v373 = vld [vmem:[#allocation2] sm:$0xff]
  %v374 = vld [vmem:[#allocation2 + $0x8] sm:$0xff]
  %v375 = vld [vmem:[#allocation2 + $0x10] sm:$0x3]
  %v376 = vld [vmem:[#allocation2 + $0x18] sm:$0xff]
  %v377 = vld [vmem:[#allocation2 + $0x20] sm:$0xff]
  %v378 = vld [vmem:[#allocation2 + $0x28] sm:$0x3]
  %vm385 = vcmask 1046528
  %v386 = vrot.slane %v373, 1
  %v387 = vrot.slane %v374, 1
  %v388 = vsel %vm385, %v386, %v387
  %v389 = vrot.slane %v375, 1
  %v390 = vsel %vm385, %v387, %v389
  %v391 = vrot.slane %v376, 1
  %v392 = vrot.slane %v377, 1
  %v393 = vsel %vm385, %v391, %v392
  %v394 = vrot.slane %v378, 1
  %v395 = vsel %vm385, %v392, %v394
  %396 = vrot.lane.b32.xlu0 %v388, 8
  %v397 = vpop.permute.xlu0 %396
  %398 = vrot.lane.b32.xlu0 %v390, 8
  %v399 = vpop.permute.xlu0 %398
  %400 = vrot.lane.b32.xlu0 %v393, 8
  %v401 = vpop.permute.xlu0 %400
  %402 = vrot.lane.b32.xlu0 %v395, 8
  %v403 = vpop.permute.xlu0 %402
  %vm408 = vcmask 1045504
  %v409 = vrot.slane %v373, 2
  %v410 = vrot.slane %v374, 2
  %v411 = vsel %vm408, %v409, %v410
  %v412 = vrot.slane %v375, 2
  %v413 = vsel %vm408, %v410, %v412
  %v414 = vrot.slane %v376, 2
  %v415 = vrot.slane %v377, 2
  %v416 = vsel %vm408, %v414, %v415
  %v417 = vrot.slane %v378, 2
  %v418 = vsel %vm408, %v415, %v417
  %419 = vrot.lane.b32.xlu0 %v411, 16
  %v420 = vpop.permute.xlu0 %419
  %421 = vrot.lane.b32.xlu0 %v413, 16
  %v422 = vpop.permute.xlu0 %421
  %423 = vrot.lane.b32.xlu0 %v416, 16
  %v424 = vpop.permute.xlu0 %423
  %425 = vrot.lane.b32.xlu0 %v418, 16
  %v426 = vpop.permute.xlu0 %425
  %v431 = vsel %vm361, %v373, %v397
  %v432 = vsel %vm361, %v374, %v399
  %v433 = vsel %vm361, %v376, %v401
  %v434 = vsel %vm361, %v377, %v403
  %vm435 = vcmask 130048
  %v436 = vsel %vm435, %v431, %v420
  %v437 = vsel %vm435, %v432, %v422
  %v438 = vsel %vm435, %v433, %v424
  %v439 = vsel %vm435, %v434, %v426
  %v441 = vperm.slane %v353, 0
  %vm443 = vcmask 195584
  %v445 = vsel %vm443, %v436, 0
  %v448 = vsel %vm443, %v437, 0
  %v451 = vsel %vm443, %v438, 0
  %v454 = vsel %vm443, %v439, 0
  %456 = vmatpush.msra.mxu0 0.0
  %457 = vmatpush.msra.mxu0 0.0
  %458 = vmatpush.msra.mxu0 0.0
  %459 = vmatpush.msra.mxu0 0.0
  %460 = vmatpush.msra.mxu0 0.0
  %461 = vmatpush.msra.mxu0 0.0
  %462 = vmatpush.msra.mxu0 0.0
  %463 = vmatpush.msra.mxu0 0.0
  %464 = vmatpush.msra.mxu0 0.0
  %465 = vmatpush.msra.mxu0 0.0
  %466 = vmatpush.msra.mxu0 0.0
  %467 = vmatpush.msra.mxu0 0.0
  %468 = vmatpush.msra.mxu0 0.0
  %469 = vmatpush.msra.mxu0 %v352
  %470 = vmatpush.msra.mxu0 %v351
  %471 = vmatpush.msra.mxu0 %v350
  %472 = vmatmul.f32.gmra.mxu0 %v445
  %v473 = vpop.f32.mrf.mxu0
  %v474 = vadd.f32 %v441, %v473
  %475 = vmatmul.f32.gmra.mxu0 %v448
  %v476 = vpop.f32.mrf.mxu0
  %v477 = vadd.f32 %v441, %v476
  %478 = vmatmul.f32.gmra.mxu0 %v451
  %v479 = vpop.f32.mrf.mxu0
  %v480 = vadd.f32 %v441, %v479
  %481 = vmatmul.f32.gmra.mxu0 %v454
  %v482 = vpop.f32.mrf.mxu0
  %v483 = vadd.f32 %v441, %v482
  %484 = vdwg.mxu0
  %v485 = vsel %vm435, %v474, 0.0
  %486 = vadd.xlane.f32.xlu0 %v485
  %v487 = vpop.xlane.xlu0 %486
  %v488 = vsel %vm435, %v477, 0.0
  %489 = vadd.xlane.f32.xlu0 %v488
  %v490 = vpop.xlane.xlu0 %489
  %v491 = vsel %vm435, %v480, 0.0
  %492 = vadd.xlane.f32.xlu0 %v491
  %v493 = vpop.xlane.xlu0 %492
  %v494 = vsel %vm435, %v483, 0.0
  %495 = vadd.xlane.f32.xlu0 %v494
  %v496 = vpop.xlane.xlu0 %495
  %v497 = vrcp.pop 16.0
  %v498 = vmul.f32 16.0, %v497
  %v499 = vsub.f32 1.0, %v498
  %v500 = vmul.f32 %v497, %v499
  %v501 = vadd.f32 %v497, %v500
  %vm502 = vweird.f32 %v497
  %v503 = vsel %vm502, %v497, %v501
  %v504 = vmul.f32 %v487, %v503
  %v505 = vmul.f32 %v490, %v503
  %v506 = vmul.f32 %v493, %v503
  %v507 = vmul.f32 %v496, %v503
  %v508 = vsub.f32 %v474, %v504
  %v509 = vsub.f32 %v477, %v505
  %v510 = vsub.f32 %v480, %v506
  %v511 = vsub.f32 %v483, %v507
  %v512 = vmul.f32 %v508, %v508
  %v513 = vmul.f32 %v509, %v509
  %v514 = vmul.f32 %v510, %v510
  %v515 = vmul.f32 %v511, %v511
  %v516 = vsel %vm435, %v512, 0.0
  %517 = vadd.xlane.f32.xlu0 %v516
  %v518 = vpop.xlane.xlu0 %517
  %v519 = vsel %vm435, %v513, 0.0
  %520 = vadd.xlane.f32.xlu0 %v519
  %v521 = vpop.xlane.xlu0 %520
  %v522 = vsel %vm435, %v514, 0.0
  %523 = vadd.xlane.f32.xlu0 %v522
  %v524 = vpop.xlane.xlu0 %523
  %v525 = vsel %vm435, %v515, 0.0
  %526 = vadd.xlane.f32.xlu0 %v525
  %v527 = vpop.xlane.xlu0 %526
  %v528 = vmul.f32 %v518, %v503
  %v529 = vmul.f32 %v521, %v503
  %v530 = vmul.f32 %v524, %v503
  %v531 = vmul.f32 %v527, %v503
  %v532 = vadd.f32 %v528, 1e-05
  %v533 = vadd.f32 %v529, 1e-05
  %v534 = vadd.f32 %v530, 1e-05
  %v535 = vadd.f32 %v531, 1e-05
  %v536 = vrsqrt.pop %v532
  %v537 = vmul.f32 %v536, %v532
  %v538 = vmul.f32 %v537, %v536
  %v539 = vmul.f32 0.5, %v538
  %v540 = vsub.f32 1.5, %v539
  %v541 = vmul.f32 %v536, %v540
  %vm542 = vweird.f32 %v532
  %vm543 = vweird.f32 %v536
  %vm544 = vmor %vm542, %vm543
  %v545 = vsel %vm544, %v536, %v541
  %v546 = vrsqrt.pop %v533
  %v547 = vmul.f32 %v546, %v533
  %v548 = vmul.f32 %v547, %v546
  %v549 = vmul.f32 0.5, %v548
  %v550 = vsub.f32 1.5, %v549
  %v551 = vmul.f32 %v546, %v550
  %vm552 = vweird.f32 %v533
  %vm553 = vweird.f32 %v546
  %vm554 = vmor %vm552, %vm553
  %v555 = vsel %vm554, %v546, %v551
  %v556 = vrsqrt.pop %v534
  %v557 = vmul.f32 %v556, %v534
  %v558 = vmul.f32 %v557, %v556
  %v559 = vmul.f32 0.5, %v558
  %v560 = vsub.f32 1.5, %v559
  %v561 = vmul.f32 %v556, %v560
  %vm562 = vweird.f32 %v534
  %vm563 = vweird.f32 %v556
  %vm564 = vmor %vm562, %vm563
  %v565 = vsel %vm564, %v556, %v561
  %v566 = vrsqrt.pop %v535
  %v567 = vmul.f32 %v566, %v535
  %v568 = vmul.f32 %v567, %v566
  %v569 = vmul.f32 0.5, %v568
  %v570 = vsub.f32 1.5, %v569
  %v571 = vmul.f32 %v566, %v570
  %vm572 = vweird.f32 %v535
  %vm573 = vweird.f32 %v566
  %vm574 = vmor %vm572, %vm573
  %v575 = vsel %vm574, %v566, %v571
  %v576 = vmul.f32 %v508, %v545
  %v577 = vmul.f32 %v509, %v555
  %v578 = vmul.f32 %v510, %v565
  %v579 = vmul.f32 %v511, %v575
  %v581 = vperm.slane %v354, 0
  %v583 = vmul.f32 %v576, %v581
  %v584 = vmul.f32 %v577, %v581
  %v585 = vmul.f32 %v578, %v581
  %v586 = vmul.f32 %v579, %v581
  %v588 = vperm.slane %v355, 0
  %v590 = vadd.f32 %v583, %v588
  %v591 = vadd.f32 %v584, %v588
  %v592 = vadd.f32 %v585, %v588
  %v593 = vadd.f32 %v586, %v588
  %v594 = vmul.f32 %v590, 0.5
  %v595 = vmul.f32 %v591, 0.5
  %v596 = vmul.f32 %v592, 0.5
  %v597 = vmul.f32 %v593, 0.5
  %v598 = vmul.f32 %v590, 0.70710677
  %v599 = vmul.f32 %v591, 0.70710677
  %v600 = vmul.f32 %v592, 0.70710677
  %v601 = vmul.f32 %v593, 0.70710677
  %v602 = vmul.f32 %v598, %v598
  %v603 = vmin.f32 16.0, %v602
  %v604 = vmul.f32 %v603, 2.1237322e-06
  %v605 = vadd.f32 %v604, 0.00028619796
  %v606 = vmul.f32 %v603, %v605
  %v607 = vadd.f32 %v606, 0.0036580483
  %v608 = vmul.f32 %v603, %v607
  %v609 = vadd.f32 %v608, 0.05243302
  %v610 = vmul.f32 %v603, %v609
  %v611 = vadd.f32 %v610, 0.18741608
  %v612 = vmul.f32 %v603, %v611
  %v613 = vadd.f32 %v612, 1.1283791
  %v614 = vmul.f32 %v598, %v613
  %v615 = vmul.f32 %v603, 3.8918573e-05
  %v616 = vadd.f32 %v615, 0.001143296
  %v617 = vmul.f32 %v603, %v616
  %v618 = vadd.f32 %v617, 0.014752088
  %v619 = vmul.f32 %v603, %v618
  %v620 = vadd.f32 %v619, 0.112945676
  %v621 = vmul.f32 %v603, %v620
  %v622 = vadd.f32 %v621, 0.4994258
  %v623 = vmul.f32 %v603, %v622
  %v624 = vadd.f32 %v623, 1.0
  %v625 = vrcp.pop %v624
  %v626 = vmul.f32 %v624, %v625
  %v627 = vsub.f32 1.0, %v626
  %v628 = vmul.f32 %v625, %v627
  %v629 = vadd.f32 %v625, %v628
  %vm630 = vweird.f32 %v624
  %vm631 = vweird.f32 %v625
  %vm632 = vmor %vm630, %vm631
  %v633 = vsel %vm632, %v625, %v629
  %v634 = vand.u32 2147483647, %v624
  %vm635 = vcmp.eq.f32.partialorder %v634, 8.507059e+37
  %v636 = vand.u32 %v624, 2147483648
  %v637 = vor.u32 1.1754944e-38, %v636
  %v638 = vsel %vm635, %v637, %v633
  %v639 = vmul.f32 %v614, %v638
  %v640 = vmin.f32 %v639, 1.0
  %v641 = vmax.f32 %v640, -1.0
  %v642 = vmul.f32 %v599, %v599
  %v643 = vmin.f32 16.0, %v642
  %v644 = vmul.f32 %v643, 2.1237322e-06
  %v645 = vadd.f32 %v644, 0.00028619796
  %v646 = vmul.f32 %v643, %v645
  %v647 = vadd.f32 %v646, 0.0036580483
  %v648 = vmul.f32 %v643, %v647
  %v649 = vadd.f32 %v648, 0.05243302
  %v650 = vmul.f32 %v643, %v649
  %v651 = vadd.f32 %v650, 0.18741608
  %v652 = vmul.f32 %v643, %v651
  %v653 = vadd.f32 %v652, 1.1283791
  %v654 = vmul.f32 %v599, %v653
  %v655 = vmul.f32 %v643, 3.8918573e-05
  %v656 = vadd.f32 %v655, 0.001143296
  %v657 = vmul.f32 %v643, %v656
  %v658 = vadd.f32 %v657, 0.014752088
  %v659 = vmul.f32 %v643, %v658
  %v660 = vadd.f32 %v659, 0.112945676
  %v661 = vmul.f32 %v643, %v660
  %v662 = vadd.f32 %v661, 0.4994258
  %v663 = vmul.f32 %v643, %v662
  %v664 = vadd.f32 %v663, 1.0
  %v665 = vrcp.pop %v664
  %v666 = vmul.f32 %v664, %v665
  %v667 = vsub.f32 1.0, %v666
  %v668 = vmul.f32 %v665, %v667
  %v669 = vadd.f32 %v665, %v668
  %vm670 = vweird.f32 %v664
  %vm671 = vweird.f32 %v665
  %vm672 = vmor %vm670, %vm671
  %v673 = vsel %vm672, %v665, %v669
  %v674 = vand.u32 2147483647, %v664
  %vm675 = vcmp.eq.f32.partialorder %v674, 8.507059e+37
  %v676 = vand.u32 %v664, 2147483648
  %v677 = vor.u32 1.1754944e-38, %v676
  %v678 = vsel %vm675, %v677, %v673
  %v679 = vmul.f32 %v654, %v678
  %v680 = vmin.f32 %v679, 1.0
  %v681 = vmax.f32 %v680, -1.0
  %v682 = vmul.f32 %v600, %v600
  %v683 = vmin.f32 16.0, %v682
  %v684 = vmul.f32 %v683, 2.1237322e-06
  %v685 = vadd.f32 %v684, 0.00028619796
  %v686 = vmul.f32 %v683, %v685
  %v687 = vadd.f32 %v686, 0.0036580483
  %v688 = vmul.f32 %v683, %v687
  %v689 = vadd.f32 %v688, 0.05243302
  %v690 = vmul.f32 %v683, %v689
  %v691 = vadd.f32 %v690, 0.18741608
  %v692 = vmul.f32 %v683, %v691
  %v693 = vadd.f32 %v692, 1.1283791
  %v694 = vmul.f32 %v600, %v693
  %v695 = vmul.f32 %v683, 3.8918573e-05
  %v696 = vadd.f32 %v695, 0.001143296
  %v697 = vmul.f32 %v683, %v696
  %v698 = vadd.f32 %v697, 0.014752088
  %v699 = vmul.f32 %v683, %v698
  %v700 = vadd.f32 %v699, 0.112945676
  %v701 = vmul.f32 %v683, %v700
  %v702 = vadd.f32 %v701, 0.4994258
  %v703 = vmul.f32 %v683, %v702
  %v704 = vadd.f32 %v703, 1.0
  %v705 = vrcp.pop %v704
  %v706 = vmul.f32 %v704, %v705
  %v707 = vsub.f32 1.0, %v706
  %v708 = vmul.f32 %v705, %v707
  %v709 = vadd.f32 %v705, %v708
  %vm710 = vweird.f32 %v704
  %vm711 = vweird.f32 %v705
  %vm712 = vmor %vm710, %vm711
  %v713 = vsel %vm712, %v705, %v709
  %v714 = vand.u32 2147483647, %v704
  %vm715 = vcmp.eq.f32.partialorder %v714, 8.507059e+37
  %v716 = vand.u32 %v704, 2147483648
  %v717 = vor.u32 1.1754944e-38, %v716
  %v718 = vsel %vm715, %v717, %v713
  %v719 = vmul.f32 %v694, %v718
  %v720 = vmin.f32 %v719, 1.0
  %v721 = vmax.f32 %v720, -1.0
  %v722 = vmul.f32 %v601, %v601
  %v723 = vmin.f32 16.0, %v722
  %v724 = vmul.f32 %v723, 2.1237322e-06
  %v725 = vadd.f32 %v724, 0.00028619796
  %v726 = vmul.f32 %v723, %v725
  %v727 = vadd.f32 %v726, 0.0036580483
  %v728 = vmul.f32 %v723, %v727
  %v729 = vadd.f32 %v728, 0.05243302
  %v730 = vmul.f32 %v723, %v729
  %v731 = vadd.f32 %v730, 0.18741608
  %v732 = vmul.f32 %v723, %v731
  %v733 = vadd.f32 %v732, 1.1283791
  %v734 = vmul.f32 %v601, %v733
  %v735 = vmul.f32 %v723, 3.8918573e-05
  %v736 = vadd.f32 %v735, 0.001143296
  %v737 = vmul.f32 %v723, %v736
  %v738 = vadd.f32 %v737, 0.014752088
  %v739 = vmul.f32 %v723, %v738
  %v740 = vadd.f32 %v739, 0.112945676
  %v741 = vmul.f32 %v723, %v740
  %v742 = vadd.f32 %v741, 0.4994258
  %v743 = vmul.f32 %v723, %v742
  %v744 = vadd.f32 %v743, 1.0
  %v745 = vrcp.pop %v744
  %v746 = vmul.f32 %v744, %v745
  %v747 = vsub.f32 1.0, %v746
  %v748 = vmul.f32 %v745, %v747
  %v749 = vadd.f32 %v745, %v748
  %vm750 = vweird.f32 %v744
  %vm751 = vweird.f32 %v745
  %vm752 = vmor %vm750, %vm751
  %v753 = vsel %vm752, %v745, %v749
  %v754 = vand.u32 2147483647, %v744
  %vm755 = vcmp.eq.f32.partialorder %v754, 8.507059e+37
  %v756 = vand.u32 %v744, 2147483648
  %v757 = vor.u32 1.1754944e-38, %v756
  %v758 = vsel %vm755, %v757, %v753
  %v759 = vmul.f32 %v734, %v758
  %v760 = vmin.f32 %v759, 1.0
  %v761 = vmax.f32 %v760, -1.0
  %v762 = vadd.f32 %v641, 1.0
  %v763 = vadd.f32 %v681, 1.0
  %v764 = vadd.f32 %v721, 1.0
  %v765 = vadd.f32 %v761, 1.0
  %v766 = vmul.f32 %v594, %v762
  %v767 = vmul.f32 %v595, %v763
  %v768 = vmul.f32 %v596, %v764
  %v769 = vmul.f32 %v597, %v765
  %v770 = vsel %vm435, %v766, 0.0
  %v771 = vsel %vm435, %v767, 0.0
  %v772 = vadd.f32 %v770, %v771
  %v773 = vrot.slane %v772, 4
  %v774 = vadd.f32 %v772, %v773
  %v775 = vrot.slane %v774, 2
  %v776 = vadd.f32 %v774, %v775
  %v777 = vrot.slane %v776, 1
  %v778 = vadd.f32 %v776, %v777
  %v779 = vsel %vm435, %v768, 0.0
  %v780 = vsel %vm435, %v769, 0.0
  %v781 = vadd.f32 %v779, %v780
  %v782 = vrot.slane %v781, 4
  %v783 = vadd.f32 %v781, %v782
  %v784 = vrot.slane %v783, 2
  %v785 = vadd.f32 %v783, %v784
  %v786 = vrot.slane %v785, 1
  %v787 = vadd.f32 %v785, %v786
  %v788 = vmul.f32 %v778, %v503
  %v789 = vmul.f32 %v787, %v503
  %v791 = vperm.slane %v358, 0
  %vm795 = vcmask 1041409
  %v796 = vsel %vm795, %v789, %v788
  %v797 = vsel %vm435, %v796, 0
  %799 = vmatpush.msra.mxu0 0.0
  %800 = vmatpush.msra.mxu0 0.0
  %801 = vmatpush.msra.mxu0 0.0
  %802 = vmatpush.msra.mxu0 0.0
  %803 = vmatpush.msra.mxu0 0.0
  %804 = vmatpush.msra.mxu0 0.0
  %805 = vmatpush.msra.mxu0 0.0
  %806 = vmatpush.msra.mxu0 0.0
  %807 = vmatpush.msra.mxu0 0.0
  %808 = vmatpush.msra.mxu0 0.0
  %809 = vmatpush.msra.mxu0 0.0
  %810 = vmatpush.msra.mxu0 0.0
  %811 = vmatpush.msra.mxu0 0.0
  %812 = vmatpush.msra.mxu0 0.0
  %813 = vmatpush.msra.mxu0 %v357
  %814 = vmatpush.msra.mxu0 %v356
  %815 = vmatmul.f32.gmra.mxu0 %v797
  %v816 = vpop.f32.mrf.mxu0
  %v817 = vadd.f32 %v791, %v816
  %818 = vdwg.mxu0
  %v819 = vmul.f32 %v817, 0.5
  %v820 = vmul.f32 %v817, 0.70710677
  %v821 = vmul.f32 %v820, %v820
  %v822 = vmin.f32 16.0, %v821
  %v823 = vmul.f32 %v822, 2.1237322e-06
  %v824 = vadd.f32 %v823, 0.00028619796
  %v825 = vmul.f32 %v822, %v824
  %v826 = vadd.f32 %v825, 0.0036580483
  %v827 = vmul.f32 %v822, %v826
  %v828 = vadd.f32 %v827, 0.05243302
  %v829 = vmul.f32 %v822, %v828
  %v830 = vadd.f32 %v829, 0.18741608
  %v831 = vmul.f32 %v822, %v830
  %v832 = vadd.f32 %v831, 1.1283791
  %v833 = vmul.f32 %v820, %v832
  %v834 = vmul.f32 %v822, 3.8918573e-05
  %v835 = vadd.f32 %v834, 0.001143296
  %v836 = vmul.f32 %v822, %v835
  %v837 = vadd.f32 %v836, 0.014752088
  %v838 = vmul.f32 %v822, %v837
  %v839 = vadd.f32 %v838, 0.112945676
  %v840 = vmul.f32 %v822, %v839
  %v841 = vadd.f32 %v840, 0.4994258
  %v842 = vmul.f32 %v822, %v841
  %v843 = vadd.f32 %v842, 1.0
  %v844 = vrcp.pop %v843
  %v845 = vmul.f32 %v843, %v844
  %v846 = vsub.f32 1.0, %v845
  %v847 = vmul.f32 %v844, %v846
  %v848 = vadd.f32 %v844, %v847
  %vm849 = vweird.f32 %v843
  %vm850 = vweird.f32 %v844
  %vm851 = vmor %vm849, %vm850
  %v852 = vsel %vm851, %v844, %v848
  %v853 = vand.u32 2147483647, %v843
  %vm854 = vcmp.eq.f32.partialorder %v853, 8.507059e+37
  %v855 = vand.u32 %v843, 2147483648
  %v856 = vor.u32 1.1754944e-38, %v855
  %v857 = vsel %vm854, %v856, %v852
  %v858 = vmul.f32 %v833, %v857
  %v859 = vmin.f32 %v858, 1.0
  %v860 = vmax.f32 %v859, -1.0
  %v861 = vadd.f32 %v860, 1.0
  %v862 = vmul.f32 %v819, %v861
  %v864 = vperm.slane %v360, 0
  %v867 = vsel %vm361, %v862, 0
  %869 = vmatpush.msra.mxu0 0.0
  %870 = vmatpush.msra.mxu0 0.0
  %871 = vmatpush.msra.mxu0 0.0
  %872 = vmatpush.msra.mxu0 0.0
  %873 = vmatpush.msra.mxu0 0.0
  %874 = vmatpush.msra.mxu0 0.0
  %875 = vmatpush.msra.mxu0 0.0
  %876 = vmatpush.msra.mxu0 0.0
  %877 = vmatpush.msra.mxu0 0.0
  %878 = vmatpush.msra.mxu0 0.0
  %879 = vmatpush.msra.mxu0 0.0
  %880 = vmatpush.msra.mxu0 0.0
  %881 = vmatpush.msra.mxu0 0.0
  %882 = vmatpush.msra.mxu0 0.0
  %883 = vmatpush.msra.mxu0 0.0
  %884 = vmatpush.msra.mxu0 %v359
  %885 = vmatmul.f32.gmra.mxu0 %v867
  %v886 = vpop.f32.mrf.mxu0
  %v887 = vadd.f32 %v864, %v886
  %888 = vdwg.mxu0
  %v889 = vxor.u32 %v887, 2147483648
  %v890 = vmul.f32 %v889, 1.442695
  %v891 = vpow.pop %v890
  %v892 = vadd.f32 %v891, 1.0
  %v893 = vrcp.pop %v892
  %v894 = vmul.f32 %v892, %v893
  %v895 = vsub.f32 1.0, %v894
  %v896 = vmul.f32 %v893, %v895
  %v897 = vadd.f32 %v893, %v896
  %vm898 = vweird.f32 %v892
  %vm899 = vweird.f32 %v893
  %vm900 = vmor %vm898, %vm899
  %v901 = vsel %vm900, %v893, %v897
  %v902 = vand.u32 2147483647, %v892
  %vm903 = vcmp.eq.f32.partialorder %v902, 8.507059e+37
  %v904 = vand.u32 %v892, 2147483648
  %v905 = vor.u32 1.1754944e-38, %v904
  %v906 = vsel %vm903, %v905, %v901
  %v907 = vmul.f32 1.0, %v906
  %v909 = vrot.slane %v907, 1
  %v910 = vperm.slane %v907, 0
  %v911 = vperm.slane %v909, 0
  %v914 = vmul.f32 %v766, %v910
  %v915 = vmul.f32 %v767, %v910
  %v916 = vmul.f32 %v768, %v911
  %v917 = vmul.f32 %v769, %v911
  %v918 = vsel %vm435, %v914, 0.0
  %v919 = vsel %vm435, %v915, 0.0
  %v920 = vadd.f32 %v918, %v919
  %v921 = vrot.slane %v920, 4
  %v922 = vadd.f32 %v920, %v921
  %v923 = vrot.slane %v922, 2
  %v924 = vadd.f32 %v922, %v923
  %v925 = vrot.slane %v924, 1
  %v926 = vadd.f32 %v924, %v925
  %v927 = vsel %vm435, %v916, 0.0
  %v928 = vsel %vm435, %v917, 0.0
  %v929 = vadd.f32 %v927, %v928
  %v930 = vrot.slane %v929, 4
  %v931 = vadd.f32 %v929, %v930
  %v932 = vrot.slane %v931, 2
  %v933 = vadd.f32 %v931, %v932
  %v934 = vrot.slane %v933, 1
  %v935 = vadd.f32 %v933, %v934
  %v936 = vmul.f32 %v926, %v503
  %v937 = vmul.f32 %v935, %v503
  %v938 = vsub.f32 %v914, %v936
  %v939 = vsub.f32 %v915, %v936
  %v940 = vsub.f32 %v916, %v937
  %v941 = vsub.f32 %v917, %v937
  %v942 = vmul.f32 %v938, %v938
  %v943 = vmul.f32 %v939, %v939
  %v944 = vmul.f32 %v940, %v940
  %v945 = vmul.f32 %v941, %v941
  %v946 = vsel %vm435, %v942, 0.0
  %v947 = vsel %vm435, %v943, 0.0
  %v948 = vadd.f32 %v946, %v947
  %v949 = vrot.slane %v948, 4
  %v950 = vadd.f32 %v948, %v949
  %v951 = vrot.slane %v950, 2
  %v952 = vadd.f32 %v950, %v951
  %v953 = vrot.slane %v952, 1
  %v954 = vadd.f32 %v952, %v953
  %v955 = vsel %vm435, %v944, 0.0
  %v956 = vsel %vm435, %v945, 0.0
  %v957 = vadd.f32 %v955, %v956
  %v958 = vrot.slane %v957, 4
  %v959 = vadd.f32 %v957, %v958
  %v960 = vrot.slane %v959, 2
  %v961 = vadd.f32 %v959, %v960
  %v962 = vrot.slane %v961, 1
  %v963 = vadd.f32 %v961, %v962
  %v964 = vmul.f32 %v954, %v503
  %v965 = vmul.f32 %v963, %v503
  %v966 = vadd.f32 %v964, 1e-05
  %v967 = vadd.f32 %v965, 1e-05
  %v968 = vrsqrt.pop %v966
  %v969 = vmul.f32 %v968, %v966
  %v970 = vmul.f32 %v969, %v968
  %v971 = vmul.f32 0.5, %v970
  %v972 = vsub.f32 1.5, %v971
  %v973 = vmul.f32 %v968, %v972
  %vm974 = vweird.f32 %v966
  %vm975 = vweird.f32 %v968
  %vm976 = vmor %vm974, %vm975
  %v977 = vsel %vm976, %v968, %v973
  %v978 = vrsqrt.pop %v967
  %v979 = vmul.f32 %v978, %v967
  %v980 = vmul.f32 %v979, %v978
  %v981 = vmul.f32 0.5, %v980
  %v982 = vsub.f32 1.5, %v981
  %v983 = vmul.f32 %v978, %v982
  %vm984 = vweird.f32 %v967
  %vm985 = vweird.f32 %v978
  %vm986 = vmor %vm984, %vm985
  %v987 = vsel %vm986, %v978, %v983
  %v988 = vmul.f32 %v938, %v977
  %v989 = vmul.f32 %v939, %v977
  %v990 = vmul.f32 %v940, %v987
  %v991 = vmul.f32 %v941, %v987
  %v992 = vld [vmem:[%s3] sm:$0xff]
  %v993 = vld [vmem:[%s3 + $0x8] sm:$0xff]
  %v994 = vld [vmem:[%s3 + $0x10] sm:$0xff]
  %v995 = vld [vmem:[%s3 + $0x18] sm:$0xff]
  %v996 = vld [vmem:[%s3 + $0x20] sm:$0xff]
  %v997 = vld [vmem:[%s3 + $0x28] sm:$0xff]
  %v998 = vld [vmem:[%s21] sm:$0xff]
  %v999 = vld [vmem:[%s21 + $0x8] sm:$0xff]
  %v1000 = vld [vmem:[%s21 + $0x10] sm:$0xff]
  %v1001 = vld [vmem:[%s21 + $0x18] sm:$0xff]
  %v1002 = vld [vmem:[%s21 + $0x20] sm:$0xff]
  %v1003 = vld [vmem:[%s23] sm:$0x1]
  %v1004 = vld [vmem:[%s25] sm:$0x1]
  %v1005 = vld [vmem:[%s27] sm:$0x1]
  %v1006 = vld [vmem:[%s29] sm:$0xff]
  %v1007 = vld [vmem:[%s29 + $0x8] sm:$0xff]
  %v1008 = vld [vmem:[%s31] sm:$0x1]
  %v1009 = vld [vmem:[%s33] sm:$0xff]
  %v1010 = vld [vmem:[%s35] sm:$0x1]
  %1011 = vst.msk [vmem:[#allocation3] sm:$0xff] %vm361, 0.0
  %1012 = vst.msk [vmem:[#allocation3 + $0x8] sm:$0xff] %vm361, 0.0
  %1013 = vst.msk [vmem:[#allocation3 + $0x10] sm:$0xff] %vm361, 0.0
  %vm1014 = vcmask 60416
  %1015 = vst.msk [vmem:[#allocation3 + $0x18] sm:$0xf] %vm1014, 0.0
  %1016 = vst.msk [vmem:[#allocation3 + $0x20] sm:$0xff] %vm361, 0.0
  %1017 = vst.msk [vmem:[#allocation3 + $0x28] sm:$0xff] %vm361, 0.0
  %1018 = vst.msk [vmem:[#allocation3 + $0x30] sm:$0xff] %vm361, 0.0
  %1019 = vst.msk [vmem:[#allocation3 + $0x38] sm:$0xf] %vm1014, 0.0
  %1020 = vst.msk [vmem:[#allocation3 + $0x2] sm:$0xff] %vm361, %v992
  %1021 = vst.msk [vmem:[#allocation3 + $0xa] sm:$0xff] %vm361, %v993
  %1022 = vst.msk [vmem:[#allocation3 + $0x12] sm:$0xff] %vm361, %v994
  %1023 = vst.msk [vmem:[#allocation3 + $0x22] sm:$0xff] %vm361, %v995
  %1024 = vst.msk [vmem:[#allocation3 + $0x2a] sm:$0xff] %vm361, %v996
  %1025 = vst.msk [vmem:[#allocation3 + $0x32] sm:$0xff] %vm361, %v997
  %v1026 = vld [vmem:[#allocation3] sm:$0xff]
  %v1027 = vld [vmem:[#allocation3 + $0x8] sm:$0xff]
  %v1028 = vld [vmem:[#allocation3 + $0x10] sm:$0xff]
  %v1029 = vld [vmem:[#allocation3 + $0x18] sm:$0xf]
  %v1030 = vld [vmem:[#allocation3 + $0x20] sm:$0xff]
  %v1031 = vld [vmem:[#allocation3 + $0x28] sm:$0xff]
  %v1032 = vld [vmem:[#allocation3 + $0x30] sm:$0xff]
  %v1033 = vld [vmem:[#allocation3 + $0x38] sm:$0xf]
  %v1042 = vrot.slane %v1026, 1
  %v1043 = vrot.slane %v1027, 1
  %v1044 = vsel %vm385, %v1042, %v1043
  %v1045 = vrot.slane %v1028, 1
  %v1046 = vsel %vm385, %v1043, %v1045
  %v1047 = vrot.slane %v1029, 1
  %v1048 = vsel %vm385, %v1045, %v1047
  %v1049 = vrot.slane %v1030, 1
  %v1050 = vrot.slane %v1031, 1
  %v1051 = vsel %vm385, %v1049, %v1050
  %v1052 = vrot.slane %v1032, 1
  %v1053 = vsel %vm385, %v1050, %v1052
  %v1054 = vrot.slane %v1033, 1
  %v1055 = vsel %vm385, %v1052, %v1054
  %1056 = vrot.lane.b32.xlu0 %v1044, 8
  %v1057 = vpop.permute.xlu0 %1056
  %1058 = vrot.lane.b32.xlu0 %v1046, 8
  %v1059 = vpop.permute.xlu0 %1058
  %1060 = vrot.lane.b32.xlu0 %v1048, 8
  %v1061 = vpop.permute.xlu0 %1060
  %1062 = vrot.lane.b32.xlu0 %v1051, 8
  %v1063 = vpop.permute.xlu0 %1062
  %1064 = vrot.lane.b32.xlu0 %v1053, 8
  %v1065 = vpop.permute.xlu0 %1064
  %1066 = vrot.lane.b32.xlu0 %v1055, 8
  %v1067 = vpop.permute.xlu0 %1066
  %v1074 = vrot.slane %v1026, 2
  %v1075 = vrot.slane %v1027, 2
  %v1076 = vsel %vm408, %v1074, %v1075
  %v1077 = vrot.slane %v1028, 2
  %v1078 = vsel %vm408, %v1075, %v1077
  %v1079 = vrot.slane %v1029, 2
  %v1080 = vsel %vm408, %v1077, %v1079
  %v1081 = vrot.slane %v1030, 2
  %v1082 = vrot.slane %v1031, 2
  %v1083 = vsel %vm408, %v1081, %v1082
  %v1084 = vrot.slane %v1032, 2
  %v1085 = vsel %vm408, %v1082, %v1084
  %v1086 = vrot.slane %v1033, 2
  %v1087 = vsel %vm408, %v1084, %v1086
  %1088 = vrot.lane.b32.xlu0 %v1076, 16
  %v1089 = vpop.permute.xlu0 %1088
  %1090 = vrot.lane.b32.xlu0 %v1078, 16
  %v1091 = vpop.permute.xlu0 %1090
  %1092 = vrot.lane.b32.xlu0 %v1080, 16
  %v1093 = vpop.permute.xlu0 %1092
  %1094 = vrot.lane.b32.xlu0 %v1083, 16
  %v1095 = vpop.permute.xlu0 %1094
  %1096 = vrot.lane.b32.xlu0 %v1085, 16
  %v1097 = vpop.permute.xlu0 %1096
  %1098 = vrot.lane.b32.xlu0 %v1087, 16
  %v1099 = vpop.permute.xlu0 %1098
  %vm1106 = vcmask 1044480
  %v1107 = vrot.slane %v1026, 3
  %v1108 = vrot.slane %v1027, 3
  %v1109 = vsel %vm1106, %v1107, %v1108
  %v1110 = vrot.slane %v1028, 3
  %v1111 = vsel %vm1106, %v1108, %v1110
  %v1112 = vrot.slane %v1029, 3
  %v1113 = vsel %vm1106, %v1110, %v1112
  %v1114 = vrot.slane %v1030, 3
  %v1115 = vrot.slane %v1031, 3
  %v1116 = vsel %vm1106, %v1114, %v1115
  %v1117 = vrot.slane %v1032, 3
  %v1118 = vsel %vm1106, %v1115, %v1117
  %v1119 = vrot.slane %v1033, 3
  %v1120 = vsel %vm1106, %v1117, %v1119
  %1121 = vrot.lane.b32.xlu0 %v1109, 24
  %v1122 = vpop.permute.xlu0 %1121
  %1123 = vrot.lane.b32.xlu0 %v1111, 24
  %v1124 = vpop.permute.xlu0 %1123
  %1125 = vrot.lane.b32.xlu0 %v1113, 24
  %v1126 = vpop.permute.xlu0 %1125
  %1127 = vrot.lane.b32.xlu0 %v1116, 24
  %v1128 = vpop.permute.xlu0 %1127
  %1129 = vrot.lane.b32.xlu0 %v1118, 24
  %v1130 = vpop.permute.xlu0 %1129
  %1131 = vrot.lane.b32.xlu0 %v1120, 24
  %v1132 = vpop.permute.xlu0 %1131
  %vm1139 = vcmask 1043456
  %v1140 = vrot.slane %v1026, 4
  %v1141 = vrot.slane %v1027, 4
  %v1142 = vsel %vm1139, %v1140, %v1141
  %v1143 = vrot.slane %v1028, 4
  %v1144 = vsel %vm1139, %v1141, %v1143
  %v1145 = vrot.slane %v1029, 4
  %v1146 = vsel %vm1139, %v1143, %v1145
  %v1147 = vrot.slane %v1030, 4
  %v1148 = vrot.slane %v1031, 4
  %v1149 = vsel %vm1139, %v1147, %v1148
  %v1150 = vrot.slane %v1032, 4
  %v1151 = vsel %vm1139, %v1148, %v1150
  %v1152 = vrot.slane %v1033, 4
  %v1153 = vsel %vm1139, %v1150, %v1152
  %1154 = vrot.lane.b32.xlu0 %v1142, 32
  %v1155 = vpop.permute.xlu0 %1154
  %1156 = vrot.lane.b32.xlu0 %v1144, 32
  %v1157 = vpop.permute.xlu0 %1156
  %1158 = vrot.lane.b32.xlu0 %v1146, 32
  %v1159 = vpop.permute.xlu0 %1158
  %1160 = vrot.lane.b32.xlu0 %v1149, 32
  %v1161 = vpop.permute.xlu0 %1160
  %1162 = vrot.lane.b32.xlu0 %v1151, 32
  %v1163 = vpop.permute.xlu0 %1162
  %1164 = vrot.lane.b32.xlu0 %v1153, 32
  %v1165 = vpop.permute.xlu0 %1164
  %v1172 = vsel %vm361, %v1026, %v1057
  %v1173 = vsel %vm361, %v1027, %v1059
  %v1174 = vsel %vm361, %v1028, %v1061
  %v1175 = vsel %vm361, %v1030, %v1063
  %v1176 = vsel %vm361, %v1031, %v1065
  %v1177 = vsel %vm361, %v1032, %v1067
  %v1178 = vsel %vm435, %v1172, %v1089
  %v1179 = vsel %vm435, %v1173, %v1091
  %v1180 = vsel %vm435, %v1174, %v1093
  %v1181 = vsel %vm435, %v1175, %v1095
  %v1182 = vsel %vm435, %v1176, %v1097
  %v1183 = vsel %vm435, %v1177, %v1099
  %v1184 = vsel %vm443, %v1178, %v1122
  %v1185 = vsel %vm443, %v1179, %v1124
  %v1186 = vsel %vm443, %v1180, %v1126
  %v1187 = vsel %vm443, %v1181, %v1128
  %v1188 = vsel %vm443, %v1182, %v1130
  %v1189 = vsel %vm443, %v1183, %v1132
  %vm1190 = vcmask 261120
  %v1191 = vsel %vm1190, %v1184, %v1155
  %v1192 = vsel %vm1190, %v1185, %v1157
  %v1193 = vsel %vm1190, %v1186, %v1159
  %v1194 = vsel %vm1190, %v1187, %v1161
  %v1195 = vsel %vm1190, %v1188, %v1163
  %v1196 = vsel %vm1190, %v1189, %v1165
  %v1198 = vperm.slane %v1003, 0
  %vm1200 = vcmask 326656
  %v1202 = vsel %vm1200, %v1191, 0
  %v1205 = vsel %vm1200, %v1192, 0
  %v1208 = vsel %vm1200, %v1193, 0
  %v1211 = vsel %vm1200, %v1194, 0
  %v1214 = vsel %vm1200, %v1195, 0
  %v1217 = vsel %vm1200, %v1196, 0
  %1219 = vmatpush.msra.mxu0 0.0
  %1220 = vmatpush.msra.mxu0 0.0
  %1221 = vmatpush.msra.mxu0 0.0
  %1222 = vmatpush.msra.mxu0 0.0
  %1223 = vmatpush.msra.mxu0 0.0
  %1224 = vmatpush.msra.mxu0 0.0
  %1225 = vmatpush.msra.mxu0 0.0
  %1226 = vmatpush.msra.mxu0 0.0
  %1227 = vmatpush.msra.mxu0 0.0
  %1228 = vmatpush.msra.mxu0 0.0
  %1229 = vmatpush.msra.mxu0 0.0
  %1230 = vmatpush.msra.mxu0 %v1002
  %1231 = vmatpush.msra.mxu0 %v1001
  %1232 = vmatpush.msra.mxu0 %v1000
  %1233 = vmatpush.msra.mxu0 %v999
  %1234 = vmatpush.msra.mxu0 %v998
  %1235 = vmatmul.f32.gmra.mxu0 %v1202
  %v1236 = vpop.f32.mrf.mxu0
  %v1237 = vadd.f32 %v1198, %v1236
  %1238 = vmatmul.f32.gmra.mxu0 %v1205
  %v1239 = vpop.f32.mrf.mxu0
  %v1240 = vadd.f32 %v1198, %v1239
  %1241 = vmatmul.f32.gmra.mxu0 %v1208
  %v1242 = vpop.f32.mrf.mxu0
  %v1243 = vadd.f32 %v1198, %v1242
  %1244 = vmatmul.f32.gmra.mxu0 %v1211
  %v1245 = vpop.f32.mrf.mxu0
  %v1246 = vadd.f32 %v1198, %v1245
  %1247 = vmatmul.f32.gmra.mxu0 %v1214
  %v1248 = vpop.f32.mrf.mxu0
  %v1249 = vadd.f32 %v1198, %v1248
  %1250 = vmatmul.f32.gmra.mxu0 %v1217
  %v1251 = vpop.f32.mrf.mxu0
  %v1252 = vadd.f32 %v1198, %v1251
  %1253 = vdwg.mxu0
  %v1254 = vsel %vm435, %v1237, 0.0
  %1255 = vadd.xlane.f32.xlu0 %v1254
  %v1256 = vpop.xlane.xlu0 %1255
  %v1257 = vsel %vm435, %v1240, 0.0
  %1258 = vadd.xlane.f32.xlu0 %v1257
  %v1259 = vpop.xlane.xlu0 %1258
  %v1260 = vsel %vm435, %v1243, 0.0
  %1261 = vadd.xlane.f32.xlu0 %v1260
  %v1262 = vpop.xlane.xlu0 %1261
  %v1263 = vsel %vm435, %v1246, 0.0
  %1264 = vadd.xlane.f32.xlu0 %v1263
  %v1265 = vpop.xlane.xlu0 %1264
  %v1266 = vsel %vm435, %v1249, 0.0
  %1267 = vadd.xlane.f32.xlu0 %v1266
  %v1268 = vpop.xlane.xlu0 %1267
  %v1269 = vsel %vm435, %v1252, 0.0
  %1270 = vadd.xlane.f32.xlu0 %v1269
  %v1271 = vpop.xlane.xlu0 %1270
  %v1272 = vmul.f32 %v1256, %v503
  %v1273 = vmul.f32 %v1259, %v503
  %v1274 = vmul.f32 %v1262, %v503
  %v1275 = vmul.f32 %v1265, %v503
  %v1276 = vmul.f32 %v1268, %v503
  %v1277 = vmul.f32 %v1271, %v503
  %v1278 = vsub.f32 %v1237, %v1272
  %v1279 = vsub.f32 %v1240, %v1273
  %v1280 = vsub.f32 %v1243, %v1274
  %v1281 = vsub.f32 %v1246, %v1275
  %v1282 = vsub.f32 %v1249, %v1276
  %v1283 = vsub.f32 %v1252, %v1277
  %v1284 = vmul.f32 %v1278, %v1278
  %v1285 = vmul.f32 %v1279, %v1279
  %v1286 = vmul.f32 %v1280, %v1280
  %v1287 = vmul.f32 %v1281, %v1281
  %v1288 = vmul.f32 %v1282, %v1282
  %v1289 = vmul.f32 %v1283, %v1283
  %v1290 = vsel %vm435, %v1284, 0.0
  %1291 = vadd.xlane.f32.xlu0 %v1290
  %v1292 = vpop.xlane.xlu0 %1291
  %v1293 = vsel %vm435, %v1285, 0.0
  %1294 = vadd.xlane.f32.xlu0 %v1293
  %v1295 = vpop.xlane.xlu0 %1294
  %v1296 = vsel %vm435, %v1286, 0.0
  %1297 = vadd.xlane.f32.xlu0 %v1296
  %v1298 = vpop.xlane.xlu0 %1297
  %v1299 = vsel %vm435, %v1287, 0.0
  %1300 = vadd.xlane.f32.xlu0 %v1299
  %v1301 = vpop.xlane.xlu0 %1300
  %v1302 = vsel %vm435, %v1288, 0.0
  %1303 = vadd.xlane.f32.xlu0 %v1302
  %v1304 = vpop.xlane.xlu0 %1303
  %v1305 = vsel %vm435, %v1289, 0.0
  %1306 = vadd.xlane.f32.xlu0 %v1305
  %v1307 = vpop.xlane.xlu0 %1306
  %v1308 = vmul.f32 %v1292, %v503
  %v1309 = vmul.f32 %v1295, %v503
  %v1310 = vmul.f32 %v1298, %v503
  %v1311 = vmul.f32 %v1301, %v503
  %v1312 = vmul.f32 %v1304, %v503
  %v1313 = vmul.f32 %v1307, %v503
  %v1314 = vadd.f32 %v1308, 1e-05
  %v1315 = vadd.f32 %v1309, 1e-05
  %v1316 = vadd.f32 %v1310, 1e-05
  %v1317 = vadd.f32 %v1311, 1e-05
  %v1318 = vadd.f32 %v1312, 1e-05
  %v1319 = vadd.f32 %v1313, 1e-05
  %v1320 = vrsqrt.pop %v1314
  %v1321 = vmul.f32 %v1320, %v1314
  %v1322 = vmul.f32 %v1321, %v1320
  %v1323 = vmul.f32 0.5, %v1322
  %v1324 = vsub.f32 1.5, %v1323
  %v1325 = vmul.f32 %v1320, %v1324
  %vm1326 = vweird.f32 %v1314
  %vm1327 = vweird.f32 %v1320
  %vm1328 = vmor %vm1326, %vm1327
  %v1329 = vsel %vm1328, %v1320, %v1325
  %v1330 = vrsqrt.pop %v1315
  %v1331 = vmul.f32 %v1330, %v1315
  %v1332 = vmul.f32 %v1331, %v1330
  %v1333 = vmul.f32 0.5, %v1332
  %v1334 = vsub.f32 1.5, %v1333
  %v1335 = vmul.f32 %v1330, %v1334
  %vm1336 = vweird.f32 %v1315
  %vm1337 = vweird.f32 %v1330
  %vm1338 = vmor %vm1336, %vm1337
  %v1339 = vsel %vm1338, %v1330, %v1335
  %v1340 = vrsqrt.pop %v1316
  %v1341 = vmul.f32 %v1340, %v1316
  %v1342 = vmul.f32 %v1341, %v1340
  %v1343 = vmul.f32 0.5, %v1342
  %v1344 = vsub.f32 1.5, %v1343
  %v1345 = vmul.f32 %v1340, %v1344
  %vm1346 = vweird.f32 %v1316
  %vm1347 = vweird.f32 %v1340
  %vm1348 = vmor %vm1346, %vm1347
  %v1349 = vsel %vm1348, %v1340, %v1345
  %v1350 = vrsqrt.pop %v1317
  %v1351 = vmul.f32 %v1350, %v1317
  %v1352 = vmul.f32 %v1351, %v1350
  %v1353 = vmul.f32 0.5, %v1352
  %v1354 = vsub.f32 1.5, %v1353
  %v1355 = vmul.f32 %v1350, %v1354
  %vm1356 = vweird.f32 %v1317
  %vm1357 = vweird.f32 %v1350
  %vm1358 = vmor %vm1356, %vm1357
  %v1359 = vsel %vm1358, %v1350, %v1355
  %v1360 = vrsqrt.pop %v1318
  %v1361 = vmul.f32 %v1360, %v1318
  %v1362 = vmul.f32 %v1361, %v1360
  %v1363 = vmul.f32 0.5, %v1362
  %v1364 = vsub.f32 1.5, %v1363
  %v1365 = vmul.f32 %v1360, %v1364
  %vm1366 = vweird.f32 %v1318
  %vm1367 = vweird.f32 %v1360
  %vm1368 = vmor %vm1366, %vm1367
  %v1369 = vsel %vm1368, %v1360, %v1365
  %v1370 = vrsqrt.pop %v1319
  %v1371 = vmul.f32 %v1370, %v1319
  %v1372 = vmul.f32 %v1371, %v1370
  %v1373 = vmul.f32 0.5, %v1372
  %v1374 = vsub.f32 1.5, %v1373
  %v1375 = vmul.f32 %v1370, %v1374
  %vm1376 = vweird.f32 %v1319
  %vm1377 = vweird.f32 %v1370
  %vm1378 = vmor %vm1376, %vm1377
  %v1379 = vsel %vm1378, %v1370, %v1375
  %v1380 = vmul.f32 %v1278, %v1329
  %v1381 = vmul.f32 %v1279, %v1339
  %v1382 = vmul.f32 %v1280, %v1349
  %v1383 = vmul.f32 %v1281, %v1359
  %v1384 = vmul.f32 %v1282, %v1369
  %v1385 = vmul.f32 %v1283, %v1379
  %v1387 = vperm.slane %v1004, 0
  %v1389 = vmul.f32 %v1380, %v1387
  %v1390 = vmul.f32 %v1381, %v1387
  %v1391 = vmul.f32 %v1382, %v1387
  %v1392 = vmul.f32 %v1383, %v1387
  %v1393 = vmul.f32 %v1384, %v1387
  %v1394 = vmul.f32 %v1385, %v1387
  %v1396 = vperm.slane %v1005, 0
  %v1398 = vadd.f32 %v1389, %v1396
  %v1399 = vadd.f32 %v1390, %v1396
  %v1400 = vadd.f32 %v1391, %v1396
  %v1401 = vadd.f32 %v1392, %v1396
  %v1402 = vadd.f32 %v1393, %v1396
  %v1403 = vadd.f32 %v1394, %v1396
  %v1404 = vmul.f32 %v1398, 0.5
  %v1405 = vmul.f32 %v1399, 0.5
  %v1406 = vmul.f32 %v1400, 0.5
  %v1407 = vmul.f32 %v1401, 0.5
  %v1408 = vmul.f32 %v1402, 0.5
  %v1409 = vmul.f32 %v1403, 0.5
  %v1410 = vmul.f32 %v1398, 0.70710677
  %v1411 = vmul.f32 %v1399, 0.70710677
  %v1412 = vmul.f32 %v1400, 0.70710677
  %v1413 = vmul.f32 %v1401, 0.70710677
  %v1414 = vmul.f32 %v1402, 0.70710677
  %v1415 = vmul.f32 %v1403, 0.70710677
  %v1416 = vmul.f32 %v1410, %v1410
  %v1417 = vmin.f32 16.0, %v1416
  %v1418 = vmul.f32 %v1417, 2.1237322e-06
  %v1419 = vadd.f32 %v1418, 0.00028619796
  %v1420 = vmul.f32 %v1417, %v1419
  %v1421 = vadd.f32 %v1420, 0.0036580483
  %v1422 = vmul.f32 %v1417, %v1421
  %v1423 = vadd.f32 %v1422, 0.05243302
  %v1424 = vmul.f32 %v1417, %v1423
  %v1425 = vadd.f32 %v1424, 0.18741608
  %v1426 = vmul.f32 %v1417, %v1425
  %v1427 = vadd.f32 %v1426, 1.1283791
  %v1428 = vmul.f32 %v1410, %v1427
  %v1429 = vmul.f32 %v1417, 3.8918573e-05
  %v1430 = vadd.f32 %v1429, 0.001143296
  %v1431 = vmul.f32 %v1417, %v1430
  %v1432 = vadd.f32 %v1431, 0.014752088
  %v1433 = vmul.f32 %v1417, %v1432
  %v1434 = vadd.f32 %v1433, 0.112945676
  %v1435 = vmul.f32 %v1417, %v1434
  %v1436 = vadd.f32 %v1435, 0.4994258
  %v1437 = vmul.f32 %v1417, %v1436
  %v1438 = vadd.f32 %v1437, 1.0
  %v1439 = vrcp.pop %v1438
  %v1440 = vmul.f32 %v1438, %v1439
  %v1441 = vsub.f32 1.0, %v1440
  %v1442 = vmul.f32 %v1439, %v1441
  %v1443 = vadd.f32 %v1439, %v1442
  %vm1444 = vweird.f32 %v1438
  %vm1445 = vweird.f32 %v1439
  %vm1446 = vmor %vm1444, %vm1445
  %v1447 = vsel %vm1446, %v1439, %v1443
  %v1448 = vand.u32 2147483647, %v1438
  %vm1449 = vcmp.eq.f32.partialorder %v1448, 8.507059e+37
  %v1450 = vand.u32 %v1438, 2147483648
  %v1451 = vor.u32 1.1754944e-38, %v1450
  %v1452 = vsel %vm1449, %v1451, %v1447
  %v1453 = vmul.f32 %v1428, %v1452
  %v1454 = vmin.f32 %v1453, 1.0
  %v1455 = vmax.f32 %v1454, -1.0
  %v1456 = vmul.f32 %v1411, %v1411
  %v1457 = vmin.f32 16.0, %v1456
  %v1458 = vmul.f32 %v1457, 2.1237322e-06
  %v1459 = vadd.f32 %v1458, 0.00028619796
  %v1460 = vmul.f32 %v1457, %v1459
  %v1461 = vadd.f32 %v1460, 0.0036580483
  %v1462 = vmul.f32 %v1457, %v1461
  %v1463 = vadd.f32 %v1462, 0.05243302
  %v1464 = vmul.f32 %v1457, %v1463
  %v1465 = vadd.f32 %v1464, 0.18741608
  %v1466 = vmul.f32 %v1457, %v1465
  %v1467 = vadd.f32 %v1466, 1.1283791
  %v1468 = vmul.f32 %v1411, %v1467
  %v1469 = vmul.f32 %v1457, 3.8918573e-05
  %v1470 = vadd.f32 %v1469, 0.001143296
  %v1471 = vmul.f32 %v1457, %v1470
  %v1472 = vadd.f32 %v1471, 0.014752088
  %v1473 = vmul.f32 %v1457, %v1472
  %v1474 = vadd.f32 %v1473, 0.112945676
  %v1475 = vmul.f32 %v1457, %v1474
  %v1476 = vadd.f32 %v1475, 0.4994258
  %v1477 = vmul.f32 %v1457, %v1476
  %v1478 = vadd.f32 %v1477, 1.0
  %v1479 = vrcp.pop %v1478
  %v1480 = vmul.f32 %v1478, %v1479
  %v1481 = vsub.f32 1.0, %v1480
  %v1482 = vmul.f32 %v1479, %v1481
  %v1483 = vadd.f32 %v1479, %v1482
  %vm1484 = vweird.f32 %v1478
  %vm1485 = vweird.f32 %v1479
  %vm1486 = vmor %vm1484, %vm1485
  %v1487 = vsel %vm1486, %v1479, %v1483
  %v1488 = vand.u32 2147483647, %v1478
  %vm1489 = vcmp.eq.f32.partialorder %v1488, 8.507059e+37
  %v1490 = vand.u32 %v1478, 2147483648
  %v1491 = vor.u32 1.1754944e-38, %v1490
  %v1492 = vsel %vm1489, %v1491, %v1487
  %v1493 = vmul.f32 %v1468, %v1492
  %v1494 = vmin.f32 %v1493, 1.0
  %v1495 = vmax.f32 %v1494, -1.0
  %v1496 = vmul.f32 %v1412, %v1412
  %v1497 = vmin.f32 16.0, %v1496
  %v1498 = vmul.f32 %v1497, 2.1237322e-06
  %v1499 = vadd.f32 %v1498, 0.00028619796
  %v1500 = vmul.f32 %v1497, %v1499
  %v1501 = vadd.f32 %v1500, 0.0036580483
  %v1502 = vmul.f32 %v1497, %v1501
  %v1503 = vadd.f32 %v1502, 0.05243302
  %v1504 = vmul.f32 %v1497, %v1503
  %v1505 = vadd.f32 %v1504, 0.18741608
  %v1506 = vmul.f32 %v1497, %v1505
  %v1507 = vadd.f32 %v1506, 1.1283791
  %v1508 = vmul.f32 %v1412, %v1507
  %v1509 = vmul.f32 %v1497, 3.8918573e-05
  %v1510 = vadd.f32 %v1509, 0.001143296
  %v1511 = vmul.f32 %v1497, %v1510
  %v1512 = vadd.f32 %v1511, 0.014752088
  %v1513 = vmul.f32 %v1497, %v1512
  %v1514 = vadd.f32 %v1513, 0.112945676
  %v1515 = vmul.f32 %v1497, %v1514
  %v1516 = vadd.f32 %v1515, 0.4994258
  %v1517 = vmul.f32 %v1497, %v1516
  %v1518 = vadd.f32 %v1517, 1.0
  %v1519 = vrcp.pop %v1518
  %v1520 = vmul.f32 %v1518, %v1519
  %v1521 = vsub.f32 1.0, %v1520
  %v1522 = vmul.f32 %v1519, %v1521
  %v1523 = vadd.f32 %v1519, %v1522
  %vm1524 = vweird.f32 %v1518
  %vm1525 = vweird.f32 %v1519
  %vm1526 = vmor %vm1524, %vm1525
  %v1527 = vsel %vm1526, %v1519, %v1523
  %v1528 = vand.u32 2147483647, %v1518
  %vm1529 = vcmp.eq.f32.partialorder %v1528, 8.507059e+37
  %v1530 = vand.u32 %v1518, 2147483648
  %v1531 = vor.u32 1.1754944e-38, %v1530
  %v1532 = vsel %vm1529, %v1531, %v1527
  %v1533 = vmul.f32 %v1508, %v1532
  %v1534 = vmin.f32 %v1533, 1.0
  %v1535 = vmax.f32 %v1534, -1.0
  %v1536 = vmul.f32 %v1413, %v1413
  %v1537 = vmin.f32 16.0, %v1536
  %v1538 = vmul.f32 %v1537, 2.1237322e-06
  %v1539 = vadd.f32 %v1538, 0.00028619796
  %v1540 = vmul.f32 %v1537, %v1539
  %v1541 = vadd.f32 %v1540, 0.0036580483
  %v1542 = vmul.f32 %v1537, %v1541
  %v1543 = vadd.f32 %v1542, 0.05243302
  %v1544 = vmul.f32 %v1537, %v1543
  %v1545 = vadd.f32 %v1544, 0.18741608
  %v1546 = vmul.f32 %v1537, %v1545
  %v1547 = vadd.f32 %v1546, 1.1283791
  %v1548 = vmul.f32 %v1413, %v1547
  %v1549 = vmul.f32 %v1537, 3.8918573e-05
  %v1550 = vadd.f32 %v1549, 0.001143296
  %v1551 = vmul.f32 %v1537, %v1550
  %v1552 = vadd.f32 %v1551, 0.014752088
  %v1553 = vmul.f32 %v1537, %v1552
  %v1554 = vadd.f32 %v1553, 0.112945676
  %v1555 = vmul.f32 %v1537, %v1554
  %v1556 = vadd.f32 %v1555, 0.4994258
  %v1557 = vmul.f32 %v1537, %v1556
  %v1558 = vadd.f32 %v1557, 1.0
  %v1559 = vrcp.pop %v1558
  %v1560 = vmul.f32 %v1558, %v1559
  %v1561 = vsub.f32 1.0, %v1560
  %v1562 = vmul.f32 %v1559, %v1561
  %v1563 = vadd.f32 %v1559, %v1562
  %vm1564 = vweird.f32 %v1558
  %vm1565 = vweird.f32 %v1559
  %vm1566 = vmor %vm1564, %vm1565
  %v1567 = vsel %vm1566, %v1559, %v1563
  %v1568 = vand.u32 2147483647, %v1558
  %vm1569 = vcmp.eq.f32.partialorder %v1568, 8.507059e+37
  %v1570 = vand.u32 %v1558, 2147483648
  %v1571 = vor.u32 1.1754944e-38, %v1570
  %v1572 = vsel %vm1569, %v1571, %v1567
  %v1573 = vmul.f32 %v1548, %v1572
  %v1574 = vmin.f32 %v1573, 1.0
  %v1575 = vmax.f32 %v1574, -1.0
  %v1576 = vmul.f32 %v1414, %v1414
  %v1577 = vmin.f32 16.0, %v1576
  %v1578 = vmul.f32 %v1577, 2.1237322e-06
  %v1579 = vadd.f32 %v1578, 0.00028619796
  %v1580 = vmul.f32 %v1577, %v1579
  %v1581 = vadd.f32 %v1580, 0.0036580483
  %v1582 = vmul.f32 %v1577, %v1581
  %v1583 = vadd.f32 %v1582, 0.05243302
  %v1584 = vmul.f32 %v1577, %v1583
  %v1585 = vadd.f32 %v1584, 0.18741608
  %v1586 = vmul.f32 %v1577, %v1585
  %v1587 = vadd.f32 %v1586, 1.1283791
  %v1588 = vmul.f32 %v1414, %v1587
  %v1589 = vmul.f32 %v1577, 3.8918573e-05
  %v1590 = vadd.f32 %v1589, 0.001143296
  %v1591 = vmul.f32 %v1577, %v1590
  %v1592 = vadd.f32 %v1591, 0.014752088
  %v1593 = vmul.f32 %v1577, %v1592
  %v1594 = vadd.f32 %v1593, 0.112945676
  %v1595 = vmul.f32 %v1577, %v1594
  %v1596 = vadd.f32 %v1595, 0.4994258
  %v1597 = vmul.f32 %v1577, %v1596
  %v1598 = vadd.f32 %v1597, 1.0
  %v1599 = vrcp.pop %v1598
  %v1600 = vmul.f32 %v1598, %v1599
  %v1601 = vsub.f32 1.0, %v1600
  %v1602 = vmul.f32 %v1599, %v1601
  %v1603 = vadd.f32 %v1599, %v1602
  %vm1604 = vweird.f32 %v1598
  %vm1605 = vweird.f32 %v1599
  %vm1606 = vmor %vm1604, %vm1605
  %v1607 = vsel %vm1606, %v1599, %v1603
  %v1608 = vand.u32 2147483647, %v1598
  %vm1609 = vcmp.eq.f32.partialorder %v1608, 8.507059e+37
  %v1610 = vand.u32 %v1598, 2147483648
  %v1611 = vor.u32 1.1754944e-38, %v1610
  %v1612 = vsel %vm1609, %v1611, %v1607
  %v1613 = vmul.f32 %v1588, %v1612
  %v1614 = vmin.f32 %v1613, 1.0
  %v1615 = vmax.f32 %v1614, -1.0
  %v1616 = vmul.f32 %v1415, %v1415
  %v1617 = vmin.f32 16.0, %v1616
  %v1618 = vmul.f32 %v1617, 2.1237322e-06
  %v1619 = vadd.f32 %v1618, 0.00028619796
  %v1620 = vmul.f32 %v1617, %v1619
  %v1621 = vadd.f32 %v1620, 0.0036580483
  %v1622 = vmul.f32 %v1617, %v1621
  %v1623 = vadd.f32 %v1622, 0.05243302
  %v1624 = vmul.f32 %v1617, %v1623
  %v1625 = vadd.f32 %v1624, 0.18741608
  %v1626 = vmul.f32 %v1617, %v1625
  %v1627 = vadd.f32 %v1626, 1.1283791
  %v1628 = vmul.f32 %v1415, %v1627
  %v1629 = vmul.f32 %v1617, 3.8918573e-05
  %v1630 = vadd.f32 %v1629, 0.001143296
  %v1631 = vmul.f32 %v1617, %v1630
  %v1632 = vadd.f32 %v1631, 0.014752088
  %v1633 = vmul.f32 %v1617, %v1632
  %v1634 = vadd.f32 %v1633, 0.112945676
  %v1635 = vmul.f32 %v1617, %v1634
  %v1636 = vadd.f32 %v1635, 0.4994258
  %v1637 = vmul.f32 %v1617, %v1636
  %v1638 = vadd.f32 %v1637, 1.0
  %v1639 = vrcp.pop %v1638
  %v1640 = vmul.f32 %v1638, %v1639
  %v1641 = vsub.f32 1.0, %v1640
  %v1642 = vmul.f32 %v1639, %v1641
  %v1643 = vadd.f32 %v1639, %v1642
  %vm1644 = vweird.f32 %v1638
  %vm1645 = vweird.f32 %v1639
  %vm1646 = vmor %vm1644, %vm1645
  %v1647 = vsel %vm1646, %v1639, %v1643
  %v1648 = vand.u32 2147483647, %v1638
  %vm1649 = vcmp.eq.f32.partialorder %v1648, 8.507059e+37
  %v1650 = vand.u32 %v1638, 2147483648
  %v1651 = vor.u32 1.1754944e-38, %v1650
  %v1652 = vsel %vm1649, %v1651, %v1647
  %v1653 = vmul.f32 %v1628, %v1652
  %v1654 = vmin.f32 %v1653, 1.0
  %v1655 = vmax.f32 %v1654, -1.0
  %v1656 = vadd.f32 %v1455, 1.0
  %v1657 = vadd.f32 %v1495, 1.0
  %v1658 = vadd.f32 %v1535, 1.0
  %v1659 = vadd.f32 %v1575, 1.0
  %v1660 = vadd.f32 %v1615, 1.0
  %v1661 = vadd.f32 %v1655, 1.0
  %v1662 = vmul.f32 %v1404, %v1656
  %v1663 = vmul.f32 %v1405, %v1657
  %v1664 = vmul.f32 %v1406, %v1658
  %v1665 = vmul.f32 %v1407, %v1659
  %v1666 = vmul.f32 %v1408, %v1660
  %v1667 = vmul.f32 %v1409, %v1661
  %v1668 = vsel %vm435, %v1662, 0.0
  %v1669 = vsel %vm435, %v1663, 0.0
  %v1670 = vadd.f32 %v1668, %v1669
  %v1671 = vsel %vm435, %v1664, 0.0
  %v1672 = vadd.f32 %v1670, %v1671
  %v1673 = vrot.slane %v1672, 4
  %v1674 = vadd.f32 %v1672, %v1673
  %v1675 = vrot.slane %v1674, 2
  %v1676 = vadd.f32 %v1674, %v1675
  %v1677 = vrot.slane %v1676, 1
  %v1678 = vadd.f32 %v1676, %v1677
  %v1679 = vsel %vm435, %v1665, 0.0
  %v1680 = vsel %vm435, %v1666, 0.0
  %v1681 = vadd.f32 %v1679, %v1680
  %v1682 = vsel %vm435, %v1667, 0.0
  %v1683 = vadd.f32 %v1681, %v1682
  %v1684 = vrot.slane %v1683, 4
  %v1685 = vadd.f32 %v1683, %v1684
  %v1686 = vrot.slane %v1685, 2
  %v1687 = vadd.f32 %v1685, %v1686
  %v1688 = vrot.slane %v1687, 1
  %v1689 = vadd.f32 %v1687, %v1688
  %v1690 = vrcp.pop 24.0
  %v1691 = vmul.f32 24.0, %v1690
  %v1692 = vsub.f32 1.0, %v1691
  %v1693 = vmul.f32 %v1690, %v1692
  %v1694 = vadd.f32 %v1690, %v1693
  %vm1695 = vweird.f32 %v1690
  %v1696 = vsel %vm1695, %v1690, %v1694
  %v1697 = vmul.f32 %v1678, %v1696
  %v1698 = vmul.f32 %v1689, %v1696
  %v1700 = vperm.slane %v1008, 0
  %v1704 = vsel %vm795, %v1698, %v1697
  %v1705 = vsel %vm435, %v1704, 0
  %1707 = vmatpush.msra.mxu0 0.0
  %1708 = vmatpush.msra.mxu0 0.0
  %1709 = vmatpush.msra.mxu0 0.0
  %1710 = vmatpush.msra.mxu0 0.0
  %1711 = vmatpush.msra.mxu0 0.0
  %1712 = vmatpush.msra.mxu0 0.0
  %1713 = vmatpush.msra.mxu0 0.0
  %1714 = vmatpush.msra.mxu0 0.0
  %1715 = vmatpush.msra.mxu0 0.0
  %1716 = vmatpush.msra.mxu0 0.0
  %1717 = vmatpush.msra.mxu0 0.0
  %1718 = vmatpush.msra.mxu0 0.0
  %1719 = vmatpush.msra.mxu0 0.0
  %1720 = vmatpush.msra.mxu0 0.0
  %1721 = vmatpush.msra.mxu0 %v1007
  %1722 = vmatpush.msra.mxu0 %v1006
  %1723 = vmatmul.f32.gmra.mxu0 %v1705
  %v1724 = vpop.f32.mrf.mxu0
  %v1725 = vadd.f32 %v1700, %v1724
  %1726 = vdwg.mxu0
  %v1727 = vmul.f32 %v1725, 0.5
  %v1728 = vmul.f32 %v1725, 0.70710677
  %v1729 = vmul.f32 %v1728, %v1728
  %v1730 = vmin.f32 16.0, %v1729
  %v1731 = vmul.f32 %v1730, 2.1237322e-06
  %v1732 = vadd.f32 %v1731, 0.00028619796
  %v1733 = vmul.f32 %v1730, %v1732
  %v1734 = vadd.f32 %v1733, 0.0036580483
  %v1735 = vmul.f32 %v1730, %v1734
  %v1736 = vadd.f32 %v1735, 0.05243302
  %v1737 = vmul.f32 %v1730, %v1736
  %v1738 = vadd.f32 %v1737, 0.18741608
  %v1739 = vmul.f32 %v1730, %v1738
  %v1740 = vadd.f32 %v1739, 1.1283791
  %v1741 = vmul.f32 %v1728, %v1740
  %v1742 = vmul.f32 %v1730, 3.8918573e-05
  %v1743 = vadd.f32 %v1742, 0.001143296
  %v1744 = vmul.f32 %v1730, %v1743
  %v1745 = vadd.f32 %v1744, 0.014752088
  %v1746 = vmul.f32 %v1730, %v1745
  %v1747 = vadd.f32 %v1746, 0.112945676
  %v1748 = vmul.f32 %v1730, %v1747
  %v1749 = vadd.f32 %v1748, 0.4994258
  %v1750 = vmul.f32 %v1730, %v1749
  %v1751 = vadd.f32 %v1750, 1.0
  %v1752 = vrcp.pop %v1751
  %v1753 = vmul.f32 %v1751, %v1752
  %v1754 = vsub.f32 1.0, %v1753
  %v1755 = vmul.f32 %v1752, %v1754
  %v1756 = vadd.f32 %v1752, %v1755
  %vm1757 = vweird.f32 %v1751
  %vm1758 = vweird.f32 %v1752
  %vm1759 = vmor %vm1757, %vm1758
  %v1760 = vsel %vm1759, %v1752, %v1756
  %v1761 = vand.u32 2147483647, %v1751
  %vm1762 = vcmp.eq.f32.partialorder %v1761, 8.507059e+37
  %v1763 = vand.u32 %v1751, 2147483648
  %v1764 = vor.u32 1.1754944e-38, %v1763
  %v1765 = vsel %vm1762, %v1764, %v1760
  %v1766 = vmul.f32 %v1741, %v1765
  %v1767 = vmin.f32 %v1766, 1.0
  %v1768 = vmax.f32 %v1767, -1.0
  %v1769 = vadd.f32 %v1768, 1.0
  %v1770 = vmul.f32 %v1727, %v1769
  %v1772 = vperm.slane %v1010, 0
  %v1775 = vsel %vm361, %v1770, 0
  %1777 = vmatpush.msra.mxu0 0.0
  %1778 = vmatpush.msra.mxu0 0.0
  %1779 = vmatpush.msra.mxu0 0.0
  %1780 = vmatpush.msra.mxu0 0.0
  %1781 = vmatpush.msra.mxu0 0.0
  %1782 = vmatpush.msra.mxu0 0.0
  %1783 = vmatpush.msra.mxu0 0.0
  %1784 = vmatpush.msra.mxu0 0.0
  %1785 = vmatpush.msra.mxu0 0.0
  %1786 = vmatpush.msra.mxu0 0.0
  %1787 = vmatpush.msra.mxu0 0.0
  %1788 = vmatpush.msra.mxu0 0.0
  %1789 = vmatpush.msra.mxu0 0.0
  %1790 = vmatpush.msra.mxu0 0.0
  %1791 = vmatpush.msra.mxu0 0.0
  %1792 = vmatpush.msra.mxu0 %v1009
  %1793 = vmatmul.f32.gmra.mxu0 %v1775
  %v1794 = vpop.f32.mrf.mxu0
  %v1795 = vadd.f32 %v1772, %v1794
  %1796 = vdwg.mxu0
  %v1797 = vxor.u32 %v1795, 2147483648
  %v1798 = vmul.f32 %v1797, 1.442695
  %v1799 = vpow.pop %v1798
  %v1800 = vadd.f32 %v1799, 1.0
  %v1801 = vrcp.pop %v1800
  %v1802 = vmul.f32 %v1800, %v1801
  %v1803 = vsub.f32 1.0, %v1802
  %v1804 = vmul.f32 %v1801, %v1803
  %v1805 = vadd.f32 %v1801, %v1804
  %vm1806 = vweird.f32 %v1800
  %vm1807 = vweird.f32 %v1801
  %vm1808 = vmor %vm1806, %vm1807
  %v1809 = vsel %vm1808, %v1801, %v1805
  %v1810 = vand.u32 2147483647, %v1800
  %vm1811 = vcmp.eq.f32.partialorder %v1810, 8.507059e+37
  %v1812 = vand.u32 %v1800, 2147483648
  %v1813 = vor.u32 1.1754944e-38, %v1812
  %v1814 = vsel %vm1811, %v1813, %v1809
  %v1815 = vmul.f32 1.0, %v1814
  %v1817 = vrot.slane %v1815, 1
  %v1818 = vperm.slane %v1815, 0
  %v1819 = vperm.slane %v1817, 0
  %v1822 = vmul.f32 %v1662, %v1818
  %v1823 = vmul.f32 %v1663, %v1818
  %v1824 = vmul.f32 %v1664, %v1818
  %v1825 = vmul.f32 %v1665, %v1819
  %v1826 = vmul.f32 %v1666, %v1819
  %v1827 = vmul.f32 %v1667, %v1819
  %v1828 = vsel %vm435, %v1822, 0.0
  %v1829 = vsel %vm435, %v1823, 0.0
  %v1830 = vadd.f32 %v1828, %v1829
  %v1831 = vsel %vm435, %v1824, 0.0
  %v1832 = vadd.f32 %v1830, %v1831
  %v1833 = vrot.slane %v1832, 4
  %v1834 = vadd.f32 %v1832, %v1833
  %v1835 = vrot.slane %v1834, 2
  %v1836 = vadd.f32 %v1834, %v1835
  %v1837 = vrot.slane %v1836, 1
  %v1838 = vadd.f32 %v1836, %v1837
  %v1839 = vsel %vm435, %v1825, 0.0
  %v1840 = vsel %vm435, %v1826, 0.0
  %v1841 = vadd.f32 %v1839, %v1840
  %v1842 = vsel %vm435, %v1827, 0.0
  %v1843 = vadd.f32 %v1841, %v1842
  %v1844 = vrot.slane %v1843, 4
  %v1845 = vadd.f32 %v1843, %v1844
  %v1846 = vrot.slane %v1845, 2
  %v1847 = vadd.f32 %v1845, %v1846
  %v1848 = vrot.slane %v1847, 1
  %v1849 = vadd.f32 %v1847, %v1848
  %v1850 = vmul.f32 %v1838, %v1696
  %v1851 = vmul.f32 %v1849, %v1696
  %v1852 = vsub.f32 %v1822, %v1850
  %v1853 = vsub.f32 %v1823, %v1850
  %v1854 = vsub.f32 %v1824, %v1850
  %v1855 = vsub.f32 %v1825, %v1851
  %v1856 = vsub.f32 %v1826, %v1851
  %v1857 = vsub.f32 %v1827, %v1851
  %v1858 = vmul.f32 %v1852, %v1852
  %v1859 = vmul.f32 %v1853, %v1853
  %v1860 = vmul.f32 %v1854, %v1854
  %v1861 = vmul.f32 %v1855, %v1855
  %v1862 = vmul.f32 %v1856, %v1856
  %v1863 = vmul.f32 %v1857, %v1857
  %v1864 = vsel %vm435, %v1858, 0.0
  %v1865 = vsel %vm435, %v1859, 0.0
  %v1866 = vadd.f32 %v1864, %v1865
  %v1867 = vsel %vm435, %v1860, 0.0
  %v1868 = vadd.f32 %v1866, %v1867
  %v1869 = vrot.slane %v1868, 4
  %v1870 = vadd.f32 %v1868, %v1869
  %v1871 = vrot.slane %v1870, 2
  %v1872 = vadd.f32 %v1870, %v1871
  %v1873 = vrot.slane %v1872, 1
  %v1874 = vadd.f32 %v1872, %v1873
  %v1875 = vsel %vm435, %v1861, 0.0
  %v1876 = vsel %vm435, %v1862, 0.0
  %v1877 = vadd.f32 %v1875, %v1876
  %v1878 = vsel %vm435, %v1863, 0.0
  %v1879 = vadd.f32 %v1877, %v1878
  %v1880 = vrot.slane %v1879, 4
  %v1881 = vadd.f32 %v1879, %v1880
  %v1882 = vrot.slane %v1881, 2
  %v1883 = vadd.f32 %v1881, %v1882
  %v1884 = vrot.slane %v1883, 1
  %v1885 = vadd.f32 %v1883, %v1884
  %v1886 = vmul.f32 %v1874, %v1696
  %v1887 = vmul.f32 %v1885, %v1696
  %v1888 = vadd.f32 %v1886, 1e-05
  %v1889 = vadd.f32 %v1887, 1e-05
  %v1890 = vrsqrt.pop %v1888
  %v1891 = vmul.f32 %v1890, %v1888
  %v1892 = vmul.f32 %v1891, %v1890
  %v1893 = vmul.f32 0.5, %v1892
  %v1894 = vsub.f32 1.5, %v1893
  %v1895 = vmul.f32 %v1890, %v1894
  %vm1896 = vweird.f32 %v1888
  %vm1897 = vweird.f32 %v1890
  %vm1898 = vmor %vm1896, %vm1897
  %v1899 = vsel %vm1898, %v1890, %v1895
  %v1900 = vrsqrt.pop %v1889
  %v1901 = vmul.f32 %v1900, %v1889
  %v1902 = vmul.f32 %v1901, %v1900
  %v1903 = vmul.f32 0.5, %v1902
  %v1904 = vsub.f32 1.5, %v1903
  %v1905 = vmul.f32 %v1900, %v1904
  %vm1906 = vweird.f32 %v1889
  %vm1907 = vweird.f32 %v1900
  %vm1908 = vmor %vm1906, %vm1907
  %v1909 = vsel %vm1908, %v1900, %v1905
  %v1910 = vmul.f32 %v1852, %v1899
  %v1911 = vmul.f32 %v1853, %v1899
  %v1912 = vmul.f32 %v1854, %v1899
  %v1913 = vmul.f32 %v1855, %v1909
  %v1914 = vmul.f32 %v1856, %v1909
  %v1915 = vmul.f32 %v1857, %v1909
  %v1916 = vld [vmem:[%s37] sm:$0xff]
  %v1917 = vld [vmem:[%s37 + $0x8] sm:$0xff]
  %v1918 = vld [vmem:[%s39] sm:$0x1]
  %v1919 = vld [vmem:[%s41] sm:$0xff]
  %v1920 = vld [vmem:[%s41 + $0x8] sm:$0xff]
  %v1921 = vld [vmem:[%s43] sm:$0x1]
  %v1922 = vld [vmem:[%s45] sm:$0xff]
  %v1923 = vld [vmem:[%s45 + $0x8] sm:$0xff]
  %v1924 = vld [vmem:[%s47] sm:$0x1]
  %v1925 = vld [vmem:[%s49] sm:$0xff]
  %v1926 = vld [vmem:[%s51] sm:$0x1]
  %v1928 = vperm.slane %v1918, 0
  %v1931 = vsel %vm435, %v988, 0
  %v1934 = vsel %vm435, %v989, 0
  %v1937 = vsel %vm435, %v990, 0
  %v1940 = vsel %vm435, %v991, 0
  %1942 = vmatpush.msra.mxu0 0.0
  %1943 = vmatpush.msra.mxu0 0.0
  %1944 = vmatpush.msra.mxu0 0.0
  %1945 = vmatpush.msra.mxu0 0.0
  %1946 = vmatpush.msra.mxu0 0.0
  %1947 = vmatpush.msra.mxu0 0.0
  %1948 = vmatpush.msra.mxu0 0.0
  %1949 = vmatpush.msra.mxu0 0.0
  %1950 = vmatpush.msra.mxu0 0.0
  %1951 = vmatpush.msra.mxu0 0.0
  %1952 = vmatpush.msra.mxu0 0.0
  %1953 = vmatpush.msra.mxu0 0.0
  %1954 = vmatpush.msra.mxu0 0.0
  %1955 = vmatpush.msra.mxu0 0.0
  %1956 = vmatpush.msra.mxu0 %v1917
  %1957 = vmatpush.msra.mxu0 %v1916
  %1958 = vmatmul.f32.gmra.mxu0 %v1931
  %v1959 = vpop.f32.mrf.mxu0
  %v1960 = vadd.f32 %v1928, %v1959
  %1961 = vmatmul.f32.gmra.mxu0 %v1934
  %v1962 = vpop.f32.mrf.mxu0
  %v1963 = vadd.f32 %v1928, %v1962
  %1964 = vmatmul.f32.gmra.mxu0 %v1937
  %v1965 = vpop.f32.mrf.mxu0
  %v1966 = vadd.f32 %v1928, %v1965
  %1967 = vmatmul.f32.gmra.mxu0 %v1940
  %v1968 = vpop.f32.mrf.mxu0
  %v1969 = vadd.f32 %v1928, %v1968
  %1970 = vdwg.mxu0
  %v1972 = vperm.slane %v1921, 0
  %v1975 = vsel %vm435, %v1910, 0
  %v1978 = vsel %vm435, %v1911, 0
  %v1981 = vsel %vm435, %v1912, 0
  %v1984 = vsel %vm435, %v1913, 0
  %v1987 = vsel %vm435, %v1914, 0
  %v1990 = vsel %vm435, %v1915, 0
  %1992 = vmatpush.msra.mxu0 0.0
  %1993 = vmatpush.msra.mxu0 0.0
  %1994 = vmatpush.msra.mxu0 0.0
  %1995 = vmatpush.msra.mxu0 0.0
  %1996 = vmatpush.msra.mxu0 0.0
  %1997 = vmatpush.msra.mxu0 0.0
  %1998 = vmatpush.msra.mxu0 0.0
  %1999 = vmatpush.msra.mxu0 0.0
  %2000 = vmatpush.msra.mxu0 0.0
  %2001 = vmatpush.msra.mxu0 0.0
  %2002 = vmatpush.msra.mxu0 0.0
  %2003 = vmatpush.msra.mxu0 0.0
  %2004 = vmatpush.msra.mxu0 0.0
  %2005 = vmatpush.msra.mxu0 0.0
  %2006 = vmatpush.msra.mxu0 %v1920
  %2007 = vmatpush.msra.mxu0 %v1919
  %2008 = vmatmul.f32.gmra.mxu0 %v1975
  %v2009 = vpop.f32.mrf.mxu0
  %v2010 = vadd.f32 %v1972, %v2009
  %2011 = vmatmul.f32.gmra.mxu0 %v1978
  %v2012 = vpop.f32.mrf.mxu0
  %v2013 = vadd.f32 %v1972, %v2012
  %2014 = vmatmul.f32.gmra.mxu0 %v1981
  %v2015 = vpop.f32.mrf.mxu0
  %v2016 = vadd.f32 %v1972, %v2015
  %2017 = vmatmul.f32.gmra.mxu0 %v1984
  %v2018 = vpop.f32.mrf.mxu0
  %v2019 = vadd.f32 %v1972, %v2018
  %2020 = vmatmul.f32.gmra.mxu0 %v1987
  %v2021 = vpop.f32.mrf.mxu0
  %v2022 = vadd.f32 %v1972, %v2021
  %2023 = vmatmul.f32.gmra.mxu0 %v1990
  %v2024 = vpop.f32.mrf.mxu0
  %v2025 = vadd.f32 %v1972, %v2024
  %2026 = vdwg.mxu0
  %v2031 = vrot.slane %v1960, 1
  %v2032 = vrot.slane %v1960, 2
  %v2033 = vrot.slane %v1960, 3
  %v2034 = vrot.slane %v1960, 4
  %v2035 = vrot.slane %v1960, 5
  %v2036 = vrot.slane %v1960, 6
  %v2037 = vrot.slane %v1960, 7
  %v2038 = vrot.slane %v1963, 1
  %v2039 = vrot.slane %v1963, 2
  %v2040 = vrot.slane %v1963, 3
  %v2041 = vrot.slane %v1963, 4
  %v2042 = vrot.slane %v1963, 5
  %v2043 = vrot.slane %v1963, 6
  %v2044 = vrot.slane %v1963, 7
  %v2045 = vrot.slane %v1966, 1
  %v2046 = vrot.slane %v1966, 2
  %v2047 = vrot.slane %v1966, 3
  %v2048 = vrot.slane %v1966, 4
  %v2049 = vrot.slane %v1966, 5
  %v2050 = vrot.slane %v1966, 6
  %v2051 = vrot.slane %v1966, 7
  %v2052 = vrot.slane %v1969, 1
  %v2053 = vrot.slane %v1969, 2
  %v2054 = vrot.slane %v1969, 3
  %v2055 = vrot.slane %v1969, 4
  %v2056 = vrot.slane %v1969, 5
  %v2057 = vrot.slane %v1969, 6
  %v2058 = vrot.slane %v1969, 7
  %v2059 = vperm.slane %v1960, 0
  %v2060 = vperm.slane %v2031, 0
  %v2061 = vperm.slane %v2032, 0
  %v2062 = vperm.slane %v2033, 0
  %v2063 = vperm.slane %v2034, 0
  %v2064 = vperm.slane %v2035, 0
  %v2065 = vperm.slane %v2036, 0
  %v2066 = vperm.slane %v2037, 0
  %v2067 = vperm.slane %v1963, 0
  %v2068 = vperm.slane %v2038, 0
  %v2069 = vperm.slane %v2039, 0
  %v2070 = vperm.slane %v2040, 0
  %v2071 = vperm.slane %v2041, 0
  %v2072 = vperm.slane %v2042, 0
  %v2073 = vperm.slane %v2043, 0
  %v2074 = vperm.slane %v2044, 0
  %v2075 = vperm.slane %v1966, 0
  %v2076 = vperm.slane %v2045, 0
  %v2077 = vperm.slane %v2046, 0
  %v2078 = vperm.slane %v2047, 0
  %v2079 = vperm.slane %v2048, 0
  %v2080 = vperm.slane %v2049, 0
  %v2081 = vperm.slane %v2050, 0
  %v2082 = vperm.slane %v2051, 0
  %v2083 = vperm.slane %v1969, 0
  %v2084 = vperm.slane %v2052, 0
  %v2085 = vperm.slane %v2053, 0
  %v2086 = vperm.slane %v2054, 0
  %v2087 = vperm.slane %v2055, 0
  %v2088 = vperm.slane %v2056, 0
  %v2089 = vperm.slane %v2057, 0
  %v2090 = vperm.slane %v2058, 0
  %v2123 = vadd.f32 %v2059, %v2010
  %v2124 = vadd.f32 %v2059, %v2013
  %v2125 = vadd.f32 %v2059, %v2016
  %v2126 = vadd.f32 %v2060, %v2010
  %v2127 = vadd.f32 %v2060, %v2013
  %v2128 = vadd.f32 %v2060, %v2016
  %v2129 = vadd.f32 %v2061, %v2010
  %v2130 = vadd.f32 %v2061, %v2013
  %v2131 = vadd.f32 %v2061, %v2016
  %v2132 = vadd.f32 %v2062, %v2010
  %v2133 = vadd.f32 %v2062, %v2013
  %v2134 = vadd.f32 %v2062, %v2016
  %v2135 = vadd.f32 %v2063, %v2010
  %v2136 = vadd.f32 %v2063, %v2013
  %v2137 = vadd.f32 %v2063, %v2016
  %v2138 = vadd.f32 %v2064, %v2010
  %v2139 = vadd.f32 %v2064, %v2013
  %v2140 = vadd.f32 %v2064, %v2016
  %v2141 = vadd.f32 %v2065, %v2010
  %v2142 = vadd.f32 %v2065, %v2013
  %v2143 = vadd.f32 %v2065, %v2016
  %v2144 = vadd.f32 %v2066, %v2010
  %v2145 = vadd.f32 %v2066, %v2013
  %v2146 = vadd.f32 %v2066, %v2016
  %v2147 = vadd.f32 %v2067, %v2010
  %v2148 = vadd.f32 %v2067, %v2013
  %v2149 = vadd.f32 %v2067, %v2016
  %v2150 = vadd.f32 %v2068, %v2010
  %v2151 = vadd.f32 %v2068, %v2013
  %v2152 = vadd.f32 %v2068, %v2016
  %v2153 = vadd.f32 %v2069, %v2010
  %v2154 = vadd.f32 %v2069, %v2013
  %v2155 = vadd.f32 %v2069, %v2016
  %v2156 = vadd.f32 %v2070, %v2010
  %v2157 = vadd.f32 %v2070, %v2013
  %v2158 = vadd.f32 %v2070, %v2016
  %v2159 = vadd.f32 %v2071, %v2010
  %v2160 = vadd.f32 %v2071, %v2013
  %v2161 = vadd.f32 %v2071, %v2016
  %v2162 = vadd.f32 %v2072, %v2010
  %v2163 = vadd.f32 %v2072, %v2013
  %v2164 = vadd.f32 %v2072, %v2016
  %v2165 = vadd.f32 %v2073, %v2010
  %v2166 = vadd.f32 %v2073, %v2013
  %v2167 = vadd.f32 %v2073, %v2016
  %v2168 = vadd.f32 %v2074, %v2010
  %v2169 = vadd.f32 %v2074, %v2013
  %v2170 = vadd.f32 %v2074, %v2016
  %v2171 = vadd.f32 %v2075, %v2019
  %v2172 = vadd.f32 %v2075, %v2022
  %v2173 = vadd.f32 %v2075, %v2025
  %v2174 = vadd.f32 %v2076, %v2019
  %v2175 = vadd.f32 %v2076, %v2022
  %v2176 = vadd.f32 %v2076, %v2025
  %v2177 = vadd.f32 %v2077, %v2019
  %v2178 = vadd.f32 %v2077, %v2022
  %v2179 = vadd.f32 %v2077, %v2025
  %v2180 = vadd.f32 %v2078, %v2019
  %v2181 = vadd.f32 %v2078, %v2022
  %v2182 = vadd.f32 %v2078, %v2025
  %v2183 = vadd.f32 %v2079, %v2019
  %v2184 = vadd.f32 %v2079, %v2022
  %v2185 = vadd.f32 %v2079, %v2025
  %v2186 = vadd.f32 %v2080, %v2019
  %v2187 = vadd.f32 %v2080, %v2022
  %v2188 = vadd.f32 %v2080, %v2025
  %v2189 = vadd.f32 %v2081, %v2019
  %v2190 = vadd.f32 %v2081, %v2022
  %v2191 = vadd.f32 %v2081, %v2025
  %v2192 = vadd.f32 %v2082, %v2019
  %v2193 = vadd.f32 %v2082, %v2022
  %v2194 = vadd.f32 %v2082, %v2025
  %v2195 = vadd.f32 %v2083, %v2019
  %v2196 = vadd.f32 %v2083, %v2022
  %v2197 = vadd.f32 %v2083, %v2025
  %v2198 = vadd.f32 %v2084, %v2019
  %v2199 = vadd.f32 %v2084, %v2022
  %v2200 = vadd.f32 %v2084, %v2025
  %v2201 = vadd.f32 %v2085, %v2019
  %v2202 = vadd.f32 %v2085, %v2022
  %v2203 = vadd.f32 %v2085, %v2025
  %v2204 = vadd.f32 %v2086, %v2019
  %v2205 = vadd.f32 %v2086, %v2022
  %v2206 = vadd.f32 %v2086, %v2025
  %v2207 = vadd.f32 %v2087, %v2019
  %v2208 = vadd.f32 %v2087, %v2022
  %v2209 = vadd.f32 %v2087, %v2025
  %v2210 = vadd.f32 %v2088, %v2019
  %v2211 = vadd.f32 %v2088, %v2022
  %v2212 = vadd.f32 %v2088, %v2025
  %v2213 = vadd.f32 %v2089, %v2019
  %v2214 = vadd.f32 %v2089, %v2022
  %v2215 = vadd.f32 %v2089, %v2025
  %v2216 = vadd.f32 %v2090, %v2019
  %v2217 = vadd.f32 %v2090, %v2022
  %v2218 = vadd.f32 %v2090, %v2025
  %v2219 = vmax.f32 %v2123, 0.0
  %v2220 = vmax.f32 %v2124, 0.0
  %v2221 = vmax.f32 %v2125, 0.0
  %v2222 = vmax.f32 %v2126, 0.0
  %v2223 = vmax.f32 %v2127, 0.0
  %v2224 = vmax.f32 %v2128, 0.0
  %v2225 = vmax.f32 %v2129, 0.0
  %v2226 = vmax.f32 %v2130, 0.0
  %v2227 = vmax.f32 %v2131, 0.0
  %v2228 = vmax.f32 %v2132, 0.0
  %v2229 = vmax.f32 %v2133, 0.0
  %v2230 = vmax.f32 %v2134, 0.0
  %v2231 = vmax.f32 %v2135, 0.0
  %v2232 = vmax.f32 %v2136, 0.0
  %v2233 = vmax.f32 %v2137, 0.0
  %v2234 = vmax.f32 %v2138, 0.0
  %v2235 = vmax.f32 %v2139, 0.0
  %v2236 = vmax.f32 %v2140, 0.0
  %v2237 = vmax.f32 %v2141, 0.0
  %v2238 = vmax.f32 %v2142, 0.0
  %v2239 = vmax.f32 %v2143, 0.0
  %v2240 = vmax.f32 %v2144, 0.0
  %v2241 = vmax.f32 %v2145, 0.0
  %v2242 = vmax.f32 %v2146, 0.0
  %v2243 = vmax.f32 %v2147, 0.0
  %v2244 = vmax.f32 %v2148, 0.0
  %v2245 = vmax.f32 %v2149, 0.0
  %v2246 = vmax.f32 %v2150, 0.0
  %v2247 = vmax.f32 %v2151, 0.0
  %v2248 = vmax.f32 %v2152, 0.0
  %v2249 = vmax.f32 %v2153, 0.0
  %v2250 = vmax.f32 %v2154, 0.0
  %v2251 = vmax.f32 %v2155, 0.0
  %v2252 = vmax.f32 %v2156, 0.0
  %v2253 = vmax.f32 %v2157, 0.0
  %v2254 = vmax.f32 %v2158, 0.0
  %v2255 = vmax.f32 %v2159, 0.0
  %v2256 = vmax.f32 %v2160, 0.0
  %v2257 = vmax.f32 %v2161, 0.0
  %v2258 = vmax.f32 %v2162, 0.0
  %v2259 = vmax.f32 %v2163, 0.0
  %v2260 = vmax.f32 %v2164, 0.0
  %v2261 = vmax.f32 %v2165, 0.0
  %v2262 = vmax.f32 %v2166, 0.0
  %v2263 = vmax.f32 %v2167, 0.0
  %v2264 = vmax.f32 %v2168, 0.0
  %v2265 = vmax.f32 %v2169, 0.0
  %v2266 = vmax.f32 %v2170, 0.0
  %v2267 = vmax.f32 %v2171, 0.0
  %v2268 = vmax.f32 %v2172, 0.0
  %v2269 = vmax.f32 %v2173, 0.0
  %v2270 = vmax.f32 %v2174, 0.0
  %v2271 = vmax.f32 %v2175, 0.0
  %v2272 = vmax.f32 %v2176, 0.0
  %v2273 = vmax.f32 %v2177, 0.0
  %v2274 = vmax.f32 %v2178, 0.0
  %v2275 = vmax.f32 %v2179, 0.0
  %v2276 = vmax.f32 %v2180, 0.0
  %v2277 = vmax.f32 %v2181, 0.0
  %v2278 = vmax.f32 %v2182, 0.0
  %v2279 = vmax.f32 %v2183, 0.0
  %v2280 = vmax.f32 %v2184, 0.0
  %v2281 = vmax.f32 %v2185, 0.0
  %v2282 = vmax.f32 %v2186, 0.0
  %v2283 = vmax.f32 %v2187, 0.0
  %v2284 = vmax.f32 %v2188, 0.0
  %v2285 = vmax.f32 %v2189, 0.0
  %v2286 = vmax.f32 %v2190, 0.0
  %v2287 = vmax.f32 %v2191, 0.0
  %v2288 = vmax.f32 %v2192, 0.0
  %v2289 = vmax.f32 %v2193, 0.0
  %v2290 = vmax.f32 %v2194, 0.0
  %v2291 = vmax.f32 %v2195, 0.0
  %v2292 = vmax.f32 %v2196, 0.0
  %v2293 = vmax.f32 %v2197, 0.0
  %v2294 = vmax.f32 %v2198, 0.0
  %v2295 = vmax.f32 %v2199, 0.0
  %v2296 = vmax.f32 %v2200, 0.0
  %v2297 = vmax.f32 %v2201, 0.0
  %v2298 = vmax.f32 %v2202, 0.0
  %v2299 = vmax.f32 %v2203, 0.0
  %v2300 = vmax.f32 %v2204, 0.0
  %v2301 = vmax.f32 %v2205, 0.0
  %v2302 = vmax.f32 %v2206, 0.0
  %v2303 = vmax.f32 %v2207, 0.0
  %v2304 = vmax.f32 %v2208, 0.0
  %v2305 = vmax.f32 %v2209, 0.0
  %v2306 = vmax.f32 %v2210, 0.0
  %v2307 = vmax.f32 %v2211, 0.0
  %v2308 = vmax.f32 %v2212, 0.0
  %v2309 = vmax.f32 %v2213, 0.0
  %v2310 = vmax.f32 %v2214, 0.0
  %v2311 = vmax.f32 %v2215, 0.0
  %v2312 = vmax.f32 %v2216, 0.0
  %v2313 = vmax.f32 %v2217, 0.0
  %v2314 = vmax.f32 %v2218, 0.0
  %v2316 = vperm.slane %v1924, 0
  %v2319 = vsel %vm435, %v2219, 0
  %v2322 = vsel %vm435, %v2220, 0
  %v2325 = vsel %vm435, %v2221, 0
  %v2328 = vsel %vm435, %v2222, 0
  %v2331 = vsel %vm435, %v2223, 0
  %v2334 = vsel %vm435, %v2224, 0
  %v2337 = vsel %vm435, %v2225, 0
  %v2340 = vsel %vm435, %v2226, 0
  %v2343 = vsel %vm435, %v2227, 0
  %v2346 = vsel %vm435, %v2228, 0
  %v2349 = vsel %vm435, %v2229, 0
  %v2352 = vsel %vm435, %v2230, 0
  %v2355 = vsel %vm435, %v2231, 0
  %v2358 = vsel %vm435, %v2232, 0
  %v2361 = vsel %vm435, %v2233, 0
  %v2364 = vsel %vm435, %v2234, 0
  %v2367 = vsel %vm435, %v2235, 0
  %v2370 = vsel %vm435, %v2236, 0
  %v2373 = vsel %vm435, %v2237, 0
  %v2376 = vsel %vm435, %v2238, 0
  %v2379 = vsel %vm435, %v2239, 0
  %v2382 = vsel %vm435, %v2240, 0
  %v2385 = vsel %vm435, %v2241, 0
  %v2388 = vsel %vm435, %v2242, 0
  %v2391 = vsel %vm435, %v2243, 0
  %v2394 = vsel %vm435, %v2244, 0
  %v2397 = vsel %vm435, %v2245, 0
  %v2400 = vsel %vm435, %v2246, 0
  %v2403 = vsel %vm435, %v2247, 0
  %v2406 = vsel %vm435, %v2248, 0
  %v2409 = vsel %vm435, %v2249, 0
  %v2412 = vsel %vm435, %v2250, 0
  %v2415 = vsel %vm435, %v2251, 0
  %v2418 = vsel %vm435, %v2252, 0
  %v2421 = vsel %vm435, %v2253, 0
  %v2424 = vsel %vm435, %v2254, 0
  %v2427 = vsel %vm435, %v2255, 0
  %v2430 = vsel %vm435, %v2256, 0
  %v2433 = vsel %vm435, %v2257, 0
  %v2436 = vsel %vm435, %v2258, 0
  %v2439 = vsel %vm435, %v2259, 0
  %v2442 = vsel %vm435, %v2260, 0
  %v2445 = vsel %vm435, %v2261, 0
  %v2448 = vsel %vm435, %v2262, 0
  %v2451 = vsel %vm435, %v2263, 0
  %v2454 = vsel %vm435, %v2264, 0
  %v2457 = vsel %vm435, %v2265, 0
  %v2460 = vsel %vm435, %v2266, 0
  %v2463 = vsel %vm435, %v2267, 0
  %v2466 = vsel %vm435, %v2268, 0
  %v2469 = vsel %vm435, %v2269, 0
  %v2472 = vsel %vm435, %v2270, 0
  %v2475 = vsel %vm435, %v2271, 0
  %v2478 = vsel %vm435, %v2272, 0
  %v2481 = vsel %vm435, %v2273, 0
  %v2484 = vsel %vm435, %v2274, 0
  %v2487 = vsel %vm435, %v2275, 0
  %v2490 = vsel %vm435, %v2276, 0
  %v2493 = vsel %vm435, %v2277, 0
  %v2496 = vsel %vm435, %v2278, 0
  %v2499 = vsel %vm435, %v2279, 0
  %v2502 = vsel %vm435, %v2280, 0
  %v2505 = vsel %vm435, %v2281, 0
  %v2508 = vsel %vm435, %v2282, 0
  %v2511 = vsel %vm435, %v2283, 0
  %v2514 = vsel %vm435, %v2284, 0
  %v2517 = vsel %vm435, %v2285, 0
  %v2520 = vsel %vm435, %v2286, 0
  %v2523 = vsel %vm435, %v2287, 0
  %v2526 = vsel %vm435, %v2288, 0
  %v2529 = vsel %vm435, %v2289, 0
  %v2532 = vsel %vm435, %v2290, 0
  %v2535 = vsel %vm435, %v2291, 0
  %v2538 = vsel %vm435, %v2292, 0
  %v2541 = vsel %vm435, %v2293, 0
  %v2544 = vsel %vm435, %v2294, 0
  %v2547 = vsel %vm435, %v2295, 0
  %v2550 = vsel %vm435, %v2296, 0
  %v2553 = vsel %vm435, %v2297, 0
  %v2556 = vsel %vm435, %v2298, 0
  %v2559 = vsel %vm435, %v2299, 0
  %v2562 = vsel %vm435, %v2300, 0
  %v2565 = vsel %vm435, %v2301, 0
  %v2568 = vsel %vm435, %v2302, 0
  %v2571 = vsel %vm435, %v2303, 0
  %v2574 = vsel %vm435, %v2304, 0
  %v2577 = vsel %vm435, %v2305, 0
  %v2580 = vsel %vm435, %v2306, 0
  %v2583 = vsel %vm435, %v2307, 0
  %v2586 = vsel %vm435, %v2308, 0
  %v2589 = vsel %vm435, %v2309, 0
  %v2592 = vsel %vm435, %v2310, 0
  %v2595 = vsel %vm435, %v2311, 0
  %v2598 = vsel %vm435, %v2312, 0
  %v2601 = vsel %vm435, %v2313, 0
  %v2604 = vsel %vm435, %v2314, 0
  %2606 = vmatpush.msra.mxu0 0.0
  %2607 = vmatpush.msra.mxu0 0.0
  %2608 = vmatpush.msra.mxu0 0.0
  %2609 = vmatpush.msra.mxu0 0.0
  %2610 = vmatpush.msra.mxu0 0.0
  %2611 = vmatpush.msra.mxu0 0.0
  %2612 = vmatpush.msra.mxu0 0.0
  %2613 = vmatpush.msra.mxu0 0.0
  %2614 = vmatpush.msra.mxu0 0.0
  %2615 = vmatpush.msra.mxu0 0.0
  %2616 = vmatpush.msra.mxu0 0.0
  %2617 = vmatpush.msra.mxu0 0.0
  %2618 = vmatpush.msra.mxu0 0.0
  %2619 = vmatpush.msra.mxu0 0.0
  %2620 = vmatpush.msra.mxu0 %v1923
  %2621 = vmatpush.msra.mxu0 %v1922
  %2622 = vmatmul.f32.gmra.mxu0 %v2319
  %v2623 = vpop.f32.mrf.mxu0
  %v2624 = vadd.f32 %v2316, %v2623
  %2625 = vmatmul.f32.gmra.mxu0 %v2322
  %v2626 = vpop.f32.mrf.mxu0
  %v2627 = vadd.f32 %v2316, %v2626
  %2628 = vmatmul.f32.gmra.mxu0 %v2325
  %v2629 = vpop.f32.mrf.mxu0
  %v2630 = vadd.f32 %v2316, %v2629
  %2631 = vmatmul.f32.gmra.mxu0 %v2328
  %v2632 = vpop.f32.mrf.mxu0
  %v2633 = vadd.f32 %v2316, %v2632
  %2634 = vmatmul.f32.gmra.mxu0 %v2331
  %v2635 = vpop.f32.mrf.mxu0
  %v2636 = vadd.f32 %v2316, %v2635
  %2637 = vmatmul.f32.gmra.mxu0 %v2334
  %v2638 = vpop.f32.mrf.mxu0
  %v2639 = vadd.f32 %v2316, %v2638
  %2640 = vmatmul.f32.gmra.mxu0 %v2337
  %v2641 = vpop.f32.mrf.mxu0
  %v2642 = vadd.f32 %v2316, %v2641
  %2643 = vmatmul.f32.gmra.mxu0 %v2340
  %v2644 = vpop.f32.mrf.mxu0
  %v2645 = vadd.f32 %v2316, %v2644
  %2646 = vmatmul.f32.gmra.mxu0 %v2343
  %v2647 = vpop.f32.mrf.mxu0
  %v2648 = vadd.f32 %v2316, %v2647
  %2649 = vmatmul.f32.gmra.mxu0 %v2346
  %v2650 = vpop.f32.mrf.mxu0
  %v2651 = vadd.f32 %v2316, %v2650
  %2652 = vmatmul.f32.gmra.mxu0 %v2349
  %v2653 = vpop.f32.mrf.mxu0
  %v2654 = vadd.f32 %v2316, %v2653
  %2655 = vmatmul.f32.gmra.mxu0 %v2352
  %v2656 = vpop.f32.mrf.mxu0
  %v2657 = vadd.f32 %v2316, %v2656
  %2658 = vmatmul.f32.gmra.mxu0 %v2355
  %v2659 = vpop.f32.mrf.mxu0
  %v2660 = vadd.f32 %v2316, %v2659
  %2661 = vmatmul.f32.gmra.mxu0 %v2358
  %v2662 = vpop.f32.mrf.mxu0
  %v2663 = vadd.f32 %v2316, %v2662
  %2664 = vmatmul.f32.gmra.mxu0 %v2361
  %v2665 = vpop.f32.mrf.mxu0
  %v2666 = vadd.f32 %v2316, %v2665
  %2667 = vmatmul.f32.gmra.mxu0 %v2364
  %v2668 = vpop.f32.mrf.mxu0
  %v2669 = vadd.f32 %v2316, %v2668
  %2670 = vmatmul.f32.gmra.mxu0 %v2367
  %v2671 = vpop.f32.mrf.mxu0
  %v2672 = vadd.f32 %v2316, %v2671
  %2673 = vmatmul.f32.gmra.mxu0 %v2370
  %v2674 = vpop.f32.mrf.mxu0
  %v2675 = vadd.f32 %v2316, %v2674
  %2676 = vmatmul.f32.gmra.mxu0 %v2373
  %v2677 = vpop.f32.mrf.mxu0
  %v2678 = vadd.f32 %v2316, %v2677
  %2679 = vmatmul.f32.gmra.mxu0 %v2376
  %v2680 = vpop.f32.mrf.mxu0
  %v2681 = vadd.f32 %v2316, %v2680
  %2682 = vmatmul.f32.gmra.mxu0 %v2379
  %v2683 = vpop.f32.mrf.mxu0
  %v2684 = vadd.f32 %v2316, %v2683
  %2685 = vmatmul.f32.gmra.mxu0 %v2382
  %v2686 = vpop.f32.mrf.mxu0
  %v2687 = vadd.f32 %v2316, %v2686
  %2688 = vmatmul.f32.gmra.mxu0 %v2385
  %v2689 = vpop.f32.mrf.mxu0
  %v2690 = vadd.f32 %v2316, %v2689
  %2691 = vmatmul.f32.gmra.mxu0 %v2388
  %v2692 = vpop.f32.mrf.mxu0
  %v2693 = vadd.f32 %v2316, %v2692
  %2694 = vmatmul.f32.gmra.mxu0 %v2391
  %v2695 = vpop.f32.mrf.mxu0
  %v2696 = vadd.f32 %v2316, %v2695
  %2697 = vmatmul.f32.gmra.mxu0 %v2394
  %v2698 = vpop.f32.mrf.mxu0
  %v2699 = vadd.f32 %v2316, %v2698
  %2700 = vmatmul.f32.gmra.mxu0 %v2397
  %v2701 = vpop.f32.mrf.mxu0
  %v2702 = vadd.f32 %v2316, %v2701
  %2703 = vmatmul.f32.gmra.mxu0 %v2400
  %v2704 = vpop.f32.mrf.mxu0
  %v2705 = vadd.f32 %v2316, %v2704
  %2706 = vmatmul.f32.gmra.mxu0 %v2403
  %v2707 = vpop.f32.mrf.mxu0
  %v2708 = vadd.f32 %v2316, %v2707
  %2709 = vmatmul.f32.gmra.mxu0 %v2406
  %v2710 = vpop.f32.mrf.mxu0
  %v2711 = vadd.f32 %v2316, %v2710
  %2712 = vmatmul.f32.gmra.mxu0 %v2409
  %v2713 = vpop.f32.mrf.mxu0
  %v2714 = vadd.f32 %v2316, %v2713
  %2715 = vmatmul.f32.gmra.mxu0 %v2412
  %v2716 = vpop.f32.mrf.mxu0
  %v2717 = vadd.f32 %v2316, %v2716
  %2718 = vmatmul.f32.gmra.mxu0 %v2415
  %v2719 = vpop.f32.mrf.mxu0
  %v2720 = vadd.f32 %v2316, %v2719
  %2721 = vmatmul.f32.gmra.mxu0 %v2418
  %v2722 = vpop.f32.mrf.mxu0
  %v2723 = vadd.f32 %v2316, %v2722
  %2724 = vmatmul.f32.gmra.mxu0 %v2421
  %v2725 = vpop.f32.mrf.mxu0
  %v2726 = vadd.f32 %v2316, %v2725
  %2727 = vmatmul.f32.gmra.mxu0 %v2424
  %v2728 = vpop.f32.mrf.mxu0
  %v2729 = vadd.f32 %v2316, %v2728
  %2730 = vmatmul.f32.gmra.mxu0 %v2427
  %v2731 = vpop.f32.mrf.mxu0
  %v2732 = vadd.f32 %v2316, %v2731
  %2733 = vmatmul.f32.gmra.mxu0 %v2430
  %v2734 = vpop.f32.mrf.mxu0
  %v2735 = vadd.f32 %v2316, %v2734
  %2736 = vmatmul.f32.gmra.mxu0 %v2433
  %v2737 = vpop.f32.mrf.mxu0
  %v2738 = vadd.f32 %v2316, %v2737
  %2739 = vmatmul.f32.gmra.mxu0 %v2436
  %v2740 = vpop.f32.mrf.mxu0
  %v2741 = vadd.f32 %v2316, %v2740
  %2742 = vmatmul.f32.gmra.mxu0 %v2439
  %v2743 = vpop.f32.mrf.mxu0
  %v2744 = vadd.f32 %v2316, %v2743
  %2745 = vmatmul.f32.gmra.mxu0 %v2442
  %v2746 = vpop.f32.mrf.mxu0
  %v2747 = vadd.f32 %v2316, %v2746
  %2748 = vmatmul.f32.gmra.mxu0 %v2445
  %v2749 = vpop.f32.mrf.mxu0
  %v2750 = vadd.f32 %v2316, %v2749
  %2751 = vmatmul.f32.gmra.mxu0 %v2448
  %v2752 = vpop.f32.mrf.mxu0
  %v2753 = vadd.f32 %v2316, %v2752
  %2754 = vmatmul.f32.gmra.mxu0 %v2451
  %v2755 = vpop.f32.mrf.mxu0
  %v2756 = vadd.f32 %v2316, %v2755
  %2757 = vmatmul.f32.gmra.mxu0 %v2454
  %v2758 = vpop.f32.mrf.mxu0
  %v2759 = vadd.f32 %v2316, %v2758
  %2760 = vmatmul.f32.gmra.mxu0 %v2457
  %v2761 = vpop.f32.mrf.mxu0
  %v2762 = vadd.f32 %v2316, %v2761
  %2763 = vmatmul.f32.gmra.mxu0 %v2460
  %v2764 = vpop.f32.mrf.mxu0
  %v2765 = vadd.f32 %v2316, %v2764
  %2766 = vmatmul.f32.gmra.mxu0 %v2463
  %v2767 = vpop.f32.mrf.mxu0
  %v2768 = vadd.f32 %v2316, %v2767
  %2769 = vmatmul.f32.gmra.mxu0 %v2466
  %v2770 = vpop.f32.mrf.mxu0
  %v2771 = vadd.f32 %v2316, %v2770
  %2772 = vmatmul.f32.gmra.mxu0 %v2469
  %v2773 = vpop.f32.mrf.mxu0
  %v2774 = vadd.f32 %v2316, %v2773
  %2775 = vmatmul.f32.gmra.mxu0 %v2472
  %v2776 = vpop.f32.mrf.mxu0
  %v2777 = vadd.f32 %v2316, %v2776
  %2778 = vmatmul.f32.gmra.mxu0 %v2475
  %v2779 = vpop.f32.mrf.mxu0
  %v2780 = vadd.f32 %v2316, %v2779
  %2781 = vmatmul.f32.gmra.mxu0 %v2478
  %v2782 = vpop.f32.mrf.mxu0
  %v2783 = vadd.f32 %v2316, %v2782
  %2784 = vmatmul.f32.gmra.mxu0 %v2481
  %v2785 = vpop.f32.mrf.mxu0
  %v2786 = vadd.f32 %v2316, %v2785
  %2787 = vmatmul.f32.gmra.mxu0 %v2484
  %v2788 = vpop.f32.mrf.mxu0
  %v2789 = vadd.f32 %v2316, %v2788
  %2790 = vmatmul.f32.gmra.mxu0 %v2487
  %v2791 = vpop.f32.mrf.mxu0
  %v2792 = vadd.f32 %v2316, %v2791
  %2793 = vmatmul.f32.gmra.mxu0 %v2490
  %v2794 = vpop.f32.mrf.mxu0
  %v2795 = vadd.f32 %v2316, %v2794
  %2796 = vmatmul.f32.gmra.mxu0 %v2493
  %v2797 = vpop.f32.mrf.mxu0
  %v2798 = vadd.f32 %v2316, %v2797
  %2799 = vmatmul.f32.gmra.mxu0 %v2496
  %v2800 = vpop.f32.mrf.mxu0
  %v2801 = vadd.f32 %v2316, %v2800
  %2802 = vmatmul.f32.gmra.mxu0 %v2499
  %v2803 = vpop.f32.mrf.mxu0
  %v2804 = vadd.f32 %v2316, %v2803
  %2805 = vmatmul.f32.gmra.mxu0 %v2502
  %v2806 = vpop.f32.mrf.mxu0
  %v2807 = vadd.f32 %v2316, %v2806
  %2808 = vmatmul.f32.gmra.mxu0 %v2505
  %v2809 = vpop.f32.mrf.mxu0
  %v2810 = vadd.f32 %v2316, %v2809
  %2811 = vmatmul.f32.gmra.mxu0 %v2508
  %v2812 = vpop.f32.mrf.mxu0
  %v2813 = vadd.f32 %v2316, %v2812
  %2814 = vmatmul.f32.gmra.mxu0 %v2511
  %v2815 = vpop.f32.mrf.mxu0
  %v2816 = vadd.f32 %v2316, %v2815
  %2817 = vmatmul.f32.gmra.mxu0 %v2514
  %v2818 = vpop.f32.mrf.mxu0
  %v2819 = vadd.f32 %v2316, %v2818
  %2820 = vmatmul.f32.gmra.mxu0 %v2517
  %v2821 = vpop.f32.mrf.mxu0
  %v2822 = vadd.f32 %v2316, %v2821
  %2823 = vmatmul.f32.gmra.mxu0 %v2520
  %v2824 = vpop.f32.mrf.mxu0
  %v2825 = vadd.f32 %v2316, %v2824
  %2826 = vmatmul.f32.gmra.mxu0 %v2523
  %v2827 = vpop.f32.mrf.mxu0
  %v2828 = vadd.f32 %v2316, %v2827
  %2829 = vmatmul.f32.gmra.mxu0 %v2526
  %v2830 = vpop.f32.mrf.mxu0
  %v2831 = vadd.f32 %v2316, %v2830
  %2832 = vmatmul.f32.gmra.mxu0 %v2529
  %v2833 = vpop.f32.mrf.mxu0
  %v2834 = vadd.f32 %v2316, %v2833
  %2835 = vmatmul.f32.gmra.mxu0 %v2532
  %v2836 = vpop.f32.mrf.mxu0
  %v2837 = vadd.f32 %v2316, %v2836
  %2838 = vmatmul.f32.gmra.mxu0 %v2535
  %v2839 = vpop.f32.mrf.mxu0
  %v2840 = vadd.f32 %v2316, %v2839
  %2841 = vmatmul.f32.gmra.mxu0 %v2538
  %v2842 = vpop.f32.mrf.mxu0
  %v2843 = vadd.f32 %v2316, %v2842
  %2844 = vmatmul.f32.gmra.mxu0 %v2541
  %v2845 = vpop.f32.mrf.mxu0
  %v2846 = vadd.f32 %v2316, %v2845
  %2847 = vmatmul.f32.gmra.mxu0 %v2544
  %v2848 = vpop.f32.mrf.mxu0
  %v2849 = vadd.f32 %v2316, %v2848
  %2850 = vmatmul.f32.gmra.mxu0 %v2547
  %v2851 = vpop.f32.mrf.mxu0
  %v2852 = vadd.f32 %v2316, %v2851
  %2853 = vmatmul.f32.gmra.mxu0 %v2550
  %v2854 = vpop.f32.mrf.mxu0
  %v2855 = vadd.f32 %v2316, %v2854
  %2856 = vmatmul.f32.gmra.mxu0 %v2553
  %v2857 = vpop.f32.mrf.mxu0
  %v2858 = vadd.f32 %v2316, %v2857
  %2859 = vmatmul.f32.gmra.mxu0 %v2556
  %v2860 = vpop.f32.mrf.mxu0
  %v2861 = vadd.f32 %v2316, %v2860
  %2862 = vmatmul.f32.gmra.mxu0 %v2559
  %v2863 = vpop.f32.mrf.mxu0
  %v2864 = vadd.f32 %v2316, %v2863
  %2865 = vmatmul.f32.gmra.mxu0 %v2562
  %v2866 = vpop.f32.mrf.mxu0
  %v2867 = vadd.f32 %v2316, %v2866
  %2868 = vmatmul.f32.gmra.mxu0 %v2565
  %v2869 = vpop.f32.mrf.mxu0
  %v2870 = vadd.f32 %v2316, %v2869
  %2871 = vmatmul.f32.gmra.mxu0 %v2568
  %v2872 = vpop.f32.mrf.mxu0
  %v2873 = vadd.f32 %v2316, %v2872
  %2874 = vmatmul.f32.gmra.mxu0 %v2571
  %v2875 = vpop.f32.mrf.mxu0
  %v2876 = vadd.f32 %v2316, %v2875
  %2877 = vmatmul.f32.gmra.mxu0 %v2574
  %v2878 = vpop.f32.mrf.mxu0
  %v2879 = vadd.f32 %v2316, %v2878
  %2880 = vmatmul.f32.gmra.mxu0 %v2577
  %v2881 = vpop.f32.mrf.mxu0
  %v2882 = vadd.f32 %v2316, %v2881
  %2883 = vmatmul.f32.gmra.mxu0 %v2580
  %v2884 = vpop.f32.mrf.mxu0
  %v2885 = vadd.f32 %v2316, %v2884
  %2886 = vmatmul.f32.gmra.mxu0 %v2583
  %v2887 = vpop.f32.mrf.mxu0
  %v2888 = vadd.f32 %v2316, %v2887
  %2889 = vmatmul.f32.gmra.mxu0 %v2586
  %v2890 = vpop.f32.mrf.mxu0
  %v2891 = vadd.f32 %v2316, %v2890
  %2892 = vmatmul.f32.gmra.mxu0 %v2589
  %v2893 = vpop.f32.mrf.mxu0
  %v2894 = vadd.f32 %v2316, %v2893
  %2895 = vmatmul.f32.gmra.mxu0 %v2592
  %v2896 = vpop.f32.mrf.mxu0
  %v2897 = vadd.f32 %v2316, %v2896
  %2898 = vmatmul.f32.gmra.mxu0 %v2595
  %v2899 = vpop.f32.mrf.mxu0
  %v2900 = vadd.f32 %v2316, %v2899
  %2901 = vmatmul.f32.gmra.mxu0 %v2598
  %v2902 = vpop.f32.mrf.mxu0
  %v2903 = vadd.f32 %v2316, %v2902
  %2904 = vmatmul.f32.gmra.mxu0 %v2601
  %v2905 = vpop.f32.mrf.mxu0
  %v2906 = vadd.f32 %v2316, %v2905
  %2907 = vmatmul.f32.gmra.mxu0 %v2604
  %v2908 = vpop.f32.mrf.mxu0
  %v2909 = vadd.f32 %v2316, %v2908
  %2910 = vdwg.mxu0
  %v2911 = vmax.f32 %v2624, 0.0
  %v2912 = vmax.f32 %v2627, 0.0
  %v2913 = vmax.f32 %v2630, 0.0
  %v2914 = vmax.f32 %v2633, 0.0
  %v2915 = vmax.f32 %v2636, 0.0
  %v2916 = vmax.f32 %v2639, 0.0
  %v2917 = vmax.f32 %v2642, 0.0
  %v2918 = vmax.f32 %v2645, 0.0
  %v2919 = vmax.f32 %v2648, 0.0
  %v2920 = vmax.f32 %v2651, 0.0
  %v2921 = vmax.f32 %v2654, 0.0
  %v2922 = vmax.f32 %v2657, 0.0
  %v2923 = vmax.f32 %v2660, 0.0
  %v2924 = vmax.f32 %v2663, 0.0
  %v2925 = vmax.f32 %v2666, 0.0
  %v2926 = vmax.f32 %v2669, 0.0
  %v2927 = vmax.f32 %v2672, 0.0
  %v2928 = vmax.f32 %v2675, 0.0
  %v2929 = vmax.f32 %v2678, 0.0
  %v2930 = vmax.f32 %v2681, 0.0
  %v2931 = vmax.f32 %v2684, 0.0
  %v2932 = vmax.f32 %v2687, 0.0
  %v2933 = vmax.f32 %v2690, 0.0
  %v2934 = vmax.f32 %v2693, 0.0
  %v2935 = vmax.f32 %v2696, 0.0
  %v2936 = vmax.f32 %v2699, 0.0
  %v2937 = vmax.f32 %v2702, 0.0
  %v2938 = vmax.f32 %v2705, 0.0
  %v2939 = vmax.f32 %v2708, 0.0
  %v2940 = vmax.f32 %v2711, 0.0
  %v2941 = vmax.f32 %v2714, 0.0
  %v2942 = vmax.f32 %v2717, 0.0
  %v2943 = vmax.f32 %v2720, 0.0
  %v2944 = vmax.f32 %v2723, 0.0
  %v2945 = vmax.f32 %v2726, 0.0
  %v2946 = vmax.f32 %v2729, 0.0
  %v2947 = vmax.f32 %v2732, 0.0
  %v2948 = vmax.f32 %v2735, 0.0
  %v2949 = vmax.f32 %v2738, 0.0
  %v2950 = vmax.f32 %v2741, 0.0
  %v2951 = vmax.f32 %v2744, 0.0
  %v2952 = vmax.f32 %v2747, 0.0
  %v2953 = vmax.f32 %v2750, 0.0
  %v2954 = vmax.f32 %v2753, 0.0
  %v2955 = vmax.f32 %v2756, 0.0
  %v2956 = vmax.f32 %v2759, 0.0
  %v2957 = vmax.f32 %v2762, 0.0
  %v2958 = vmax.f32 %v2765, 0.0
  %v2959 = vmax.f32 %v2768, 0.0
  %v2960 = vmax.f32 %v2771, 0.0
  %v2961 = vmax.f32 %v2774, 0.0
  %v2962 = vmax.f32 %v2777, 0.0
  %v2963 = vmax.f32 %v2780, 0.0
  %v2964 = vmax.f32 %v2783, 0.0
  %v2965 = vmax.f32 %v2786, 0.0
  %v2966 = vmax.f32 %v2789, 0.0
  %v2967 = vmax.f32 %v2792, 0.0
  %v2968 = vmax.f32 %v2795, 0.0
  %v2969 = vmax.f32 %v2798, 0.0
  %v2970 = vmax.f32 %v2801, 0.0
  %v2971 = vmax.f32 %v2804, 0.0
  %v2972 = vmax.f32 %v2807, 0.0
  %v2973 = vmax.f32 %v2810, 0.0
  %v2974 = vmax.f32 %v2813, 0.0
  %v2975 = vmax.f32 %v2816, 0.0
  %v2976 = vmax.f32 %v2819, 0.0
  %v2977 = vmax.f32 %v2822, 0.0
  %v2978 = vmax.f32 %v2825, 0.0
  %v2979 = vmax.f32 %v2828, 0.0
  %v2980 = vmax.f32 %v2831, 0.0
  %v2981 = vmax.f32 %v2834, 0.0
  %v2982 = vmax.f32 %v2837, 0.0
  %v2983 = vmax.f32 %v2840, 0.0
  %v2984 = vmax.f32 %v2843, 0.0
  %v2985 = vmax.f32 %v2846, 0.0
  %v2986 = vmax.f32 %v2849, 0.0
  %v2987 = vmax.f32 %v2852, 0.0
  %v2988 = vmax.f32 %v2855, 0.0
  %v2989 = vmax.f32 %v2858, 0.0
  %v2990 = vmax.f32 %v2861, 0.0
  %v2991 = vmax.f32 %v2864, 0.0
  %v2992 = vmax.f32 %v2867, 0.0
  %v2993 = vmax.f32 %v2870, 0.0
  %v2994 = vmax.f32 %v2873, 0.0
  %v2995 = vmax.f32 %v2876, 0.0
  %v2996 = vmax.f32 %v2879, 0.0
  %v2997 = vmax.f32 %v2882, 0.0
  %v2998 = vmax.f32 %v2885, 0.0
  %v2999 = vmax.f32 %v2888, 0.0
  %v3000 = vmax.f32 %v2891, 0.0
  %v3001 = vmax.f32 %v2894, 0.0
  %v3002 = vmax.f32 %v2897, 0.0
  %v3003 = vmax.f32 %v2900, 0.0
  %v3004 = vmax.f32 %v2903, 0.0
  %v3005 = vmax.f32 %v2906, 0.0
  %v3006 = vmax.f32 %v2909, 0.0
  %v3008 = vperm.slane %v1926, 0
  %v3011 = vsel %vm361, %v2911, 0
  %v3014 = vsel %vm361, %v2912, 0
  %v3017 = vsel %vm361, %v2913, 0
  %v3020 = vsel %vm361, %v2914, 0
  %v3023 = vsel %vm361, %v2915, 0
  %v3026 = vsel %vm361, %v2916, 0
  %v3029 = vsel %vm361, %v2917, 0
  %v3032 = vsel %vm361, %v2918, 0
  %v3035 = vsel %vm361, %v2919, 0
  %v3038 = vsel %vm361, %v2920, 0
  %v3041 = vsel %vm361, %v2921, 0
  %v3044 = vsel %vm361, %v2922, 0
  %v3047 = vsel %vm361, %v2923, 0
  %v3050 = vsel %vm361, %v2924, 0
  %v3053 = vsel %vm361, %v2925, 0
  %v3056 = vsel %vm361, %v2926, 0
  %v3059 = vsel %vm361, %v2927, 0
  %v3062 = vsel %vm361, %v2928, 0
  %v3065 = vsel %vm361, %v2929, 0
  %v3068 = vsel %vm361, %v2930, 0
  %v3071 = vsel %vm361, %v2931, 0
  %v3074 = vsel %vm361, %v2932, 0
  %v3077 = vsel %vm361, %v2933, 0
  %v3080 = vsel %vm361, %v2934, 0
  %v3083 = vsel %vm361, %v2935, 0
  %v3086 = vsel %vm361, %v2936, 0
  %v3089 = vsel %vm361, %v2937, 0
  %v3092 = vsel %vm361, %v2938, 0
  %v3095 = vsel %vm361, %v2939, 0
  %v3098 = vsel %vm361, %v2940, 0
  %v3101 = vsel %vm361, %v2941, 0
  %v3104 = vsel %vm361, %v2942, 0
  %v3107 = vsel %vm361, %v2943, 0
  %v3110 = vsel %vm361, %v2944, 0
  %v3113 = vsel %vm361, %v2945, 0
  %v3116 = vsel %vm361, %v2946, 0
  %v3119 = vsel %vm361, %v2947, 0
  %v3122 = vsel %vm361, %v2948, 0
  %v3125 = vsel %vm361, %v2949, 0
  %v3128 = vsel %vm361, %v2950, 0
  %v3131 = vsel %vm361, %v2951, 0
  %v3134 = vsel %vm361, %v2952, 0
  %v3137 = vsel %vm361, %v2953, 0
  %v3140 = vsel %vm361, %v2954, 0
  %v3143 = vsel %vm361, %v2955, 0
  %v3146 = vsel %vm361, %v2956, 0
  %v3149 = vsel %vm361, %v2957, 0
  %v3152 = vsel %vm361, %v2958, 0
  %v3155 = vsel %vm361, %v2959, 0
  %v3158 = vsel %vm361, %v2960, 0
  %v3161 = vsel %vm361, %v2961, 0
  %v3164 = vsel %vm361, %v2962, 0
  %v3167 = vsel %vm361, %v2963, 0
  %v3170 = vsel %vm361, %v2964, 0
  %v3173 = vsel %vm361, %v2965, 0
  %v3176 = vsel %vm361, %v2966, 0
  %v3179 = vsel %vm361, %v2967, 0
  %v3182 = vsel %vm361, %v2968, 0
  %v3185 = vsel %vm361, %v2969, 0
  %v3188 = vsel %vm361, %v2970, 0
  %v3191 = vsel %vm361, %v2971, 0
  %v3194 = vsel %vm361, %v2972, 0
  %v3197 = vsel %vm361, %v2973, 0
  %v3200 = vsel %vm361, %v2974, 0
  %v3203 = vsel %vm361, %v2975, 0
  %v3206 = vsel %vm361, %v2976, 0
  %v3209 = vsel %vm361, %v2977, 0
  %v3212 = vsel %vm361, %v2978, 0
  %v3215 = vsel %vm361, %v2979, 0
  %v3218 = vsel %vm361, %v2980, 0
  %v3221 = vsel %vm361, %v2981, 0
  %v3224 = vsel %vm361, %v2982, 0
  %v3227 = vsel %vm361, %v2983, 0
  %v3230 = vsel %vm361, %v2984, 0
  %v3233 = vsel %vm361, %v2985, 0
  %v3236 = vsel %vm361, %v2986, 0
  %v3239 = vsel %vm361, %v2987, 0
  %v3242 = vsel %vm361, %v2988, 0
  %v3245 = vsel %vm361, %v2989, 0
  %v3248 = vsel %vm361, %v2990, 0
  %v3251 = vsel %vm361, %v2991, 0
  %v3254 = vsel %vm361, %v2992, 0
  %v3257 = vsel %vm361, %v2993, 0
  %v3260 = vsel %vm361, %v2994, 0
  %v3263 = vsel %vm361, %v2995, 0
  %v3266 = vsel %vm361, %v2996, 0
  %v3269 = vsel %vm361, %v2997, 0
  %v3272 = vsel %vm361, %v2998, 0
  %v3275 = vsel %vm361, %v2999, 0
  %v3278 = vsel %vm361, %v3000, 0
  %v3281 = vsel %vm361, %v3001, 0
  %v3284 = vsel %vm361, %v3002, 0
  %v3287 = vsel %vm361, %v3003, 0
  %v3290 = vsel %vm361, %v3004, 0
  %v3293 = vsel %vm361, %v3005, 0
  %v3296 = vsel %vm361, %v3006, 0
  %3298 = vmatpush.msra.mxu0 0.0
  %3299 = vmatpush.msra.mxu0 0.0
  %3300 = vmatpush.msra.mxu0 0.0
  %3301 = vmatpush.msra.mxu0 0.0
  %3302 = vmatpush.msra.mxu0 0.0
  %3303 = vmatpush.msra.mxu0 0.0
  %3304 = vmatpush.msra.mxu0 0.0
  %3305 = vmatpush.msra.mxu0 0.0
  %3306 = vmatpush.msra.mxu0 0.0
  %3307 = vmatpush.msra.mxu0 0.0
  %3308 = vmatpush.msra.mxu0 0.0
  %3309 = vmatpush.msra.mxu0 0.0
  %3310 = vmatpush.msra.mxu0 0.0
  %3311 = vmatpush.msra.mxu0 0.0
  %3312 = vmatpush.msra.mxu0 0.0
  %3313 = vmatpush.msra.mxu0 %v1925
  %3314 = vmatmul.f32.gmra.mxu0 %v3011
  %v3315 = vpop.f32.mrf.mxu0
  %v3316 = vadd.f32 %v3008, %v3315
  %3317 = vmatmul.f32.gmra.mxu0 %v3014
  %v3318 = vpop.f32.mrf.mxu0
  %v3319 = vadd.f32 %v3008, %v3318
  %3320 = vmatmul.f32.gmra.mxu0 %v3017
  %v3321 = vpop.f32.mrf.mxu0
  %v3322 = vadd.f32 %v3008, %v3321
  %3323 = vmatmul.f32.gmra.mxu0 %v3020
  %v3324 = vpop.f32.mrf.mxu0
  %v3325 = vadd.f32 %v3008, %v3324
  %3326 = vmatmul.f32.gmra.mxu0 %v3023
  %v3327 = vpop.f32.mrf.mxu0
  %v3328 = vadd.f32 %v3008, %v3327
  %3329 = vmatmul.f32.gmra.mxu0 %v3026
  %v3330 = vpop.f32.mrf.mxu0
  %v3331 = vadd.f32 %v3008, %v3330
  %3332 = vmatmul.f32.gmra.mxu0 %v3029
  %v3333 = vpop.f32.mrf.mxu0
  %v3334 = vadd.f32 %v3008, %v3333
  %3335 = vmatmul.f32.gmra.mxu0 %v3032
  %v3336 = vpop.f32.mrf.mxu0
  %v3337 = vadd.f32 %v3008, %v3336
  %3338 = vmatmul.f32.gmra.mxu0 %v3035
  %v3339 = vpop.f32.mrf.mxu0
  %v3340 = vadd.f32 %v3008, %v3339
  %3341 = vmatmul.f32.gmra.mxu0 %v3038
  %v3342 = vpop.f32.mrf.mxu0
  %v3343 = vadd.f32 %v3008, %v3342
  %3344 = vmatmul.f32.gmra.mxu0 %v3041
  %v3345 = vpop.f32.mrf.mxu0
  %v3346 = vadd.f32 %v3008, %v3345
  %3347 = vmatmul.f32.gmra.mxu0 %v3044
  %v3348 = vpop.f32.mrf.mxu0
  %v3349 = vadd.f32 %v3008, %v3348
  %3350 = vmatmul.f32.gmra.mxu0 %v3047
  %v3351 = vpop.f32.mrf.mxu0
  %v3352 = vadd.f32 %v3008, %v3351
  %3353 = vmatmul.f32.gmra.mxu0 %v3050
  %v3354 = vpop.f32.mrf.mxu0
  %v3355 = vadd.f32 %v3008, %v3354
  %3356 = vmatmul.f32.gmra.mxu0 %v3053
  %v3357 = vpop.f32.mrf.mxu0
  %v3358 = vadd.f32 %v3008, %v3357
  %3359 = vmatmul.f32.gmra.mxu0 %v3056
  %v3360 = vpop.f32.mrf.mxu0
  %v3361 = vadd.f32 %v3008, %v3360
  %3362 = vmatmul.f32.gmra.mxu0 %v3059
  %v3363 = vpop.f32.mrf.mxu0
  %v3364 = vadd.f32 %v3008, %v3363
  %3365 = vmatmul.f32.gmra.mxu0 %v3062
  %v3366 = vpop.f32.mrf.mxu0
  %v3367 = vadd.f32 %v3008, %v3366
  %3368 = vmatmul.f32.gmra.mxu0 %v3065
  %v3369 = vpop.f32.mrf.mxu0
  %v3370 = vadd.f32 %v3008, %v3369
  %3371 = vmatmul.f32.gmra.mxu0 %v3068
  %v3372 = vpop.f32.mrf.mxu0
  %v3373 = vadd.f32 %v3008, %v3372
  %3374 = vmatmul.f32.gmra.mxu0 %v3071
  %v3375 = vpop.f32.mrf.mxu0
  %v3376 = vadd.f32 %v3008, %v3375
  %3377 = vmatmul.f32.gmra.mxu0 %v3074
  %v3378 = vpop.f32.mrf.mxu0
  %v3379 = vadd.f32 %v3008, %v3378
  %3380 = vmatmul.f32.gmra.mxu0 %v3077
  %v3381 = vpop.f32.mrf.mxu0
  %v3382 = vadd.f32 %v3008, %v3381
  %3383 = vmatmul.f32.gmra.mxu0 %v3080
  %v3384 = vpop.f32.mrf.mxu0
  %v3385 = vadd.f32 %v3008, %v3384
  %3386 = vmatmul.f32.gmra.mxu0 %v3083
  %v3387 = vpop.f32.mrf.mxu0
  %v3388 = vadd.f32 %v3008, %v3387
  %3389 = vmatmul.f32.gmra.mxu0 %v3086
  %v3390 = vpop.f32.mrf.mxu0
  %v3391 = vadd.f32 %v3008, %v3390
  %3392 = vmatmul.f32.gmra.mxu0 %v3089
  %v3393 = vpop.f32.mrf.mxu0
  %v3394 = vadd.f32 %v3008, %v3393
  %3395 = vmatmul.f32.gmra.mxu0 %v3092
  %v3396 = vpop.f32.mrf.mxu0
  %v3397 = vadd.f32 %v3008, %v3396
  %3398 = vmatmul.f32.gmra.mxu0 %v3095
  %v3399 = vpop.f32.mrf.mxu0
  %v3400 = vadd.f32 %v3008, %v3399
  %3401 = vmatmul.f32.gmra.mxu0 %v3098
  %v3402 = vpop.f32.mrf.mxu0
  %v3403 = vadd.f32 %v3008, %v3402
  %3404 = vmatmul.f32.gmra.mxu0 %v3101
  %v3405 = vpop.f32.mrf.mxu0
  %v3406 = vadd.f32 %v3008, %v3405
  %3407 = vmatmul.f32.gmra.mxu0 %v3104
  %v3408 = vpop.f32.mrf.mxu0
  %v3409 = vadd.f32 %v3008, %v3408
  %3410 = vmatmul.f32.gmra.mxu0 %v3107
  %v3411 = vpop.f32.mrf.mxu0
  %v3412 = vadd.f32 %v3008, %v3411
  %3413 = vmatmul.f32.gmra.mxu0 %v3110
  %v3414 = vpop.f32.mrf.mxu0
  %v3415 = vadd.f32 %v3008, %v3414
  %3416 = vmatmul.f32.gmra.mxu0 %v3113
  %v3417 = vpop.f32.mrf.mxu0
  %v3418 = vadd.f32 %v3008, %v3417
  %3419 = vmatmul.f32.gmra.mxu0 %v3116
  %v3420 = vpop.f32.mrf.mxu0
  %v3421 = vadd.f32 %v3008, %v3420
  %3422 = vmatmul.f32.gmra.mxu0 %v3119
  %v3423 = vpop.f32.mrf.mxu0
  %v3424 = vadd.f32 %v3008, %v3423
  %3425 = vmatmul.f32.gmra.mxu0 %v3122
  %v3426 = vpop.f32.mrf.mxu0
  %v3427 = vadd.f32 %v3008, %v3426
  %3428 = vmatmul.f32.gmra.mxu0 %v3125
  %v3429 = vpop.f32.mrf.mxu0
  %v3430 = vadd.f32 %v3008, %v3429
  %3431 = vmatmul.f32.gmra.mxu0 %v3128
  %v3432 = vpop.f32.mrf.mxu0
  %v3433 = vadd.f32 %v3008, %v3432
  %3434 = vmatmul.f32.gmra.mxu0 %v3131
  %v3435 = vpop.f32.mrf.mxu0
  %v3436 = vadd.f32 %v3008, %v3435
  %3437 = vmatmul.f32.gmra.mxu0 %v3134
  %v3438 = vpop.f32.mrf.mxu0
  %v3439 = vadd.f32 %v3008, %v3438
  %3440 = vmatmul.f32.gmra.mxu0 %v3137
  %v3441 = vpop.f32.mrf.mxu0
  %v3442 = vadd.f32 %v3008, %v3441
  %3443 = vmatmul.f32.gmra.mxu0 %v3140
  %v3444 = vpop.f32.mrf.mxu0
  %v3445 = vadd.f32 %v3008, %v3444
  %3446 = vmatmul.f32.gmra.mxu0 %v3143
  %v3447 = vpop.f32.mrf.mxu0
  %v3448 = vadd.f32 %v3008, %v3447
  %3449 = vmatmul.f32.gmra.mxu0 %v3146
  %v3450 = vpop.f32.mrf.mxu0
  %v3451 = vadd.f32 %v3008, %v3450
  %3452 = vmatmul.f32.gmra.mxu0 %v3149
  %v3453 = vpop.f32.mrf.mxu0
  %v3454 = vadd.f32 %v3008, %v3453
  %3455 = vmatmul.f32.gmra.mxu0 %v3152
  %v3456 = vpop.f32.mrf.mxu0
  %v3457 = vadd.f32 %v3008, %v3456
  %3458 = vmatmul.f32.gmra.mxu0 %v3155
  %v3459 = vpop.f32.mrf.mxu0
  %v3460 = vadd.f32 %v3008, %v3459
  %3461 = vmatmul.f32.gmra.mxu0 %v3158
  %v3462 = vpop.f32.mrf.mxu0
  %v3463 = vadd.f32 %v3008, %v3462
  %3464 = vmatmul.f32.gmra.mxu0 %v3161
  %v3465 = vpop.f32.mrf.mxu0
  %v3466 = vadd.f32 %v3008, %v3465
  %3467 = vmatmul.f32.gmra.mxu0 %v3164
  %v3468 = vpop.f32.mrf.mxu0
  %v3469 = vadd.f32 %v3008, %v3468
  %3470 = vmatmul.f32.gmra.mxu0 %v3167
  %v3471 = vpop.f32.mrf.mxu0
  %v3472 = vadd.f32 %v3008, %v3471
  %3473 = vmatmul.f32.gmra.mxu0 %v3170
  %v3474 = vpop.f32.mrf.mxu0
  %v3475 = vadd.f32 %v3008, %v3474
  %3476 = vmatmul.f32.gmra.mxu0 %v3173
  %v3477 = vpop.f32.mrf.mxu0
  %v3478 = vadd.f32 %v3008, %v3477
  %3479 = vmatmul.f32.gmra.mxu0 %v3176
  %v3480 = vpop.f32.mrf.mxu0
  %v3481 = vadd.f32 %v3008, %v3480
  %3482 = vmatmul.f32.gmra.mxu0 %v3179
  %v3483 = vpop.f32.mrf.mxu0
  %v3484 = vadd.f32 %v3008, %v3483
  %3485 = vmatmul.f32.gmra.mxu0 %v3182
  %v3486 = vpop.f32.mrf.mxu0
  %v3487 = vadd.f32 %v3008, %v3486
  %3488 = vmatmul.f32.gmra.mxu0 %v3185
  %v3489 = vpop.f32.mrf.mxu0
  %v3490 = vadd.f32 %v3008, %v3489
  %3491 = vmatmul.f32.gmra.mxu0 %v3188
  %v3492 = vpop.f32.mrf.mxu0
  %v3493 = vadd.f32 %v3008, %v3492
  %3494 = vmatmul.f32.gmra.mxu0 %v3191
  %v3495 = vpop.f32.mrf.mxu0
  %v3496 = vadd.f32 %v3008, %v3495
  %3497 = vmatmul.f32.gmra.mxu0 %v3194
  %v3498 = vpop.f32.mrf.mxu0
  %v3499 = vadd.f32 %v3008, %v3498
  %3500 = vmatmul.f32.gmra.mxu0 %v3197
  %v3501 = vpop.f32.mrf.mxu0
  %v3502 = vadd.f32 %v3008, %v3501
  %3503 = vmatmul.f32.gmra.mxu0 %v3200
  %v3504 = vpop.f32.mrf.mxu0
  %v3505 = vadd.f32 %v3008, %v3504
  %3506 = vmatmul.f32.gmra.mxu0 %v3203
  %v3507 = vpop.f32.mrf.mxu0
  %v3508 = vadd.f32 %v3008, %v3507
  %3509 = vmatmul.f32.gmra.mxu0 %v3206
  %v3510 = vpop.f32.mrf.mxu0
  %v3511 = vadd.f32 %v3008, %v3510
  %3512 = vmatmul.f32.gmra.mxu0 %v3209
  %v3513 = vpop.f32.mrf.mxu0
  %v3514 = vadd.f32 %v3008, %v3513
  %3515 = vmatmul.f32.gmra.mxu0 %v3212
  %v3516 = vpop.f32.mrf.mxu0
  %v3517 = vadd.f32 %v3008, %v3516
  %3518 = vmatmul.f32.gmra.mxu0 %v3215
  %v3519 = vpop.f32.mrf.mxu0
  %v3520 = vadd.f32 %v3008, %v3519
  %3521 = vmatmul.f32.gmra.mxu0 %v3218
  %v3522 = vpop.f32.mrf.mxu0
  %v3523 = vadd.f32 %v3008, %v3522
  %3524 = vmatmul.f32.gmra.mxu0 %v3221
  %v3525 = vpop.f32.mrf.mxu0
  %v3526 = vadd.f32 %v3008, %v3525
  %3527 = vmatmul.f32.gmra.mxu0 %v3224
  %v3528 = vpop.f32.mrf.mxu0
  %v3529 = vadd.f32 %v3008, %v3528
  %3530 = vmatmul.f32.gmra.mxu0 %v3227
  %v3531 = vpop.f32.mrf.mxu0
  %v3532 = vadd.f32 %v3008, %v3531
  %3533 = vmatmul.f32.gmra.mxu0 %v3230
  %v3534 = vpop.f32.mrf.mxu0
  %v3535 = vadd.f32 %v3008, %v3534
  %3536 = vmatmul.f32.gmra.mxu0 %v3233
  %v3537 = vpop.f32.mrf.mxu0
  %v3538 = vadd.f32 %v3008, %v3537
  %3539 = vmatmul.f32.gmra.mxu0 %v3236
  %v3540 = vpop.f32.mrf.mxu0
  %v3541 = vadd.f32 %v3008, %v3540
  %3542 = vmatmul.f32.gmra.mxu0 %v3239
  %v3543 = vpop.f32.mrf.mxu0
  %v3544 = vadd.f32 %v3008, %v3543
  %3545 = vmatmul.f32.gmra.mxu0 %v3242
  %v3546 = vpop.f32.mrf.mxu0
  %v3547 = vadd.f32 %v3008, %v3546
  %3548 = vmatmul.f32.gmra.mxu0 %v3245
  %v3549 = vpop.f32.mrf.mxu0
  %v3550 = vadd.f32 %v3008, %v3549
  %3551 = vmatmul.f32.gmra.mxu0 %v3248
  %v3552 = vpop.f32.mrf.mxu0
  %v3553 = vadd.f32 %v3008, %v3552
  %3554 = vmatmul.f32.gmra.mxu0 %v3251
  %v3555 = vpop.f32.mrf.mxu0
  %v3556 = vadd.f32 %v3008, %v3555
  %3557 = vmatmul.f32.gmra.mxu0 %v3254
  %v3558 = vpop.f32.mrf.mxu0
  %v3559 = vadd.f32 %v3008, %v3558
  %3560 = vmatmul.f32.gmra.mxu0 %v3257
  %v3561 = vpop.f32.mrf.mxu0
  %v3562 = vadd.f32 %v3008, %v3561
  %3563 = vmatmul.f32.gmra.mxu0 %v3260
  %v3564 = vpop.f32.mrf.mxu0
  %v3565 = vadd.f32 %v3008, %v3564
  %3566 = vmatmul.f32.gmra.mxu0 %v3263
  %v3567 = vpop.f32.mrf.mxu0
  %v3568 = vadd.f32 %v3008, %v3567
  %3569 = vmatmul.f32.gmra.mxu0 %v3266
  %v3570 = vpop.f32.mrf.mxu0
  %v3571 = vadd.f32 %v3008, %v3570
  %3572 = vmatmul.f32.gmra.mxu0 %v3269
  %v3573 = vpop.f32.mrf.mxu0
  %v3574 = vadd.f32 %v3008, %v3573
  %3575 = vmatmul.f32.gmra.mxu0 %v3272
  %v3576 = vpop.f32.mrf.mxu0
  %v3577 = vadd.f32 %v3008, %v3576
  %3578 = vmatmul.f32.gmra.mxu0 %v3275
  %v3579 = vpop.f32.mrf.mxu0
  %v3580 = vadd.f32 %v3008, %v3579
  %3581 = vmatmul.f32.gmra.mxu0 %v3278
  %v3582 = vpop.f32.mrf.mxu0
  %v3583 = vadd.f32 %v3008, %v3582
  %3584 = vmatmul.f32.gmra.mxu0 %v3281
  %v3585 = vpop.f32.mrf.mxu0
  %v3586 = vadd.f32 %v3008, %v3585
  %3587 = vmatmul.f32.gmra.mxu0 %v3284
  %v3588 = vpop.f32.mrf.mxu0
  %v3589 = vadd.f32 %v3008, %v3588
  %3590 = vmatmul.f32.gmra.mxu0 %v3287
  %v3591 = vpop.f32.mrf.mxu0
  %v3592 = vadd.f32 %v3008, %v3591
  %3593 = vmatmul.f32.gmra.mxu0 %v3290
  %v3594 = vpop.f32.mrf.mxu0
  %v3595 = vadd.f32 %v3008, %v3594
  %3596 = vmatmul.f32.gmra.mxu0 %v3293
  %v3597 = vpop.f32.mrf.mxu0
  %v3598 = vadd.f32 %v3008, %v3597
  %3599 = vmatmul.f32.gmra.mxu0 %v3296
  %v3600 = vpop.f32.mrf.mxu0
  %v3601 = vadd.f32 %v3008, %v3600
  %3602 = vdwg.mxu0
  %v3603 = vsel %vm435, %v3316, 0.0
  %v3604 = vsel %vm435, %v3319, 0.0
  %v3605 = vadd.f32 %v3603, %v3604
  %v3606 = vsel %vm435, %v3322, 0.0
  %v3607 = vadd.f32 %v3605, %v3606
  %v3608 = vrot.slane %v3607, 4
  %v3609 = vadd.f32 %v3607, %v3608
  %v3610 = vrot.slane %v3609, 2
  %v3611 = vadd.f32 %v3609, %v3610
  %v3612 = vrot.slane %v3611, 1
  %v3613 = vadd.f32 %v3611, %v3612
  %v3614 = vsel %vm435, %v3325, 0.0
  %v3615 = vsel %vm435, %v3328, 0.0
  %v3616 = vadd.f32 %v3614, %v3615
  %v3617 = vsel %vm435, %v3331, 0.0
  %v3618 = vadd.f32 %v3616, %v3617
  %v3619 = vrot.slane %v3618, 4
  %v3620 = vadd.f32 %v3618, %v3619
  %v3621 = vrot.slane %v3620, 2
  %v3622 = vadd.f32 %v3620, %v3621
  %v3623 = vrot.slane %v3622, 1
  %v3624 = vadd.f32 %v3622, %v3623
  %v3625 = vsel %vm435, %v3334, 0.0
  %v3626 = vsel %vm435, %v3337, 0.0
  %v3627 = vadd.f32 %v3625, %v3626
  %v3628 = vsel %vm435, %v3340, 0.0
  %v3629 = vadd.f32 %v3627, %v3628
  %v3630 = vrot.slane %v3629, 4
  %v3631 = vadd.f32 %v3629, %v3630
  %v3632 = vrot.slane %v3631, 2
  %v3633 = vadd.f32 %v3631, %v3632
  %v3634 = vrot.slane %v3633, 1
  %v3635 = vadd.f32 %v3633, %v3634
  %v3636 = vsel %vm435, %v3343, 0.0
  %v3637 = vsel %vm435, %v3346, 0.0
  %v3638 = vadd.f32 %v3636, %v3637
  %v3639 = vsel %vm435, %v3349, 0.0
  %v3640 = vadd.f32 %v3638, %v3639
  %v3641 = vrot.slane %v3640, 4
  %v3642 = vadd.f32 %v3640, %v3641
  %v3643 = vrot.slane %v3642, 2
  %v3644 = vadd.f32 %v3642, %v3643
  %v3645 = vrot.slane %v3644, 1
  %v3646 = vadd.f32 %v3644, %v3645
  %v3647 = vsel %vm435, %v3352, 0.0
  %v3648 = vsel %vm435, %v3355, 0.0
  %v3649 = vadd.f32 %v3647, %v3648
  %v3650 = vsel %vm435, %v3358, 0.0
  %v3651 = vadd.f32 %v3649, %v3650
  %v3652 = vrot.slane %v3651, 4
  %v3653 = vadd.f32 %v3651, %v3652
  %v3654 = vrot.slane %v3653, 2
  %v3655 = vadd.f32 %v3653, %v3654
  %v3656 = vrot.slane %v3655, 1
  %v3657 = vadd.f32 %v3655, %v3656
  %v3658 = vsel %vm435, %v3361, 0.0
  %v3659 = vsel %vm435, %v3364, 0.0
  %v3660 = vadd.f32 %v3658, %v3659
  %v3661 = vsel %vm435, %v3367, 0.0
  %v3662 = vadd.f32 %v3660, %v3661
  %v3663 = vrot.slane %v3662, 4
  %v3664 = vadd.f32 %v3662, %v3663
  %v3665 = vrot.slane %v3664, 2
  %v3666 = vadd.f32 %v3664, %v3665
  %v3667 = vrot.slane %v3666, 1
  %v3668 = vadd.f32 %v3666, %v3667
  %v3669 = vsel %vm435, %v3370, 0.0
  %v3670 = vsel %vm435, %v3373, 0.0
  %v3671 = vadd.f32 %v3669, %v3670
  %v3672 = vsel %vm435, %v3376, 0.0
  %v3673 = vadd.f32 %v3671, %v3672
  %v3674 = vrot.slane %v3673, 4
  %v3675 = vadd.f32 %v3673, %v3674
  %v3676 = vrot.slane %v3675, 2
  %v3677 = vadd.f32 %v3675, %v3676
  %v3678 = vrot.slane %v3677, 1
  %v3679 = vadd.f32 %v3677, %v3678
  %v3680 = vsel %vm435, %v3379, 0.0
  %v3681 = vsel %vm435, %v3382, 0.0
  %v3682 = vadd.f32 %v3680, %v3681
  %v3683 = vsel %vm435, %v3385, 0.0
  %v3684 = vadd.f32 %v3682, %v3683
  %v3685 = vrot.slane %v3684, 4
  %v3686 = vadd.f32 %v3684, %v3685
  %v3687 = vrot.slane %v3686, 2
  %v3688 = vadd.f32 %v3686, %v3687
  %v3689 = vrot.slane %v3688, 1
  %v3690 = vadd.f32 %v3688, %v3689
  %v3691 = vsel %vm435, %v3388, 0.0
  %v3692 = vsel %vm435, %v3391, 0.0
  %v3693 = vadd.f32 %v3691, %v3692
  %v3694 = vsel %vm435, %v3394, 0.0
  %v3695 = vadd.f32 %v3693, %v3694
  %v3696 = vrot.slane %v3695, 4
  %v3697 = vadd.f32 %v3695, %v3696
  %v3698 = vrot.slane %v3697, 2
  %v3699 = vadd.f32 %v3697, %v3698
  %v3700 = vrot.slane %v3699, 1
  %v3701 = vadd.f32 %v3699, %v3700
  %v3702 = vsel %vm435, %v3397, 0.0
  %v3703 = vsel %vm435, %v3400, 0.0
  %v3704 = vadd.f32 %v3702, %v3703
  %v3705 = vsel %vm435, %v3403, 0.0
  %v3706 = vadd.f32 %v3704, %v3705
  %v3707 = vrot.slane %v3706, 4
  %v3708 = vadd.f32 %v3706, %v3707
  %v3709 = vrot.slane %v3708, 2
  %v3710 = vadd.f32 %v3708, %v3709
  %v3711 = vrot.slane %v3710, 1
  %v3712 = vadd.f32 %v3710, %v3711
  %v3713 = vsel %vm435, %v3406, 0.0
  %v3714 = vsel %vm435, %v3409, 0.0
  %v3715 = vadd.f32 %v3713, %v3714
  %v3716 = vsel %vm435, %v3412, 0.0
  %v3717 = vadd.f32 %v3715, %v3716
  %v3718 = vrot.slane %v3717, 4
  %v3719 = vadd.f32 %v3717, %v3718
  %v3720 = vrot.slane %v3719, 2
  %v3721 = vadd.f32 %v3719, %v3720
  %v3722 = vrot.slane %v3721, 1
  %v3723 = vadd.f32 %v3721, %v3722
  %v3724 = vsel %vm435, %v3415, 0.0
  %v3725 = vsel %vm435, %v3418, 0.0
  %v3726 = vadd.f32 %v3724, %v3725
  %v3727 = vsel %vm435, %v3421, 0.0
  %v3728 = vadd.f32 %v3726, %v3727
  %v3729 = vrot.slane %v3728, 4
  %v3730 = vadd.f32 %v3728, %v3729
  %v3731 = vrot.slane %v3730, 2
  %v3732 = vadd.f32 %v3730, %v3731
  %v3733 = vrot.slane %v3732, 1
  %v3734 = vadd.f32 %v3732, %v3733
  %v3735 = vsel %vm435, %v3424, 0.0
  %v3736 = vsel %vm435, %v3427, 0.0
  %v3737 = vadd.f32 %v3735, %v3736
  %v3738 = vsel %vm435, %v3430, 0.0
  %v3739 = vadd.f32 %v3737, %v3738
  %v3740 = vrot.slane %v3739, 4
  %v3741 = vadd.f32 %v3739, %v3740
  %v3742 = vrot.slane %v3741, 2
  %v3743 = vadd.f32 %v3741, %v3742
  %v3744 = vrot.slane %v3743, 1
  %v3745 = vadd.f32 %v3743, %v3744
  %v3746 = vsel %vm435, %v3433, 0.0
  %v3747 = vsel %vm435, %v3436, 0.0
  %v3748 = vadd.f32 %v3746, %v3747
  %v3749 = vsel %vm435, %v3439, 0.0
  %v3750 = vadd.f32 %v3748, %v3749
  %v3751 = vrot.slane %v3750, 4
  %v3752 = vadd.f32 %v3750, %v3751
  %v3753 = vrot.slane %v3752, 2
  %v3754 = vadd.f32 %v3752, %v3753
  %v3755 = vrot.slane %v3754, 1
  %v3756 = vadd.f32 %v3754, %v3755
  %v3757 = vsel %vm435, %v3442, 0.0
  %v3758 = vsel %vm435, %v3445, 0.0
  %v3759 = vadd.f32 %v3757, %v3758
  %v3760 = vsel %vm435, %v3448, 0.0
  %v3761 = vadd.f32 %v3759, %v3760
  %v3762 = vrot.slane %v3761, 4
  %v3763 = vadd.f32 %v3761, %v3762
  %v3764 = vrot.slane %v3763, 2
  %v3765 = vadd.f32 %v3763, %v3764
  %v3766 = vrot.slane %v3765, 1
  %v3767 = vadd.f32 %v3765, %v3766
  %v3768 = vsel %vm435, %v3451, 0.0
  %v3769 = vsel %vm435, %v3454, 0.0
  %v3770 = vadd.f32 %v3768, %v3769
  %v3771 = vsel %vm435, %v3457, 0.0
  %v3772 = vadd.f32 %v3770, %v3771
  %v3773 = vrot.slane %v3772, 4
  %v3774 = vadd.f32 %v3772, %v3773
  %v3775 = vrot.slane %v3774, 2
  %v3776 = vadd.f32 %v3774, %v3775
  %v3777 = vrot.slane %v3776, 1
  %v3778 = vadd.f32 %v3776, %v3777
  %v3779 = vsel %vm435, %v3460, 0.0
  %v3780 = vsel %vm435, %v3463, 0.0
  %v3781 = vadd.f32 %v3779, %v3780
  %v3782 = vsel %vm435, %v3466, 0.0
  %v3783 = vadd.f32 %v3781, %v3782
  %v3784 = vrot.slane %v3783, 4
  %v3785 = vadd.f32 %v3783, %v3784
  %v3786 = vrot.slane %v3785, 2
  %v3787 = vadd.f32 %v3785, %v3786
  %v3788 = vrot.slane %v3787, 1
  %v3789 = vadd.f32 %v3787, %v3788
  %v3790 = vsel %vm435, %v3469, 0.0
  %v3791 = vsel %vm435, %v3472, 0.0
  %v3792 = vadd.f32 %v3790, %v3791
  %v3793 = vsel %vm435, %v3475, 0.0
  %v3794 = vadd.f32 %v3792, %v3793
  %v3795 = vrot.slane %v3794, 4
  %v3796 = vadd.f32 %v3794, %v3795
  %v3797 = vrot.slane %v3796, 2
  %v3798 = vadd.f32 %v3796, %v3797
  %v3799 = vrot.slane %v3798, 1
  %v3800 = vadd.f32 %v3798, %v3799
  %v3801 = vsel %vm435, %v3478, 0.0
  %v3802 = vsel %vm435, %v3481, 0.0
  %v3803 = vadd.f32 %v3801, %v3802
  %v3804 = vsel %vm435, %v3484, 0.0
  %v3805 = vadd.f32 %v3803, %v3804
  %v3806 = vrot.slane %v3805, 4
  %v3807 = vadd.f32 %v3805, %v3806
  %v3808 = vrot.slane %v3807, 2
  %v3809 = vadd.f32 %v3807, %v3808
  %v3810 = vrot.slane %v3809, 1
  %v3811 = vadd.f32 %v3809, %v3810
  %v3812 = vsel %vm435, %v3487, 0.0
  %v3813 = vsel %vm435, %v3490, 0.0
  %v3814 = vadd.f32 %v3812, %v3813
  %v3815 = vsel %vm435, %v3493, 0.0
  %v3816 = vadd.f32 %v3814, %v3815
  %v3817 = vrot.slane %v3816, 4
  %v3818 = vadd.f32 %v3816, %v3817
  %v3819 = vrot.slane %v3818, 2
  %v3820 = vadd.f32 %v3818, %v3819
  %v3821 = vrot.slane %v3820, 1
  %v3822 = vadd.f32 %v3820, %v3821
  %v3823 = vsel %vm435, %v3496, 0.0
  %v3824 = vsel %vm435, %v3499, 0.0
  %v3825 = vadd.f32 %v3823, %v3824
  %v3826 = vsel %vm435, %v3502, 0.0
  %v3827 = vadd.f32 %v3825, %v3826
  %v3828 = vrot.slane %v3827, 4
  %v3829 = vadd.f32 %v3827, %v3828
  %v3830 = vrot.slane %v3829, 2
  %v3831 = vadd.f32 %v3829, %v3830
  %v3832 = vrot.slane %v3831, 1
  %v3833 = vadd.f32 %v3831, %v3832
  %v3834 = vsel %vm435, %v3505, 0.0
  %v3835 = vsel %vm435, %v3508, 0.0
  %v3836 = vadd.f32 %v3834, %v3835
  %v3837 = vsel %vm435, %v3511, 0.0
  %v3838 = vadd.f32 %v3836, %v3837
  %v3839 = vrot.slane %v3838, 4
  %v3840 = vadd.f32 %v3838, %v3839
  %v3841 = vrot.slane %v3840, 2
  %v3842 = vadd.f32 %v3840, %v3841
  %v3843 = vrot.slane %v3842, 1
  %v3844 = vadd.f32 %v3842, %v3843
  %v3845 = vsel %vm435, %v3514, 0.0
  %v3846 = vsel %vm435, %v3517, 0.0
  %v3847 = vadd.f32 %v3845, %v3846
  %v3848 = vsel %vm435, %v3520, 0.0
  %v3849 = vadd.f32 %v3847, %v3848
  %v3850 = vrot.slane %v3849, 4
  %v3851 = vadd.f32 %v3849, %v3850
  %v3852 = vrot.slane %v3851, 2
  %v3853 = vadd.f32 %v3851, %v3852
  %v3854 = vrot.slane %v3853, 1
  %v3855 = vadd.f32 %v3853, %v3854
  %v3856 = vsel %vm435, %v3523, 0.0
  %v3857 = vsel %vm435, %v3526, 0.0
  %v3858 = vadd.f32 %v3856, %v3857
  %v3859 = vsel %vm435, %v3529, 0.0
  %v3860 = vadd.f32 %v3858, %v3859
  %v3861 = vrot.slane %v3860, 4
  %v3862 = vadd.f32 %v3860, %v3861
  %v3863 = vrot.slane %v3862, 2
  %v3864 = vadd.f32 %v3862, %v3863
  %v3865 = vrot.slane %v3864, 1
  %v3866 = vadd.f32 %v3864, %v3865
  %v3867 = vsel %vm435, %v3532, 0.0
  %v3868 = vsel %vm435, %v3535, 0.0
  %v3869 = vadd.f32 %v3867, %v3868
  %v3870 = vsel %vm435, %v3538, 0.0
  %v3871 = vadd.f32 %v3869, %v3870
  %v3872 = vrot.slane %v3871, 4
  %v3873 = vadd.f32 %v3871, %v3872
  %v3874 = vrot.slane %v3873, 2
  %v3875 = vadd.f32 %v3873, %v3874
  %v3876 = vrot.slane %v3875, 1
  %v3877 = vadd.f32 %v3875, %v3876
  %v3878 = vsel %vm435, %v3541, 0.0
  %v3879 = vsel %vm435, %v3544, 0.0
  %v3880 = vadd.f32 %v3878, %v3879
  %v3881 = vsel %vm435, %v3547, 0.0
  %v3882 = vadd.f32 %v3880, %v3881
  %v3883 = vrot.slane %v3882, 4
  %v3884 = vadd.f32 %v3882, %v3883
  %v3885 = vrot.slane %v3884, 2
  %v3886 = vadd.f32 %v3884, %v3885
  %v3887 = vrot.slane %v3886, 1
  %v3888 = vadd.f32 %v3886, %v3887
  %v3889 = vsel %vm435, %v3550, 0.0
  %v3890 = vsel %vm435, %v3553, 0.0
  %v3891 = vadd.f32 %v3889, %v3890
  %v3892 = vsel %vm435, %v3556, 0.0
  %v3893 = vadd.f32 %v3891, %v3892
  %v3894 = vrot.slane %v3893, 4
  %v3895 = vadd.f32 %v3893, %v3894
  %v3896 = vrot.slane %v3895, 2
  %v3897 = vadd.f32 %v3895, %v3896
  %v3898 = vrot.slane %v3897, 1
  %v3899 = vadd.f32 %v3897, %v3898
  %v3900 = vsel %vm435, %v3559, 0.0
  %v3901 = vsel %vm435, %v3562, 0.0
  %v3902 = vadd.f32 %v3900, %v3901
  %v3903 = vsel %vm435, %v3565, 0.0
  %v3904 = vadd.f32 %v3902, %v3903
  %v3905 = vrot.slane %v3904, 4
  %v3906 = vadd.f32 %v3904, %v3905
  %v3907 = vrot.slane %v3906, 2
  %v3908 = vadd.f32 %v3906, %v3907
  %v3909 = vrot.slane %v3908, 1
  %v3910 = vadd.f32 %v3908, %v3909
  %v3911 = vsel %vm435, %v3568, 0.0
  %v3912 = vsel %vm435, %v3571, 0.0
  %v3913 = vadd.f32 %v3911, %v3912
  %v3914 = vsel %vm435, %v3574, 0.0
  %v3915 = vadd.f32 %v3913, %v3914
  %v3916 = vrot.slane %v3915, 4
  %v3917 = vadd.f32 %v3915, %v3916
  %v3918 = vrot.slane %v3917, 2
  %v3919 = vadd.f32 %v3917, %v3918
  %v3920 = vrot.slane %v3919, 1
  %v3921 = vadd.f32 %v3919, %v3920
  %v3922 = vsel %vm435, %v3577, 0.0
  %v3923 = vsel %vm435, %v3580, 0.0
  %v3924 = vadd.f32 %v3922, %v3923
  %v3925 = vsel %vm435, %v3583, 0.0
  %v3926 = vadd.f32 %v3924, %v3925
  %v3927 = vrot.slane %v3926, 4
  %v3928 = vadd.f32 %v3926, %v3927
  %v3929 = vrot.slane %v3928, 2
  %v3930 = vadd.f32 %v3928, %v3929
  %v3931 = vrot.slane %v3930, 1
  %v3932 = vadd.f32 %v3930, %v3931
  %v3933 = vsel %vm435, %v3586, 0.0
  %v3934 = vsel %vm435, %v3589, 0.0
  %v3935 = vadd.f32 %v3933, %v3934
  %v3936 = vsel %vm435, %v3592, 0.0
  %v3937 = vadd.f32 %v3935, %v3936
  %v3938 = vrot.slane %v3937, 4
  %v3939 = vadd.f32 %v3937, %v3938
  %v3940 = vrot.slane %v3939, 2
  %v3941 = vadd.f32 %v3939, %v3940
  %v3942 = vrot.slane %v3941, 1
  %v3943 = vadd.f32 %v3941, %v3942
  %v3944 = vsel %vm435, %v3595, 0.0
  %v3945 = vsel %vm435, %v3598, 0.0
  %v3946 = vadd.f32 %v3944, %v3945
  %v3947 = vsel %vm435, %v3601, 0.0
  %v3948 = vadd.f32 %v3946, %v3947
  %v3949 = vrot.slane %v3948, 4
  %v3950 = vadd.f32 %v3948, %v3949
  %v3951 = vrot.slane %v3950, 2
  %v3952 = vadd.f32 %v3950, %v3951
  %v3953 = vrot.slane %v3952, 1
  %v3954 = vadd.f32 %v3952, %v3953
  %v3955 = vmul.f32 %v3613, %v1696
  %v3956 = vmul.f32 %v3624, %v1696
  %v3957 = vmul.f32 %v3635, %v1696
  %v3958 = vmul.f32 %v3646, %v1696
  %v3959 = vmul.f32 %v3657, %v1696
  %v3960 = vmul.f32 %v3668, %v1696
  %v3961 = vmul.f32 %v3679, %v1696
  %v3962 = vmul.f32 %v3690, %v1696
  %v3963 = vmul.f32 %v3701, %v1696
  %v3964 = vmul.f32 %v3712, %v1696
  %v3965 = vmul.f32 %v3723, %v1696
  %v3966 = vmul.f32 %v3734, %v1696
  %v3967 = vmul.f32 %v3745, %v1696
  %v3968 = vmul.f32 %v3756, %v1696
  %v3969 = vmul.f32 %v3767, %v1696
  %v3970 = vmul.f32 %v3778, %v1696
  %v3971 = vmul.f32 %v3789, %v1696
  %v3972 = vmul.f32 %v3800, %v1696
  %v3973 = vmul.f32 %v3811, %v1696
  %v3974 = vmul.f32 %v3822, %v1696
  %v3975 = vmul.f32 %v3833, %v1696
  %v3976 = vmul.f32 %v3844, %v1696
  %v3977 = vmul.f32 %v3855, %v1696
  %v3978 = vmul.f32 %v3866, %v1696
  %v3979 = vmul.f32 %v3877, %v1696
  %v3980 = vmul.f32 %v3888, %v1696
  %v3981 = vmul.f32 %v3899, %v1696
  %v3982 = vmul.f32 %v3910, %v1696
  %v3983 = vmul.f32 %v3921, %v1696
  %v3984 = vmul.f32 %v3932, %v1696
  %v3985 = vmul.f32 %v3943, %v1696
  %v3986 = vmul.f32 %v3954, %v1696
  %v3987 = vadd.f32 %v3316, %v3325
  %v3988 = vadd.f32 %v3319, %v3328
  %v3989 = vadd.f32 %v3322, %v3331
  %v3990 = vadd.f32 %v3460, %v3469
  %v3991 = vadd.f32 %v3463, %v3472
  %v3992 = vadd.f32 %v3466, %v3475
  %v3993 = vadd.f32 %v3987, %v3334
  %v3994 = vadd.f32 %v3988, %v3337
  %v3995 = vadd.f32 %v3989, %v3340
  %v3996 = vadd.f32 %v3990, %v3478
  %v3997 = vadd.f32 %v3991, %v3481
  %v3998 = vadd.f32 %v3992, %v3484
  %v3999 = vadd.f32 %v3993, %v3343
  %v4000 = vadd.f32 %v3994, %v3346
  %v4001 = vadd.f32 %v3995, %v3349
  %v4002 = vadd.f32 %v3996, %v3487
  %v4003 = vadd.f32 %v3997, %v3490
  %v4004 = vadd.f32 %v3998, %v3493
  %v4005 = vadd.f32 %v3999, %v3352
  %v4006 = vadd.f32 %v4000, %v3355
  %v4007 = vadd.f32 %v4001, %v3358
  %v4008 = vadd.f32 %v4002, %v3496
  %v4009 = vadd.f32 %v4003, %v3499
  %v4010 = vadd.f32 %v4004, %v3502
  %v4011 = vadd.f32 %v4005, %v3361
  %v4012 = vadd.f32 %v4006, %v3364
  %v4013 = vadd.f32 %v4007, %v3367
  %v4014 = vadd.f32 %v4008, %v3505
  %v4015 = vadd.f32 %v4009, %v3508
  %v4016 = vadd.f32 %v4010, %v3511
  %v4017 = vadd.f32 %v4011, %v3370
  %v4018 = vadd.f32 %v4012, %v3373
  %v4019 = vadd.f32 %v4013, %v3376
  %v4020 = vadd.f32 %v4014, %v3514
  %v4021 = vadd.f32 %v4015, %v3517
  %v4022 = vadd.f32 %v4016, %v3520
  %v4023 = vadd.f32 %v4017, %v3379
  %v4024 = vadd.f32 %v4018, %v3382
  %v4025 = vadd.f32 %v4019, %v3385
  %v4026 = vadd.f32 %v4020, %v3523
  %v4027 = vadd.f32 %v4021, %v3526
  %v4028 = vadd.f32 %v4022, %v3529
  %v4029 = vadd.f32 %v4023, %v3388
  %v4030 = vadd.f32 %v4024, %v3391
  %v4031 = vadd.f32 %v4025, %v3394
  %v4032 = vadd.f32 %v4026, %v3532
  %v4033 = vadd.f32 %v4027, %v3535
  %v4034 = vadd.f32 %v4028, %v3538
  %v4035 = vadd.f32 %v4029, %v3397
  %v4036 = vadd.f32 %v4030, %v3400
  %v4037 = vadd.f32 %v4031, %v3403
  %v4038 = vadd.f32 %v4032, %v3541
  %v4039 = vadd.f32 %v4033, %v3544
  %v4040 = vadd.f32 %v4034, %v3547
  %v4041 = vadd.f32 %v4035, %v3406
  %v4042 = vadd.f32 %v4036, %v3409
  %v4043 = vadd.f32 %v4037, %v3412
  %v4044 = vadd.f32 %v4038, %v3550
  %v4045 = vadd.f32 %v4039, %v3553
  %v4046 = vadd.f32 %v4040, %v3556
  %v4047 = vadd.f32 %v4041, %v3415
  %v4048 = vadd.f32 %v4042, %v3418
  %v4049 = vadd.f32 %v4043, %v3421
  %v4050 = vadd.f32 %v4044, %v3559
  %v4051 = vadd.f32 %v4045, %v3562
  %v4052 = vadd.f32 %v4046, %v3565
  %v4053 = vadd.f32 %v4047, %v3424
  %v4054 = vadd.f32 %v4048, %v3427
  %v4055 = vadd.f32 %v4049, %v3430
  %v4056 = vadd.f32 %v4050, %v3568
  %v4057 = vadd.f32 %v4051, %v3571
  %v4058 = vadd.f32 %v4052, %v3574
  %v4059 = vadd.f32 %v4053, %v3433
  %v4060 = vadd.f32 %v4054, %v3436
  %v4061 = vadd.f32 %v4055, %v3439
  %v4062 = vadd.f32 %v4056, %v3577
  %v4063 = vadd.f32 %v4057, %v3580
  %v4064 = vadd.f32 %v4058, %v3583
  %v4065 = vadd.f32 %v4059, %v3442
  %v4066 = vadd.f32 %v4060, %v3445
  %v4067 = vadd.f32 %v4061, %v3448
  %v4068 = vadd.f32 %v4062, %v3586
  %v4069 = vadd.f32 %v4063, %v3589
  %v4070 = vadd.f32 %v4064, %v3592
  %v4071 = vadd.f32 %v4065, %v3451
  %v4072 = vadd.f32 %v4066, %v3454
  %v4073 = vadd.f32 %v4067, %v3457
  %v4074 = vadd.f32 %v4068, %v3595
  %v4075 = vadd.f32 %v4069, %v3598
  %v4076 = vadd.f32 %v4070, %v3601
  %v4077 = vmul.f32 %v4071, 0.0625
  %v4078 = vmul.f32 %v4072, 0.0625
  %v4079 = vmul.f32 %v4073, 0.0625
  %v4080 = vmul.f32 %v4074, 0.0625
  %v4081 = vmul.f32 %v4075, 0.0625
  %v4082 = vmul.f32 %v4076, 0.0625
  %v4083 = vxor.u32 %v3955, 2147483648
  %v4084 = vxor.u32 %v3956, 2147483648
  %v4085 = vxor.u32 %v3957, 2147483648
  %v4086 = vxor.u32 %v3958, 2147483648
  %v4087 = vxor.u32 %v3959, 2147483648
  %v4088 = vxor.u32 %v3960, 2147483648
  %v4089 = vxor.u32 %v3961, 2147483648
  %v4090 = vxor.u32 %v3962, 2147483648
  %v4091 = vxor.u32 %v3963, 2147483648
  %v4092 = vxor.u32 %v3964, 2147483648
  %v4093 = vxor.u32 %v3965, 2147483648
  %v4094 = vxor.u32 %v3966, 2147483648
  %v4095 = vxor.u32 %v3967, 2147483648
  %v4096 = vxor.u32 %v3968, 2147483648
  %v4097 = vxor.u32 %v3969, 2147483648
  %v4098 = vxor.u32 %v3970, 2147483648
  %v4099 = vxor.u32 %v3971, 2147483648
  %v4100 = vxor.u32 %v3972, 2147483648
  %v4101 = vxor.u32 %v3973, 2147483648
  %v4102 = vxor.u32 %v3974, 2147483648
  %v4103 = vxor.u32 %v3975, 2147483648
  %v4104 = vxor.u32 %v3976, 2147483648
  %v4105 = vxor.u32 %v3977, 2147483648
  %v4106 = vxor.u32 %v3978, 2147483648
  %v4107 = vxor.u32 %v3979, 2147483648
  %v4108 = vxor.u32 %v3980, 2147483648
  %v4109 = vxor.u32 %v3981, 2147483648
  %v4110 = vxor.u32 %v3982, 2147483648
  %v4111 = vxor.u32 %v3983, 2147483648
  %v4112 = vxor.u32 %v3984, 2147483648
  %v4113 = vxor.u32 %v3985, 2147483648
  %v4114 = vxor.u32 %v3986, 2147483648
  %v4115 = vmul.f32 %v4083, 1.442695
  %v4116 = vpow.pop %v4115
  %v4117 = vmul.f32 %v4084, 1.442695
  %v4118 = vpow.pop %v4117
  %v4119 = vmul.f32 %v4085, 1.442695
  %v4120 = vpow.pop %v4119
  %v4121 = vmul.f32 %v4086, 1.442695
  %v4122 = vpow.pop %v4121
  %v4123 = vmul.f32 %v4087, 1.442695
  %v4124 = vpow.pop %v4123
  %v4125 = vmul.f32 %v4088, 1.442695
  %v4126 = vpow.pop %v4125
  %v4127 = vmul.f32 %v4089, 1.442695
  %v4128 = vpow.pop %v4127
  %v4129 = vmul.f32 %v4090, 1.442695
  %v4130 = vpow.pop %v4129
  %v4131 = vmul.f32 %v4091, 1.442695
  %v4132 = vpow.pop %v4131
  %v4133 = vmul.f32 %v4092, 1.442695
  %v4134 = vpow.pop %v4133
  %v4135 = vmul.f32 %v4093, 1.442695
  %v4136 = vpow.pop %v4135
  %v4137 = vmul.f32 %v4094, 1.442695
  %v4138 = vpow.pop %v4137
  %v4139 = vmul.f32 %v4095, 1.442695
  %v4140 = vpow.pop %v4139
  %v4141 = vmul.f32 %v4096, 1.442695
  %v4142 = vpow.pop %v4141
  %v4143 = vmul.f32 %v4097, 1.442695
  %v4144 = vpow.pop %v4143
  %v4145 = vmul.f32 %v4098, 1.442695
  %v4146 = vpow.pop %v4145
  %v4147 = vmul.f32 %v4099, 1.442695
  %v4148 = vpow.pop %v4147
  %v4149 = vmul.f32 %v4100, 1.442695
  %v4150 = vpow.pop %v4149
  %v4151 = vmul.f32 %v4101, 1.442695
  %v4152 = vpow.pop %v4151
  %v4153 = vmul.f32 %v4102, 1.442695
  %v4154 = vpow.pop %v4153
  %v4155 = vmul.f32 %v4103, 1.442695
  %v4156 = vpow.pop %v4155
  %v4157 = vmul.f32 %v4104, 1.442695
  %v4158 = vpow.pop %v4157
  %v4159 = vmul.f32 %v4105, 1.442695
  %v4160 = vpow.pop %v4159
  %v4161 = vmul.f32 %v4106, 1.442695
  %v4162 = vpow.pop %v4161
  %v4163 = vmul.f32 %v4107, 1.442695
  %v4164 = vpow.pop %v4163
  %v4165 = vmul.f32 %v4108, 1.442695
  %v4166 = vpow.pop %v4165
  %v4167 = vmul.f32 %v4109, 1.442695
  %v4168 = vpow.pop %v4167
  %v4169 = vmul.f32 %v4110, 1.442695
  %v4170 = vpow.pop %v4169
  %v4171 = vmul.f32 %v4111, 1.442695
  %v4172 = vpow.pop %v4171
  %v4173 = vmul.f32 %v4112, 1.442695
  %v4174 = vpow.pop %v4173
  %v4175 = vmul.f32 %v4113, 1.442695
  %v4176 = vpow.pop %v4175
  %v4177 = vmul.f32 %v4114, 1.442695
  %v4178 = vpow.pop %v4177
  %v4179 = vadd.f32 %v4116, 1.0
  %v4180 = vadd.f32 %v4118, 1.0
  %v4181 = vadd.f32 %v4120, 1.0
  %v4182 = vadd.f32 %v4122, 1.0
  %v4183 = vadd.f32 %v4124, 1.0
  %v4184 = vadd.f32 %v4126, 1.0
  %v4185 = vadd.f32 %v4128, 1.0
  %v4186 = vadd.f32 %v4130, 1.0
  %v4187 = vadd.f32 %v4132, 1.0
  %v4188 = vadd.f32 %v4134, 1.0
  %v4189 = vadd.f32 %v4136, 1.0
  %v4190 = vadd.f32 %v4138, 1.0
  %v4191 = vadd.f32 %v4140, 1.0
  %v4192 = vadd.f32 %v4142, 1.0
  %v4193 = vadd.f32 %v4144, 1.0
  %v4194 = vadd.f32 %v4146, 1.0
  %v4195 = vadd.f32 %v4148, 1.0
  %v4196 = vadd.f32 %v4150, 1.0
  %v4197 = vadd.f32 %v4152, 1.0
  %v4198 = vadd.f32 %v4154, 1.0
  %v4199 = vadd.f32 %v4156, 1.0
  %v4200 = vadd.f32 %v4158, 1.0
  %v4201 = vadd.f32 %v4160, 1.0
  %v4202 = vadd.f32 %v4162, 1.0
  %v4203 = vadd.f32 %v4164, 1.0
  %v4204 = vadd.f32 %v4166, 1.0
  %v4205 = vadd.f32 %v4168, 1.0
  %v4206 = vadd.f32 %v4170, 1.0
  %v4207 = vadd.f32 %v4172, 1.0
  %v4208 = vadd.f32 %v4174, 1.0
  %v4209 = vadd.f32 %v4176, 1.0
  %v4210 = vadd.f32 %v4178, 1.0
  %v4211 = vrcp.pop %v4179
  %v4212 = vmul.f32 %v4179, %v4211
  %v4213 = vsub.f32 1.0, %v4212
  %v4214 = vmul.f32 %v4211, %v4213
  %v4215 = vadd.f32 %v4211, %v4214
  %vm4216 = vweird.f32 %v4179
  %vm4217 = vweird.f32 %v4211
  %vm4218 = vmor %vm4216, %vm4217
  %v4219 = vsel %vm4218, %v4211, %v4215
  %v4220 = vand.u32 2147483647, %v4179
  %vm4221 = vcmp.eq.f32.partialorder %v4220, 8.507059e+37
  %v4222 = vand.u32 %v4179, 2147483648
  %v4223 = vor.u32 1.1754944e-38, %v4222
  %v4224 = vsel %vm4221, %v4223, %v4219
  %v4225 = vmul.f32 1.0, %v4224
  %v4226 = vrcp.pop %v4180
  %v4227 = vmul.f32 %v4180, %v4226
  %v4228 = vsub.f32 1.0, %v4227
  %v4229 = vmul.f32 %v4226, %v4228
  %v4230 = vadd.f32 %v4226, %v4229
  %vm4231 = vweird.f32 %v4180
  %vm4232 = vweird.f32 %v4226
  %vm4233 = vmor %vm4231, %vm4232
  %v4234 = vsel %vm4233, %v4226, %v4230
  %v4235 = vand.u32 2147483647, %v4180
  %vm4236 = vcmp.eq.f32.partialorder %v4235, 8.507059e+37
  %v4237 = vand.u32 %v4180, 2147483648
  %v4238 = vor.u32 1.1754944e-38, %v4237
  %v4239 = vsel %vm4236, %v4238, %v4234
  %v4240 = vmul.f32 1.0, %v4239
  %v4241 = vrcp.pop %v4181
  %v4242 = vmul.f32 %v4181, %v4241
  %v4243 = vsub.f32 1.0, %v4242
  %v4244 = vmul.f32 %v4241, %v4243
  %v4245 = vadd.f32 %v4241, %v4244
  %vm4246 = vweird.f32 %v4181
  %vm4247 = vweird.f32 %v4241
  %vm4248 = vmor %vm4246, %vm4247
  %v4249 = vsel %vm4248, %v4241, %v4245
  %v4250 = vand.u32 2147483647, %v4181
  %vm4251 = vcmp.eq.f32.partialorder %v4250, 8.507059e+37
  %v4252 = vand.u32 %v4181, 2147483648
  %v4253 = vor.u32 1.1754944e-38, %v4252
  %v4254 = vsel %vm4251, %v4253, %v4249
  %v4255 = vmul.f32 1.0, %v4254
  %v4256 = vrcp.pop %v4182
  %v4257 = vmul.f32 %v4182, %v4256
  %v4258 = vsub.f32 1.0, %v4257
  %v4259 = vmul.f32 %v4256, %v4258
  %v4260 = vadd.f32 %v4256, %v4259
  %vm4261 = vweird.f32 %v4182
  %vm4262 = vweird.f32 %v4256
  %vm4263 = vmor %vm4261, %vm4262
  %v4264 = vsel %vm4263, %v4256, %v4260
  %v4265 = vand.u32 2147483647, %v4182
  %vm4266 = vcmp.eq.f32.partialorder %v4265, 8.507059e+37
  %v4267 = vand.u32 %v4182, 2147483648
  %v4268 = vor.u32 1.1754944e-38, %v4267
  %v4269 = vsel %vm4266, %v4268, %v4264
  %v4270 = vmul.f32 1.0, %v4269
  %v4271 = vrcp.pop %v4183
  %v4272 = vmul.f32 %v4183, %v4271
  %v4273 = vsub.f32 1.0, %v4272
  %v4274 = vmul.f32 %v4271, %v4273
  %v4275 = vadd.f32 %v4271, %v4274
  %vm4276 = vweird.f32 %v4183
  %vm4277 = vweird.f32 %v4271
  %vm4278 = vmor %vm4276, %vm4277
  %v4279 = vsel %vm4278, %v4271, %v4275
  %v4280 = vand.u32 2147483647, %v4183
  %vm4281 = vcmp.eq.f32.partialorder %v4280, 8.507059e+37
  %v4282 = vand.u32 %v4183, 2147483648
  %v4283 = vor.u32 1.1754944e-38, %v4282
  %v4284 = vsel %vm4281, %v4283, %v4279
  %v4285 = vmul.f32 1.0, %v4284
  %v4286 = vrcp.pop %v4184
  %v4287 = vmul.f32 %v4184, %v4286
  %v4288 = vsub.f32 1.0, %v4287
  %v4289 = vmul.f32 %v4286, %v4288
  %v4290 = vadd.f32 %v4286, %v4289
  %vm4291 = vweird.f32 %v4184
  %vm4292 = vweird.f32 %v4286
  %vm4293 = vmor %vm4291, %vm4292
  %v4294 = vsel %vm4293, %v4286, %v4290
  %v4295 = vand.u32 2147483647, %v4184
  %vm4296 = vcmp.eq.f32.partialorder %v4295, 8.507059e+37
  %v4297 = vand.u32 %v4184, 2147483648
  %v4298 = vor.u32 1.1754944e-38, %v4297
  %v4299 = vsel %vm4296, %v4298, %v4294
  %v4300 = vmul.f32 1.0, %v4299
  %v4301 = vrcp.pop %v4185
  %v4302 = vmul.f32 %v4185, %v4301
  %v4303 = vsub.f32 1.0, %v4302
  %v4304 = vmul.f32 %v4301, %v4303
  %v4305 = vadd.f32 %v4301, %v4304
  %vm4306 = vweird.f32 %v4185
  %vm4307 = vweird.f32 %v4301
  %vm4308 = vmor %vm4306, %vm4307
  %v4309 = vsel %vm4308, %v4301, %v4305
  %v4310 = vand.u32 2147483647, %v4185
  %vm4311 = vcmp.eq.f32.partialorder %v4310, 8.507059e+37
  %v4312 = vand.u32 %v4185, 2147483648
  %v4313 = vor.u32 1.1754944e-38, %v4312
  %v4314 = vsel %vm4311, %v4313, %v4309
  %v4315 = vmul.f32 1.0, %v4314
  %v4316 = vrcp.pop %v4186
  %v4317 = vmul.f32 %v4186, %v4316
  %v4318 = vsub.f32 1.0, %v4317
  %v4319 = vmul.f32 %v4316, %v4318
  %v4320 = vadd.f32 %v4316, %v4319
  %vm4321 = vweird.f32 %v4186
  %vm4322 = vweird.f32 %v4316
  %vm4323 = vmor %vm4321, %vm4322
  %v4324 = vsel %vm4323, %v4316, %v4320
  %v4325 = vand.u32 2147483647, %v4186
  %vm4326 = vcmp.eq.f32.partialorder %v4325, 8.507059e+37
  %v4327 = vand.u32 %v4186, 2147483648
  %v4328 = vor.u32 1.1754944e-38, %v4327
  %v4329 = vsel %vm4326, %v4328, %v4324
  %v4330 = vmul.f32 1.0, %v4329
  %v4331 = vrcp.pop %v4187
  %v4332 = vmul.f32 %v4187, %v4331
  %v4333 = vsub.f32 1.0, %v4332
  %v4334 = vmul.f32 %v4331, %v4333
  %v4335 = vadd.f32 %v4331, %v4334
  %vm4336 = vweird.f32 %v4187
  %vm4337 = vweird.f32 %v4331
  %vm4338 = vmor %vm4336, %vm4337
  %v4339 = vsel %vm4338, %v4331, %v4335
  %v4340 = vand.u32 2147483647, %v4187
  %vm4341 = vcmp.eq.f32.partialorder %v4340, 8.507059e+37
  %v4342 = vand.u32 %v4187, 2147483648
  %v4343 = vor.u32 1.1754944e-38, %v4342
  %v4344 = vsel %vm4341, %v4343, %v4339
  %v4345 = vmul.f32 1.0, %v4344
  %v4346 = vrcp.pop %v4188
  %v4347 = vmul.f32 %v4188, %v4346
  %v4348 = vsub.f32 1.0, %v4347
  %v4349 = vmul.f32 %v4346, %v4348
  %v4350 = vadd.f32 %v4346, %v4349
  %vm4351 = vweird.f32 %v4188
  %vm4352 = vweird.f32 %v4346
  %vm4353 = vmor %vm4351, %vm4352
  %v4354 = vsel %vm4353, %v4346, %v4350
  %v4355 = vand.u32 2147483647, %v4188
  %vm4356 = vcmp.eq.f32.partialorder %v4355, 8.507059e+37
  %v4357 = vand.u32 %v4188, 2147483648
  %v4358 = vor.u32 1.1754944e-38, %v4357
  %v4359 = vsel %vm4356, %v4358, %v4354
  %v4360 = vmul.f32 1.0, %v4359
  %v4361 = vrcp.pop %v4189
  %v4362 = vmul.f32 %v4189, %v4361
  %v4363 = vsub.f32 1.0, %v4362
  %v4364 = vmul.f32 %v4361, %v4363
  %v4365 = vadd.f32 %v4361, %v4364
  %vm4366 = vweird.f32 %v4189
  %vm4367 = vweird.f32 %v4361
  %vm4368 = vmor %vm4366, %vm4367
  %v4369 = vsel %vm4368, %v4361, %v4365
  %v4370 = vand.u32 2147483647, %v4189
  %vm4371 = vcmp.eq.f32.partialorder %v4370, 8.507059e+37
  %v4372 = vand.u32 %v4189, 2147483648
  %v4373 = vor.u32 1.1754944e-38, %v4372
  %v4374 = vsel %vm4371, %v4373, %v4369
  %v4375 = vmul.f32 1.0, %v4374
  %v4376 = vrcp.pop %v4190
  %v4377 = vmul.f32 %v4190, %v4376
  %v4378 = vsub.f32 1.0, %v4377
  %v4379 = vmul.f32 %v4376, %v4378
  %v4380 = vadd.f32 %v4376, %v4379
  %vm4381 = vweird.f32 %v4190
  %vm4382 = vweird.f32 %v4376
  %vm4383 = vmor %vm4381, %vm4382
  %v4384 = vsel %vm4383, %v4376, %v4380
  %v4385 = vand.u32 2147483647, %v4190
  %vm4386 = vcmp.eq.f32.partialorder %v4385, 8.507059e+37
  %v4387 = vand.u32 %v4190, 2147483648
  %v4388 = vor.u32 1.1754944e-38, %v4387
  %v4389 = vsel %vm4386, %v4388, %v4384
  %v4390 = vmul.f32 1.0, %v4389
  %v4391 = vrcp.pop %v4191
  %v4392 = vmul.f32 %v4191, %v4391
  %v4393 = vsub.f32 1.0, %v4392
  %v4394 = vmul.f32 %v4391, %v4393
  %v4395 = vadd.f32 %v4391, %v4394
  %vm4396 = vweird.f32 %v4191
  %vm4397 = vweird.f32 %v4391
  %vm4398 = vmor %vm4396, %vm4397
  %v4399 = vsel %vm4398, %v4391, %v4395
  %v4400 = vand.u32 2147483647, %v4191
  %vm4401 = vcmp.eq.f32.partialorder %v4400, 8.507059e+37
  %v4402 = vand.u32 %v4191, 2147483648
  %v4403 = vor.u32 1.1754944e-38, %v4402
  %v4404 = vsel %vm4401, %v4403, %v4399
  %v4405 = vmul.f32 1.0, %v4404
  %v4406 = vrcp.pop %v4192
  %v4407 = vmul.f32 %v4192, %v4406
  %v4408 = vsub.f32 1.0, %v4407
  %v4409 = vmul.f32 %v4406, %v4408
  %v4410 = vadd.f32 %v4406, %v4409
  %vm4411 = vweird.f32 %v4192
  %vm4412 = vweird.f32 %v4406
  %vm4413 = vmor %vm4411, %vm4412
  %v4414 = vsel %vm4413, %v4406, %v4410
  %v4415 = vand.u32 2147483647, %v4192
  %vm4416 = vcmp.eq.f32.partialorder %v4415, 8.507059e+37
  %v4417 = vand.u32 %v4192, 2147483648
  %v4418 = vor.u32 1.1754944e-38, %v4417
  %v4419 = vsel %vm4416, %v4418, %v4414
  %v4420 = vmul.f32 1.0, %v4419
  %v4421 = vrcp.pop %v4193
  %v4422 = vmul.f32 %v4193, %v4421
  %v4423 = vsub.f32 1.0, %v4422
  %v4424 = vmul.f32 %v4421, %v4423
  %v4425 = vadd.f32 %v4421, %v4424
  %vm4426 = vweird.f32 %v4193
  %vm4427 = vweird.f32 %v4421
  %vm4428 = vmor %vm4426, %vm4427
  %v4429 = vsel %vm4428, %v4421, %v4425
  %v4430 = vand.u32 2147483647, %v4193
  %vm4431 = vcmp.eq.f32.partialorder %v4430, 8.507059e+37
  %v4432 = vand.u32 %v4193, 2147483648
  %v4433 = vor.u32 1.1754944e-38, %v4432
  %v4434 = vsel %vm4431, %v4433, %v4429
  %v4435 = vmul.f32 1.0, %v4434
  %v4436 = vrcp.pop %v4194
  %v4437 = vmul.f32 %v4194, %v4436
  %v4438 = vsub.f32 1.0, %v4437
  %v4439 = vmul.f32 %v4436, %v4438
  %v4440 = vadd.f32 %v4436, %v4439
  %vm4441 = vweird.f32 %v4194
  %vm4442 = vweird.f32 %v4436
  %vm4443 = vmor %vm4441, %vm4442
  %v4444 = vsel %vm4443, %v4436, %v4440
  %v4445 = vand.u32 2147483647, %v4194
  %vm4446 = vcmp.eq.f32.partialorder %v4445, 8.507059e+37
  %v4447 = vand.u32 %v4194, 2147483648
  %v4448 = vor.u32 1.1754944e-38, %v4447
  %v4449 = vsel %vm4446, %v4448, %v4444
  %v4450 = vmul.f32 1.0, %v4449
  %v4451 = vrcp.pop %v4195
  %v4452 = vmul.f32 %v4195, %v4451
  %v4453 = vsub.f32 1.0, %v4452
  %v4454 = vmul.f32 %v4451, %v4453
  %v4455 = vadd.f32 %v4451, %v4454
  %vm4456 = vweird.f32 %v4195
  %vm4457 = vweird.f32 %v4451
  %vm4458 = vmor %vm4456, %vm4457
  %v4459 = vsel %vm4458, %v4451, %v4455
  %v4460 = vand.u32 2147483647, %v4195
  %vm4461 = vcmp.eq.f32.partialorder %v4460, 8.507059e+37
  %v4462 = vand.u32 %v4195, 2147483648
  %v4463 = vor.u32 1.1754944e-38, %v4462
  %v4464 = vsel %vm4461, %v4463, %v4459
  %v4465 = vmul.f32 1.0, %v4464
  %v4466 = vrcp.pop %v4196
  %v4467 = vmul.f32 %v4196, %v4466
  %v4468 = vsub.f32 1.0, %v4467
  %v4469 = vmul.f32 %v4466, %v4468
  %v4470 = vadd.f32 %v4466, %v4469
  %vm4471 = vweird.f32 %v4196
  %vm4472 = vweird.f32 %v4466
  %vm4473 = vmor %vm4471, %vm4472
  %v4474 = vsel %vm4473, %v4466, %v4470
  %v4475 = vand.u32 2147483647, %v4196
  %vm4476 = vcmp.eq.f32.partialorder %v4475, 8.507059e+37
  %v4477 = vand.u32 %v4196, 2147483648
  %v4478 = vor.u32 1.1754944e-38, %v4477
  %v4479 = vsel %vm4476, %v4478, %v4474
  %v4480 = vmul.f32 1.0, %v4479
  %v4481 = vrcp.pop %v4197
  %v4482 = vmul.f32 %v4197, %v4481
  %v4483 = vsub.f32 1.0, %v4482
  %v4484 = vmul.f32 %v4481, %v4483
  %v4485 = vadd.f32 %v4481, %v4484
  %vm4486 = vweird.f32 %v4197
  %vm4487 = vweird.f32 %v4481
  %vm4488 = vmor %vm4486, %vm4487
  %v4489 = vsel %vm4488, %v4481, %v4485
  %v4490 = vand.u32 2147483647, %v4197
  %vm4491 = vcmp.eq.f32.partialorder %v4490, 8.507059e+37
  %v4492 = vand.u32 %v4197, 2147483648
  %v4493 = vor.u32 1.1754944e-38, %v4492
  %v4494 = vsel %vm4491, %v4493, %v4489
  %v4495 = vmul.f32 1.0, %v4494
  %v4496 = vrcp.pop %v4198
  %v4497 = vmul.f32 %v4198, %v4496
  %v4498 = vsub.f32 1.0, %v4497
  %v4499 = vmul.f32 %v4496, %v4498
  %v4500 = vadd.f32 %v4496, %v4499
  %vm4501 = vweird.f32 %v4198
  %vm4502 = vweird.f32 %v4496
  %vm4503 = vmor %vm4501, %vm4502
  %v4504 = vsel %vm4503, %v4496, %v4500
  %v4505 = vand.u32 2147483647, %v4198
  %vm4506 = vcmp.eq.f32.partialorder %v4505, 8.507059e+37
  %v4507 = vand.u32 %v4198, 2147483648
  %v4508 = vor.u32 1.1754944e-38, %v4507
  %v4509 = vsel %vm4506, %v4508, %v4504
  %v4510 = vmul.f32 1.0, %v4509
  %v4511 = vrcp.pop %v4199
  %v4512 = vmul.f32 %v4199, %v4511
  %v4513 = vsub.f32 1.0, %v4512
  %v4514 = vmul.f32 %v4511, %v4513
  %v4515 = vadd.f32 %v4511, %v4514
  %vm4516 = vweird.f32 %v4199
  %vm4517 = vweird.f32 %v4511
  %vm4518 = vmor %vm4516, %vm4517
  %v4519 = vsel %vm4518, %v4511, %v4515
  %v4520 = vand.u32 2147483647, %v4199
  %vm4521 = vcmp.eq.f32.partialorder %v4520, 8.507059e+37
  %v4522 = vand.u32 %v4199, 2147483648
  %v4523 = vor.u32 1.1754944e-38, %v4522
  %v4524 = vsel %vm4521, %v4523, %v4519
  %v4525 = vmul.f32 1.0, %v4524
  %v4526 = vrcp.pop %v4200
  %v4527 = vmul.f32 %v4200, %v4526
  %v4528 = vsub.f32 1.0, %v4527
  %v4529 = vmul.f32 %v4526, %v4528
  %v4530 = vadd.f32 %v4526, %v4529
  %vm4531 = vweird.f32 %v4200
  %vm4532 = vweird.f32 %v4526
  %vm4533 = vmor %vm4531, %vm4532
  %v4534 = vsel %vm4533, %v4526, %v4530
  %v4535 = vand.u32 2147483647, %v4200
  %vm4536 = vcmp.eq.f32.partialorder %v4535, 8.507059e+37
  %v4537 = vand.u32 %v4200, 2147483648
  %v4538 = vor.u32 1.1754944e-38, %v4537
  %v4539 = vsel %vm4536, %v4538, %v4534
  %v4540 = vmul.f32 1.0, %v4539
  %v4541 = vrcp.pop %v4201
  %v4542 = vmul.f32 %v4201, %v4541
  %v4543 = vsub.f32 1.0, %v4542
  %v4544 = vmul.f32 %v4541, %v4543
  %v4545 = vadd.f32 %v4541, %v4544
  %vm4546 = vweird.f32 %v4201
  %vm4547 = vweird.f32 %v4541
  %vm4548 = vmor %vm4546, %vm4547
  %v4549 = vsel %vm4548, %v4541, %v4545
  %v4550 = vand.u32 2147483647, %v4201
  %vm4551 = vcmp.eq.f32.partialorder %v4550, 8.507059e+37
  %v4552 = vand.u32 %v4201, 2147483648
  %v4553 = vor.u32 1.1754944e-38, %v4552
  %v4554 = vsel %vm4551, %v4553, %v4549
  %v4555 = vmul.f32 1.0, %v4554
  %v4556 = vrcp.pop %v4202
  %v4557 = vmul.f32 %v4202, %v4556
  %v4558 = vsub.f32 1.0, %v4557
  %v4559 = vmul.f32 %v4556, %v4558
  %v4560 = vadd.f32 %v4556, %v4559
  %vm4561 = vweird.f32 %v4202
  %vm4562 = vweird.f32 %v4556
  %vm4563 = vmor %vm4561, %vm4562
  %v4564 = vsel %vm4563, %v4556, %v4560
  %v4565 = vand.u32 2147483647, %v4202
  %vm4566 = vcmp.eq.f32.partialorder %v4565, 8.507059e+37
  %v4567 = vand.u32 %v4202, 2147483648
  %v4568 = vor.u32 1.1754944e-38, %v4567
  %v4569 = vsel %vm4566, %v4568, %v4564
  %v4570 = vmul.f32 1.0, %v4569
  %v4571 = vrcp.pop %v4203
  %v4572 = vmul.f32 %v4203, %v4571
  %v4573 = vsub.f32 1.0, %v4572
  %v4574 = vmul.f32 %v4571, %v4573
  %v4575 = vadd.f32 %v4571, %v4574
  %vm4576 = vweird.f32 %v4203
  %vm4577 = vweird.f32 %v4571
  %vm4578 = vmor %vm4576, %vm4577
  %v4579 = vsel %vm4578, %v4571, %v4575
  %v4580 = vand.u32 2147483647, %v4203
  %vm4581 = vcmp.eq.f32.partialorder %v4580, 8.507059e+37
  %v4582 = vand.u32 %v4203, 2147483648
  %v4583 = vor.u32 1.1754944e-38, %v4582
  %v4584 = vsel %vm4581, %v4583, %v4579
  %v4585 = vmul.f32 1.0, %v4584
  %v4586 = vrcp.pop %v4204
  %v4587 = vmul.f32 %v4204, %v4586
  %v4588 = vsub.f32 1.0, %v4587
  %v4589 = vmul.f32 %v4586, %v4588
  %v4590 = vadd.f32 %v4586, %v4589
  %vm4591 = vweird.f32 %v4204
  %vm4592 = vweird.f32 %v4586
  %vm4593 = vmor %vm4591, %vm4592
  %v4594 = vsel %vm4593, %v4586, %v4590
  %v4595 = vand.u32 2147483647, %v4204
  %vm4596 = vcmp.eq.f32.partialorder %v4595, 8.507059e+37
  %v4597 = vand.u32 %v4204, 2147483648
  %v4598 = vor.u32 1.1754944e-38, %v4597
  %v4599 = vsel %vm4596, %v4598, %v4594
  %v4600 = vmul.f32 1.0, %v4599
  %v4601 = vrcp.pop %v4205
  %v4602 = vmul.f32 %v4205, %v4601
  %v4603 = vsub.f32 1.0, %v4602
  %v4604 = vmul.f32 %v4601, %v4603
  %v4605 = vadd.f32 %v4601, %v4604
  %vm4606 = vweird.f32 %v4205
  %vm4607 = vweird.f32 %v4601
  %vm4608 = vmor %vm4606, %vm4607
  %v4609 = vsel %vm4608, %v4601, %v4605
  %v4610 = vand.u32 2147483647, %v4205
  %vm4611 = vcmp.eq.f32.partialorder %v4610, 8.507059e+37
  %v4612 = vand.u32 %v4205, 2147483648
  %v4613 = vor.u32 1.1754944e-38, %v4612
  %v4614 = vsel %vm4611, %v4613, %v4609
  %v4615 = vmul.f32 1.0, %v4614
  %v4616 = vrcp.pop %v4206
  %v4617 = vmul.f32 %v4206, %v4616
  %v4618 = vsub.f32 1.0, %v4617
  %v4619 = vmul.f32 %v4616, %v4618
  %v4620 = vadd.f32 %v4616, %v4619
  %vm4621 = vweird.f32 %v4206
  %vm4622 = vweird.f32 %v4616
  %vm4623 = vmor %vm4621, %vm4622
  %v4624 = vsel %vm4623, %v4616, %v4620
  %v4625 = vand.u32 2147483647, %v4206
  %vm4626 = vcmp.eq.f32.partialorder %v4625, 8.507059e+37
  %v4627 = vand.u32 %v4206, 2147483648
  %v4628 = vor.u32 1.1754944e-38, %v4627
  %v4629 = vsel %vm4626, %v4628, %v4624
  %v4630 = vmul.f32 1.0, %v4629
  %v4631 = vrcp.pop %v4207
  %v4632 = vmul.f32 %v4207, %v4631
  %v4633 = vsub.f32 1.0, %v4632
  %v4634 = vmul.f32 %v4631, %v4633
  %v4635 = vadd.f32 %v4631, %v4634
  %vm4636 = vweird.f32 %v4207
  %vm4637 = vweird.f32 %v4631
  %vm4638 = vmor %vm4636, %vm4637
  %v4639 = vsel %vm4638, %v4631, %v4635
  %v4640 = vand.u32 2147483647, %v4207
  %vm4641 = vcmp.eq.f32.partialorder %v4640, 8.507059e+37
  %v4642 = vand.u32 %v4207, 2147483648
  %v4643 = vor.u32 1.1754944e-38, %v4642
  %v4644 = vsel %vm4641, %v4643, %v4639
  %v4645 = vmul.f32 1.0, %v4644
  %v4646 = vrcp.pop %v4208
  %v4647 = vmul.f32 %v4208, %v4646
  %v4648 = vsub.f32 1.0, %v4647
  %v4649 = vmul.f32 %v4646, %v4648
  %v4650 = vadd.f32 %v4646, %v4649
  %vm4651 = vweird.f32 %v4208
  %vm4652 = vweird.f32 %v4646
  %vm4653 = vmor %vm4651, %vm4652
  %v4654 = vsel %vm4653, %v4646, %v4650
  %v4655 = vand.u32 2147483647, %v4208
  %vm4656 = vcmp.eq.f32.partialorder %v4655, 8.507059e+37
  %v4657 = vand.u32 %v4208, 2147483648
  %v4658 = vor.u32 1.1754944e-38, %v4657
  %v4659 = vsel %vm4656, %v4658, %v4654
  %v4660 = vmul.f32 1.0, %v4659
  %v4661 = vrcp.pop %v4209
  %v4662 = vmul.f32 %v4209, %v4661
  %v4663 = vsub.f32 1.0, %v4662
  %v4664 = vmul.f32 %v4661, %v4663
  %v4665 = vadd.f32 %v4661, %v4664
  %vm4666 = vweird.f32 %v4209
  %vm4667 = vweird.f32 %v4661
  %vm4668 = vmor %vm4666, %vm4667
  %v4669 = vsel %vm4668, %v4661, %v4665
  %v4670 = vand.u32 2147483647, %v4209
  %vm4671 = vcmp.eq.f32.partialorder %v4670, 8.507059e+37
  %v4672 = vand.u32 %v4209, 2147483648
  %v4673 = vor.u32 1.1754944e-38, %v4672
  %v4674 = vsel %vm4671, %v4673, %v4669
  %v4675 = vmul.f32 1.0, %v4674
  %v4676 = vrcp.pop %v4210
  %v4677 = vmul.f32 %v4210, %v4676
  %v4678 = vsub.f32 1.0, %v4677
  %v4679 = vmul.f32 %v4676, %v4678
  %v4680 = vadd.f32 %v4676, %v4679
  %vm4681 = vweird.f32 %v4210
  %vm4682 = vweird.f32 %v4676
  %vm4683 = vmor %vm4681, %vm4682
  %v4684 = vsel %vm4683, %v4676, %v4680
  %v4685 = vand.u32 2147483647, %v4210
  %vm4686 = vcmp.eq.f32.partialorder %v4685, 8.507059e+37
  %v4687 = vand.u32 %v4210, 2147483648
  %v4688 = vor.u32 1.1754944e-38, %v4687
  %v4689 = vsel %vm4686, %v4688, %v4684
  %v4690 = vmul.f32 1.0, %v4689
  %v4691 = vtanh.pop %v3955
  %v4692 = vtanh.pop %v3956
  %v4693 = vtanh.pop %v3957
  %v4694 = vtanh.pop %v3958
  %v4695 = vtanh.pop %v3959
  %v4696 = vtanh.pop %v3960
  %v4697 = vtanh.pop %v3961
  %v4698 = vtanh.pop %v3962
  %v4699 = vtanh.pop %v3963
  %v4700 = vtanh.pop %v3964
  %v4701 = vtanh.pop %v3965
  %v4702 = vtanh.pop %v3966
  %v4703 = vtanh.pop %v3967
  %v4704 = vtanh.pop %v3968
  %v4705 = vtanh.pop %v3969
  %v4706 = vtanh.pop %v3970
  %v4707 = vtanh.pop %v3971
  %v4708 = vtanh.pop %v3972
  %v4709 = vtanh.pop %v3973
  %v4710 = vtanh.pop %v3974
  %v4711 = vtanh.pop %v3975
  %v4712 = vtanh.pop %v3976
  %v4713 = vtanh.pop %v3977
  %v4714 = vtanh.pop %v3978
  %v4715 = vtanh.pop %v3979
  %v4716 = vtanh.pop %v3980
  %v4717 = vtanh.pop %v3981
  %v4718 = vtanh.pop %v3982
  %v4719 = vtanh.pop %v3983
  %v4720 = vtanh.pop %v3984
  %v4721 = vtanh.pop %v3985
  %v4722 = vtanh.pop %v3986
  %v4723 = vmul.f32 %v4225, %v4691
  %v4724 = vmul.f32 %v4240, %v4692
  %v4725 = vmul.f32 %v4255, %v4693
  %v4726 = vmul.f32 %v4270, %v4694
  %v4727 = vmul.f32 %v4285, %v4695
  %v4728 = vmul.f32 %v4300, %v4696
  %v4729 = vmul.f32 %v4315, %v4697
  %v4730 = vmul.f32 %v4330, %v4698
  %v4731 = vmul.f32 %v4345, %v4699
  %v4732 = vmul.f32 %v4360, %v4700
  %v4733 = vmul.f32 %v4375, %v4701
  %v4734 = vmul.f32 %v4390, %v4702
  %v4735 = vmul.f32 %v4405, %v4703
  %v4736 = vmul.f32 %v4420, %v4704
  %v4737 = vmul.f32 %v4435, %v4705
  %v4738 = vmul.f32 %v4450, %v4706
  %v4739 = vmul.f32 %v4465, %v4707
  %v4740 = vmul.f32 %v4480, %v4708
  %v4741 = vmul.f32 %v4495, %v4709
  %v4742 = vmul.f32 %v4510, %v4710
  %v4743 = vmul.f32 %v4525, %v4711
  %v4744 = vmul.f32 %v4540, %v4712
  %v4745 = vmul.f32 %v4555, %v4713
  %v4746 = vmul.f32 %v4570, %v4714
  %v4747 = vmul.f32 %v4585, %v4715
  %v4748 = vmul.f32 %v4600, %v4716
  %v4749 = vmul.f32 %v4615, %v4717
  %v4750 = vmul.f32 %v4630, %v4718
  %v4751 = vmul.f32 %v4645, %v4719
  %v4752 = vmul.f32 %v4660, %v4720
  %v4753 = vmul.f32 %v4675, %v4721
  %v4754 = vmul.f32 %v4690, %v4722
  %v4755 = vxor.u32 %v4077, 2147483648
  %v4756 = vxor.u32 %v4078, 2147483648
  %v4757 = vxor.u32 %v4079, 2147483648
  %v4758 = vxor.u32 %v4080, 2147483648
  %v4759 = vxor.u32 %v4081, 2147483648
  %v4760 = vxor.u32 %v4082, 2147483648
  %v4761 = vmul.f32 %v4755, 1.442695
  %v4762 = vpow.pop %v4761
  %v4763 = vmul.f32 %v4756, 1.442695
  %v4764 = vpow.pop %v4763
  %v4765 = vmul.f32 %v4757, 1.442695
  %v4766 = vpow.pop %v4765
  %v4767 = vmul.f32 %v4758, 1.442695
  %v4768 = vpow.pop %v4767
  %v4769 = vmul.f32 %v4759, 1.442695
  %v4770 = vpow.pop %v4769
  %v4771 = vmul.f32 %v4760, 1.442695
  %v4772 = vpow.pop %v4771
  %v4773 = vadd.f32 %v4762, 1.0
  %v4774 = vadd.f32 %v4764, 1.0
  %v4775 = vadd.f32 %v4766, 1.0
  %v4776 = vadd.f32 %v4768, 1.0
  %v4777 = vadd.f32 %v4770, 1.0
  %v4778 = vadd.f32 %v4772, 1.0
  %v4779 = vrcp.pop %v4773
  %v4780 = vmul.f32 %v4773, %v4779
  %v4781 = vsub.f32 1.0, %v4780
  %v4782 = vmul.f32 %v4779, %v4781
  %v4783 = vadd.f32 %v4779, %v4782
  %vm4784 = vweird.f32 %v4773
  %vm4785 = vweird.f32 %v4779
  %vm4786 = vmor %vm4784, %vm4785
  %v4787 = vsel %vm4786, %v4779, %v4783
  %v4788 = vand.u32 2147483647, %v4773
  %vm4789 = vcmp.eq.f32.partialorder %v4788, 8.507059e+37
  %v4790 = vand.u32 %v4773, 2147483648
  %v4791 = vor.u32 1.1754944e-38, %v4790
  %v4792 = vsel %vm4789, %v4791, %v4787
  %v4793 = vmul.f32 1.0, %v4792
  %v4794 = vrcp.pop %v4774
  %v4795 = vmul.f32 %v4774, %v4794
  %v4796 = vsub.f32 1.0, %v4795
  %v4797 = vmul.f32 %v4794, %v4796
  %v4798 = vadd.f32 %v4794, %v4797
  %vm4799 = vweird.f32 %v4774
  %vm4800 = vweird.f32 %v4794
  %vm4801 = vmor %vm4799, %vm4800
  %v4802 = vsel %vm4801, %v4794, %v4798
  %v4803 = vand.u32 2147483647, %v4774
  %vm4804 = vcmp.eq.f32.partialorder %v4803, 8.507059e+37
  %v4805 = vand.u32 %v4774, 2147483648
  %v4806 = vor.u32 1.1754944e-38, %v4805
  %v4807 = vsel %vm4804, %v4806, %v4802
  %v4808 = vmul.f32 1.0, %v4807
  %v4809 = vrcp.pop %v4775
  %v4810 = vmul.f32 %v4775, %v4809
  %v4811 = vsub.f32 1.0, %v4810
  %v4812 = vmul.f32 %v4809, %v4811
  %v4813 = vadd.f32 %v4809, %v4812
  %vm4814 = vweird.f32 %v4775
  %vm4815 = vweird.f32 %v4809
  %vm4816 = vmor %vm4814, %vm4815
  %v4817 = vsel %vm4816, %v4809, %v4813
  %v4818 = vand.u32 2147483647, %v4775
  %vm4819 = vcmp.eq.f32.partialorder %v4818, 8.507059e+37
  %v4820 = vand.u32 %v4775, 2147483648
  %v4821 = vor.u32 1.1754944e-38, %v4820
  %v4822 = vsel %vm4819, %v4821, %v4817
  %v4823 = vmul.f32 1.0, %v4822
  %v4824 = vrcp.pop %v4776
  %v4825 = vmul.f32 %v4776, %v4824
  %v4826 = vsub.f32 1.0, %v4825
  %v4827 = vmul.f32 %v4824, %v4826
  %v4828 = vadd.f32 %v4824, %v4827
  %vm4829 = vweird.f32 %v4776
  %vm4830 = vweird.f32 %v4824
  %vm4831 = vmor %vm4829, %vm4830
  %v4832 = vsel %vm4831, %v4824, %v4828
  %v4833 = vand.u32 2147483647, %v4776
  %vm4834 = vcmp.eq.f32.partialorder %v4833, 8.507059e+37
  %v4835 = vand.u32 %v4776, 2147483648
  %v4836 = vor.u32 1.1754944e-38, %v4835
  %v4837 = vsel %vm4834, %v4836, %v4832
  %v4838 = vmul.f32 1.0, %v4837
  %v4839 = vrcp.pop %v4777
  %v4840 = vmul.f32 %v4777, %v4839
  %v4841 = vsub.f32 1.0, %v4840
  %v4842 = vmul.f32 %v4839, %v4841
  %v4843 = vadd.f32 %v4839, %v4842
  %vm4844 = vweird.f32 %v4777
  %vm4845 = vweird.f32 %v4839
  %vm4846 = vmor %vm4844, %vm4845
  %v4847 = vsel %vm4846, %v4839, %v4843
  %v4848 = vand.u32 2147483647, %v4777
  %vm4849 = vcmp.eq.f32.partialorder %v4848, 8.507059e+37
  %v4850 = vand.u32 %v4777, 2147483648
  %v4851 = vor.u32 1.1754944e-38, %v4850
  %v4852 = vsel %vm4849, %v4851, %v4847
  %v4853 = vmul.f32 1.0, %v4852
  %v4854 = vrcp.pop %v4778
  %v4855 = vmul.f32 %v4778, %v4854
  %v4856 = vsub.f32 1.0, %v4855
  %v4857 = vmul.f32 %v4854, %v4856
  %v4858 = vadd.f32 %v4854, %v4857
  %vm4859 = vweird.f32 %v4778
  %vm4860 = vweird.f32 %v4854
  %vm4861 = vmor %vm4859, %vm4860
  %v4862 = vsel %vm4861, %v4854, %v4858
  %v4863 = vand.u32 2147483647, %v4778
  %vm4864 = vcmp.eq.f32.partialorder %v4863, 8.507059e+37
  %v4865 = vand.u32 %v4778, 2147483648
  %v4866 = vor.u32 1.1754944e-38, %v4865
  %v4867 = vsel %vm4864, %v4866, %v4862
  %v4868 = vmul.f32 1.0, %v4867
  %v4869 = vtanh.pop %v4077
  %v4870 = vtanh.pop %v4078
  %v4871 = vtanh.pop %v4079
  %v4872 = vtanh.pop %v4080
  %v4873 = vtanh.pop %v4081
  %v4874 = vtanh.pop %v4082
  %v4875 = vmul.f32 %v4793, %v4869
  %v4876 = vmul.f32 %v4808, %v4870
  %v4877 = vmul.f32 %v4823, %v4871
  %v4878 = vmul.f32 %v4838, %v4872
  %v4879 = vmul.f32 %v4853, %v4873
  %v4880 = vmul.f32 %v4868, %v4874
  %v4881 = vmul.f32 %v988, 0.5
  %v4882 = vmul.f32 %v989, 0.5
  %v4883 = vmul.f32 %v990, 0.5
  %v4884 = vmul.f32 %v991, 0.5
  %v4917 = vsel %vm795, %v4724, %v4723
  %vm4918 = vcmask 1042434
  %v4919 = vsel %vm4918, %v4725, %v4917
  %vm4920 = vcmask 1043459
  %v4921 = vsel %vm4920, %v4726, %v4919
  %vm4922 = vcmask 1044484
  %v4923 = vsel %vm4922, %v4727, %v4921
  %vm4924 = vcmask 1045509
  %v4925 = vsel %vm4924, %v4728, %v4923
  %vm4926 = vcmask 1046534
  %v4927 = vsel %vm4926, %v4729, %v4925
  %vm4928 = vcmask 1047559
  %v4929 = vsel %vm4928, %v4730, %v4927
  %v4930 = vsel %vm795, %v4732, %v4731
  %v4931 = vsel %vm4918, %v4733, %v4930
  %v4932 = vsel %vm4920, %v4734, %v4931
  %v4933 = vsel %vm4922, %v4735, %v4932
  %v4934 = vsel %vm4924, %v4736, %v4933
  %v4935 = vsel %vm4926, %v4737, %v4934
  %v4936 = vsel %vm4928, %v4738, %v4935
  %v4937 = vsel %vm795, %v4740, %v4739
  %v4938 = vsel %vm4918, %v4741, %v4937
  %v4939 = vsel %vm4920, %v4742, %v4938
  %v4940 = vsel %vm4922, %v4743, %v4939
  %v4941 = vsel %vm4924, %v4744, %v4940
  %v4942 = vsel %vm4926, %v4745, %v4941
  %v4943 = vsel %vm4928, %v4746, %v4942
  %v4944 = vsel %vm795, %v4748, %v4747
  %v4945 = vsel %vm4918, %v4749, %v4944
  %v4946 = vsel %vm4920, %v4750, %v4945
  %v4947 = vsel %vm4922, %v4751, %v4946
  %v4948 = vsel %vm4924, %v4752, %v4947
  %v4949 = vsel %vm4926, %v4753, %v4948
  %v4950 = vsel %vm4928, %v4754, %v4949
  %v4955 = vmul.f32 %v988, %v4929
  %v4956 = vmul.f32 %v989, %v4936
  %v4957 = vmul.f32 %v990, %v4943
  %v4958 = vmul.f32 %v991, %v4950
  %v4959 = vadd.f32 %v4881, %v4955
  %v4960 = vadd.f32 %v4882, %v4956
  %v4961 = vadd.f32 %v4883, %v4957
  %v4962 = vadd.f32 %v4884, %v4958
  %v4963 = vmul.f32 %v1910, 0.5
  %v4964 = vmul.f32 %v1911, 0.5
  %v4965 = vmul.f32 %v1912, 0.5
  %v4966 = vmul.f32 %v1913, 0.5
  %v4967 = vmul.f32 %v1914, 0.5
  %v4968 = vmul.f32 %v1915, 0.5
  %v4969 = vmul.f32 %v1910, %v4875
  %v4970 = vmul.f32 %v1911, %v4876
  %v4971 = vmul.f32 %v1912, %v4877
  %v4972 = vmul.f32 %v1913, %v4878
  %v4973 = vmul.f32 %v1914, %v4879
  %v4974 = vmul.f32 %v1915, %v4880
  %v4975 = vadd.f32 %v4963, %v4969
  %v4976 = vadd.f32 %v4964, %v4970
  %v4977 = vadd.f32 %v4965, %v4971
  %v4978 = vadd.f32 %v4966, %v4972
  %v4979 = vadd.f32 %v4967, %v4973
  %v4980 = vadd.f32 %v4968, %v4974
  %v4981 = vsel %vm435, %v4959, -inf
  %v4982 = vsel %vm435, %v4960, -inf
  %v4983 = vmax.f32 %v4981, %v4982
  %v4984 = vrot.slane %v4983, 4
  %v4985 = vmax.f32 %v4983, %v4984
  %v4986 = vrot.slane %v4985, 2
  %v4987 = vmax.f32 %v4985, %v4986
  %v4988 = vrot.slane %v4987, 1
  %v4989 = vmax.f32 %v4987, %v4988
  %v4990 = vsel %vm435, %v4961, -inf
  %v4991 = vsel %vm435, %v4962, -inf
  %v4992 = vmax.f32 %v4990, %v4991
  %v4993 = vrot.slane %v4992, 4
  %v4994 = vmax.f32 %v4992, %v4993
  %v4995 = vrot.slane %v4994, 2
  %v4996 = vmax.f32 %v4994, %v4995
  %v4997 = vrot.slane %v4996, 1
  %v4998 = vmax.f32 %v4996, %v4997
  %v4999 = vsel %vm435, %v4975, -inf
  %v5000 = vsel %vm435, %v4976, -inf
  %v5001 = vsel %vm435, %v4977, -inf
  %v5002 = vmax.f32 %v4999, %v5001
  %v5003 = vmax.f32 %v5002, %v5000
  %v5004 = vrot.slane %v5003, 4
  %v5005 = vmax.f32 %v5003, %v5004
  %v5006 = vrot.slane %v5005, 2
  %v5007 = vmax.f32 %v5005, %v5006
  %v5008 = vrot.slane %v5007, 1
  %v5009 = vmax.f32 %v5007, %v5008
  %v5010 = vsel %vm435, %v4978, -inf
  %v5011 = vsel %vm435, %v4979, -inf
  %v5012 = vsel %vm435, %v4980, -inf
  %v5013 = vmax.f32 %v5010, %v5012
  %v5014 = vmax.f32 %v5013, %v5011
  %v5015 = vrot.slane %v5014, 4
  %v5016 = vmax.f32 %v5014, %v5015
  %v5017 = vrot.slane %v5016, 2
  %v5018 = vmax.f32 %v5016, %v5017
  %v5019 = vrot.slane %v5018, 1
  %v5020 = vmax.f32 %v5018, %v5019
  %v5023 = vsel %vm795, %v4998, %v4989
  %v5027 = vsel %vm795, %v5020, %v5009
  %5028 = vrot.lane.b32.xlu0 %v5027, 16
  %v5029 = vpop.permute.xlu0 %5028
  %v5031 = vsel %vm435, %v5023, %v5029
  %s5032 = smul.u32 4, 4
  %s5033 = smul.u32 %s5032, 8
  %s5034 = sshll.u32 %s5033, 4
  %5035 = dma.done [#allocation7], %s5034
  %s5036 = smul.u32 4, 128
  %s5037 = smul.u32 %s5036, 4
  %s5038 = sshll.u32 %s5037, 4
  %5039 = dma.done %s187, %s5038
  %s5040 = smul.u32 4, 64
  %s5041 = smul.u32 %s5040, 2
  %s5042 = sshll.u32 %s5041, 4
  %5043 = dma.done %s201, %s5042
  %v5044 = vpack.c.bf16 %v5031, %v5031
  %v5045 = vld [vmem:[#allocation4] sm:$0xff]
  %v5046 = vld [vmem:[#allocation4 + $0x8] sm:$0xff]
  %v5047 = vld [vmem:[#allocation4 + $0x10] sm:$0xff]
  %v5048 = vld [vmem:[#allocation4 + $0x18] sm:$0xff]
  %v5049 = vld [vmem:[#allocation4 + $0x20] sm:$0xff]
  %v5050 = vld [vmem:[#allocation4 + $0x28] sm:$0xff]
  %v5051 = vld [vmem:[#allocation4 + $0x30] sm:$0xff]
  %v5052 = vld [vmem:[#allocation4 + $0x38] sm:$0xff]
  %v5053 = vld [vmem:[#allocation4 + $0x40] sm:$0xff]
  %v5054 = vld [vmem:[#allocation4 + $0x48] sm:$0xff]
  %v5055 = vld [vmem:[#allocation4 + $0x50] sm:$0xff]
  %v5056 = vld [vmem:[#allocation4 + $0x58] sm:$0xff]
  %v5057 = vld [vmem:[#allocation4 + $0x60] sm:$0xff]
  %v5058 = vld [vmem:[#allocation4 + $0x68] sm:$0xff]
  %v5059 = vld [vmem:[#allocation4 + $0x70] sm:$0xff]
  %v5060 = vld [vmem:[#allocation4 + $0x78] sm:$0xff]
  %v5061 = vld [vmem:[%s53] sm:$0xff]
  %v5063 = vperm.slane %v5061, 0
  %v5064 = vperm.slane %v5061, 1
  %v5065 = vperm.slane %v5061, 2
  %v5066 = vperm.slane %v5061, 3
  %v5067 = vperm.slane %v5061, 4
  %v5068 = vperm.slane %v5061, 5
  %v5069 = vperm.slane %v5061, 6
  %v5070 = vperm.slane %v5061, 7
  %v5095 = vunpack.c.l.b16 %v5045
  %v5096 = vunpack.c.h.b16 %v5045
  %v5097 = vunpack.c.l.b16 %v5046
  %v5098 = vunpack.c.h.b16 %v5046
  %v5099 = vunpack.c.l.b16 %v5047
  %v5100 = vunpack.c.h.b16 %v5047
  %v5101 = vunpack.c.l.b16 %v5048
  %v5102 = vunpack.c.h.b16 %v5048
  %v5103 = vunpack.c.l.b16 %v5049
  %v5104 = vunpack.c.h.b16 %v5049
  %v5105 = vunpack.c.l.b16 %v5050
  %v5106 = vunpack.c.h.b16 %v5050
  %v5107 = vunpack.c.l.b16 %v5051
  %v5108 = vunpack.c.h.b16 %v5051
  %v5109 = vunpack.c.l.b16 %v5052
  %v5110 = vunpack.c.h.b16 %v5052
  %v5111 = vunpack.c.l.b16 %v5053
  %v5112 = vunpack.c.h.b16 %v5053
  %v5113 = vunpack.c.l.b16 %v5054
  %v5114 = vunpack.c.h.b16 %v5054
  %v5115 = vunpack.c.l.b16 %v5055
  %v5116 = vunpack.c.h.b16 %v5055
  %v5117 = vunpack.c.l.b16 %v5056
  %v5118 = vunpack.c.h.b16 %v5056
  %v5119 = vunpack.c.l.b16 %v5057
  %v5120 = vunpack.c.h.b16 %v5057
  %v5121 = vunpack.c.l.b16 %v5058
  %v5122 = vunpack.c.h.b16 %v5058
  %v5123 = vunpack.c.l.b16 %v5059
  %v5124 = vunpack.c.h.b16 %v5059
  %v5125 = vunpack.c.l.b16 %v5060
  %v5126 = vunpack.c.h.b16 %v5060
  %v5127 = vpack.c.b16 %v5103, %v5095
  %v5128 = vpack.c.b16 %v5104, %v5096
  %v5129 = vpack.c.b16 %v5105, %v5097
  %v5130 = vpack.c.b16 %v5106, %v5098
  %v5131 = vpack.c.b16 %v5107, %v5099
  %v5132 = vpack.c.b16 %v5108, %v5100
  %v5133 = vpack.c.b16 %v5109, %v5101
  %v5134 = vpack.c.b16 %v5110, %v5102
  %v5135 = vpack.c.b16 %v5119, %v5111
  %v5136 = vpack.c.b16 %v5120, %v5112
  %v5137 = vpack.c.b16 %v5121, %v5113
  %v5138 = vpack.c.b16 %v5122, %v5114
  %v5139 = vpack.c.b16 %v5123, %v5115
  %v5140 = vpack.c.b16 %v5124, %v5116
  %v5141 = vpack.c.b16 %v5125, %v5117
  %v5142 = vpack.c.b16 %v5126, %v5118
  %v5160 = vsel %vm1190, %v5044, 0
  %5162 = vmatpush.bf16.msra.mxu0 0
  %5163 = vmatpush.bf16.msra.mxu0 0
  %5164 = vmatpush.bf16.msra.mxu0 0
  %5165 = vmatpush.bf16.msra.mxu0 0
  %5166 = vmatpush.bf16.msra.mxu0 0
  %5167 = vmatpush.bf16.msra.mxu0 0
  %5168 = vmatpush.bf16.msra.mxu0 %v5135
  %5169 = vmatpush.bf16.msra.mxu0 %v5127
  %5170 = vmatmul.bf16.gmra.mxu0 %v5160
  %v5171 = vpop.f32.mrf.mxu0
  %v5172 = vadd.f32 %v5063, %v5171
  %v5173 = vpop.f32.mrf.mxu0
  %5174 = vdwg.mxu0
  %5175 = vmatpush.bf16.msra.mxu0 0
  %5176 = vmatpush.bf16.msra.mxu0 0
  %5177 = vmatpush.bf16.msra.mxu0 0
  %5178 = vmatpush.bf16.msra.mxu0 0
  %5179 = vmatpush.bf16.msra.mxu0 0
  %5180 = vmatpush.bf16.msra.mxu0 0
  %5181 = vmatpush.bf16.msra.mxu0 %v5136
  %5182 = vmatpush.bf16.msra.mxu0 %v5128
  %5183 = vmatmul.bf16.gmra.mxu0 %v5160
  %v5184 = vpop.f32.mrf.mxu0
  %v5185 = vadd.f32 %v5064, %v5184
  %v5186 = vpop.f32.mrf.mxu0
  %5187 = vdwg.mxu0
  %5188 = vmatpush.bf16.msra.mxu0 0
  %5189 = vmatpush.bf16.msra.mxu0 0
  %5190 = vmatpush.bf16.msra.mxu0 0
  %5191 = vmatpush.bf16.msra.mxu0 0
  %5192 = vmatpush.bf16.msra.mxu0 0
  %5193 = vmatpush.bf16.msra.mxu0 0
  %5194 = vmatpush.bf16.msra.mxu0 %v5137
  %5195 = vmatpush.bf16.msra.mxu0 %v5129
  %5196 = vmatmul.bf16.gmra.mxu0 %v5160
  %v5197 = vpop.f32.mrf.mxu0
  %v5198 = vadd.f32 %v5065, %v5197
  %v5199 = vpop.f32.mrf.mxu0
  %5200 = vdwg.mxu0
  %5201 = vmatpush.bf16.msra.mxu0 0
  %5202 = vmatpush.bf16.msra.mxu0 0
  %5203 = vmatpush.bf16.msra.mxu0 0
  %5204 = vmatpush.bf16.msra.mxu0 0
  %5205 = vmatpush.bf16.msra.mxu0 0
  %5206 = vmatpush.bf16.msra.mxu0 0
  %5207 = vmatpush.bf16.msra.mxu0 %v5138
  %5208 = vmatpush.bf16.msra.mxu0 %v5130
  %5209 = vmatmul.bf16.gmra.mxu0 %v5160
  %v5210 = vpop.f32.mrf.mxu0
  %v5211 = vadd.f32 %v5066, %v5210
  %v5212 = vpop.f32.mrf.mxu0
  %5213 = vdwg.mxu0
  %5214 = vmatpush.bf16.msra.mxu0 0
  %5215 = vmatpush.bf16.msra.mxu0 0
  %5216 = vmatpush.bf16.msra.mxu0 0
  %5217 = vmatpush.bf16.msra.mxu0 0
  %5218 = vmatpush.bf16.msra.mxu0 0
  %5219 = vmatpush.bf16.msra.mxu0 0
  %5220 = vmatpush.bf16.msra.mxu0 %v5139
  %5221 = vmatpush.bf16.msra.mxu0 %v5131
  %5222 = vmatmul.bf16.gmra.mxu0 %v5160
  %v5223 = vpop.f32.mrf.mxu0
  %v5224 = vadd.f32 %v5067, %v5223
  %v5225 = vpop.f32.mrf.mxu0
  %5226 = vdwg.mxu0
  %5227 = vmatpush.bf16.msra.mxu0 0
  %5228 = vmatpush.bf16.msra.mxu0 0
  %5229 = vmatpush.bf16.msra.mxu0 0
  %5230 = vmatpush.bf16.msra.mxu0 0
  %5231 = vmatpush.bf16.msra.mxu0 0
  %5232 = vmatpush.bf16.msra.mxu0 0
  %5233 = vmatpush.bf16.msra.mxu0 %v5140
  %5234 = vmatpush.bf16.msra.mxu0 %v5132
  %5235 = vmatmul.bf16.gmra.mxu0 %v5160
  %v5236 = vpop.f32.mrf.mxu0
  %v5237 = vadd.f32 %v5068, %v5236
  %v5238 = vpop.f32.mrf.mxu0
  %5239 = vdwg.mxu0
  %5240 = vmatpush.bf16.msra.mxu0 0
  %5241 = vmatpush.bf16.msra.mxu0 0
  %5242 = vmatpush.bf16.msra.mxu0 0
  %5243 = vmatpush.bf16.msra.mxu0 0
  %5244 = vmatpush.bf16.msra.mxu0 0
  %5245 = vmatpush.bf16.msra.mxu0 0
  %5246 = vmatpush.bf16.msra.mxu0 %v5141
  %5247 = vmatpush.bf16.msra.mxu0 %v5133
  %5248 = vmatmul.bf16.gmra.mxu0 %v5160
  %v5249 = vpop.f32.mrf.mxu0
  %v5250 = vadd.f32 %v5069, %v5249
  %v5251 = vpop.f32.mrf.mxu0
  %5252 = vdwg.mxu0
  %5253 = vmatpush.bf16.msra.mxu0 0
  %5254 = vmatpush.bf16.msra.mxu0 0
  %5255 = vmatpush.bf16.msra.mxu0 0
  %5256 = vmatpush.bf16.msra.mxu0 0
  %5257 = vmatpush.bf16.msra.mxu0 0
  %5258 = vmatpush.bf16.msra.mxu0 0
  %5259 = vmatpush.bf16.msra.mxu0 %v5142
  %5260 = vmatpush.bf16.msra.mxu0 %v5134
  %5261 = vmatmul.bf16.gmra.mxu0 %v5160
  %v5262 = vpop.f32.mrf.mxu0
  %v5263 = vadd.f32 %v5070, %v5262
  %v5264 = vpop.f32.mrf.mxu0
  %5265 = vdwg.mxu0
  %v5266 = vmul.f32 %v5172, 0.5
  %v5267 = vmul.f32 %v5185, 0.5
  %v5268 = vmul.f32 %v5198, 0.5
  %v5269 = vmul.f32 %v5211, 0.5
  %v5270 = vmul.f32 %v5224, 0.5
  %v5271 = vmul.f32 %v5237, 0.5
  %v5272 = vmul.f32 %v5250, 0.5
  %v5273 = vmul.f32 %v5263, 0.5
  %v5274 = vmul.f32 %v5172, 0.70710677
  %v5275 = vmul.f32 %v5185, 0.70710677
  %v5276 = vmul.f32 %v5198, 0.70710677
  %v5277 = vmul.f32 %v5211, 0.70710677
  %v5278 = vmul.f32 %v5224, 0.70710677
  %v5279 = vmul.f32 %v5237, 0.70710677
  %v5280 = vmul.f32 %v5250, 0.70710677
  %v5281 = vmul.f32 %v5263, 0.70710677
  %v5282 = vmul.f32 %v5274, %v5274
  %v5283 = vmin.f32 16.0, %v5282
  %v5284 = vmul.f32 %v5283, 2.1237322e-06
  %v5285 = vadd.f32 %v5284, 0.00028619796
  %v5286 = vmul.f32 %v5283, %v5285
  %v5287 = vadd.f32 %v5286, 0.0036580483
  %v5288 = vmul.f32 %v5283, %v5287
  %v5289 = vadd.f32 %v5288, 0.05243302
  %v5290 = vmul.f32 %v5283, %v5289
  %v5291 = vadd.f32 %v5290, 0.18741608
  %v5292 = vmul.f32 %v5283, %v5291
  %v5293 = vadd.f32 %v5292, 1.1283791
  %v5294 = vmul.f32 %v5274, %v5293
  %v5295 = vmul.f32 %v5283, 3.8918573e-05
  %v5296 = vadd.f32 %v5295, 0.001143296
  %v5297 = vmul.f32 %v5283, %v5296
  %v5298 = vadd.f32 %v5297, 0.014752088
  %v5299 = vmul.f32 %v5283, %v5298
  %v5300 = vadd.f32 %v5299, 0.112945676
  %v5301 = vmul.f32 %v5283, %v5300
  %v5302 = vadd.f32 %v5301, 0.4994258
  %v5303 = vmul.f32 %v5283, %v5302
  %v5304 = vadd.f32 %v5303, 1.0
  %v5305 = vrcp.pop %v5304
  %v5306 = vmul.f32 %v5304, %v5305
  %v5307 = vsub.f32 1.0, %v5306
  %v5308 = vmul.f32 %v5305, %v5307
  %v5309 = vadd.f32 %v5305, %v5308
  %vm5310 = vweird.f32 %v5304
  %vm5311 = vweird.f32 %v5305
  %vm5312 = vmor %vm5310, %vm5311
  %v5313 = vsel %vm5312, %v5305, %v5309
  %v5314 = vand.u32 2147483647, %v5304
  %vm5315 = vcmp.eq.f32.partialorder %v5314, 8.507059e+37
  %v5316 = vand.u32 %v5304, 2147483648
  %v5317 = vor.u32 1.1754944e-38, %v5316
  %v5318 = vsel %vm5315, %v5317, %v5313
  %v5319 = vmul.f32 %v5294, %v5318
  %v5320 = vmin.f32 %v5319, 1.0
  %v5321 = vmax.f32 %v5320, -1.0
  %v5322 = vmul.f32 %v5275, %v5275
  %v5323 = vmin.f32 16.0, %v5322
  %v5324 = vmul.f32 %v5323, 2.1237322e-06
  %v5325 = vadd.f32 %v5324, 0.00028619796
  %v5326 = vmul.f32 %v5323, %v5325
  %v5327 = vadd.f32 %v5326, 0.0036580483
  %v5328 = vmul.f32 %v5323, %v5327
  %v5329 = vadd.f32 %v5328, 0.05243302
  %v5330 = vmul.f32 %v5323, %v5329
  %v5331 = vadd.f32 %v5330, 0.18741608
  %v5332 = vmul.f32 %v5323, %v5331
  %v5333 = vadd.f32 %v5332, 1.1283791
  %v5334 = vmul.f32 %v5275, %v5333
  %v5335 = vmul.f32 %v5323, 3.8918573e-05
  %v5336 = vadd.f32 %v5335, 0.001143296
  %v5337 = vmul.f32 %v5323, %v5336
  %v5338 = vadd.f32 %v5337, 0.014752088
  %v5339 = vmul.f32 %v5323, %v5338
  %v5340 = vadd.f32 %v5339, 0.112945676
  %v5341 = vmul.f32 %v5323, %v5340
  %v5342 = vadd.f32 %v5341, 0.4994258
  %v5343 = vmul.f32 %v5323, %v5342
  %v5344 = vadd.f32 %v5343, 1.0
  %v5345 = vrcp.pop %v5344
  %v5346 = vmul.f32 %v5344, %v5345
  %v5347 = vsub.f32 1.0, %v5346
  %v5348 = vmul.f32 %v5345, %v5347
  %v5349 = vadd.f32 %v5345, %v5348
  %vm5350 = vweird.f32 %v5344
  %vm5351 = vweird.f32 %v5345
  %vm5352 = vmor %vm5350, %vm5351
  %v5353 = vsel %vm5352, %v5345, %v5349
  %v5354 = vand.u32 2147483647, %v5344
  %vm5355 = vcmp.eq.f32.partialorder %v5354, 8.507059e+37
  %v5356 = vand.u32 %v5344, 2147483648
  %v5357 = vor.u32 1.1754944e-38, %v5356
  %v5358 = vsel %vm5355, %v5357, %v5353
  %v5359 = vmul.f32 %v5334, %v5358
  %v5360 = vmin.f32 %v5359, 1.0
  %v5361 = vmax.f32 %v5360, -1.0
  %v5362 = vmul.f32 %v5276, %v5276
  %v5363 = vmin.f32 16.0, %v5362
  %v5364 = vmul.f32 %v5363, 2.1237322e-06
  %v5365 = vadd.f32 %v5364, 0.00028619796
  %v5366 = vmul.f32 %v5363, %v5365
  %v5367 = vadd.f32 %v5366, 0.0036580483
  %v5368 = vmul.f32 %v5363, %v5367
  %v5369 = vadd.f32 %v5368, 0.05243302
  %v5370 = vmul.f32 %v5363, %v5369
  %v5371 = vadd.f32 %v5370, 0.18741608
  %v5372 = vmul.f32 %v5363, %v5371
  %v5373 = vadd.f32 %v5372, 1.1283791
  %v5374 = vmul.f32 %v5276, %v5373
  %v5375 = vmul.f32 %v5363, 3.8918573e-05
  %v5376 = vadd.f32 %v5375, 0.001143296
  %v5377 = vmul.f32 %v5363, %v5376
  %v5378 = vadd.f32 %v5377, 0.014752088
  %v5379 = vmul.f32 %v5363, %v5378
  %v5380 = vadd.f32 %v5379, 0.112945676
  %v5381 = vmul.f32 %v5363, %v5380
  %v5382 = vadd.f32 %v5381, 0.4994258
  %v5383 = vmul.f32 %v5363, %v5382
  %v5384 = vadd.f32 %v5383, 1.0
  %v5385 = vrcp.pop %v5384
  %v5386 = vmul.f32 %v5384, %v5385
  %v5387 = vsub.f32 1.0, %v5386
  %v5388 = vmul.f32 %v5385, %v5387
  %v5389 = vadd.f32 %v5385, %v5388
  %vm5390 = vweird.f32 %v5384
  %vm5391 = vweird.f32 %v5385
  %vm5392 = vmor %vm5390, %vm5391
  %v5393 = vsel %vm5392, %v5385, %v5389
  %v5394 = vand.u32 2147483647, %v5384
  %vm5395 = vcmp.eq.f32.partialorder %v5394, 8.507059e+37
  %v5396 = vand.u32 %v5384, 2147483648
  %v5397 = vor.u32 1.1754944e-38, %v5396
  %v5398 = vsel %vm5395, %v5397, %v5393
  %v5399 = vmul.f32 %v5374, %v5398
  %v5400 = vmin.f32 %v5399, 1.0
  %v5401 = vmax.f32 %v5400, -1.0
  %v5402 = vmul.f32 %v5277, %v5277
  %v5403 = vmin.f32 16.0, %v5402
  %v5404 = vmul.f32 %v5403, 2.1237322e-06
  %v5405 = vadd.f32 %v5404, 0.00028619796
  %v5406 = vmul.f32 %v5403, %v5405
  %v5407 = vadd.f32 %v5406, 0.0036580483
  %v5408 = vmul.f32 %v5403, %v5407
  %v5409 = vadd.f32 %v5408, 0.05243302
  %v5410 = vmul.f32 %v5403, %v5409
  %v5411 = vadd.f32 %v5410, 0.18741608
  %v5412 = vmul.f32 %v5403, %v5411
  %v5413 = vadd.f32 %v5412, 1.1283791
  %v5414 = vmul.f32 %v5277, %v5413
  %v5415 = vmul.f32 %v5403, 3.8918573e-05
  %v5416 = vadd.f32 %v5415, 0.001143296
  %v5417 = vmul.f32 %v5403, %v5416
  %v5418 = vadd.f32 %v5417, 0.014752088
  %v5419 = vmul.f32 %v5403, %v5418
  %v5420 = vadd.f32 %v5419, 0.112945676
  %v5421 = vmul.f32 %v5403, %v5420
  %v5422 = vadd.f32 %v5421, 0.4994258
  %v5423 = vmul.f32 %v5403, %v5422
  %v5424 = vadd.f32 %v5423, 1.0
  %v5425 = vrcp.pop %v5424
  %v5426 = vmul.f32 %v5424, %v5425
  %v5427 = vsub.f32 1.0, %v5426
  %v5428 = vmul.f32 %v5425, %v5427
  %v5429 = vadd.f32 %v5425, %v5428
  %vm5430 = vweird.f32 %v5424
  %vm5431 = vweird.f32 %v5425
  %vm5432 = vmor %vm5430, %vm5431
  %v5433 = vsel %vm5432, %v5425, %v5429
  %v5434 = vand.u32 2147483647, %v5424
  %vm5435 = vcmp.eq.f32.partialorder %v5434, 8.507059e+37
  %v5436 = vand.u32 %v5424, 2147483648
  %v5437 = vor.u32 1.1754944e-38, %v5436
  %v5438 = vsel %vm5435, %v5437, %v5433
  %v5439 = vmul.f32 %v5414, %v5438
  %v5440 = vmin.f32 %v5439, 1.0
  %v5441 = vmax.f32 %v5440, -1.0
  %v5442 = vmul.f32 %v5278, %v5278
  %v5443 = vmin.f32 16.0, %v5442
  %v5444 = vmul.f32 %v5443, 2.1237322e-06
  %v5445 = vadd.f32 %v5444, 0.00028619796
  %v5446 = vmul.f32 %v5443, %v5445
  %v5447 = vadd.f32 %v5446, 0.0036580483
  %v5448 = vmul.f32 %v5443, %v5447
  %v5449 = vadd.f32 %v5448, 0.05243302
  %v5450 = vmul.f32 %v5443, %v5449
  %v5451 = vadd.f32 %v5450, 0.18741608
  %v5452 = vmul.f32 %v5443, %v5451
  %v5453 = vadd.f32 %v5452, 1.1283791
  %v5454 = vmul.f32 %v5278, %v5453
  %v5455 = vmul.f32 %v5443, 3.8918573e-05
  %v5456 = vadd.f32 %v5455, 0.001143296
  %v5457 = vmul.f32 %v5443, %v5456
  %v5458 = vadd.f32 %v5457, 0.014752088
  %v5459 = vmul.f32 %v5443, %v5458
  %v5460 = vadd.f32 %v5459, 0.112945676
  %v5461 = vmul.f32 %v5443, %v5460
  %v5462 = vadd.f32 %v5461, 0.4994258
  %v5463 = vmul.f32 %v5443, %v5462
  %v5464 = vadd.f32 %v5463, 1.0
  %v5465 = vrcp.pop %v5464
  %v5466 = vmul.f32 %v5464, %v5465
  %v5467 = vsub.f32 1.0, %v5466
  %v5468 = vmul.f32 %v5465, %v5467
  %v5469 = vadd.f32 %v5465, %v5468
  %vm5470 = vweird.f32 %v5464
  %vm5471 = vweird.f32 %v5465
  %vm5472 = vmor %vm5470, %vm5471
  %v5473 = vsel %vm5472, %v5465, %v5469
  %v5474 = vand.u32 2147483647, %v5464
  %vm5475 = vcmp.eq.f32.partialorder %v5474, 8.507059e+37
  %v5476 = vand.u32 %v5464, 2147483648
  %v5477 = vor.u32 1.1754944e-38, %v5476
  %v5478 = vsel %vm5475, %v5477, %v5473
  %v5479 = vmul.f32 %v5454, %v5478
  %v5480 = vmin.f32 %v5479, 1.0
  %v5481 = vmax.f32 %v5480, -1.0
  %v5482 = vmul.f32 %v5279, %v5279
  %v5483 = vmin.f32 16.0, %v5482
  %v5484 = vmul.f32 %v5483, 2.1237322e-06
  %v5485 = vadd.f32 %v5484, 0.00028619796
  %v5486 = vmul.f32 %v5483, %v5485
  %v5487 = vadd.f32 %v5486, 0.0036580483
  %v5488 = vmul.f32 %v5483, %v5487
  %v5489 = vadd.f32 %v5488, 0.05243302
  %v5490 = vmul.f32 %v5483, %v5489
  %v5491 = vadd.f32 %v5490, 0.18741608
  %v5492 = vmul.f32 %v5483, %v5491
  %v5493 = vadd.f32 %v5492, 1.1283791
  %v5494 = vmul.f32 %v5279, %v5493
  %v5495 = vmul.f32 %v5483, 3.8918573e-05
  %v5496 = vadd.f32 %v5495, 0.001143296
  %v5497 = vmul.f32 %v5483, %v5496
  %v5498 = vadd.f32 %v5497, 0.014752088
  %v5499 = vmul.f32 %v5483, %v5498
  %v5500 = vadd.f32 %v5499, 0.112945676
  %v5501 = vmul.f32 %v5483, %v5500
  %v5502 = vadd.f32 %v5501, 0.4994258
  %v5503 = vmul.f32 %v5483, %v5502
  %v5504 = vadd.f32 %v5503, 1.0
  %v5505 = vrcp.pop %v5504
  %v5506 = vmul.f32 %v5504, %v5505
  %v5507 = vsub.f32 1.0, %v5506
  %v5508 = vmul.f32 %v5505, %v5507
  %v5509 = vadd.f32 %v5505, %v5508
  %vm5510 = vweird.f32 %v5504
  %vm5511 = vweird.f32 %v5505
  %vm5512 = vmor %vm5510, %vm5511
  %v5513 = vsel %vm5512, %v5505, %v5509
  %v5514 = vand.u32 2147483647, %v5504
  %vm5515 = vcmp.eq.f32.partialorder %v5514, 8.507059e+37
  %v5516 = vand.u32 %v5504, 2147483648
  %v5517 = vor.u32 1.1754944e-38, %v5516
  %v5518 = vsel %vm5515, %v5517, %v5513
  %v5519 = vmul.f32 %v5494, %v5518
  %v5520 = vmin.f32 %v5519, 1.0
  %v5521 = vmax.f32 %v5520, -1.0
  %v5522 = vmul.f32 %v5280, %v5280
  %v5523 = vmin.f32 16.0, %v5522
  %v5524 = vmul.f32 %v5523, 2.1237322e-06
  %v5525 = vadd.f32 %v5524, 0.00028619796
  %v5526 = vmul.f32 %v5523, %v5525
  %v5527 = vadd.f32 %v5526, 0.0036580483
  %v5528 = vmul.f32 %v5523, %v5527
  %v5529 = vadd.f32 %v5528, 0.05243302
  %v5530 = vmul.f32 %v5523, %v5529
  %v5531 = vadd.f32 %v5530, 0.18741608
  %v5532 = vmul.f32 %v5523, %v5531
  %v5533 = vadd.f32 %v5532, 1.1283791
  %v5534 = vmul.f32 %v5280, %v5533
  %v5535 = vmul.f32 %v5523, 3.8918573e-05
  %v5536 = vadd.f32 %v5535, 0.001143296
  %v5537 = vmul.f32 %v5523, %v5536
  %v5538 = vadd.f32 %v5537, 0.014752088
  %v5539 = vmul.f32 %v5523, %v5538
  %v5540 = vadd.f32 %v5539, 0.112945676
  %v5541 = vmul.f32 %v5523, %v5540
  %v5542 = vadd.f32 %v5541, 0.4994258
  %v5543 = vmul.f32 %v5523, %v5542
  %v5544 = vadd.f32 %v5543, 1.0
  %v5545 = vrcp.pop %v5544
  %v5546 = vmul.f32 %v5544, %v5545
  %v5547 = vsub.f32 1.0, %v5546
  %v5548 = vmul.f32 %v5545, %v5547
  %v5549 = vadd.f32 %v5545, %v5548
  %vm5550 = vweird.f32 %v5544
  %vm5551 = vweird.f32 %v5545
  %vm5552 = vmor %vm5550, %vm5551
  %v5553 = vsel %vm5552, %v5545, %v5549
  %v5554 = vand.u32 2147483647, %v5544
  %vm5555 = vcmp.eq.f32.partialorder %v5554, 8.507059e+37
  %v5556 = vand.u32 %v5544, 2147483648
  %v5557 = vor.u32 1.1754944e-38, %v5556
  %v5558 = vsel %vm5555, %v5557, %v5553
  %v5559 = vmul.f32 %v5534, %v5558
  %v5560 = vmin.f32 %v5559, 1.0
  %v5561 = vmax.f32 %v5560, -1.0
  %v5562 = vmul.f32 %v5281, %v5281
  %v5563 = vmin.f32 16.0, %v5562
  %v5564 = vmul.f32 %v5563, 2.1237322e-06
  %v5565 = vadd.f32 %v5564, 0.00028619796
  %v5566 = vmul.f32 %v5563, %v5565
  %v5567 = vadd.f32 %v5566, 0.0036580483
  %v5568 = vmul.f32 %v5563, %v5567
  %v5569 = vadd.f32 %v5568, 0.05243302
  %v5570 = vmul.f32 %v5563, %v5569
  %v5571 = vadd.f32 %v5570, 0.18741608
  %v5572 = vmul.f32 %v5563, %v5571
  %v5573 = vadd.f32 %v5572, 1.1283791
  %v5574 = vmul.f32 %v5281, %v5573
  %v5575 = vmul.f32 %v5563, 3.8918573e-05
  %v5576 = vadd.f32 %v5575, 0.001143296
  %v5577 = vmul.f32 %v5563, %v5576
  %v5578 = vadd.f32 %v5577, 0.014752088
  %v5579 = vmul.f32 %v5563, %v5578
  %v5580 = vadd.f32 %v5579, 0.112945676
  %v5581 = vmul.f32 %v5563, %v5580
  %v5582 = vadd.f32 %v5581, 0.4994258
  %v5583 = vmul.f32 %v5563, %v5582
  %v5584 = vadd.f32 %v5583, 1.0
  %v5585 = vrcp.pop %v5584
  %v5586 = vmul.f32 %v5584, %v5585
  %v5587 = vsub.f32 1.0, %v5586
  %v5588 = vmul.f32 %v5585, %v5587
  %v5589 = vadd.f32 %v5585, %v5588
  %vm5590 = vweird.f32 %v5584
  %vm5591 = vweird.f32 %v5585
  %vm5592 = vmor %vm5590, %vm5591
  %v5593 = vsel %vm5592, %v5585, %v5589
  %v5594 = vand.u32 2147483647, %v5584
  %vm5595 = vcmp.eq.f32.partialorder %v5594, 8.507059e+37
  %v5596 = vand.u32 %v5584, 2147483648
  %v5597 = vor.u32 1.1754944e-38, %v5596
  %v5598 = vsel %vm5595, %v5597, %v5593
  %v5599 = vmul.f32 %v5574, %v5598
  %v5600 = vmin.f32 %v5599, 1.0
  %v5601 = vmax.f32 %v5600, -1.0
  %v5602 = vadd.f32 %v5321, 1.0
  %v5603 = vadd.f32 %v5361, 1.0
  %v5604 = vadd.f32 %v5401, 1.0
  %v5605 = vadd.f32 %v5441, 1.0
  %v5606 = vadd.f32 %v5481, 1.0
  %v5607 = vadd.f32 %v5521, 1.0
  %v5608 = vadd.f32 %v5561, 1.0
  %v5609 = vadd.f32 %v5601, 1.0
  %v5610 = vmul.f32 %v5266, %v5602
  %v5611 = vmul.f32 %v5267, %v5603
  %v5612 = vmul.f32 %v5268, %v5604
  %v5613 = vmul.f32 %v5269, %v5605
  %v5614 = vmul.f32 %v5270, %v5606
  %v5615 = vmul.f32 %v5271, %v5607
  %v5616 = vmul.f32 %v5272, %v5608
  %v5617 = vmul.f32 %v5273, %v5609
  %v5618 = vpack.c.bf16 %v5610, %v5610
  %v5619 = vpack.c.bf16 %v5611, %v5611
  %v5620 = vpack.c.bf16 %v5612, %v5612
  %v5621 = vpack.c.bf16 %v5613, %v5613
  %v5622 = vpack.c.bf16 %v5614, %v5614
  %v5623 = vpack.c.bf16 %v5615, %v5615
  %v5624 = vpack.c.bf16 %v5616, %v5616
  %v5625 = vpack.c.bf16 %v5617, %v5617
  %v5626 = vld [vmem:[#allocation5] sm:$0xff]
  %v5627 = vld [vmem:[#allocation5 + $0x8] sm:$0xff]
  %v5628 = vld [vmem:[#allocation5 + $0x10] sm:$0xff]
  %v5629 = vld [vmem:[#allocation5 + $0x18] sm:$0xff]
  %v5630 = vld [vmem:[#allocation5 + $0x20] sm:$0xff]
  %v5631 = vld [vmem:[#allocation5 + $0x28] sm:$0xff]
  %v5632 = vld [vmem:[#allocation5 + $0x30] sm:$0xff]
  %v5633 = vld [vmem:[#allocation5 + $0x38] sm:$0xff]
  %v5634 = vld [vmem:[#allocation5 + $0x40] sm:$0xff]
  %v5635 = vld [vmem:[#allocation5 + $0x48] sm:$0xff]
  %v5636 = vld [vmem:[#allocation5 + $0x50] sm:$0xff]
  %v5637 = vld [vmem:[#allocation5 + $0x58] sm:$0xff]
  %v5638 = vld [vmem:[#allocation5 + $0x60] sm:$0xff]
  %v5639 = vld [vmem:[#allocation5 + $0x68] sm:$0xff]
  %v5640 = vld [vmem:[#allocation5 + $0x70] sm:$0xff]
  %v5641 = vld [vmem:[#allocation5 + $0x78] sm:$0xff]
  %v5642 = vld [vmem:[#allocation5 + $0x80] sm:$0xff]
  %v5643 = vld [vmem:[#allocation5 + $0x88] sm:$0xff]
  %v5644 = vld [vmem:[#allocation5 + $0x90] sm:$0xff]
  %v5645 = vld [vmem:[#allocation5 + $0x98] sm:$0xff]
  %v5646 = vld [vmem:[#allocation5 + $0xa0] sm:$0xff]
  %v5647 = vld [vmem:[#allocation5 + $0xa8] sm:$0xff]
  %v5648 = vld [vmem:[#allocation5 + $0xb0] sm:$0xff]
  %v5649 = vld [vmem:[#allocation5 + $0xb8] sm:$0xff]
  %v5650 = vld [vmem:[#allocation5 + $0xc0] sm:$0xff]
  %v5651 = vld [vmem:[#allocation5 + $0xc8] sm:$0xff]
  %v5652 = vld [vmem:[#allocation5 + $0xd0] sm:$0xff]
  %v5653 = vld [vmem:[#allocation5 + $0xd8] sm:$0xff]
  %v5654 = vld [vmem:[#allocation5 + $0xe0] sm:$0xff]
  %v5655 = vld [vmem:[#allocation5 + $0xe8] sm:$0xff]
  %v5656 = vld [vmem:[#allocation5 + $0xf0] sm:$0xff]
  %v5657 = vld [vmem:[#allocation5 + $0xf8] sm:$0xff]
  %v5658 = vld [vmem:[#allocation5 + $0x100] sm:$0xff]
  %v5659 = vld [vmem:[#allocation5 + $0x108] sm:$0xff]
  %v5660 = vld [vmem:[#allocation5 + $0x110] sm:$0xff]
  %v5661 = vld [vmem:[#allocation5 + $0x118] sm:$0xff]
  %v5662 = vld [vmem:[#allocation5 + $0x120] sm:$0xff]
  %v5663 = vld [vmem:[#allocation5 + $0x128] sm:$0xff]
  %v5664 = vld [vmem:[#allocation5 + $0x130] sm:$0xff]
  %v5665 = vld [vmem:[#allocation5 + $0x138] sm:$0xff]
  %v5666 = vld [vmem:[#allocation5 + $0x140] sm:$0xff]
  %v5667 = vld [vmem:[#allocation5 + $0x148] sm:$0xff]
  %v5668 = vld [vmem:[#allocation5 + $0x150] sm:$0xff]
  %v5669 = vld [vmem:[#allocation5 + $0x158] sm:$0xff]
  %v5670 = vld [vmem:[#allocation5 + $0x160] sm:$0xff]
  %v5671 = vld [vmem:[#allocation5 + $0x168] sm:$0xff]
  %v5672 = vld [vmem:[#allocation5 + $0x170] sm:$0xff]
  %v5673 = vld [vmem:[#allocation5 + $0x178] sm:$0xff]
  %v5674 = vld [vmem:[#allocation5 + $0x180] sm:$0xff]
  %v5675 = vld [vmem:[#allocation5 + $0x188] sm:$0xff]
  %v5676 = vld [vmem:[#allocation5 + $0x190] sm:$0xff]
  %v5677 = vld [vmem:[#allocation5 + $0x198] sm:$0xff]
  %v5678 = vld [vmem:[#allocation5 + $0x1a0] sm:$0xff]
  %v5679 = vld [vmem:[#allocation5 + $0x1a8] sm:$0xff]
  %v5680 = vld [vmem:[#allocation5 + $0x1b0] sm:$0xff]
  %v5681 = vld [vmem:[#allocation5 + $0x1b8] sm:$0xff]
  %v5682 = vld [vmem:[#allocation5 + $0x1c0] sm:$0xff]
  %v5683 = vld [vmem:[#allocation5 + $0x1c8] sm:$0xff]
  %v5684 = vld [vmem:[#allocation5 + $0x1d0] sm:$0xff]
  %v5685 = vld [vmem:[#allocation5 + $0x1d8] sm:$0xff]
  %v5686 = vld [vmem:[#allocation5 + $0x1e0] sm:$0xff]
  %v5687 = vld [vmem:[#allocation5 + $0x1e8] sm:$0xff]
  %v5688 = vld [vmem:[#allocation5 + $0x1f0] sm:$0xff]
  %v5689 = vld [vmem:[#allocation5 + $0x1f8] sm:$0xff]
  %v5690 = vld [vmem:[#allocation5 + $0x200] sm:$0xff]
  %v5691 = vld [vmem:[#allocation5 + $0x208] sm:$0xff]
  %v5692 = vld [vmem:[#allocation5 + $0x210] sm:$0xff]
  %v5693 = vld [vmem:[#allocation5 + $0x218] sm:$0xff]
  %v5694 = vld [vmem:[#allocation5 + $0x220] sm:$0xff]
  %v5695 = vld [vmem:[#allocation5 + $0x228] sm:$0xff]
  %v5696 = vld [vmem:[#allocation5 + $0x230] sm:$0xff]
  %v5697 = vld [vmem:[#allocation5 + $0x238] sm:$0xff]
  %v5698 = vld [vmem:[#allocation5 + $0x240] sm:$0xff]
  %v5699 = vld [vmem:[#allocation5 + $0x248] sm:$0xff]
  %v5700 = vld [vmem:[#allocation5 + $0x250] sm:$0xff]
  %v5701 = vld [vmem:[#allocation5 + $0x258] sm:$0xff]
  %v5702 = vld [vmem:[#allocation5 + $0x260] sm:$0xff]
  %v5703 = vld [vmem:[#allocation5 + $0x268] sm:$0xff]
  %v5704 = vld [vmem:[#allocation5 + $0x270] sm:$0xff]
  %v5705 = vld [vmem:[#allocation5 + $0x278] sm:$0xff]
  %v5706 = vld [vmem:[#allocation5 + $0x280] sm:$0xff]
  %v5707 = vld [vmem:[#allocation5 + $0x288] sm:$0xff]
  %v5708 = vld [vmem:[#allocation5 + $0x290] sm:$0xff]
  %v5709 = vld [vmem:[#allocation5 + $0x298] sm:$0xff]
  %v5710 = vld [vmem:[#allocation5 + $0x2a0] sm:$0xff]
  %v5711 = vld [vmem:[#allocation5 + $0x2a8] sm:$0xff]
  %v5712 = vld [vmem:[#allocation5 + $0x2b0] sm:$0xff]
  %v5713 = vld [vmem:[#allocation5 + $0x2b8] sm:$0xff]
  %v5714 = vld [vmem:[#allocation5 + $0x2c0] sm:$0xff]
  %v5715 = vld [vmem:[#allocation5 + $0x2c8] sm:$0xff]
  %v5716 = vld [vmem:[#allocation5 + $0x2d0] sm:$0xff]
  %v5717 = vld [vmem:[#allocation5 + $0x2d8] sm:$0xff]
  %v5718 = vld [vmem:[#allocation5 + $0x2e0] sm:$0xff]
  %v5719 = vld [vmem:[#allocation5 + $0x2e8] sm:$0xff]
  %v5720 = vld [vmem:[#allocation5 + $0x2f0] sm:$0xff]
  %v5721 = vld [vmem:[#allocation5 + $0x2f8] sm:$0xff]
  %v5722 = vld [vmem:[#allocation5 + $0x300] sm:$0xff]
  %v5723 = vld [vmem:[#allocation5 + $0x308] sm:$0xff]
  %v5724 = vld [vmem:[#allocation5 + $0x310] sm:$0xff]
  %v5725 = vld [vmem:[#allocation5 + $0x318] sm:$0xff]
  %v5726 = vld [vmem:[#allocation5 + $0x320] sm:$0xff]
  %v5727 = vld [vmem:[#allocation5 + $0x328] sm:$0xff]
  %v5728 = vld [vmem:[#allocation5 + $0x330] sm:$0xff]
  %v5729 = vld [vmem:[#allocation5 + $0x338] sm:$0xff]
  %v5730 = vld [vmem:[#allocation5 + $0x340] sm:$0xff]
  %v5731 = vld [vmem:[#allocation5 + $0x348] sm:$0xff]
  %v5732 = vld [vmem:[#allocation5 + $0x350] sm:$0xff]
  %v5733 = vld [vmem:[#allocation5 + $0x358] sm:$0xff]
  %v5734 = vld [vmem:[#allocation5 + $0x360] sm:$0xff]
  %v5735 = vld [vmem:[#allocation5 + $0x368] sm:$0xff]
  %v5736 = vld [vmem:[#allocation5 + $0x370] sm:$0xff]
  %v5737 = vld [vmem:[#allocation5 + $0x378] sm:$0xff]
  %v5738 = vld [vmem:[#allocation5 + $0x380] sm:$0xff]
  %v5739 = vld [vmem:[#allocation5 + $0x388] sm:$0xff]
  %v5740 = vld [vmem:[#allocation5 + $0x390] sm:$0xff]
  %v5741 = vld [vmem:[#allocation5 + $0x398] sm:$0xff]
  %v5742 = vld [vmem:[#allocation5 + $0x3a0] sm:$0xff]
  %v5743 = vld [vmem:[#allocation5 + $0x3a8] sm:$0xff]
  %v5744 = vld [vmem:[#allocation5 + $0x3b0] sm:$0xff]
  %v5745 = vld [vmem:[#allocation5 + $0x3b8] sm:$0xff]
  %v5746 = vld [vmem:[#allocation5 + $0x3c0] sm:$0xff]
  %v5747 = vld [vmem:[#allocation5 + $0x3c8] sm:$0xff]
  %v5748 = vld [vmem:[#allocation5 + $0x3d0] sm:$0xff]
  %v5749 = vld [vmem:[#allocation5 + $0x3d8] sm:$0xff]
  %v5750 = vld [vmem:[#allocation5 + $0x3e0] sm:$0xff]
  %v5751 = vld [vmem:[#allocation5 + $0x3e8] sm:$0xff]
  %v5752 = vld [vmem:[#allocation5 + $0x3f0] sm:$0xff]
  %v5753 = vld [vmem:[#allocation5 + $0x3f8] sm:$0xff]
  %v5754 = vld [vmem:[#allocation5 + $0x400] sm:$0xff]
  %v5755 = vld [vmem:[#allocation5 + $0x408] sm:$0xff]
  %v5756 = vld [vmem:[#allocation5 + $0x410] sm:$0xff]
  %v5757 = vld [vmem:[#allocation5 + $0x418] sm:$0xff]
  %v5758 = vld [vmem:[#allocation5 + $0x420] sm:$0xff]
  %v5759 = vld [vmem:[#allocation5 + $0x428] sm:$0xff]
  %v5760 = vld [vmem:[#allocation5 + $0x430] sm:$0xff]
  %v5761 = vld [vmem:[#allocation5 + $0x438] sm:$0xff]
  %v5762 = vld [vmem:[#allocation5 + $0x440] sm:$0xff]
  %v5763 = vld [vmem:[#allocation5 + $0x448] sm:$0xff]
  %v5764 = vld [vmem:[#allocation5 + $0x450] sm:$0xff]
  %v5765 = vld [vmem:[#allocation5 + $0x458] sm:$0xff]
  %v5766 = vld [vmem:[#allocation5 + $0x460] sm:$0xff]
  %v5767 = vld [vmem:[#allocation5 + $0x468] sm:$0xff]
  %v5768 = vld [vmem:[#allocation5 + $0x470] sm:$0xff]
  %v5769 = vld [vmem:[#allocation5 + $0x478] sm:$0xff]
  %v5770 = vld [vmem:[#allocation5 + $0x480] sm:$0xff]
  %v5771 = vld [vmem:[#allocation5 + $0x488] sm:$0xff]
  %v5772 = vld [vmem:[#allocation5 + $0x490] sm:$0xff]
  %v5773 = vld [vmem:[#allocation5 + $0x498] sm:$0xff]
  %v5774 = vld [vmem:[#allocation5 + $0x4a0] sm:$0xff]
  %v5775 = vld [vmem:[#allocation5 + $0x4a8] sm:$0xff]
  %v5776 = vld [vmem:[#allocation5 + $0x4b0] sm:$0xff]
  %v5777 = vld [vmem:[#allocation5 + $0x4b8] sm:$0xff]
  %v5778 = vld [vmem:[#allocation5 + $0x4c0] sm:$0xff]
  %v5779 = vld [vmem:[#allocation5 + $0x4c8] sm:$0xff]
  %v5780 = vld [vmem:[#allocation5 + $0x4d0] sm:$0xff]
  %v5781 = vld [vmem:[#allocation5 + $0x4d8] sm:$0xff]
  %v5782 = vld [vmem:[#allocation5 + $0x4e0] sm:$0xff]
  %v5783 = vld [vmem:[#allocation5 + $0x4e8] sm:$0xff]
  %v5784 = vld [vmem:[#allocation5 + $0x4f0] sm:$0xff]
  %v5785 = vld [vmem:[#allocation5 + $0x4f8] sm:$0xff]
  %v5786 = vld [vmem:[#allocation5 + $0x500] sm:$0xff]
  %v5787 = vld [vmem:[#allocation5 + $0x508] sm:$0xff]
  %v5788 = vld [vmem:[#allocation5 + $0x510] sm:$0xff]
  %v5789 = vld [vmem:[#allocation5 + $0x518] sm:$0xff]
  %v5790 = vld [vmem:[#allocation5 + $0x520] sm:$0xff]
  %v5791 = vld [vmem:[#allocation5 + $0x528] sm:$0xff]
  %v5792 = vld [vmem:[#allocation5 + $0x530] sm:$0xff]
  %v5793 = vld [vmem:[#allocation5 + $0x538] sm:$0xff]
  %v5794 = vld [vmem:[#allocation5 + $0x540] sm:$0xff]
  %v5795 = vld [vmem:[#allocation5 + $0x548] sm:$0xff]
  %v5796 = vld [vmem:[#allocation5 + $0x550] sm:$0xff]
  %v5797 = vld [vmem:[#allocation5 + $0x558] sm:$0xff]
  %v5798 = vld [vmem:[#allocation5 + $0x560] sm:$0xff]
  %v5799 = vld [vmem:[#allocation5 + $0x568] sm:$0xff]
  %v5800 = vld [vmem:[#allocation5 + $0x570] sm:$0xff]
  %v5801 = vld [vmem:[#allocation5 + $0x578] sm:$0xff]
  %v5802 = vld [vmem:[#allocation5 + $0x580] sm:$0xff]
  %v5803 = vld [vmem:[#allocation5 + $0x588] sm:$0xff]
  %v5804 = vld [vmem:[#allocation5 + $0x590] sm:$0xff]
  %v5805 = vld [vmem:[#allocation5 + $0x598] sm:$0xff]
  %v5806 = vld [vmem:[#allocation5 + $0x5a0] sm:$0xff]
  %v5807 = vld [vmem:[#allocation5 + $0x5a8] sm:$0xff]
  %v5808 = vld [vmem:[#allocation5 + $0x5b0] sm:$0xff]
  %v5809 = vld [vmem:[#allocation5 + $0x5b8] sm:$0xff]
  %v5810 = vld [vmem:[#allocation5 + $0x5c0] sm:$0xff]
  %v5811 = vld [vmem:[#allocation5 + $0x5c8] sm:$0xff]
  %v5812 = vld [vmem:[#allocation5 + $0x5d0] sm:$0xff]
  %v5813 = vld [vmem:[#allocation5 + $0x5d8] sm:$0xff]
  %v5814 = vld [vmem:[#allocation5 + $0x5e0] sm:$0xff]
  %v5815 = vld [vmem:[#allocation5 + $0x5e8] sm:$0xff]
  %v5816 = vld [vmem:[#allocation5 + $0x5f0] sm:$0xff]
  %v5817 = vld [vmem:[#allocation5 + $0x5f8] sm:$0xff]
  %v5818 = vld [vmem:[#allocation5 + $0x600] sm:$0xff]
  %v5819 = vld [vmem:[#allocation5 + $0x608] sm:$0xff]
  %v5820 = vld [vmem:[#allocation5 + $0x610] sm:$0xff]
  %v5821 = vld [vmem:[#allocation5 + $0x618] sm:$0xff]
  %v5822 = vld [vmem:[#allocation5 + $0x620] sm:$0xff]
  %v5823 = vld [vmem:[#allocation5 + $0x628] sm:$0xff]
  %v5824 = vld [vmem:[#allocation5 + $0x630] sm:$0xff]
  %v5825 = vld [vmem:[#allocation5 + $0x638] sm:$0xff]
  %v5826 = vld [vmem:[#allocation5 + $0x640] sm:$0xff]
  %v5827 = vld [vmem:[#allocation5 + $0x648] sm:$0xff]
  %v5828 = vld [vmem:[#allocation5 + $0x650] sm:$0xff]
  %v5829 = vld [vmem:[#allocation5 + $0x658] sm:$0xff]
  %v5830 = vld [vmem:[#allocation5 + $0x660] sm:$0xff]
  %v5831 = vld [vmem:[#allocation5 + $0x668] sm:$0xff]
  %v5832 = vld [vmem:[#allocation5 + $0x670] sm:$0xff]
  %v5833 = vld [vmem:[#allocation5 + $0x678] sm:$0xff]
  %v5834 = vld [vmem:[#allocation5 + $0x680] sm:$0xff]
  %v5835 = vld [vmem:[#allocation5 + $0x688] sm:$0xff]
  %v5836 = vld [vmem:[#allocation5 + $0x690] sm:$0xff]
  %v5837 = vld [vmem:[#allocation5 + $0x698] sm:$0xff]
  %v5838 = vld [vmem:[#allocation5 + $0x6a0] sm:$0xff]
  %v5839 = vld [vmem:[#allocation5 + $0x6a8] sm:$0xff]
  %v5840 = vld [vmem:[#allocation5 + $0x6b0] sm:$0xff]
  %v5841 = vld [vmem:[#allocation5 + $0x6b8] sm:$0xff]
  %v5842 = vld [vmem:[#allocation5 + $0x6c0] sm:$0xff]
  %v5843 = vld [vmem:[#allocation5 + $0x6c8] sm:$0xff]
  %v5844 = vld [vmem:[#allocation5 + $0x6d0] sm:$0xff]
  %v5845 = vld [vmem:[#allocation5 + $0x6d8] sm:$0xff]
  %v5846 = vld [vmem:[#allocation5 + $0x6e0] sm:$0xff]
  %v5847 = vld [vmem:[#allocation5 + $0x6e8] sm:$0xff]
  %v5848 = vld [vmem:[#allocation5 + $0x6f0] sm:$0xff]
  %v5849 = vld [vmem:[#allocation5 + $0x6f8] sm:$0xff]
  %v5850 = vld [vmem:[#allocation5 + $0x700] sm:$0xff]
  %v5851 = vld [vmem:[#allocation5 + $0x708] sm:$0xff]
  %v5852 = vld [vmem:[#allocation5 + $0x710] sm:$0xff]
  %v5853 = vld [vmem:[#allocation5 + $0x718] sm:$0xff]
  %v5854 = vld [vmem:[#allocation5 + $0x720] sm:$0xff]
  %v5855 = vld [vmem:[#allocation5 + $0x728] sm:$0xff]
  %v5856 = vld [vmem:[#allocation5 + $0x730] sm:$0xff]
  %v5857 = vld [vmem:[#allocation5 + $0x738] sm:$0xff]
  %v5858 = vld [vmem:[#allocation5 + $0x740] sm:$0xff]
  %v5859 = vld [vmem:[#allocation5 + $0x748] sm:$0xff]
  %v5860 = vld [vmem:[#allocation5 + $0x750] sm:$0xff]
  %v5861 = vld [vmem:[#allocation5 + $0x758] sm:$0xff]
  %v5862 = vld [vmem:[#allocation5 + $0x760] sm:$0xff]
  %v5863 = vld [vmem:[#allocation5 + $0x768] sm:$0xff]
  %v5864 = vld [vmem:[#allocation5 + $0x770] sm:$0xff]
  %v5865 = vld [vmem:[#allocation5 + $0x778] sm:$0xff]
  %v5866 = vld [vmem:[#allocation5 + $0x780] sm:$0xff]
  %v5867 = vld [vmem:[#allocation5 + $0x788] sm:$0xff]
  %v5868 = vld [vmem:[#allocation5 + $0x790] sm:$0xff]
  %v5869 = vld [vmem:[#allocation5 + $0x798] sm:$0xff]
  %v5870 = vld [vmem:[#allocation5 + $0x7a0] sm:$0xff]
  %v5871 = vld [vmem:[#allocation5 + $0x7a8] sm:$0xff]
  %v5872 = vld [vmem:[#allocation5 + $0x7b0] sm:$0xff]
  %v5873 = vld [vmem:[#allocation5 + $0x7b8] sm:$0xff]
  %v5874 = vld [vmem:[#allocation5 + $0x7c0] sm:$0xff]
  %v5875 = vld [vmem:[#allocation5 + $0x7c8] sm:$0xff]
  %v5876 = vld [vmem:[#allocation5 + $0x7d0] sm:$0xff]
  %v5877 = vld [vmem:[#allocation5 + $0x7d8] sm:$0xff]
  %v5878 = vld [vmem:[#allocation5 + $0x7e0] sm:$0xff]
  %v5879 = vld [vmem:[#allocation5 + $0x7e8] sm:$0xff]
  %v5880 = vld [vmem:[#allocation5 + $0x7f0] sm:$0xff]
  %v5881 = vld [vmem:[#allocation5 + $0x7f8] sm:$0xff]
  %v5882 = vld [vmem:[%s55] sm:$0xf]
  %v5884 = vperm.slane %v5882, 0
  %v5885 = vperm.slane %v5882, 1
  %v5886 = vperm.slane %v5882, 2
  %v5887 = vperm.slane %v5882, 3
  %v6148 = vunpack.c.l.b16 %v5626
  %v6149 = vunpack.c.h.b16 %v5626
  %v6150 = vunpack.c.l.b16 %v5627
  %v6151 = vunpack.c.h.b16 %v5627
  %v6152 = vunpack.c.l.b16 %v5628
  %v6153 = vunpack.c.h.b16 %v5628
  %v6154 = vunpack.c.l.b16 %v5629
  %v6155 = vunpack.c.h.b16 %v5629
  %v6156 = vunpack.c.l.b16 %v5630
  %v6157 = vunpack.c.h.b16 %v5630
  %v6158 = vunpack.c.l.b16 %v5631
  %v6159 = vunpack.c.h.b16 %v5631
  %v6160 = vunpack.c.l.b16 %v5632
  %v6161 = vunpack.c.h.b16 %v5632
  %v6162 = vunpack.c.l.b16 %v5633
  %v6163 = vunpack.c.h.b16 %v5633
  %v6164 = vunpack.c.l.b16 %v5634
  %v6165 = vunpack.c.h.b16 %v5634
  %v6166 = vunpack.c.l.b16 %v5635
  %v6167 = vunpack.c.h.b16 %v5635
  %v6168 = vunpack.c.l.b16 %v5636
  %v6169 = vunpack.c.h.b16 %v5636
  %v6170 = vunpack.c.l.b16 %v5637
  %v6171 = vunpack.c.h.b16 %v5637
  %v6172 = vunpack.c.l.b16 %v5638
  %v6173 = vunpack.c.h.b16 %v5638
  %v6174 = vunpack.c.l.b16 %v5639
  %v6175 = vunpack.c.h.b16 %v5639
  %v6176 = vunpack.c.l.b16 %v5640
  %v6177 = vunpack.c.h.b16 %v5640
  %v6178 = vunpack.c.l.b16 %v5641
  %v6179 = vunpack.c.h.b16 %v5641
  %v6180 = vunpack.c.l.b16 %v5642
  %v6181 = vunpack.c.h.b16 %v5642
  %v6182 = vunpack.c.l.b16 %v5643
  %v6183 = vunpack.c.h.b16 %v5643
  %v6184 = vunpack.c.l.b16 %v5644
  %v6185 = vunpack.c.h.b16 %v5644
  %v6186 = vunpack.c.l.b16 %v5645
  %v6187 = vunpack.c.h.b16 %v5645
  %v6188 = vunpack.c.l.b16 %v5646
  %v6189 = vunpack.c.h.b16 %v5646
  %v6190 = vunpack.c.l.b16 %v5647
  %v6191 = vunpack.c.h.b16 %v5647
  %v6192 = vunpack.c.l.b16 %v5648
  %v6193 = vunpack.c.h.b16 %v5648
  %v6194 = vunpack.c.l.b16 %v5649
  %v6195 = vunpack.c.h.b16 %v5649
  %v6196 = vunpack.c.l.b16 %v5650
  %v6197 = vunpack.c.h.b16 %v5650
  %v6198 = vunpack.c.l.b16 %v5651
  %v6199 = vunpack.c.h.b16 %v5651
  %v6200 = vunpack.c.l.b16 %v5652
  %v6201 = vunpack.c.h.b16 %v5652
  %v6202 = vunpack.c.l.b16 %v5653
  %v6203 = vunpack.c.h.b16 %v5653
  %v6204 = vunpack.c.l.b16 %v5654
  %v6205 = vunpack.c.h.b16 %v5654
  %v6206 = vunpack.c.l.b16 %v5655
  %v6207 = vunpack.c.h.b16 %v5655
  %v6208 = vunpack.c.l.b16 %v5656
  %v6209 = vunpack.c.h.b16 %v5656
  %v6210 = vunpack.c.l.b16 %v5657
  %v6211 = vunpack.c.h.b16 %v5657
  %v6212 = vunpack.c.l.b16 %v5658
  %v6213 = vunpack.c.h.b16 %v5658
  %v6214 = vunpack.c.l.b16 %v5659
  %v6215 = vunpack.c.h.b16 %v5659
  %v6216 = vunpack.c.l.b16 %v5660
  %v6217 = vunpack.c.h.b16 %v5660
  %v6218 = vunpack.c.l.b16 %v5661
  %v6219 = vunpack.c.h.b16 %v5661
  %v6220 = vunpack.c.l.b16 %v5662
  %v6221 = vunpack.c.h.b16 %v5662
  %v6222 = vunpack.c.l.b16 %v5663
  %v6223 = vunpack.c.h.b16 %v5663
  %v6224 = vunpack.c.l.b16 %v5664
  %v6225 = vunpack.c.h.b16 %v5664
  %v6226 = vunpack.c.l.b16 %v5665
  %v6227 = vunpack.c.h.b16 %v5665
  %v6228 = vunpack.c.l.b16 %v5666
  %v6229 = vunpack.c.h.b16 %v5666
  %v6230 = vunpack.c.l.b16 %v5667
  %v6231 = vunpack.c.h.b16 %v5667
  %v6232 = vunpack.c.l.b16 %v5668
  %v6233 = vunpack.c.h.b16 %v5668
  %v6234 = vunpack.c.l.b16 %v5669
  %v6235 = vunpack.c.h.b16 %v5669
  %v6236 = vunpack.c.l.b16 %v5670
  %v6237 = vunpack.c.h.b16 %v5670
  %v6238 = vunpack.c.l.b16 %v5671
  %v6239 = vunpack.c.h.b16 %v5671
  %v6240 = vunpack.c.l.b16 %v5672
  %v6241 = vunpack.c.h.b16 %v5672
  %v6242 = vunpack.c.l.b16 %v5673
  %v6243 = vunpack.c.h.b16 %v5673
  %v6244 = vunpack.c.l.b16 %v5674
  %v6245 = vunpack.c.h.b16 %v5674
  %v6246 = vunpack.c.l.b16 %v5675
  %v6247 = vunpack.c.h.b16 %v5675
  %v6248 = vunpack.c.l.b16 %v5676
  %v6249 = vunpack.c.h.b16 %v5676
  %v6250 = vunpack.c.l.b16 %v5677
  %v6251 = vunpack.c.h.b16 %v5677
  %v6252 = vunpack.c.l.b16 %v5678
  %v6253 = vunpack.c.h.b16 %v5678
  %v6254 = vunpack.c.l.b16 %v5679
  %v6255 = vunpack.c.h.b16 %v5679
  %v6256 = vunpack.c.l.b16 %v5680
  %v6257 = vunpack.c.h.b16 %v5680
  %v6258 = vunpack.c.l.b16 %v5681
  %v6259 = vunpack.c.h.b16 %v5681
  %v6260 = vunpack.c.l.b16 %v5682
  %v6261 = vunpack.c.h.b16 %v5682
  %v6262 = vunpack.c.l.b16 %v5683
  %v6263 = vunpack.c.h.b16 %v5683
  %v6264 = vunpack.c.l.b16 %v5684
  %v6265 = vunpack.c.h.b16 %v5684
  %v6266 = vunpack.c.l.b16 %v5685
  %v6267 = vunpack.c.h.b16 %v5685
  %v6268 = vunpack.c.l.b16 %v5686
  %v6269 = vunpack.c.h.b16 %v5686
  %v6270 = vunpack.c.l.b16 %v5687
  %v6271 = vunpack.c.h.b16 %v5687
  %v6272 = vunpack.c.l.b16 %v5688
  %v6273 = vunpack.c.h.b16 %v5688
  %v6274 = vunpack.c.l.b16 %v5689
  %v6275 = vunpack.c.h.b16 %v5689
  %v6276 = vunpack.c.l.b16 %v5690
  %v6277 = vunpack.c.h.b16 %v5690
  %v6278 = vunpack.c.l.b16 %v5691
  %v6279 = vunpack.c.h.b16 %v5691
  %v6280 = vunpack.c.l.b16 %v5692
  %v6281 = vunpack.c.h.b16 %v5692
  %v6282 = vunpack.c.l.b16 %v5693
  %v6283 = vunpack.c.h.b16 %v5693
  %v6284 = vunpack.c.l.b16 %v5694
  %v6285 = vunpack.c.h.b16 %v5694
  %v6286 = vunpack.c.l.b16 %v5695
  %v6287 = vunpack.c.h.b16 %v5695
  %v6288 = vunpack.c.l.b16 %v5696
  %v6289 = vunpack.c.h.b16 %v5696
  %v6290 = vunpack.c.l.b16 %v5697
  %v6291 = vunpack.c.h.b16 %v5697
  %v6292 = vunpack.c.l.b16 %v5698
  %v6293 = vunpack.c.h.b16 %v5698
  %v6294 = vunpack.c.l.b16 %v5699
  %v6295 = vunpack.c.h.b16 %v5699
  %v6296 = vunpack.c.l.b16 %v5700
  %v6297 = vunpack.c.h.b16 %v5700
  %v6298 = vunpack.c.l.b16 %v5701
  %v6299 = vunpack.c.h.b16 %v5701
  %v6300 = vunpack.c.l.b16 %v5702
  %v6301 = vunpack.c.h.b16 %v5702
  %v6302 = vunpack.c.l.b16 %v5703
  %v6303 = vunpack.c.h.b16 %v5703
  %v6304 = vunpack.c.l.b16 %v5704
  %v6305 = vunpack.c.h.b16 %v5704
  %v6306 = vunpack.c.l.b16 %v5705
  %v6307 = vunpack.c.h.b16 %v5705
  %v6308 = vunpack.c.l.b16 %v5706
  %v6309 = vunpack.c.h.b16 %v5706
  %v6310 = vunpack.c.l.b16 %v5707
  %v6311 = vunpack.c.h.b16 %v5707
  %v6312 = vunpack.c.l.b16 %v5708
  %v6313 = vunpack.c.h.b16 %v5708
  %v6314 = vunpack.c.l.b16 %v5709
  %v6315 = vunpack.c.h.b16 %v5709
  %v6316 = vunpack.c.l.b16 %v5710
  %v6317 = vunpack.c.h.b16 %v5710
  %v6318 = vunpack.c.l.b16 %v5711
  %v6319 = vunpack.c.h.b16 %v5711
  %v6320 = vunpack.c.l.b16 %v5712
  %v6321 = vunpack.c.h.b16 %v5712
  %v6322 = vunpack.c.l.b16 %v5713
  %v6323 = vunpack.c.h.b16 %v5713
  %v6324 = vunpack.c.l.b16 %v5714
  %v6325 = vunpack.c.h.b16 %v5714
  %v6326 = vunpack.c.l.b16 %v5715
  %v6327 = vunpack.c.h.b16 %v5715
  %v6328 = vunpack.c.l.b16 %v5716
  %v6329 = vunpack.c.h.b16 %v5716
  %v6330 = vunpack.c.l.b16 %v5717
  %v6331 = vunpack.c.h.b16 %v5717
  %v6332 = vunpack.c.l.b16 %v5718
  %v6333 = vunpack.c.h.b16 %v5718
  %v6334 = vunpack.c.l.b16 %v5719
  %v6335 = vunpack.c.h.b16 %v5719
  %v6336 = vunpack.c.l.b16 %v5720
  %v6337 = vunpack.c.h.b16 %v5720
  %v6338 = vunpack.c.l.b16 %v5721
  %v6339 = vunpack.c.h.b16 %v5721
  %v6340 = vunpack.c.l.b16 %v5722
  %v6341 = vunpack.c.h.b16 %v5722
  %v6342 = vunpack.c.l.b16 %v5723
  %v6343 = vunpack.c.h.b16 %v5723
  %v6344 = vunpack.c.l.b16 %v5724
  %v6345 = vunpack.c.h.b16 %v5724
  %v6346 = vunpack.c.l.b16 %v5725
  %v6347 = vunpack.c.h.b16 %v5725
  %v6348 = vunpack.c.l.b16 %v5726
  %v6349 = vunpack.c.h.b16 %v5726
  %v6350 = vunpack.c.l.b16 %v5727
  %v6351 = vunpack.c.h.b16 %v5727
  %v6352 = vunpack.c.l.b16 %v5728
  %v6353 = vunpack.c.h.b16 %v5728
  %v6354 = vunpack.c.l.b16 %v5729
  %v6355 = vunpack.c.h.b16 %v5729
  %v6356 = vunpack.c.l.b16 %v5730
  %v6357 = vunpack.c.h.b16 %v5730
  %v6358 = vunpack.c.l.b16 %v5731
  %v6359 = vunpack.c.h.b16 %v5731
  %v6360 = vunpack.c.l.b16 %v5732
  %v6361 = vunpack.c.h.b16 %v5732
  %v6362 = vunpack.c.l.b16 %v5733
  %v6363 = vunpack.c.h.b16 %v5733
  %v6364 = vunpack.c.l.b16 %v5734
  %v6365 = vunpack.c.h.b16 %v5734
  %v6366 = vunpack.c.l.b16 %v5735
  %v6367 = vunpack.c.h.b16 %v5735
  %v6368 = vunpack.c.l.b16 %v5736
  %v6369 = vunpack.c.h.b16 %v5736
  %v6370 = vunpack.c.l.b16 %v5737
  %v6371 = vunpack.c.h.b16 %v5737
  %v6372 = vunpack.c.l.b16 %v5738
  %v6373 = vunpack.c.h.b16 %v5738
  %v6374 = vunpack.c.l.b16 %v5739
  %v6375 = vunpack.c.h.b16 %v5739
  %v6376 = vunpack.c.l.b16 %v5740
  %v6377 = vunpack.c.h.b16 %v5740
  %v6378 = vunpack.c.l.b16 %v5741
  %v6379 = vunpack.c.h.b16 %v5741
  %v6380 = vunpack.c.l.b16 %v5742
  %v6381 = vunpack.c.h.b16 %v5742
  %v6382 = vunpack.c.l.b16 %v5743
  %v6383 = vunpack.c.h.b16 %v5743
  %v6384 = vunpack.c.l.b16 %v5744
  %v6385 = vunpack.c.h.b16 %v5744
  %v6386 = vunpack.c.l.b16 %v5745
  %v6387 = vunpack.c.h.b16 %v5745
  %v6388 = vunpack.c.l.b16 %v5746
  %v6389 = vunpack.c.h.b16 %v5746
  %v6390 = vunpack.c.l.b16 %v5747
  %v6391 = vunpack.c.h.b16 %v5747
  %v6392 = vunpack.c.l.b16 %v5748
  %v6393 = vunpack.c.h.b16 %v5748
  %v6394 = vunpack.c.l.b16 %v5749
  %v6395 = vunpack.c.h.b16 %v5749
  %v6396 = vunpack.c.l.b16 %v5750
  %v6397 = vunpack.c.h.b16 %v5750
  %v6398 = vunpack.c.l.b16 %v5751
  %v6399 = vunpack.c.h.b16 %v5751
  %v6400 = vunpack.c.l.b16 %v5752
  %v6401 = vunpack.c.h.b16 %v5752
  %v6402 = vunpack.c.l.b16 %v5753
  %v6403 = vunpack.c.h.b16 %v5753
  %v6404 = vunpack.c.l.b16 %v5754
  %v6405 = vunpack.c.h.b16 %v5754
  %v6406 = vunpack.c.l.b16 %v5755
  %v6407 = vunpack.c.h.b16 %v5755
  %v6408 = vunpack.c.l.b16 %v5756
  %v6409 = vunpack.c.h.b16 %v5756
  %v6410 = vunpack.c.l.b16 %v5757
  %v6411 = vunpack.c.h.b16 %v5757
  %v6412 = vunpack.c.l.b16 %v5758
  %v6413 = vunpack.c.h.b16 %v5758
  %v6414 = vunpack.c.l.b16 %v5759
  %v6415 = vunpack.c.h.b16 %v5759
  %v6416 = vunpack.c.l.b16 %v5760
  %v6417 = vunpack.c.h.b16 %v5760
  %v6418 = vunpack.c.l.b16 %v5761
  %v6419 = vunpack.c.h.b16 %v5761
  %v6420 = vunpack.c.l.b16 %v5762
  %v6421 = vunpack.c.h.b16 %v5762
  %v6422 = vunpack.c.l.b16 %v5763
  %v6423 = vunpack.c.h.b16 %v5763
  %v6424 = vunpack.c.l.b16 %v5764
  %v6425 = vunpack.c.h.b16 %v5764
  %v6426 = vunpack.c.l.b16 %v5765
  %v6427 = vunpack.c.h.b16 %v5765
  %v6428 = vunpack.c.l.b16 %v5766
  %v6429 = vunpack.c.h.b16 %v5766
  %v6430 = vunpack.c.l.b16 %v5767
  %v6431 = vunpack.c.h.b16 %v5767
  %v6432 = vunpack.c.l.b16 %v5768
  %v6433 = vunpack.c.h.b16 %v5768
  %v6434 = vunpack.c.l.b16 %v5769
  %v6435 = vunpack.c.h.b16 %v5769
  %v6436 = vunpack.c.l.b16 %v5770
  %v6437 = vunpack.c.h.b16 %v5770
  %v6438 = vunpack.c.l.b16 %v5771
  %v6439 = vunpack.c.h.b16 %v5771
  %v6440 = vunpack.c.l.b16 %v5772
  %v6441 = vunpack.c.h.b16 %v5772
  %v6442 = vunpack.c.l.b16 %v5773
  %v6443 = vunpack.c.h.b16 %v5773
  %v6444 = vunpack.c.l.b16 %v5774
  %v6445 = vunpack.c.h.b16 %v5774
  %v6446 = vunpack.c.l.b16 %v5775
  %v6447 = vunpack.c.h.b16 %v5775
  %v6448 = vunpack.c.l.b16 %v5776
  %v6449 = vunpack.c.h.b16 %v5776
  %v6450 = vunpack.c.l.b16 %v5777
  %v6451 = vunpack.c.h.b16 %v5777
  %v6452 = vunpack.c.l.b16 %v5778
  %v6453 = vunpack.c.h.b16 %v5778
  %v6454 = vunpack.c.l.b16 %v5779
  %v6455 = vunpack.c.h.b16 %v5779
  %v6456 = vunpack.c.l.b16 %v5780
  %v6457 = vunpack.c.h.b16 %v5780
  %v6458 = vunpack.c.l.b16 %v5781
  %v6459 = vunpack.c.h.b16 %v5781
  %v6460 = vunpack.c.l.b16 %v5782
  %v6461 = vunpack.c.h.b16 %v5782
  %v6462 = vunpack.c.l.b16 %v5783
  %v6463 = vunpack.c.h.b16 %v5783
  %v6464 = vunpack.c.l.b16 %v5784
  %v6465 = vunpack.c.h.b16 %v5784
  %v6466 = vunpack.c.l.b16 %v5785
  %v6467 = vunpack.c.h.b16 %v5785
  %v6468 = vunpack.c.l.b16 %v5786
  %v6469 = vunpack.c.h.b16 %v5786
  %v6470 = vunpack.c.l.b16 %v5787
  %v6471 = vunpack.c.h.b16 %v5787
  %v6472 = vunpack.c.l.b16 %v5788
  %v6473 = vunpack.c.h.b16 %v5788
  %v6474 = vunpack.c.l.b16 %v5789
  %v6475 = vunpack.c.h.b16 %v5789
  %v6476 = vunpack.c.l.b16 %v5790
  %v6477 = vunpack.c.h.b16 %v5790
  %v6478 = vunpack.c.l.b16 %v5791
  %v6479 = vunpack.c.h.b16 %v5791
  %v6480 = vunpack.c.l.b16 %v5792
  %v6481 = vunpack.c.h.b16 %v5792
  %v6482 = vunpack.c.l.b16 %v5793
  %v6483 = vunpack.c.h.b16 %v5793
  %v6484 = vunpack.c.l.b16 %v5794
  %v6485 = vunpack.c.h.b16 %v5794
  %v6486 = vunpack.c.l.b16 %v5795
  %v6487 = vunpack.c.h.b16 %v5795
  %v6488 = vunpack.c.l.b16 %v5796
  %v6489 = vunpack.c.h.b16 %v5796
  %v6490 = vunpack.c.l.b16 %v5797
  %v6491 = vunpack.c.h.b16 %v5797
  %v6492 = vunpack.c.l.b16 %v5798
  %v6493 = vunpack.c.h.b16 %v5798
  %v6494 = vunpack.c.l.b16 %v5799
  %v6495 = vunpack.c.h.b16 %v5799
  %v6496 = vunpack.c.l.b16 %v5800
  %v6497 = vunpack.c.h.b16 %v5800
  %v6498 = vunpack.c.l.b16 %v5801
  %v6499 = vunpack.c.h.b16 %v5801
  %v6500 = vunpack.c.l.b16 %v5802
  %v6501 = vunpack.c.h.b16 %v5802
  %v6502 = vunpack.c.l.b16 %v5803
  %v6503 = vunpack.c.h.b16 %v5803
  %v6504 = vunpack.c.l.b16 %v5804
  %v6505 = vunpack.c.h.b16 %v5804
  %v6506 = vunpack.c.l.b16 %v5805
  %v6507 = vunpack.c.h.b16 %v5805
  %v6508 = vunpack.c.l.b16 %v5806
  %v6509 = vunpack.c.h.b16 %v5806
  %v6510 = vunpack.c.l.b16 %v5807
  %v6511 = vunpack.c.h.b16 %v5807
  %v6512 = vunpack.c.l.b16 %v5808
  %v6513 = vunpack.c.h.b16 %v5808
  %v6514 = vunpack.c.l.b16 %v5809
  %v6515 = vunpack.c.h.b16 %v5809
  %v6516 = vunpack.c.l.b16 %v5810
  %v6517 = vunpack.c.h.b16 %v5810
  %v6518 = vunpack.c.l.b16 %v5811
  %v6519 = vunpack.c.h.b16 %v5811
  %v6520 = vunpack.c.l.b16 %v5812
  %v6521 = vunpack.c.h.b16 %v5812
  %v6522 = vunpack.c.l.b16 %v5813
  %v6523 = vunpack.c.h.b16 %v5813
  %v6524 = vunpack.c.l.b16 %v5814
  %v6525 = vunpack.c.h.b16 %v5814
  %v6526 = vunpack.c.l.b16 %v5815
  %v6527 = vunpack.c.h.b16 %v5815
  %v6528 = vunpack.c.l.b16 %v5816
  %v6529 = vunpack.c.h.b16 %v5816
  %v6530 = vunpack.c.l.b16 %v5817
  %v6531 = vunpack.c.h.b16 %v5817
  %v6532 = vunpack.c.l.b16 %v5818
  %v6533 = vunpack.c.h.b16 %v5818
  %v6534 = vunpack.c.l.b16 %v5819
  %v6535 = vunpack.c.h.b16 %v5819
  %v6536 = vunpack.c.l.b16 %v5820
  %v6537 = vunpack.c.h.b16 %v5820
  %v6538 = vunpack.c.l.b16 %v5821
  %v6539 = vunpack.c.h.b16 %v5821
  %v6540 = vunpack.c.l.b16 %v5822
  %v6541 = vunpack.c.h.b16 %v5822
  %v6542 = vunpack.c.l.b16 %v5823
  %v6543 = vunpack.c.h.b16 %v5823
  %v6544 = vunpack.c.l.b16 %v5824
  %v6545 = vunpack.c.h.b16 %v5824
  %v6546 = vunpack.c.l.b16 %v5825
  %v6547 = vunpack.c.h.b16 %v5825
  %v6548 = vunpack.c.l.b16 %v5826
  %v6549 = vunpack.c.h.b16 %v5826
  %v6550 = vunpack.c.l.b16 %v5827
  %v6551 = vunpack.c.h.b16 %v5827
  %v6552 = vunpack.c.l.b16 %v5828
  %v6553 = vunpack.c.h.b16 %v5828
  %v6554 = vunpack.c.l.b16 %v5829
  %v6555 = vunpack.c.h.b16 %v5829
  %v6556 = vunpack.c.l.b16 %v5830
  %v6557 = vunpack.c.h.b16 %v5830
  %v6558 = vunpack.c.l.b16 %v5831
  %v6559 = vunpack.c.h.b16 %v5831
  %v6560 = vunpack.c.l.b16 %v5832
  %v6561 = vunpack.c.h.b16 %v5832
  %v6562 = vunpack.c.l.b16 %v5833
  %v6563 = vunpack.c.h.b16 %v5833
  %v6564 = vunpack.c.l.b16 %v5834
  %v6565 = vunpack.c.h.b16 %v5834
  %v6566 = vunpack.c.l.b16 %v5835
  %v6567 = vunpack.c.h.b16 %v5835
  %v6568 = vunpack.c.l.b16 %v5836
  %v6569 = vunpack.c.h.b16 %v5836
  %v6570 = vunpack.c.l.b16 %v5837
  %v6571 = vunpack.c.h.b16 %v5837
  %v6572 = vunpack.c.l.b16 %v5838
  %v6573 = vunpack.c.h.b16 %v5838
  %v6574 = vunpack.c.l.b16 %v5839
  %v6575 = vunpack.c.h.b16 %v5839
  %v6576 = vunpack.c.l.b16 %v5840
  %v6577 = vunpack.c.h.b16 %v5840
  %v6578 = vunpack.c.l.b16 %v5841
  %v6579 = vunpack.c.h.b16 %v5841
  %v6580 = vunpack.c.l.b16 %v5842
  %v6581 = vunpack.c.h.b16 %v5842
  %v6582 = vunpack.c.l.b16 %v5843
  %v6583 = vunpack.c.h.b16 %v5843
  %v6584 = vunpack.c.l.b16 %v5844
  %v6585 = vunpack.c.h.b16 %v5844
  %v6586 = vunpack.c.l.b16 %v5845
  %v6587 = vunpack.c.h.b16 %v5845
  %v6588 = vunpack.c.l.b16 %v5846
  %v6589 = vunpack.c.h.b16 %v5846
  %v6590 = vunpack.c.l.b16 %v5847
  %v6591 = vunpack.c.h.b16 %v5847
  %v6592 = vunpack.c.l.b16 %v5848
  %v6593 = vunpack.c.h.b16 %v5848
  %v6594 = vunpack.c.l.b16 %v5849
  %v6595 = vunpack.c.h.b16 %v5849
  %v6596 = vunpack.c.l.b16 %v5850
  %v6597 = vunpack.c.h.b16 %v5850
  %v6598 = vunpack.c.l.b16 %v5851
  %v6599 = vunpack.c.h.b16 %v5851
  %v6600 = vunpack.c.l.b16 %v5852
  %v6601 = vunpack.c.h.b16 %v5852
  %v6602 = vunpack.c.l.b16 %v5853
  %v6603 = vunpack.c.h.b16 %v5853
  %v6604 = vunpack.c.l.b16 %v5854
  %v6605 = vunpack.c.h.b16 %v5854
  %v6606 = vunpack.c.l.b16 %v5855
  %v6607 = vunpack.c.h.b16 %v5855
  %v6608 = vunpack.c.l.b16 %v5856
  %v6609 = vunpack.c.h.b16 %v5856
  %v6610 = vunpack.c.l.b16 %v5857
  %v6611 = vunpack.c.h.b16 %v5857
  %v6612 = vunpack.c.l.b16 %v5858
  %v6613 = vunpack.c.h.b16 %v5858
  %v6614 = vunpack.c.l.b16 %v5859
  %v6615 = vunpack.c.h.b16 %v5859
  %v6616 = vunpack.c.l.b16 %v5860
  %v6617 = vunpack.c.h.b16 %v5860
  %v6618 = vunpack.c.l.b16 %v5861
  %v6619 = vunpack.c.h.b16 %v5861
  %v6620 = vunpack.c.l.b16 %v5862
  %v6621 = vunpack.c.h.b16 %v5862
  %v6622 = vunpack.c.l.b16 %v5863
  %v6623 = vunpack.c.h.b16 %v5863
  %v6624 = vunpack.c.l.b16 %v5864
  %v6625 = vunpack.c.h.b16 %v5864
  %v6626 = vunpack.c.l.b16 %v5865
  %v6627 = vunpack.c.h.b16 %v5865
  %v6628 = vunpack.c.l.b16 %v5866
  %v6629 = vunpack.c.h.b16 %v5866
  %v6630 = vunpack.c.l.b16 %v5867
  %v6631 = vunpack.c.h.b16 %v5867
  %v6632 = vunpack.c.l.b16 %v5868
  %v6633 = vunpack.c.h.b16 %v5868
  %v6634 = vunpack.c.l.b16 %v5869
  %v6635 = vunpack.c.h.b16 %v5869
  %v6636 = vunpack.c.l.b16 %v5870
  %v6637 = vunpack.c.h.b16 %v5870
  %v6638 = vunpack.c.l.b16 %v5871
  %v6639 = vunpack.c.h.b16 %v5871
  %v6640 = vunpack.c.l.b16 %v5872
  %v6641 = vunpack.c.h.b16 %v5872
  %v6642 = vunpack.c.l.b16 %v5873
  %v6643 = vunpack.c.h.b16 %v5873
  %v6644 = vunpack.c.l.b16 %v5874
  %v6645 = vunpack.c.h.b16 %v5874
  %v6646 = vunpack.c.l.b16 %v5875
  %v6647 = vunpack.c.h.b16 %v5875
  %v6648 = vunpack.c.l.b16 %v5876
  %v6649 = vunpack.c.h.b16 %v5876
  %v6650 = vunpack.c.l.b16 %v5877
  %v6651 = vunpack.c.h.b16 %v5877
  %v6652 = vunpack.c.l.b16 %v5878
  %v6653 = vunpack.c.h.b16 %v5878
  %v6654 = vunpack.c.l.b16 %v5879
  %v6655 = vunpack.c.h.b16 %v5879
  %v6656 = vunpack.c.l.b16 %v5880
  %v6657 = vunpack.c.h.b16 %v5880
  %v6658 = vunpack.c.l.b16 %v5881
  %v6659 = vunpack.c.h.b16 %v5881
  %v6660 = vpack.c.b16 %v6152, %v6148
  %v6661 = vpack.c.b16 %v6153, %v6149
  %v6662 = vpack.c.b16 %v6154, %v6150
  %v6663 = vpack.c.b16 %v6155, %v6151
  %v6664 = vpack.c.b16 %v6160, %v6156
  %v6665 = vpack.c.b16 %v6161, %v6157
  %v6666 = vpack.c.b16 %v6162, %v6158
  %v6667 = vpack.c.b16 %v6163, %v6159
  %v6668 = vpack.c.b16 %v6168, %v6164
  %v6669 = vpack.c.b16 %v6169, %v6165
  %v6670 = vpack.c.b16 %v6170, %v6166
  %v6671 = vpack.c.b16 %v6171, %v6167
  %v6672 = vpack.c.b16 %v6176, %v6172
  %v6673 = vpack.c.b16 %v6177, %v6173
  %v6674 = vpack.c.b16 %v6178, %v6174
  %v6675 = vpack.c.b16 %v6179, %v6175
  %v6676 = vpack.c.b16 %v6184, %v6180
  %v6677 = vpack.c.b16 %v6185, %v6181
  %v6678 = vpack.c.b16 %v6186, %v6182
  %v6679 = vpack.c.b16 %v6187, %v6183
  %v6680 = vpack.c.b16 %v6192, %v6188
  %v6681 = vpack.c.b16 %v6193, %v6189
  %v6682 = vpack.c.b16 %v6194, %v6190
  %v6683 = vpack.c.b16 %v6195, %v6191
  %v6684 = vpack.c.b16 %v6200, %v6196
  %v6685 = vpack.c.b16 %v6201, %v6197
  %v6686 = vpack.c.b16 %v6202, %v6198
  %v6687 = vpack.c.b16 %v6203, %v6199
  %v6688 = vpack.c.b16 %v6208, %v6204
  %v6689 = vpack.c.b16 %v6209, %v6205
  %v6690 = vpack.c.b16 %v6210, %v6206
  %v6691 = vpack.c.b16 %v6211, %v6207
  %v6692 = vpack.c.b16 %v6216, %v6212
  %v6693 = vpack.c.b16 %v6217, %v6213
  %v6694 = vpack.c.b16 %v6218, %v6214
  %v6695 = vpack.c.b16 %v6219, %v6215
  %v6696 = vpack.c.b16 %v6224, %v6220
  %v6697 = vpack.c.b16 %v6225, %v6221
  %v6698 = vpack.c.b16 %v6226, %v6222
  %v6699 = vpack.c.b16 %v6227, %v6223
  %v6700 = vpack.c.b16 %v6232, %v6228
  %v6701 = vpack.c.b16 %v6233, %v6229
  %v6702 = vpack.c.b16 %v6234, %v6230
  %v6703 = vpack.c.b16 %v6235, %v6231
  %v6704 = vpack.c.b16 %v6240, %v6236
  %v6705 = vpack.c.b16 %v6241, %v6237
  %v6706 = vpack.c.b16 %v6242, %v6238
  %v6707 = vpack.c.b16 %v6243, %v6239
  %v6708 = vpack.c.b16 %v6248, %v6244
  %v6709 = vpack.c.b16 %v6249, %v6245
  %v6710 = vpack.c.b16 %v6250, %v6246
  %v6711 = vpack.c.b16 %v6251, %v6247
  %v6712 = vpack.c.b16 %v6256, %v6252
  %v6713 = vpack.c.b16 %v6257, %v6253
  %v6714 = vpack.c.b16 %v6258, %v6254
  %v6715 = vpack.c.b16 %v6259, %v6255
  %v6716 = vpack.c.b16 %v6264, %v6260
  %v6717 = vpack.c.b16 %v6265, %v6261
  %v6718 = vpack.c.b16 %v6266, %v6262
  %v6719 = vpack.c.b16 %v6267, %v6263
  %v6720 = vpack.c.b16 %v6272, %v6268
  %v6721 = vpack.c.b16 %v6273, %v6269
  %v6722 = vpack.c.b16 %v6274, %v6270
  %v6723 = vpack.c.b16 %v6275, %v6271
  %v6724 = vpack.c.b16 %v6280, %v6276
  %v6725 = vpack.c.b16 %v6281, %v6277
  %v6726 = vpack.c.b16 %v6282, %v6278
  %v6727 = vpack.c.b16 %v6283, %v6279
  %v6728 = vpack.c.b16 %v6288, %v6284
  %v6729 = vpack.c.b16 %v6289, %v6285
  %v6730 = vpack.c.b16 %v6290, %v6286
  %v6731 = vpack.c.b16 %v6291, %v6287
  %v6732 = vpack.c.b16 %v6296, %v6292
  %v6733 = vpack.c.b16 %v6297, %v6293
  %v6734 = vpack.c.b16 %v6298, %v6294
  %v6735 = vpack.c.b16 %v6299, %v6295
  %v6736 = vpack.c.b16 %v6304, %v6300
  %v6737 = vpack.c.b16 %v6305, %v6301
  %v6738 = vpack.c.b16 %v6306, %v6302
  %v6739 = vpack.c.b16 %v6307, %v6303
  %v6740 = vpack.c.b16 %v6312, %v6308
  %v6741 = vpack.c.b16 %v6313, %v6309
  %v6742 = vpack.c.b16 %v6314, %v6310
  %v6743 = vpack.c.b16 %v6315, %v6311
  %v6744 = vpack.c.b16 %v6320, %v6316
  %v6745 = vpack.c.b16 %v6321, %v6317
  %v6746 = vpack.c.b16 %v6322, %v6318
  %v6747 = vpack.c.b16 %v6323, %v6319
  %v6748 = vpack.c.b16 %v6328, %v6324
  %v6749 = vpack.c.b16 %v6329, %v6325
  %v6750 = vpack.c.b16 %v6330, %v6326
  %v6751 = vpack.c.b16 %v6331, %v6327
  %v6752 = vpack.c.b16 %v6336, %v6332
  %v6753 = vpack.c.b16 %v6337, %v6333
  %v6754 = vpack.c.b16 %v6338, %v6334
  %v6755 = vpack.c.b16 %v6339, %v6335
  %v6756 = vpack.c.b16 %v6344, %v6340
  %v6757 = vpack.c.b16 %v6345, %v6341
  %v6758 = vpack.c.b16 %v6346, %v6342
  %v6759 = vpack.c.b16 %v6347, %v6343
  %v6760 = vpack.c.b16 %v6352, %v6348
  %v6761 = vpack.c.b16 %v6353, %v6349
  %v6762 = vpack.c.b16 %v6354, %v6350
  %v6763 = vpack.c.b16 %v6355, %v6351
  %v6764 = vpack.c.b16 %v6360, %v6356
  %v6765 = vpack.c.b16 %v6361, %v6357
  %v6766 = vpack.c.b16 %v6362, %v6358
  %v6767 = vpack.c.b16 %v6363, %v6359
  %v6768 = vpack.c.b16 %v6368, %v6364
  %v6769 = vpack.c.b16 %v6369, %v6365
  %v6770 = vpack.c.b16 %v6370, %v6366
  %v6771 = vpack.c.b16 %v6371, %v6367
  %v6772 = vpack.c.b16 %v6376, %v6372
  %v6773 = vpack.c.b16 %v6377, %v6373
  %v6774 = vpack.c.b16 %v6378, %v6374
  %v6775 = vpack.c.b16 %v6379, %v6375
  %v6776 = vpack.c.b16 %v6384, %v6380
  %v6777 = vpack.c.b16 %v6385, %v6381
  %v6778 = vpack.c.b16 %v6386, %v6382
  %v6779 = vpack.c.b16 %v6387, %v6383
  %v6780 = vpack.c.b16 %v6392, %v6388
  %v6781 = vpack.c.b16 %v6393, %v6389
  %v6782 = vpack.c.b16 %v6394, %v6390
  %v6783 = vpack.c.b16 %v6395, %v6391
  %v6784 = vpack.c.b16 %v6400, %v6396
  %v6785 = vpack.c.b16 %v6401, %v6397
  %v6786 = vpack.c.b16 %v6402, %v6398
  %v6787 = vpack.c.b16 %v6403, %v6399
  %v6788 = vpack.c.b16 %v6408, %v6404
  %v6789 = vpack.c.b16 %v6409, %v6405
  %v6790 = vpack.c.b16 %v6410, %v6406
  %v6791 = vpack.c.b16 %v6411, %v6407
  %v6792 = vpack.c.b16 %v6416, %v6412
  %v6793 = vpack.c.b16 %v6417, %v6413
  %v6794 = vpack.c.b16 %v6418, %v6414
  %v6795 = vpack.c.b16 %v6419, %v6415
  %v6796 = vpack.c.b16 %v6424, %v6420
  %v6797 = vpack.c.b16 %v6425, %v6421
  %v6798 = vpack.c.b16 %v6426, %v6422
  %v6799 = vpack.c.b16 %v6427, %v6423
  %v6800 = vpack.c.b16 %v6432, %v6428
  %v6801 = vpack.c.b16 %v6433, %v6429
  %v6802 = vpack.c.b16 %v6434, %v6430
  %v6803 = vpack.c.b16 %v6435, %v6431
  %v6804 = vpack.c.b16 %v6440, %v6436
  %v6805 = vpack.c.b16 %v6441, %v6437
  %v6806 = vpack.c.b16 %v6442, %v6438
  %v6807 = vpack.c.b16 %v6443, %v6439
  %v6808 = vpack.c.b16 %v6448, %v6444
  %v6809 = vpack.c.b16 %v6449, %v6445
  %v6810 = vpack.c.b16 %v6450, %v6446
  %v6811 = vpack.c.b16 %v6451, %v6447
  %v6812 = vpack.c.b16 %v6456, %v6452
  %v6813 = vpack.c.b16 %v6457, %v6453
  %v6814 = vpack.c.b16 %v6458, %v6454
  %v6815 = vpack.c.b16 %v6459, %v6455
  %v6816 = vpack.c.b16 %v6464, %v6460
  %v6817 = vpack.c.b16 %v6465, %v6461
  %v6818 = vpack.c.b16 %v6466, %v6462
  %v6819 = vpack.c.b16 %v6467, %v6463
  %v6820 = vpack.c.b16 %v6472, %v6468
  %v6821 = vpack.c.b16 %v6473, %v6469
  %v6822 = vpack.c.b16 %v6474, %v6470
  %v6823 = vpack.c.b16 %v6475, %v6471
  %v6824 = vpack.c.b16 %v6480, %v6476
  %v6825 = vpack.c.b16 %v6481, %v6477
  %v6826 = vpack.c.b16 %v6482, %v6478
  %v6827 = vpack.c.b16 %v6483, %v6479
  %v6828 = vpack.c.b16 %v6488, %v6484
  %v6829 = vpack.c.b16 %v6489, %v6485
  %v6830 = vpack.c.b16 %v6490, %v6486
  %v6831 = vpack.c.b16 %v6491, %v6487
  %v6832 = vpack.c.b16 %v6496, %v6492
  %v6833 = vpack.c.b16 %v6497, %v6493
  %v6834 = vpack.c.b16 %v6498, %v6494
  %v6835 = vpack.c.b16 %v6499, %v6495
  %v6836 = vpack.c.b16 %v6504, %v6500
  %v6837 = vpack.c.b16 %v6505, %v6501
  %v6838 = vpack.c.b16 %v6506, %v6502
  %v6839 = vpack.c.b16 %v6507, %v6503
  %v6840 = vpack.c.b16 %v6512, %v6508
  %v6841 = vpack.c.b16 %v6513, %v6509
  %v6842 = vpack.c.b16 %v6514, %v6510
  %v6843 = vpack.c.b16 %v6515, %v6511
  %v6844 = vpack.c.b16 %v6520, %v6516
  %v6845 = vpack.c.b16 %v6521, %v6517
  %v6846 = vpack.c.b16 %v6522, %v6518
  %v6847 = vpack.c.b16 %v6523, %v6519
  %v6848 = vpack.c.b16 %v6528, %v6524
  %v6849 = vpack.c.b16 %v6529, %v6525
  %v6850 = vpack.c.b16 %v6530, %v6526
  %v6851 = vpack.c.b16 %v6531, %v6527
  %v6852 = vpack.c.b16 %v6536, %v6532
  %v6853 = vpack.c.b16 %v6537, %v6533
  %v6854 = vpack.c.b16 %v6538, %v6534
  %v6855 = vpack.c.b16 %v6539, %v6535
  %v6856 = vpack.c.b16 %v6544, %v6540
  %v6857 = vpack.c.b16 %v6545, %v6541
  %v6858 = vpack.c.b16 %v6546, %v6542
  %v6859 = vpack.c.b16 %v6547, %v6543
  %v6860 = vpack.c.b16 %v6552, %v6548
  %v6861 = vpack.c.b16 %v6553, %v6549
  %v6862 = vpack.c.b16 %v6554, %v6550
  %v6863 = vpack.c.b16 %v6555, %v6551
  %v6864 = vpack.c.b16 %v6560, %v6556
  %v6865 = vpack.c.b16 %v6561, %v6557
  %v6866 = vpack.c.b16 %v6562, %v6558
  %v6867 = vpack.c.b16 %v6563, %v6559
  %v6868 = vpack.c.b16 %v6568, %v6564
  %v6869 = vpack.c.b16 %v6569, %v6565
  %v6870 = vpack.c.b16 %v6570, %v6566
  %v6871 = vpack.c.b16 %v6571, %v6567
  %v6872 = vpack.c.b16 %v6576, %v6572
  %v6873 = vpack.c.b16 %v6577, %v6573
  %v6874 = vpack.c.b16 %v6578, %v6574
  %v6875 = vpack.c.b16 %v6579, %v6575
  %v6876 = vpack.c.b16 %v6584, %v6580
  %v6877 = vpack.c.b16 %v6585, %v6581
  %v6878 = vpack.c.b16 %v6586, %v6582
  %v6879 = vpack.c.b16 %v6587, %v6583
  %v6880 = vpack.c.b16 %v6592, %v6588
  %v6881 = vpack.c.b16 %v6593, %v6589
  %v6882 = vpack.c.b16 %v6594, %v6590
  %v6883 = vpack.c.b16 %v6595, %v6591
  %v6884 = vpack.c.b16 %v6600, %v6596
  %v6885 = vpack.c.b16 %v6601, %v6597
  %v6886 = vpack.c.b16 %v6602, %v6598
  %v6887 = vpack.c.b16 %v6603, %v6599
  %v6888 = vpack.c.b16 %v6608, %v6604
  %v6889 = vpack.c.b16 %v6609, %v6605
  %v6890 = vpack.c.b16 %v6610, %v6606
  %v6891 = vpack.c.b16 %v6611, %v6607
  %v6892 = vpack.c.b16 %v6616, %v6612
  %v6893 = vpack.c.b16 %v6617, %v6613
  %v6894 = vpack.c.b16 %v6618, %v6614
  %v6895 = vpack.c.b16 %v6619, %v6615
  %v6896 = vpack.c.b16 %v6624, %v6620
  %v6897 = vpack.c.b16 %v6625, %v6621
  %v6898 = vpack.c.b16 %v6626, %v6622
  %v6899 = vpack.c.b16 %v6627, %v6623
  %v6900 = vpack.c.b16 %v6632, %v6628
  %v6901 = vpack.c.b16 %v6633, %v6629
  %v6902 = vpack.c.b16 %v6634, %v6630
  %v6903 = vpack.c.b16 %v6635, %v6631
  %v6904 = vpack.c.b16 %v6640, %v6636
  %v6905 = vpack.c.b16 %v6641, %v6637
  %v6906 = vpack.c.b16 %v6642, %v6638
  %v6907 = vpack.c.b16 %v6643, %v6639
  %v6908 = vpack.c.b16 %v6648, %v6644
  %v6909 = vpack.c.b16 %v6649, %v6645
  %v6910 = vpack.c.b16 %v6650, %v6646
  %v6911 = vpack.c.b16 %v6651, %v6647
  %v6912 = vpack.c.b16 %v6656, %v6652
  %v6913 = vpack.c.b16 %v6657, %v6653
  %v6914 = vpack.c.b16 %v6658, %v6654
  %v6915 = vpack.c.b16 %v6659, %v6655
  %7172 = vmatpush.bf16.msra.mxu0 %v6688
  %7173 = vmatpush.bf16.msra.mxu0 %v6684
  %7174 = vmatpush.bf16.msra.mxu0 %v6680
  %7175 = vmatpush.bf16.msra.mxu0 %v6676
  %7176 = vmatpush.bf16.msra.mxu0 %v6672
  %7177 = vmatpush.bf16.msra.mxu0 %v6668
  %7178 = vmatpush.bf16.msra.mxu0 %v6664
  %7179 = vmatpush.bf16.msra.mxu0 %v6660
  %7180 = vmatmul.bf16.gmra.mxu0 %v5618
  %v7181 = vpop.f32.mrf.mxu0
  %v7182 = vadd.f32 %v5884, %v7181
  %v7183 = vpop.f32.mrf.mxu0
  %7184 = vdwg.mxu0
  %7185 = vmatpush.bf16.msra.mxu0 %v6720
  %7186 = vmatpush.bf16.msra.mxu0 %v6716
  %7187 = vmatpush.bf16.msra.mxu0 %v6712
  %7188 = vmatpush.bf16.msra.mxu0 %v6708
  %7189 = vmatpush.bf16.msra.mxu0 %v6704
  %7190 = vmatpush.bf16.msra.mxu0 %v6700
  %7191 = vmatpush.bf16.msra.mxu0 %v6696
  %7192 = vmatpush.bf16.msra.mxu0 %v6692
  %7193 = vmatmul.bf16.gmra.mxu0 %v5619
  %v7194 = vpop.f32.mrf.mxu0
  %v7195 = vadd.f32 %v7182, %v7194
  %v7196 = vpop.f32.mrf.mxu0
  %7197 = vdwg.mxu0
  %7198 = vmatpush.bf16.msra.mxu0 %v6752
  %7199 = vmatpush.bf16.msra.mxu0 %v6748
  %7200 = vmatpush.bf16.msra.mxu0 %v6744
  %7201 = vmatpush.bf16.msra.mxu0 %v6740
  %7202 = vmatpush.bf16.msra.mxu0 %v6736
  %7203 = vmatpush.bf16.msra.mxu0 %v6732
  %7204 = vmatpush.bf16.msra.mxu0 %v6728
  %7205 = vmatpush.bf16.msra.mxu0 %v6724
  %7206 = vmatmul.bf16.gmra.mxu0 %v5620
  %v7207 = vpop.f32.mrf.mxu0
  %v7208 = vadd.f32 %v7195, %v7207
  %v7209 = vpop.f32.mrf.mxu0
  %7210 = vdwg.mxu0
  %7211 = vmatpush.bf16.msra.mxu0 %v6784
  %7212 = vmatpush.bf16.msra.mxu0 %v6780
  %7213 = vmatpush.bf16.msra.mxu0 %v6776
  %7214 = vmatpush.bf16.msra.mxu0 %v6772
  %7215 = vmatpush.bf16.msra.mxu0 %v6768
  %7216 = vmatpush.bf16.msra.mxu0 %v6764
  %7217 = vmatpush.bf16.msra.mxu0 %v6760
  %7218 = vmatpush.bf16.msra.mxu0 %v6756
  %7219 = vmatmul.bf16.gmra.mxu0 %v5621
  %v7220 = vpop.f32.mrf.mxu0
  %v7221 = vadd.f32 %v7208, %v7220
  %v7222 = vpop.f32.mrf.mxu0
  %7223 = vdwg.mxu0
  %7224 = vmatpush.bf16.msra.mxu0 %v6816
  %7225 = vmatpush.bf16.msra.mxu0 %v6812
  %7226 = vmatpush.bf16.msra.mxu0 %v6808
  %7227 = vmatpush.bf16.msra.mxu0 %v6804
  %7228 = vmatpush.bf16.msra.mxu0 %v6800
  %7229 = vmatpush.bf16.msra.mxu0 %v6796
  %7230 = vmatpush.bf16.msra.mxu0 %v6792
  %7231 = vmatpush.bf16.msra.mxu0 %v6788
  %7232 = vmatmul.bf16.gmra.mxu0 %v5622
  %v7233 = vpop.f32.mrf.mxu0
  %v7234 = vadd.f32 %v7221, %v7233
  %v7235 = vpop.f32.mrf.mxu0
  %7236 = vdwg.mxu0
  %7237 = vmatpush.bf16.msra.mxu0 %v6848
  %7238 = vmatpush.bf16.msra.mxu0 %v6844
  %7239 = vmatpush.bf16.msra.mxu0 %v6840
  %7240 = vmatpush.bf16.msra.mxu0 %v6836
  %7241 = vmatpush.bf16.msra.mxu0 %v6832
  %7242 = vmatpush.bf16.msra.mxu0 %v6828
  %7243 = vmatpush.bf16.msra.mxu0 %v6824
  %7244 = vmatpush.bf16.msra.mxu0 %v6820
  %7245 = vmatmul.bf16.gmra.mxu0 %v5623
  %v7246 = vpop.f32.mrf.mxu0
  %v7247 = vadd.f32 %v7234, %v7246
  %v7248 = vpop.f32.mrf.mxu0
  %7249 = vdwg.mxu0
  %7250 = vmatpush.bf16.msra.mxu0 %v6880
  %7251 = vmatpush.bf16.msra.mxu0 %v6876
  %7252 = vmatpush.bf16.msra.mxu0 %v6872
  %7253 = vmatpush.bf16.msra.mxu0 %v6868
  %7254 = vmatpush.bf16.msra.mxu0 %v6864
  %7255 = vmatpush.bf16.msra.mxu0 %v6860
  %7256 = vmatpush.bf16.msra.mxu0 %v6856
  %7257 = vmatpush.bf16.msra.mxu0 %v6852
  %7258 = vmatmul.bf16.gmra.mxu0 %v5624
  %v7259 = vpop.f32.mrf.mxu0
  %v7260 = vadd.f32 %v7247, %v7259
  %v7261 = vpop.f32.mrf.mxu0
  %7262 = vdwg.mxu0
  %7263 = vmatpush.bf16.msra.mxu0 %v6912
  %7264 = vmatpush.bf16.msra.mxu0 %v6908
  %7265 = vmatpush.bf16.msra.mxu0 %v6904
  %7266 = vmatpush.bf16.msra.mxu0 %v6900
  %7267 = vmatpush.bf16.msra.mxu0 %v6896
  %7268 = vmatpush.bf16.msra.mxu0 %v6892
  %7269 = vmatpush.bf16.msra.mxu0 %v6888
  %7270 = vmatpush.bf16.msra.mxu0 %v6884
  %7271 = vmatmul.bf16.gmra.mxu0 %v5625
  %v7272 = vpop.f32.mrf.mxu0
  %v7273 = vadd.f32 %v7260, %v7272
  %v7274 = vpop.f32.mrf.mxu0
  %7275 = vdwg.mxu0
  %7276 = vmatpush.bf16.msra.mxu0 %v6689
  %7277 = vmatpush.bf16.msra.mxu0 %v6685
  %7278 = vmatpush.bf16.msra.mxu0 %v6681
  %7279 = vmatpush.bf16.msra.mxu0 %v6677
  %7280 = vmatpush.bf16.msra.mxu0 %v6673
  %7281 = vmatpush.bf16.msra.mxu0 %v6669
  %7282 = vmatpush.bf16.msra.mxu0 %v6665
  %7283 = vmatpush.bf16.msra.mxu0 %v6661
  %7284 = vmatmul.bf16.gmra.mxu0 %v5618
  %v7285 = vpop.f32.mrf.mxu0
  %v7286 = vadd.f32 %v5885, %v7285
  %v7287 = vpop.f32.mrf.mxu0
  %7288 = vdwg.mxu0
  %7289 = vmatpush.bf16.msra.mxu0 %v6721
  %7290 = vmatpush.bf16.msra.mxu0 %v6717
  %7291 = vmatpush.bf16.msra.mxu0 %v6713
  %7292 = vmatpush.bf16.msra.mxu0 %v6709
  %7293 = vmatpush.bf16.msra.mxu0 %v6705
  %7294 = vmatpush.bf16.msra.mxu0 %v6701
  %7295 = vmatpush.bf16.msra.mxu0 %v6697
  %7296 = vmatpush.bf16.msra.mxu0 %v6693
  %7297 = vmatmul.bf16.gmra.mxu0 %v5619
  %v7298 = vpop.f32.mrf.mxu0
  %v7299 = vadd.f32 %v7286, %v7298
  %v7300 = vpop.f32.mrf.mxu0
  %7301 = vdwg.mxu0
  %7302 = vmatpush.bf16.msra.mxu0 %v6753
  %7303 = vmatpush.bf16.msra.mxu0 %v6749
  %7304 = vmatpush.bf16.msra.mxu0 %v6745
  %7305 = vmatpush.bf16.msra.mxu0 %v6741
  %7306 = vmatpush.bf16.msra.mxu0 %v6737
  %7307 = vmatpush.bf16.msra.mxu0 %v6733
  %7308 = vmatpush.bf16.msra.mxu0 %v6729
  %7309 = vmatpush.bf16.msra.mxu0 %v6725
  %7310 = vmatmul.bf16.gmra.mxu0 %v5620
  %v7311 = vpop.f32.mrf.mxu0
  %v7312 = vadd.f32 %v7299, %v7311
  %v7313 = vpop.f32.mrf.mxu0
  %7314 = vdwg.mxu0
  %7315 = vmatpush.bf16.msra.mxu0 %v6785
  %7316 = vmatpush.bf16.msra.mxu0 %v6781
  %7317 = vmatpush.bf16.msra.mxu0 %v6777
  %7318 = vmatpush.bf16.msra.mxu0 %v6773
  %7319 = vmatpush.bf16.msra.mxu0 %v6769
  %7320 = vmatpush.bf16.msra.mxu0 %v6765
  %7321 = vmatpush.bf16.msra.mxu0 %v6761
  %7322 = vmatpush.bf16.msra.mxu0 %v6757
  %7323 = vmatmul.bf16.gmra.mxu0 %v5621
  %v7324 = vpop.f32.mrf.mxu0
  %v7325 = vadd.f32 %v7312, %v7324
  %v7326 = vpop.f32.mrf.mxu0
  %7327 = vdwg.mxu0
  %7328 = vmatpush.bf16.msra.mxu0 %v6817
  %7329 = vmatpush.bf16.msra.mxu0 %v6813
  %7330 = vmatpush.bf16.msra.mxu0 %v6809
  %7331 = vmatpush.bf16.msra.mxu0 %v6805
  %7332 = vmatpush.bf16.msra.mxu0 %v6801
  %7333 = vmatpush.bf16.msra.mxu0 %v6797
  %7334 = vmatpush.bf16.msra.mxu0 %v6793
  %7335 = vmatpush.bf16.msra.mxu0 %v6789
  %7336 = vmatmul.bf16.gmra.mxu0 %v5622
  %v7337 = vpop.f32.mrf.mxu0
  %v7338 = vadd.f32 %v7325, %v7337
  %v7339 = vpop.f32.mrf.mxu0
  %7340 = vdwg.mxu0
  %7341 = vmatpush.bf16.msra.mxu0 %v6849
  %7342 = vmatpush.bf16.msra.mxu0 %v6845
  %7343 = vmatpush.bf16.msra.mxu0 %v6841
  %7344 = vmatpush.bf16.msra.mxu0 %v6837
  %7345 = vmatpush.bf16.msra.mxu0 %v6833
  %7346 = vmatpush.bf16.msra.mxu0 %v6829
  %7347 = vmatpush.bf16.msra.mxu0 %v6825
  %7348 = vmatpush.bf16.msra.mxu0 %v6821
  %7349 = vmatmul.bf16.gmra.mxu0 %v5623
  %v7350 = vpop.f32.mrf.mxu0
  %v7351 = vadd.f32 %v7338, %v7350
  %v7352 = vpop.f32.mrf.mxu0
  %7353 = vdwg.mxu0
  %7354 = vmatpush.bf16.msra.mxu0 %v6881
  %7355 = vmatpush.bf16.msra.mxu0 %v6877
  %7356 = vmatpush.bf16.msra.mxu0 %v6873
  %7357 = vmatpush.bf16.msra.mxu0 %v6869
  %7358 = vmatpush.bf16.msra.mxu0 %v6865
  %7359 = vmatpush.bf16.msra.mxu0 %v6861
  %7360 = vmatpush.bf16.msra.mxu0 %v6857
  %7361 = vmatpush.bf16.msra.mxu0 %v6853
  %7362 = vmatmul.bf16.gmra.mxu0 %v5624
  %v7363 = vpop.f32.mrf.mxu0
  %v7364 = vadd.f32 %v7351, %v7363
  %v7365 = vpop.f32.mrf.mxu0
  %7366 = vdwg.mxu0
  %7367 = vmatpush.bf16.msra.mxu0 %v6913
  %7368 = vmatpush.bf16.msra.mxu0 %v6909
  %7369 = vmatpush.bf16.msra.mxu0 %v6905
  %7370 = vmatpush.bf16.msra.mxu0 %v6901
  %7371 = vmatpush.bf16.msra.mxu0 %v6897
  %7372 = vmatpush.bf16.msra.mxu0 %v6893
  %7373 = vmatpush.bf16.msra.mxu0 %v6889
  %7374 = vmatpush.bf16.msra.mxu0 %v6885
  %7375 = vmatmul.bf16.gmra.mxu0 %v5625
  %v7376 = vpop.f32.mrf.mxu0
  %v7377 = vadd.f32 %v7364, %v7376
  %v7378 = vpop.f32.mrf.mxu0
  %7379 = vdwg.mxu0
  %7380 = vmatpush.bf16.msra.mxu0 %v6690
  %7381 = vmatpush.bf16.msra.mxu0 %v6686
  %7382 = vmatpush.bf16.msra.mxu0 %v6682
  %7383 = vmatpush.bf16.msra.mxu0 %v6678
  %7384 = vmatpush.bf16.msra.mxu0 %v6674
  %7385 = vmatpush.bf16.msra.mxu0 %v6670
  %7386 = vmatpush.bf16.msra.mxu0 %v6666
  %7387 = vmatpush.bf16.msra.mxu0 %v6662
  %7388 = vmatmul.bf16.gmra.mxu0 %v5618
  %v7389 = vpop.f32.mrf.mxu0
  %v7390 = vadd.f32 %v5886, %v7389
  %v7391 = vpop.f32.mrf.mxu0
  %7392 = vdwg.mxu0
  %7393 = vmatpush.bf16.msra.mxu0 %v6722
  %7394 = vmatpush.bf16.msra.mxu0 %v6718
  %7395 = vmatpush.bf16.msra.mxu0 %v6714
  %7396 = vmatpush.bf16.msra.mxu0 %v6710
  %7397 = vmatpush.bf16.msra.mxu0 %v6706
  %7398 = vmatpush.bf16.msra.mxu0 %v6702
  %7399 = vmatpush.bf16.msra.mxu0 %v6698
  %7400 = vmatpush.bf16.msra.mxu0 %v6694
  %7401 = vmatmul.bf16.gmra.mxu0 %v5619
  %v7402 = vpop.f32.mrf.mxu0
  %v7403 = vadd.f32 %v7390, %v7402
  %v7404 = vpop.f32.mrf.mxu0
  %7405 = vdwg.mxu0
  %7406 = vmatpush.bf16.msra.mxu0 %v6754
  %7407 = vmatpush.bf16.msra.mxu0 %v6750
  %7408 = vmatpush.bf16.msra.mxu0 %v6746
  %7409 = vmatpush.bf16.msra.mxu0 %v6742
  %7410 = vmatpush.bf16.msra.mxu0 %v6738
  %7411 = vmatpush.bf16.msra.mxu0 %v6734
  %7412 = vmatpush.bf16.msra.mxu0 %v6730
  %7413 = vmatpush.bf16.msra.mxu0 %v6726
  %7414 = vmatmul.bf16.gmra.mxu0 %v5620
  %v7415 = vpop.f32.mrf.mxu0
  %v7416 = vadd.f32 %v7403, %v7415
  %v7417 = vpop.f32.mrf.mxu0
  %7418 = vdwg.mxu0
  %7419 = vmatpush.bf16.msra.mxu0 %v6786
  %7420 = vmatpush.bf16.msra.mxu0 %v6782
  %7421 = vmatpush.bf16.msra.mxu0 %v6778
  %7422 = vmatpush.bf16.msra.mxu0 %v6774
  %7423 = vmatpush.bf16.msra.mxu0 %v6770
  %7424 = vmatpush.bf16.msra.mxu0 %v6766
  %7425 = vmatpush.bf16.msra.mxu0 %v6762
  %7426 = vmatpush.bf16.msra.mxu0 %v6758
  %7427 = vmatmul.bf16.gmra.mxu0 %v5621
  %v7428 = vpop.f32.mrf.mxu0
  %v7429 = vadd.f32 %v7416, %v7428
  %v7430 = vpop.f32.mrf.mxu0
  %7431 = vdwg.mxu0
  %7432 = vmatpush.bf16.msra.mxu0 %v6818
  %7433 = vmatpush.bf16.msra.mxu0 %v6814
  %7434 = vmatpush.bf16.msra.mxu0 %v6810
  %7435 = vmatpush.bf16.msra.mxu0 %v6806
  %7436 = vmatpush.bf16.msra.mxu0 %v6802
  %7437 = vmatpush.bf16.msra.mxu0 %v6798
  %7438 = vmatpush.bf16.msra.mxu0 %v6794
  %7439 = vmatpush.bf16.msra.mxu0 %v6790
  %7440 = vmatmul.bf16.gmra.mxu0 %v5622
  %v7441 = vpop.f32.mrf.mxu0
  %v7442 = vadd.f32 %v7429, %v7441
  %v7443 = vpop.f32.mrf.mxu0
  %7444 = vdwg.mxu0
  %7445 = vmatpush.bf16.msra.mxu0 %v6850
  %7446 = vmatpush.bf16.msra.mxu0 %v6846
  %7447 = vmatpush.bf16.msra.mxu0 %v6842
  %7448 = vmatpush.bf16.msra.mxu0 %v6838
  %7449 = vmatpush.bf16.msra.mxu0 %v6834
  %7450 = vmatpush.bf16.msra.mxu0 %v6830
  %7451 = vmatpush.bf16.msra.mxu0 %v6826
  %7452 = vmatpush.bf16.msra.mxu0 %v6822
  %7453 = vmatmul.bf16.gmra.mxu0 %v5623
  %v7454 = vpop.f32.mrf.mxu0
  %v7455 = vadd.f32 %v7442, %v7454
  %v7456 = vpop.f32.mrf.mxu0
  %7457 = vdwg.mxu0
  %7458 = vmatpush.bf16.msra.mxu0 %v6882
  %7459 = vmatpush.bf16.msra.mxu0 %v6878
  %7460 = vmatpush.bf16.msra.mxu0 %v6874
  %7461 = vmatpush.bf16.msra.mxu0 %v6870
  %7462 = vmatpush.bf16.msra.mxu0 %v6866
  %7463 = vmatpush.bf16.msra.mxu0 %v6862
  %7464 = vmatpush.bf16.msra.mxu0 %v6858
  %7465 = vmatpush.bf16.msra.mxu0 %v6854
  %7466 = vmatmul.bf16.gmra.mxu0 %v5624
  %v7467 = vpop.f32.mrf.mxu0
  %v7468 = vadd.f32 %v7455, %v7467
  %v7469 = vpop.f32.mrf.mxu0
  %7470 = vdwg.mxu0
  %7471 = vmatpush.bf16.msra.mxu0 %v6914
  %7472 = vmatpush.bf16.msra.mxu0 %v6910
  %7473 = vmatpush.bf16.msra.mxu0 %v6906
  %7474 = vmatpush.bf16.msra.mxu0 %v6902
  %7475 = vmatpush.bf16.msra.mxu0 %v6898
  %7476 = vmatpush.bf16.msra.mxu0 %v6894
  %7477 = vmatpush.bf16.msra.mxu0 %v6890
  %7478 = vmatpush.bf16.msra.mxu0 %v6886
  %7479 = vmatmul.bf16.gmra.mxu0 %v5625
  %v7480 = vpop.f32.mrf.mxu0
  %v7481 = vadd.f32 %v7468, %v7480
  %v7482 = vpop.f32.mrf.mxu0
  %7483 = vdwg.mxu0
  %7484 = vmatpush.bf16.msra.mxu0 %v6691
  %7485 = vmatpush.bf16.msra.mxu0 %v6687
  %7486 = vmatpush.bf16.msra.mxu0 %v6683
  %7487 = vmatpush.bf16.msra.mxu0 %v6679
  %7488 = vmatpush.bf16.msra.mxu0 %v6675
  %7489 = vmatpush.bf16.msra.mxu0 %v6671
  %7490 = vmatpush.bf16.msra.mxu0 %v6667
  %7491 = vmatpush.bf16.msra.mxu0 %v6663
  %7492 = vmatmul.bf16.gmra.mxu0 %v5618
  %v7493 = vpop.f32.mrf.mxu0
  %v7494 = vadd.f32 %v5887, %v7493
  %v7495 = vpop.f32.mrf.mxu0
  %7496 = vdwg.mxu0
  %7497 = vmatpush.bf16.msra.mxu0 %v6723
  %7498 = vmatpush.bf16.msra.mxu0 %v6719
  %7499 = vmatpush.bf16.msra.mxu0 %v6715
  %7500 = vmatpush.bf16.msra.mxu0 %v6711
  %7501 = vmatpush.bf16.msra.mxu0 %v6707
  %7502 = vmatpush.bf16.msra.mxu0 %v6703
  %7503 = vmatpush.bf16.msra.mxu0 %v6699
  %7504 = vmatpush.bf16.msra.mxu0 %v6695
  %7505 = vmatmul.bf16.gmra.mxu0 %v5619
  %v7506 = vpop.f32.mrf.mxu0
  %v7507 = vadd.f32 %v7494, %v7506
  %v7508 = vpop.f32.mrf.mxu0
  %7509 = vdwg.mxu0
  %7510 = vmatpush.bf16.msra.mxu0 %v6755
  %7511 = vmatpush.bf16.msra.mxu0 %v6751
  %7512 = vmatpush.bf16.msra.mxu0 %v6747
  %7513 = vmatpush.bf16.msra.mxu0 %v6743
  %7514 = vmatpush.bf16.msra.mxu0 %v6739
  %7515 = vmatpush.bf16.msra.mxu0 %v6735
  %7516 = vmatpush.bf16.msra.mxu0 %v6731
  %7517 = vmatpush.bf16.msra.mxu0 %v6727
  %7518 = vmatmul.bf16.gmra.mxu0 %v5620
  %v7519 = vpop.f32.mrf.mxu0
  %v7520 = vadd.f32 %v7507, %v7519
  %v7521 = vpop.f32.mrf.mxu0
  %7522 = vdwg.mxu0
  %7523 = vmatpush.bf16.msra.mxu0 %v6787
  %7524 = vmatpush.bf16.msra.mxu0 %v6783
  %7525 = vmatpush.bf16.msra.mxu0 %v6779
  %7526 = vmatpush.bf16.msra.mxu0 %v6775
  %7527 = vmatpush.bf16.msra.mxu0 %v6771
  %7528 = vmatpush.bf16.msra.mxu0 %v6767
  %7529 = vmatpush.bf16.msra.mxu0 %v6763
  %7530 = vmatpush.bf16.msra.mxu0 %v6759
  %7531 = vmatmul.bf16.gmra.mxu0 %v5621
  %v7532 = vpop.f32.mrf.mxu0
  %v7533 = vadd.f32 %v7520, %v7532
  %v7534 = vpop.f32.mrf.mxu0
  %7535 = vdwg.mxu0
  %7536 = vmatpush.bf16.msra.mxu0 %v6819
  %7537 = vmatpush.bf16.msra.mxu0 %v6815
  %7538 = vmatpush.bf16.msra.mxu0 %v6811
  %7539 = vmatpush.bf16.msra.mxu0 %v6807
  %7540 = vmatpush.bf16.msra.mxu0 %v6803
  %7541 = vmatpush.bf16.msra.mxu0 %v6799
  %7542 = vmatpush.bf16.msra.mxu0 %v6795
  %7543 = vmatpush.bf16.msra.mxu0 %v6791
  %7544 = vmatmul.bf16.gmra.mxu0 %v5622
  %v7545 = vpop.f32.mrf.mxu0
  %v7546 = vadd.f32 %v7533, %v7545
  %v7547 = vpop.f32.mrf.mxu0
  %7548 = vdwg.mxu0
  %7549 = vmatpush.bf16.msra.mxu0 %v6851
  %7550 = vmatpush.bf16.msra.mxu0 %v6847
  %7551 = vmatpush.bf16.msra.mxu0 %v6843
  %7552 = vmatpush.bf16.msra.mxu0 %v6839
  %7553 = vmatpush.bf16.msra.mxu0 %v6835
  %7554 = vmatpush.bf16.msra.mxu0 %v6831
  %7555 = vmatpush.bf16.msra.mxu0 %v6827
  %7556 = vmatpush.bf16.msra.mxu0 %v6823
  %7557 = vmatmul.bf16.gmra.mxu0 %v5623
  %v7558 = vpop.f32.mrf.mxu0
  %v7559 = vadd.f32 %v7546, %v7558
  %v7560 = vpop.f32.mrf.mxu0
  %7561 = vdwg.mxu0
  %7562 = vmatpush.bf16.msra.mxu0 %v6883
  %7563 = vmatpush.bf16.msra.mxu0 %v6879
  %7564 = vmatpush.bf16.msra.mxu0 %v6875
  %7565 = vmatpush.bf16.msra.mxu0 %v6871
  %7566 = vmatpush.bf16.msra.mxu0 %v6867
  %7567 = vmatpush.bf16.msra.mxu0 %v6863
  %7568 = vmatpush.bf16.msra.mxu0 %v6859
  %7569 = vmatpush.bf16.msra.mxu0 %v6855
  %7570 = vmatmul.bf16.gmra.mxu0 %v5624
  %v7571 = vpop.f32.mrf.mxu0
  %v7572 = vadd.f32 %v7559, %v7571
  %v7573 = vpop.f32.mrf.mxu0
  %7574 = vdwg.mxu0
  %7575 = vmatpush.bf16.msra.mxu0 %v6915
  %7576 = vmatpush.bf16.msra.mxu0 %v6911
  %7577 = vmatpush.bf16.msra.mxu0 %v6907
  %7578 = vmatpush.bf16.msra.mxu0 %v6903
  %7579 = vmatpush.bf16.msra.mxu0 %v6899
  %7580 = vmatpush.bf16.msra.mxu0 %v6895
  %7581 = vmatpush.bf16.msra.mxu0 %v6891
  %7582 = vmatpush.bf16.msra.mxu0 %v6887
  %7583 = vmatmul.bf16.gmra.mxu0 %v5625
  %v7584 = vpop.f32.mrf.mxu0
  %v7585 = vadd.f32 %v7572, %v7584
  %v7586 = vpop.f32.mrf.mxu0
  %7587 = vdwg.mxu0
  %v7588 = vmul.f32 %v7273, 0.5
  %v7589 = vmul.f32 %v7377, 0.5
  %v7590 = vmul.f32 %v7481, 0.5
  %v7591 = vmul.f32 %v7585, 0.5
  %v7592 = vmul.f32 %v7273, 0.70710677
  %v7593 = vmul.f32 %v7377, 0.70710677
  %v7594 = vmul.f32 %v7481, 0.70710677
  %v7595 = vmul.f32 %v7585, 0.70710677
  %v7596 = vmul.f32 %v7592, %v7592
  %v7597 = vmin.f32 16.0, %v7596
  %v7598 = vmul.f32 %v7597, 2.1237322e-06
  %v7599 = vadd.f32 %v7598, 0.00028619796
  %v7600 = vmul.f32 %v7597, %v7599
  %v7601 = vadd.f32 %v7600, 0.0036580483
  %v7602 = vmul.f32 %v7597, %v7601
  %v7603 = vadd.f32 %v7602, 0.05243302
  %v7604 = vmul.f32 %v7597, %v7603
  %v7605 = vadd.f32 %v7604, 0.18741608
  %v7606 = vmul.f32 %v7597, %v7605
  %v7607 = vadd.f32 %v7606, 1.1283791
  %v7608 = vmul.f32 %v7592, %v7607
  %v7609 = vmul.f32 %v7597, 3.8918573e-05
  %v7610 = vadd.f32 %v7609, 0.001143296
  %v7611 = vmul.f32 %v7597, %v7610
  %v7612 = vadd.f32 %v7611, 0.014752088
  %v7613 = vmul.f32 %v7597, %v7612
  %v7614 = vadd.f32 %v7613, 0.112945676
  %v7615 = vmul.f32 %v7597, %v7614
  %v7616 = vadd.f32 %v7615, 0.4994258
  %v7617 = vmul.f32 %v7597, %v7616
  %v7618 = vadd.f32 %v7617, 1.0
  %v7619 = vrcp.pop %v7618
  %v7620 = vmul.f32 %v7618, %v7619
  %v7621 = vsub.f32 1.0, %v7620
  %v7622 = vmul.f32 %v7619, %v7621
  %v7623 = vadd.f32 %v7619, %v7622
  %vm7624 = vweird.f32 %v7618
  %vm7625 = vweird.f32 %v7619
  %vm7626 = vmor %vm7624, %vm7625
  %v7627 = vsel %vm7626, %v7619, %v7623
  %v7628 = vand.u32 2147483647, %v7618
  %vm7629 = vcmp.eq.f32.partialorder %v7628, 8.507059e+37
  %v7630 = vand.u32 %v7618, 2147483648
  %v7631 = vor.u32 1.1754944e-38, %v7630
  %v7632 = vsel %vm7629, %v7631, %v7627
  %v7633 = vmul.f32 %v7608, %v7632
  %v7634 = vmin.f32 %v7633, 1.0
  %v7635 = vmax.f32 %v7634, -1.0
  %v7636 = vmul.f32 %v7593, %v7593
  %v7637 = vmin.f32 16.0, %v7636
  %v7638 = vmul.f32 %v7637, 2.1237322e-06
  %v7639 = vadd.f32 %v7638, 0.00028619796
  %v7640 = vmul.f32 %v7637, %v7639
  %v7641 = vadd.f32 %v7640, 0.0036580483
  %v7642 = vmul.f32 %v7637, %v7641
  %v7643 = vadd.f32 %v7642, 0.05243302
  %v7644 = vmul.f32 %v7637, %v7643
  %v7645 = vadd.f32 %v7644, 0.18741608
  %v7646 = vmul.f32 %v7637, %v7645
  %v7647 = vadd.f32 %v7646, 1.1283791
  %v7648 = vmul.f32 %v7593, %v7647
  %v7649 = vmul.f32 %v7637, 3.8918573e-05
  %v7650 = vadd.f32 %v7649, 0.001143296
  %v7651 = vmul.f32 %v7637, %v7650
  %v7652 = vadd.f32 %v7651, 0.014752088
  %v7653 = vmul.f32 %v7637, %v7652
  %v7654 = vadd.f32 %v7653, 0.112945676
  %v7655 = vmul.f32 %v7637, %v7654
  %v7656 = vadd.f32 %v7655, 0.4994258
  %v7657 = vmul.f32 %v7637, %v7656
  %v7658 = vadd.f32 %v7657, 1.0
  %v7659 = vrcp.pop %v7658
  %v7660 = vmul.f32 %v7658, %v7659
  %v7661 = vsub.f32 1.0, %v7660
  %v7662 = vmul.f32 %v7659, %v7661
  %v7663 = vadd.f32 %v7659, %v7662
  %vm7664 = vweird.f32 %v7658
  %vm7665 = vweird.f32 %v7659
  %vm7666 = vmor %vm7664, %vm7665
  %v7667 = vsel %vm7666, %v7659, %v7663
  %v7668 = vand.u32 2147483647, %v7658
  %vm7669 = vcmp.eq.f32.partialorder %v7668, 8.507059e+37
  %v7670 = vand.u32 %v7658, 2147483648
  %v7671 = vor.u32 1.1754944e-38, %v7670
  %v7672 = vsel %vm7669, %v7671, %v7667
  %v7673 = vmul.f32 %v7648, %v7672
  %v7674 = vmin.f32 %v7673, 1.0
  %v7675 = vmax.f32 %v7674, -1.0
  %v7676 = vmul.f32 %v7594, %v7594
  %v7677 = vmin.f32 16.0, %v7676
  %v7678 = vmul.f32 %v7677, 2.1237322e-06
  %v7679 = vadd.f32 %v7678, 0.00028619796
  %v7680 = vmul.f32 %v7677, %v7679
  %v7681 = vadd.f32 %v7680, 0.0036580483
  %v7682 = vmul.f32 %v7677, %v7681
  %v7683 = vadd.f32 %v7682, 0.05243302
  %v7684 = vmul.f32 %v7677, %v7683
  %v7685 = vadd.f32 %v7684, 0.18741608
  %v7686 = vmul.f32 %v7677, %v7685
  %v7687 = vadd.f32 %v7686, 1.1283791
  %v7688 = vmul.f32 %v7594, %v7687
  %v7689 = vmul.f32 %v7677, 3.8918573e-05
  %v7690 = vadd.f32 %v7689, 0.001143296
  %v7691 = vmul.f32 %v7677, %v7690
  %v7692 = vadd.f32 %v7691, 0.014752088
  %v7693 = vmul.f32 %v7677, %v7692
  %v7694 = vadd.f32 %v7693, 0.112945676
  %v7695 = vmul.f32 %v7677, %v7694
  %v7696 = vadd.f32 %v7695, 0.4994258
  %v7697 = vmul.f32 %v7677, %v7696
  %v7698 = vadd.f32 %v7697, 1.0
  %v7699 = vrcp.pop %v7698
  %v7700 = vmul.f32 %v7698, %v7699
  %v7701 = vsub.f32 1.0, %v7700
  %v7702 = vmul.f32 %v7699, %v7701
  %v7703 = vadd.f32 %v7699, %v7702
  %vm7704 = vweird.f32 %v7698
  %vm7705 = vweird.f32 %v7699
  %vm7706 = vmor %vm7704, %vm7705
  %v7707 = vsel %vm7706, %v7699, %v7703
  %v7708 = vand.u32 2147483647, %v7698
  %vm7709 = vcmp.eq.f32.partialorder %v7708, 8.507059e+37
  %v7710 = vand.u32 %v7698, 2147483648
  %v7711 = vor.u32 1.1754944e-38, %v7710
  %v7712 = vsel %vm7709, %v7711, %v7707
  %v7713 = vmul.f32 %v7688, %v7712
  %v7714 = vmin.f32 %v7713, 1.0
  %v7715 = vmax.f32 %v7714, -1.0
  %v7716 = vmul.f32 %v7595, %v7595
  %v7717 = vmin.f32 16.0, %v7716
  %v7718 = vmul.f32 %v7717, 2.1237322e-06
  %v7719 = vadd.f32 %v7718, 0.00028619796
  %v7720 = vmul.f32 %v7717, %v7719
  %v7721 = vadd.f32 %v7720, 0.0036580483
  %v7722 = vmul.f32 %v7717, %v7721
  %v7723 = vadd.f32 %v7722, 0.05243302
  %v7724 = vmul.f32 %v7717, %v7723
  %v7725 = vadd.f32 %v7724, 0.18741608
  %v7726 = vmul.f32 %v7717, %v7725
  %v7727 = vadd.f32 %v7726, 1.1283791
  %v7728 = vmul.f32 %v7595, %v7727
  %v7729 = vmul.f32 %v7717, 3.8918573e-05
  %v7730 = vadd.f32 %v7729, 0.001143296
  %v7731 = vmul.f32 %v7717, %v7730
  %v7732 = vadd.f32 %v7731, 0.014752088
  %v7733 = vmul.f32 %v7717, %v7732
  %v7734 = vadd.f32 %v7733, 0.112945676
  %v7735 = vmul.f32 %v7717, %v7734
  %v7736 = vadd.f32 %v7735, 0.4994258
  %v7737 = vmul.f32 %v7717, %v7736
  %v7738 = vadd.f32 %v7737, 1.0
  %v7739 = vrcp.pop %v7738
  %v7740 = vmul.f32 %v7738, %v7739
  %v7741 = vsub.f32 1.0, %v7740
  %v7742 = vmul.f32 %v7739, %v7741
  %v7743 = vadd.f32 %v7739, %v7742
  %vm7744 = vweird.f32 %v7738
  %vm7745 = vweird.f32 %v7739
  %vm7746 = vmor %vm7744, %vm7745
  %v7747 = vsel %vm7746, %v7739, %v7743
  %v7748 = vand.u32 2147483647, %v7738
  %vm7749 = vcmp.eq.f32.partialorder %v7748, 8.507059e+37
  %v7750 = vand.u32 %v7738, 2147483648
  %v7751 = vor.u32 1.1754944e-38, %v7750
  %v7752 = vsel %vm7749, %v7751, %v7747
  %v7753 = vmul.f32 %v7728, %v7752
  %v7754 = vmin.f32 %v7753, 1.0
  %v7755 = vmax.f32 %v7754, -1.0
  %v7756 = vadd.f32 %v7635, 1.0
  %v7757 = vadd.f32 %v7675, 1.0
  %v7758 = vadd.f32 %v7715, 1.0
  %v7759 = vadd.f32 %v7755, 1.0
  %v7760 = vmul.f32 %v7588, %v7756
  %v7761 = vmul.f32 %v7589, %v7757
  %v7762 = vmul.f32 %v7590, %v7758
  %v7763 = vmul.f32 %v7591, %v7759
  %v7764 = vpack.c.bf16 %v7760, %v7760
  %v7765 = vpack.c.bf16 %v7761, %v7761
  %v7766 = vpack.c.bf16 %v7762, %v7762
  %v7767 = vpack.c.bf16 %v7763, %v7763
  %v7768 = vld [vmem:[#allocation6] sm:$0xff]
  %v7769 = vld [vmem:[#allocation6 + $0x8] sm:$0xff]
  %v7770 = vld [vmem:[#allocation6 + $0x10] sm:$0xff]
  %v7771 = vld [vmem:[#allocation6 + $0x18] sm:$0xff]
  %v7772 = vld [vmem:[#allocation6 + $0x20] sm:$0xff]
  %v7773 = vld [vmem:[#allocation6 + $0x28] sm:$0xff]
  %v7774 = vld [vmem:[#allocation6 + $0x30] sm:$0xff]
  %v7775 = vld [vmem:[#allocation6 + $0x38] sm:$0xff]
  %v7776 = vld [vmem:[#allocation6 + $0x40] sm:$0xff]
  %v7777 = vld [vmem:[#allocation6 + $0x48] sm:$0xff]
  %v7778 = vld [vmem:[#allocation6 + $0x50] sm:$0xff]
  %v7779 = vld [vmem:[#allocation6 + $0x58] sm:$0xff]
  %v7780 = vld [vmem:[#allocation6 + $0x60] sm:$0xff]
  %v7781 = vld [vmem:[#allocation6 + $0x68] sm:$0xff]
  %v7782 = vld [vmem:[#allocation6 + $0x70] sm:$0xff]
  %v7783 = vld [vmem:[#allocation6 + $0x78] sm:$0xff]
  %v7784 = vld [vmem:[#allocation6 + $0x80] sm:$0xff]
  %v7785 = vld [vmem:[#allocation6 + $0x88] sm:$0xff]
  %v7786 = vld [vmem:[#allocation6 + $0x90] sm:$0xff]
  %v7787 = vld [vmem:[#allocation6 + $0x98] sm:$0xff]
  %v7788 = vld [vmem:[#allocation6 + $0xa0] sm:$0xff]
  %v7789 = vld [vmem:[#allocation6 + $0xa8] sm:$0xff]
  %v7790 = vld [vmem:[#allocation6 + $0xb0] sm:$0xff]
  %v7791 = vld [vmem:[#allocation6 + $0xb8] sm:$0xff]
  %v7792 = vld [vmem:[#allocation6 + $0xc0] sm:$0xff]
  %v7793 = vld [vmem:[#allocation6 + $0xc8] sm:$0xff]
  %v7794 = vld [vmem:[#allocation6 + $0xd0] sm:$0xff]
  %v7795 = vld [vmem:[#allocation6 + $0xd8] sm:$0xff]
  %v7796 = vld [vmem:[#allocation6 + $0xe0] sm:$0xff]
  %v7797 = vld [vmem:[#allocation6 + $0xe8] sm:$0xff]
  %v7798 = vld [vmem:[#allocation6 + $0xf0] sm:$0xff]
  %v7799 = vld [vmem:[#allocation6 + $0xf8] sm:$0xff]
  %v7800 = vld [vmem:[#allocation6 + $0x100] sm:$0xff]
  %v7801 = vld [vmem:[#allocation6 + $0x108] sm:$0xff]
  %v7802 = vld [vmem:[#allocation6 + $0x110] sm:$0xff]
  %v7803 = vld [vmem:[#allocation6 + $0x118] sm:$0xff]
  %v7804 = vld [vmem:[#allocation6 + $0x120] sm:$0xff]
  %v7805 = vld [vmem:[#allocation6 + $0x128] sm:$0xff]
  %v7806 = vld [vmem:[#allocation6 + $0x130] sm:$0xff]
  %v7807 = vld [vmem:[#allocation6 + $0x138] sm:$0xff]
  %v7808 = vld [vmem:[#allocation6 + $0x140] sm:$0xff]
  %v7809 = vld [vmem:[#allocation6 + $0x148] sm:$0xff]
  %v7810 = vld [vmem:[#allocation6 + $0x150] sm:$0xff]
  %v7811 = vld [vmem:[#allocation6 + $0x158] sm:$0xff]
  %v7812 = vld [vmem:[#allocation6 + $0x160] sm:$0xff]
  %v7813 = vld [vmem:[#allocation6 + $0x168] sm:$0xff]
  %v7814 = vld [vmem:[#allocation6 + $0x170] sm:$0xff]
  %v7815 = vld [vmem:[#allocation6 + $0x178] sm:$0xff]
  %v7816 = vld [vmem:[#allocation6 + $0x180] sm:$0xff]
  %v7817 = vld [vmem:[#allocation6 + $0x188] sm:$0xff]
  %v7818 = vld [vmem:[#allocation6 + $0x190] sm:$0xff]
  %v7819 = vld [vmem:[#allocation6 + $0x198] sm:$0xff]
  %v7820 = vld [vmem:[#allocation6 + $0x1a0] sm:$0xff]
  %v7821 = vld [vmem:[#allocation6 + $0x1a8] sm:$0xff]
  %v7822 = vld [vmem:[#allocation6 + $0x1b0] sm:$0xff]
  %v7823 = vld [vmem:[#allocation6 + $0x1b8] sm:$0xff]
  %v7824 = vld [vmem:[#allocation6 + $0x1c0] sm:$0xff]
  %v7825 = vld [vmem:[#allocation6 + $0x1c8] sm:$0xff]
  %v7826 = vld [vmem:[#allocation6 + $0x1d0] sm:$0xff]
  %v7827 = vld [vmem:[#allocation6 + $0x1d8] sm:$0xff]
  %v7828 = vld [vmem:[#allocation6 + $0x1e0] sm:$0xff]
  %v7829 = vld [vmem:[#allocation6 + $0x1e8] sm:$0xff]
  %v7830 = vld [vmem:[#allocation6 + $0x1f0] sm:$0xff]
  %v7831 = vld [vmem:[#allocation6 + $0x1f8] sm:$0xff]
  %v7832 = vld [vmem:[%s57] sm:$0x3]
  %v7834 = vperm.slane %v7832, 0
  %v7835 = vperm.slane %v7832, 1
  %v7902 = vunpack.c.l.b16 %v7768
  %v7903 = vunpack.c.h.b16 %v7768
  %v7904 = vunpack.c.l.b16 %v7769
  %v7905 = vunpack.c.h.b16 %v7769
  %v7906 = vunpack.c.l.b16 %v7770
  %v7907 = vunpack.c.h.b16 %v7770
  %v7908 = vunpack.c.l.b16 %v7771
  %v7909 = vunpack.c.h.b16 %v7771
  %v7910 = vunpack.c.l.b16 %v7772
  %v7911 = vunpack.c.h.b16 %v7772
  %v7912 = vunpack.c.l.b16 %v7773
  %v7913 = vunpack.c.h.b16 %v7773
  %v7914 = vunpack.c.l.b16 %v7774
  %v7915 = vunpack.c.h.b16 %v7774
  %v7916 = vunpack.c.l.b16 %v7775
  %v7917 = vunpack.c.h.b16 %v7775
  %v7918 = vunpack.c.l.b16 %v7776
  %v7919 = vunpack.c.h.b16 %v7776
  %v7920 = vunpack.c.l.b16 %v7777
  %v7921 = vunpack.c.h.b16 %v7777
  %v7922 = vunpack.c.l.b16 %v7778
  %v7923 = vunpack.c.h.b16 %v7778
  %v7924 = vunpack.c.l.b16 %v7779
  %v7925 = vunpack.c.h.b16 %v7779
  %v7926 = vunpack.c.l.b16 %v7780
  %v7927 = vunpack.c.h.b16 %v7780
  %v7928 = vunpack.c.l.b16 %v7781
  %v7929 = vunpack.c.h.b16 %v7781
  %v7930 = vunpack.c.l.b16 %v7782
  %v7931 = vunpack.c.h.b16 %v7782
  %v7932 = vunpack.c.l.b16 %v7783
  %v7933 = vunpack.c.h.b16 %v7783
  %v7934 = vunpack.c.l.b16 %v7784
  %v7935 = vunpack.c.h.b16 %v7784
  %v7936 = vunpack.c.l.b16 %v7785
  %v7937 = vunpack.c.h.b16 %v7785
  %v7938 = vunpack.c.l.b16 %v7786
  %v7939 = vunpack.c.h.b16 %v7786
  %v7940 = vunpack.c.l.b16 %v7787
  %v7941 = vunpack.c.h.b16 %v7787
  %v7942 = vunpack.c.l.b16 %v7788
  %v7943 = vunpack.c.h.b16 %v7788
  %v7944 = vunpack.c.l.b16 %v7789
  %v7945 = vunpack.c.h.b16 %v7789
  %v7946 = vunpack.c.l.b16 %v7790
  %v7947 = vunpack.c.h.b16 %v7790
  %v7948 = vunpack.c.l.b16 %v7791
  %v7949 = vunpack.c.h.b16 %v7791
  %v7950 = vunpack.c.l.b16 %v7792
  %v7951 = vunpack.c.h.b16 %v7792
  %v7952 = vunpack.c.l.b16 %v7793
  %v7953 = vunpack.c.h.b16 %v7793
  %v7954 = vunpack.c.l.b16 %v7794
  %v7955 = vunpack.c.h.b16 %v7794
  %v7956 = vunpack.c.l.b16 %v7795
  %v7957 = vunpack.c.h.b16 %v7795
  %v7958 = vunpack.c.l.b16 %v7796
  %v7959 = vunpack.c.h.b16 %v7796
  %v7960 = vunpack.c.l.b16 %v7797
  %v7961 = vunpack.c.h.b16 %v7797
  %v7962 = vunpack.c.l.b16 %v7798
  %v7963 = vunpack.c.h.b16 %v7798
  %v7964 = vunpack.c.l.b16 %v7799
  %v7965 = vunpack.c.h.b16 %v7799
  %v7966 = vunpack.c.l.b16 %v7800
  %v7967 = vunpack.c.h.b16 %v7800
  %v7968 = vunpack.c.l.b16 %v7801
  %v7969 = vunpack.c.h.b16 %v7801
  %v7970 = vunpack.c.l.b16 %v7802
  %v7971 = vunpack.c.h.b16 %v7802
  %v7972 = vunpack.c.l.b16 %v7803
  %v7973 = vunpack.c.h.b16 %v7803
  %v7974 = vunpack.c.l.b16 %v7804
  %v7975 = vunpack.c.h.b16 %v7804
  %v7976 = vunpack.c.l.b16 %v7805
  %v7977 = vunpack.c.h.b16 %v7805
  %v7978 = vunpack.c.l.b16 %v7806
  %v7979 = vunpack.c.h.b16 %v7806
  %v7980 = vunpack.c.l.b16 %v7807
  %v7981 = vunpack.c.h.b16 %v7807
  %v7982 = vunpack.c.l.b16 %v7808
  %v7983 = vunpack.c.h.b16 %v7808
  %v7984 = vunpack.c.l.b16 %v7809
  %v7985 = vunpack.c.h.b16 %v7809
  %v7986 = vunpack.c.l.b16 %v7810
  %v7987 = vunpack.c.h.b16 %v7810
  %v7988 = vunpack.c.l.b16 %v7811
  %v7989 = vunpack.c.h.b16 %v7811
  %v7990 = vunpack.c.l.b16 %v7812
  %v7991 = vunpack.c.h.b16 %v7812
  %v7992 = vunpack.c.l.b16 %v7813
  %v7993 = vunpack.c.h.b16 %v7813
  %v7994 = vunpack.c.l.b16 %v7814
  %v7995 = vunpack.c.h.b16 %v7814
  %v7996 = vunpack.c.l.b16 %v7815
  %v7997 = vunpack.c.h.b16 %v7815
  %v7998 = vunpack.c.l.b16 %v7816
  %v7999 = vunpack.c.h.b16 %v7816
  %v8000 = vunpack.c.l.b16 %v7817
  %v8001 = vunpack.c.h.b16 %v7817
  %v8002 = vunpack.c.l.b16 %v7818
  %v8003 = vunpack.c.h.b16 %v7818
  %v8004 = vunpack.c.l.b16 %v7819
  %v8005 = vunpack.c.h.b16 %v7819
  %v8006 = vunpack.c.l.b16 %v7820
  %v8007 = vunpack.c.h.b16 %v7820
  %v8008 = vunpack.c.l.b16 %v7821
  %v8009 = vunpack.c.h.b16 %v7821
  %v8010 = vunpack.c.l.b16 %v7822
  %v8011 = vunpack.c.h.b16 %v7822
  %v8012 = vunpack.c.l.b16 %v7823
  %v8013 = vunpack.c.h.b16 %v7823
  %v8014 = vunpack.c.l.b16 %v7824
  %v8015 = vunpack.c.h.b16 %v7824
  %v8016 = vunpack.c.l.b16 %v7825
  %v8017 = vunpack.c.h.b16 %v7825
  %v8018 = vunpack.c.l.b16 %v7826
  %v8019 = vunpack.c.h.b16 %v7826
  %v8020 = vunpack.c.l.b16 %v7827
  %v8021 = vunpack.c.h.b16 %v7827
  %v8022 = vunpack.c.l.b16 %v7828
  %v8023 = vunpack.c.h.b16 %v7828
  %v8024 = vunpack.c.l.b16 %v7829
  %v8025 = vunpack.c.h.b16 %v7829
  %v8026 = vunpack.c.l.b16 %v7830
  %v8027 = vunpack.c.h.b16 %v7830
  %v8028 = vunpack.c.l.b16 %v7831
  %v8029 = vunpack.c.h.b16 %v7831
  %v8030 = vpack.c.b16 %v7904, %v7902
  %v8031 = vpack.c.b16 %v7905, %v7903
  %v8032 = vpack.c.b16 %v7908, %v7906
  %v8033 = vpack.c.b16 %v7909, %v7907
  %v8034 = vpack.c.b16 %v7912, %v7910
  %v8035 = vpack.c.b16 %v7913, %v7911
  %v8036 = vpack.c.b16 %v7916, %v7914
  %v8037 = vpack.c.b16 %v7917, %v7915
  %v8038 = vpack.c.b16 %v7920, %v7918
  %v8039 = vpack.c.b16 %v7921, %v7919
  %v8040 = vpack.c.b16 %v7924, %v7922
  %v8041 = vpack.c.b16 %v7925, %v7923
  %v8042 = vpack.c.b16 %v7928, %v7926
  %v8043 = vpack.c.b16 %v7929, %v7927
  %v8044 = vpack.c.b16 %v7932, %v7930
  %v8045 = vpack.c.b16 %v7933, %v7931
  %v8046 = vpack.c.b16 %v7936, %v7934
  %v8047 = vpack.c.b16 %v7937, %v7935
  %v8048 = vpack.c.b16 %v7940, %v7938
  %v8049 = vpack.c.b16 %v7941, %v7939
  %v8050 = vpack.c.b16 %v7944, %v7942
  %v8051 = vpack.c.b16 %v7945, %v7943
  %v8052 = vpack.c.b16 %v7948, %v7946
  %v8053 = vpack.c.b16 %v7949, %v7947
  %v8054 = vpack.c.b16 %v7952, %v7950
  %v8055 = vpack.c.b16 %v7953, %v7951
  %v8056 = vpack.c.b16 %v7956, %v7954
  %v8057 = vpack.c.b16 %v7957, %v7955
  %v8058 = vpack.c.b16 %v7960, %v7958
  %v8059 = vpack.c.b16 %v7961, %v7959
  %v8060 = vpack.c.b16 %v7964, %v7962
  %v8061 = vpack.c.b16 %v7965, %v7963
  %v8062 = vpack.c.b16 %v7968, %v7966
  %v8063 = vpack.c.b16 %v7969, %v7967
  %v8064 = vpack.c.b16 %v7972, %v7970
  %v8065 = vpack.c.b16 %v7973, %v7971
  %v8066 = vpack.c.b16 %v7976, %v7974
  %v8067 = vpack.c.b16 %v7977, %v7975
  %v8068 = vpack.c.b16 %v7980, %v7978
  %v8069 = vpack.c.b16 %v7981, %v7979
  %v8070 = vpack.c.b16 %v7984, %v7982
  %v8071 = vpack.c.b16 %v7985, %v7983
  %v8072 = vpack.c.b16 %v7988, %v7986
  %v8073 = vpack.c.b16 %v7989, %v7987
  %v8074 = vpack.c.b16 %v7992, %v7990
  %v8075 = vpack.c.b16 %v7993, %v7991
  %v8076 = vpack.c.b16 %v7996, %v7994
  %v8077 = vpack.c.b16 %v7997, %v7995
  %v8078 = vpack.c.b16 %v8000, %v7998
  %v8079 = vpack.c.b16 %v8001, %v7999
  %v8080 = vpack.c.b16 %v8004, %v8002
  %v8081 = vpack.c.b16 %v8005, %v8003
  %v8082 = vpack.c.b16 %v8008, %v8006
  %v8083 = vpack.c.b16 %v8009, %v8007
  %v8084 = vpack.c.b16 %v8012, %v8010
  %v8085 = vpack.c.b16 %v8013, %v8011
  %v8086 = vpack.c.b16 %v8016, %v8014
  %v8087 = vpack.c.b16 %v8017, %v8015
  %v8088 = vpack.c.b16 %v8020, %v8018
  %v8089 = vpack.c.b16 %v8021, %v8019
  %v8090 = vpack.c.b16 %v8024, %v8022
  %v8091 = vpack.c.b16 %v8025, %v8023
  %v8092 = vpack.c.b16 %v8028, %v8026
  %v8093 = vpack.c.b16 %v8029, %v8027
  %8158 = vmatpush.bf16.msra.mxu0 %v8044
  %8159 = vmatpush.bf16.msra.mxu0 %v8042
  %8160 = vmatpush.bf16.msra.mxu0 %v8040
  %8161 = vmatpush.bf16.msra.mxu0 %v8038
  %8162 = vmatpush.bf16.msra.mxu0 %v8036
  %8163 = vmatpush.bf16.msra.mxu0 %v8034
  %8164 = vmatpush.bf16.msra.mxu0 %v8032
  %8165 = vmatpush.bf16.msra.mxu0 %v8030
  %8166 = vmatmul.bf16.gmra.mxu0 %v7764
  %v8167 = vpop.f32.mrf.mxu0
  %v8168 = vadd.f32 %v7834, %v8167
  %v8169 = vpop.f32.mrf.mxu0
  %8170 = vdwg.mxu0
  %8171 = vmatpush.bf16.msra.mxu0 %v8060
  %8172 = vmatpush.bf16.msra.mxu0 %v8058
  %8173 = vmatpush.bf16.msra.mxu0 %v8056
  %8174 = vmatpush.bf16.msra.mxu0 %v8054
  %8175 = vmatpush.bf16.msra.mxu0 %v8052
  %8176 = vmatpush.bf16.msra.mxu0 %v8050
  %8177 = vmatpush.bf16.msra.mxu0 %v8048
  %8178 = vmatpush.bf16.msra.mxu0 %v8046
  %8179 = vmatmul.bf16.gmra.mxu0 %v7765
  %v8180 = vpop.f32.mrf.mxu0
  %v8181 = vadd.f32 %v8168, %v8180
  %v8182 = vpop.f32.mrf.mxu0
  %8183 = vdwg.mxu0
  %8184 = vmatpush.bf16.msra.mxu0 %v8076
  %8185 = vmatpush.bf16.msra.mxu0 %v8074
  %8186 = vmatpush.bf16.msra.mxu0 %v8072
  %8187 = vmatpush.bf16.msra.mxu0 %v8070
  %8188 = vmatpush.bf16.msra.mxu0 %v8068
  %8189 = vmatpush.bf16.msra.mxu0 %v8066
  %8190 = vmatpush.bf16.msra.mxu0 %v8064
  %8191 = vmatpush.bf16.msra.mxu0 %v8062
  %8192 = vmatmul.bf16.gmra.mxu0 %v7766
  %v8193 = vpop.f32.mrf.mxu0
  %v8194 = vadd.f32 %v8181, %v8193
  %v8195 = vpop.f32.mrf.mxu0
  %8196 = vdwg.mxu0
  %8197 = vmatpush.bf16.msra.mxu0 %v8092
  %8198 = vmatpush.bf16.msra.mxu0 %v8090
  %8199 = vmatpush.bf16.msra.mxu0 %v8088
  %8200 = vmatpush.bf16.msra.mxu0 %v8086
  %8201 = vmatpush.bf16.msra.mxu0 %v8084
  %8202 = vmatpush.bf16.msra.mxu0 %v8082
  %8203 = vmatpush.bf16.msra.mxu0 %v8080
  %8204 = vmatpush.bf16.msra.mxu0 %v8078
  %8205 = vmatmul.bf16.gmra.mxu0 %v7767
  %v8206 = vpop.f32.mrf.mxu0
  %v8207 = vadd.f32 %v8194, %v8206
  %v8208 = vpop.f32.mrf.mxu0
  %8209 = vdwg.mxu0
  %8210 = vmatpush.bf16.msra.mxu0 %v8045
  %8211 = vmatpush.bf16.msra.mxu0 %v8043
  %8212 = vmatpush.bf16.msra.mxu0 %v8041
  %8213 = vmatpush.bf16.msra.mxu0 %v8039
  %8214 = vmatpush.bf16.msra.mxu0 %v8037
  %8215 = vmatpush.bf16.msra.mxu0 %v8035
  %8216 = vmatpush.bf16.msra.mxu0 %v8033
  %8217 = vmatpush.bf16.msra.mxu0 %v8031
  %8218 = vmatmul.bf16.gmra.mxu0 %v7764
  %v8219 = vpop.f32.mrf.mxu0
  %v8220 = vadd.f32 %v7835, %v8219
  %v8221 = vpop.f32.mrf.mxu0
  %8222 = vdwg.mxu0
  %8223 = vmatpush.bf16.msra.mxu0 %v8061
  %8224 = vmatpush.bf16.msra.mxu0 %v8059
  %8225 = vmatpush.bf16.msra.mxu0 %v8057
  %8226 = vmatpush.bf16.msra.mxu0 %v8055
  %8227 = vmatpush.bf16.msra.mxu0 %v8053
  %8228 = vmatpush.bf16.msra.mxu0 %v8051
  %8229 = vmatpush.bf16.msra.mxu0 %v8049
  %8230 = vmatpush.bf16.msra.mxu0 %v8047
  %8231 = vmatmul.bf16.gmra.mxu0 %v7765
  %v8232 = vpop.f32.mrf.mxu0
  %v8233 = vadd.f32 %v8220, %v8232
  %v8234 = vpop.f32.mrf.mxu0
  %8235 = vdwg.mxu0
  %8236 = vmatpush.bf16.msra.mxu0 %v8077
  %8237 = vmatpush.bf16.msra.mxu0 %v8075
  %8238 = vmatpush.bf16.msra.mxu0 %v8073
  %8239 = vmatpush.bf16.msra.mxu0 %v8071
  %8240 = vmatpush.bf16.msra.mxu0 %v8069
  %8241 = vmatpush.bf16.msra.mxu0 %v8067
  %8242 = vmatpush.bf16.msra.mxu0 %v8065
  %8243 = vmatpush.bf16.msra.mxu0 %v8063
  %8244 = vmatmul.bf16.gmra.mxu0 %v7766
  %v8245 = vpop.f32.mrf.mxu0
  %v8246 = vadd.f32 %v8233, %v8245
  %v8247 = vpop.f32.mrf.mxu0
  %8248 = vdwg.mxu0
  %8249 = vmatpush.bf16.msra.mxu0 %v8093
  %8250 = vmatpush.bf16.msra.mxu0 %v8091
  %8251 = vmatpush.bf16.msra.mxu0 %v8089
  %8252 = vmatpush.bf16.msra.mxu0 %v8087
  %8253 = vmatpush.bf16.msra.mxu0 %v8085
  %8254 = vmatpush.bf16.msra.mxu0 %v8083
  %8255 = vmatpush.bf16.msra.mxu0 %v8081
  %8256 = vmatpush.bf16.msra.mxu0 %v8079
  %8257 = vmatmul.bf16.gmra.mxu0 %v7767
  %v8258 = vpop.f32.mrf.mxu0
  %v8259 = vadd.f32 %v8246, %v8258
  %v8260 = vpop.f32.mrf.mxu0
  %8261 = vdwg.mxu0
  %v8262 = vmul.f32 %v8207, 0.5
  %v8263 = vmul.f32 %v8259, 0.5
  %v8264 = vmul.f32 %v8207, 0.70710677
  %v8265 = vmul.f32 %v8259, 0.70710677
  %v8266 = vmul.f32 %v8264, %v8264
  %v8267 = vmin.f32 16.0, %v8266
  %v8268 = vmul.f32 %v8267, 2.1237322e-06
  %v8269 = vadd.f32 %v8268, 0.00028619796
  %v8270 = vmul.f32 %v8267, %v8269
  %v8271 = vadd.f32 %v8270, 0.0036580483
  %v8272 = vmul.f32 %v8267, %v8271
  %v8273 = vadd.f32 %v8272, 0.05243302
  %v8274 = vmul.f32 %v8267, %v8273
  %v8275 = vadd.f32 %v8274, 0.18741608
  %v8276 = vmul.f32 %v8267, %v8275
  %v8277 = vadd.f32 %v8276, 1.1283791
  %v8278 = vmul.f32 %v8264, %v8277
  %v8279 = vmul.f32 %v8267, 3.8918573e-05
  %v8280 = vadd.f32 %v8279, 0.001143296
  %v8281 = vmul.f32 %v8267, %v8280
  %v8282 = vadd.f32 %v8281, 0.014752088
  %v8283 = vmul.f32 %v8267, %v8282
  %v8284 = vadd.f32 %v8283, 0.112945676
  %v8285 = vmul.f32 %v8267, %v8284
  %v8286 = vadd.f32 %v8285, 0.4994258
  %v8287 = vmul.f32 %v8267, %v8286
  %v8288 = vadd.f32 %v8287, 1.0
  %v8289 = vrcp.pop %v8288
  %v8290 = vmul.f32 %v8288, %v8289
  %v8291 = vsub.f32 1.0, %v8290
  %v8292 = vmul.f32 %v8289, %v8291
  %v8293 = vadd.f32 %v8289, %v8292
  %vm8294 = vweird.f32 %v8288
  %vm8295 = vweird.f32 %v8289
  %vm8296 = vmor %vm8294, %vm8295
  %v8297 = vsel %vm8296, %v8289, %v8293
  %v8298 = vand.u32 2147483647, %v8288
  %vm8299 = vcmp.eq.f32.partialorder %v8298, 8.507059e+37
  %v8300 = vand.u32 %v8288, 2147483648
  %v8301 = vor.u32 1.1754944e-38, %v8300
  %v8302 = vsel %vm8299, %v8301, %v8297
  %v8303 = vmul.f32 %v8278, %v8302
  %v8304 = vmin.f32 %v8303, 1.0
  %v8305 = vmax.f32 %v8304, -1.0
  %v8306 = vmul.f32 %v8265, %v8265
  %v8307 = vmin.f32 16.0, %v8306
  %v8308 = vmul.f32 %v8307, 2.1237322e-06
  %v8309 = vadd.f32 %v8308, 0.00028619796
  %v8310 = vmul.f32 %v8307, %v8309
  %v8311 = vadd.f32 %v8310, 0.0036580483
  %v8312 = vmul.f32 %v8307, %v8311
  %v8313 = vadd.f32 %v8312, 0.05243302
  %v8314 = vmul.f32 %v8307, %v8313
  %v8315 = vadd.f32 %v8314, 0.18741608
  %v8316 = vmul.f32 %v8307, %v8315
  %v8317 = vadd.f32 %v8316, 1.1283791
  %v8318 = vmul.f32 %v8265, %v8317
  %v8319 = vmul.f32 %v8307, 3.8918573e-05
  %v8320 = vadd.f32 %v8319, 0.001143296
  %v8321 = vmul.f32 %v8307, %v8320
  %v8322 = vadd.f32 %v8321, 0.014752088
  %v8323 = vmul.f32 %v8307, %v8322
  %v8324 = vadd.f32 %v8323, 0.112945676
  %v8325 = vmul.f32 %v8307, %v8324
  %v8326 = vadd.f32 %v8325, 0.4994258
  %v8327 = vmul.f32 %v8307, %v8326
  %v8328 = vadd.f32 %v8327, 1.0
  %v8329 = vrcp.pop %v8328
  %v8330 = vmul.f32 %v8328, %v8329
  %v8331 = vsub.f32 1.0, %v8330
  %v8332 = vmul.f32 %v8329, %v8331
  %v8333 = vadd.f32 %v8329, %v8332
  %vm8334 = vweird.f32 %v8328
  %vm8335 = vweird.f32 %v8329
  %vm8336 = vmor %vm8334, %vm8335
  %v8337 = vsel %vm8336, %v8329, %v8333
  %v8338 = vand.u32 2147483647, %v8328
  %vm8339 = vcmp.eq.f32.partialorder %v8338, 8.507059e+37
  %v8340 = vand.u32 %v8328, 2147483648
  %v8341 = vor.u32 1.1754944e-38, %v8340
  %v8342 = vsel %vm8339, %v8341, %v8337
  %v8343 = vmul.f32 %v8318, %v8342
  %v8344 = vmin.f32 %v8343, 1.0
  %v8345 = vmax.f32 %v8344, -1.0
  %v8346 = vadd.f32 %v8305, 1.0
  %v8347 = vadd.f32 %v8345, 1.0
  %v8348 = vmul.f32 %v8262, %v8346
  %v8349 = vmul.f32 %v8263, %v8347
  %v8350 = vld [vmem:[%s59] sm:$0xff]
  %v8351 = vld [vmem:[%s59 + $0x8] sm:$0xff]
  %v8352 = vld [vmem:[%s59 + $0x10] sm:$0xff]
  %v8353 = vld [vmem:[%s59 + $0x18] sm:$0xff]
  %v8354 = vld [vmem:[%s59 + $0x20] sm:$0xff]
  %v8355 = vld [vmem:[%s59 + $0x28] sm:$0xff]
  %v8356 = vld [vmem:[%s59 + $0x30] sm:$0xff]
  %v8357 = vld [vmem:[%s59 + $0x38] sm:$0xff]
  %v8358 = vld [vmem:[%s59 + $0x40] sm:$0xff]
  %v8359 = vld [vmem:[%s59 + $0x48] sm:$0xff]
  %v8360 = vld [vmem:[%s59 + $0x50] sm:$0xff]
  %v8361 = vld [vmem:[%s59 + $0x58] sm:$0xff]
  %v8362 = vld [vmem:[%s59 + $0x60] sm:$0xff]
  %v8363 = vld [vmem:[%s59 + $0x68] sm:$0xff]
  %v8364 = vld [vmem:[%s59 + $0x70] sm:$0xff]
  %v8365 = vld [vmem:[%s59 + $0x78] sm:$0xff]
  %v8366 = vld [vmem:[%s59 + $0x80] sm:$0xff]
  %v8367 = vld [vmem:[%s59 + $0x88] sm:$0xff]
  %v8368 = vld [vmem:[%s59 + $0x90] sm:$0xff]
  %v8369 = vld [vmem:[%s59 + $0x98] sm:$0xff]
  %v8370 = vld [vmem:[%s59 + $0xa0] sm:$0xff]
  %v8371 = vld [vmem:[%s59 + $0xa8] sm:$0xff]
  %v8372 = vld [vmem:[%s59 + $0xb0] sm:$0xff]
  %v8373 = vld [vmem:[%s59 + $0xb8] sm:$0xff]
  %v8374 = vld [vmem:[%s59 + $0xc0] sm:$0xff]
  %v8375 = vld [vmem:[%s59 + $0xc8] sm:$0xff]
  %v8376 = vld [vmem:[%s59 + $0xd0] sm:$0xff]
  %v8377 = vld [vmem:[%s59 + $0xd8] sm:$0xff]
  %v8378 = vld [vmem:[%s59 + $0xe0] sm:$0xff]
  %v8379 = vld [vmem:[%s59 + $0xe8] sm:$0xff]
  %v8380 = vld [vmem:[%s59 + $0xf0] sm:$0xff]
  %v8381 = vld [vmem:[%s59 + $0xf8] sm:$0xff]
  %v8382 = vld [vmem:[#allocation8] sm:$0x1]
  %v8384 = vperm.slane %v8382, 0
  %8386 = vmatpush.msra.mxu0 %v8365
  %8387 = vmatpush.msra.mxu0 %v8364
  %8388 = vmatpush.msra.mxu0 %v8363
  %8389 = vmatpush.msra.mxu0 %v8362
  %8390 = vmatpush.msra.mxu0 %v8361
  %8391 = vmatpush.msra.mxu0 %v8360
  %8392 = vmatpush.msra.mxu0 %v8359
  %8393 = vmatpush.msra.mxu0 %v8358
  %8394 = vmatpush.msra.mxu0 %v8357
  %8395 = vmatpush.msra.mxu0 %v8356
  %8396 = vmatpush.msra.mxu0 %v8355
  %8397 = vmatpush.msra.mxu0 %v8354
  %8398 = vmatpush.msra.mxu0 %v8353
  %8399 = vmatpush.msra.mxu0 %v8352
  %8400 = vmatpush.msra.mxu0 %v8351
  %8401 = vmatpush.msra.mxu0 %v8350
  %8402 = vmatmul.f32.gmra.mxu0 %v8348
  %v8403 = vpop.f32.mrf.mxu0
  %v8404 = vadd.f32 %v8384, %v8403
  %8405 = vdwg.mxu0
  %8406 = vmatpush.msra.mxu0 %v8381
  %8407 = vmatpush.msra.mxu0 %v8380
  %8408 = vmatpush.msra.mxu0 %v8379
  %8409 = vmatpush.msra.mxu0 %v8378
  %8410 = vmatpush.msra.mxu0 %v8377
  %8411 = vmatpush.msra.mxu0 %v8376
  %8412 = vmatpush.msra.mxu0 %v8375
  %8413 = vmatpush.msra.mxu0 %v8374
  %8414 = vmatpush.msra.mxu0 %v8373
  %8415 = vmatpush.msra.mxu0 %v8372
  %8416 = vmatpush.msra.mxu0 %v8371
  %8417 = vmatpush.msra.mxu0 %v8370
  %8418 = vmatpush.msra.mxu0 %v8369
  %8419 = vmatpush.msra.mxu0 %v8368
  %8420 = vmatpush.msra.mxu0 %v8367
  %8421 = vmatpush.msra.mxu0 %v8366
  %8422 = vmatmul.f32.gmra.mxu0 %v8349
  %v8423 = vpop.f32.mrf.mxu0
  %v8424 = vadd.f32 %v8404, %v8423
  %8425 = vdwg.mxu0
  %vm8426 = vcmask 1024
  %8427 = vst.msk [vmem:[%s69] sm:$0x3] %vm8426, %v8424
  // Predicated region
  $region168: #{forward.1} parent=0 // pred_check
    _
  $region169: #{forward.1} parent=0 // pred_check_branch
    %8429 = sbr.rel (0) target = $region171
  $region170: #{forward.1} parent=0 // pred_region
    _
  $region171: #{forward.1} parent=0 // pred_fallthru
    _
  // Predicated region
  $region172: #{forward.1} parent=0 // pred_check
    _
  $region173: #{forward.1} parent=0 // pred_check_branch
    %8431 = sbr.rel (0) target = $region175
  $region174: #{forward.1} parent=0 // pred_region
    _
  $region175: #{forward.1} parent=0 // pred_fallthru
    _
  %8432 = vsyncmov [#allocation7]
  %s8433 = vpop.sfrf %8432
  %p8434 = scmp.eq.s32.totalorder %s8433, 0
  %p8435 = pneg %p8434
  %8437 = shalt.err (%p8435)
  %s8438 = scalar_lea.sflag [#allocation7], 1
  %8439 = vsyncmov %s8438
  %s8440 = vpop.sfrf %8439
  %p8441 = scmp.eq.s32.totalorder %s8440, 0
  %p8442 = pneg %p8441
  %8444 = shalt.err (%p8442)
  %s8445 = scalar_lea.sflag [#allocation7], 2
  %8446 = vsyncmov %s8445
  %s8447 = vpop.sfrf %8446
  %p8448 = scmp.eq.s32.totalorder %s8447, 0
  %p8449 = pneg %p8448
  %8451 = shalt.err (%p8449)

</llo_original>
